<compile_context>
chip_gen: v5e
topology: v5e:2x2
jax: 0.10.0
libtpu: 0.0.40
codegen_flags: <defaults>
</compile_context>

<pallas_src>
import functools

import jax
import jax.numpy as jnp
from jax.experimental import pallas as pl
from jax.experimental.pallas import tpu as pltpu


_LANE = 128


def _round_up(x, m):
    return ((x + m - 1) // m) * m


def _pick_tm(M):
    # >= 2 grid steps when M is big enough (shards across both v7x TensorCores,
    # enables double-buffering); rounded to 16 for bf16 sublane packing.
    if M <= 256:
        return _round_up(M, 16)
    if M <= 1024:
        return _round_up((M + 1) // 2, 16)
    return 512


# ----------------------------- Pallas kernels --------------------------------

def _gated_conv_kernel(p_ref, w_ref, b_ref, o_ref, *, cpad, activation, post_tanh):
    """Fused gated conv: res = P @ [Wc||Wm] + [bc||bm] (single MXU call).
    Each half is padded to a 128-lane multiple so the conv/gate split lands on a
    vreg boundary and the output store is unmasked."""
    res = jnp.dot(p_ref[...], w_ref[...],
                  preferred_element_type=jnp.float32) + b_ref[...]
    conv = res[:, :cpad]
    gate = jax.nn.sigmoid(res[:, cpad:])
    if activation == 'lrelu':
        conv = jnp.where(conv >= 0, conv, 0.2 * conv)
    elif activation == 'relu':
        conv = jnp.maximum(conv, 0.0)
    out = conv * gate
    if post_tanh:
        out = jnp.tanh(out)
    o_ref[...] = out


def _bmm_kernel(a_ref, b_ref, o_ref):
    """Batched matmul tile (batch dim squeezed): [tp,K]bf16 @ [K,L]bf16 -> [tp,L]f32."""
    o_ref[...] = jnp.dot(a_ref[...], b_ref[...], preferred_element_type=jnp.float32)


def _attn_softmax_agg_kernel(s_ref, mm_ref, r_ref, o_ref, *, scale):
    """Masked softmax over background patches + weighted patch aggregation."""
    mm = mm_ref[...]                                  # (1, L) f32
    z = s_ref[...] * mm * scale                       # (tp, L) f32
    z_max = jnp.max(z, axis=-1, keepdims=True)
    e = jnp.exp(z - z_max)
    denom = jnp.sum(e, axis=-1, keepdims=True)
    p = e * pl.reciprocal(denom, approx=True)         # divide on the EUP slot
    p = p * mm
    o_ref[...] = jnp.dot(p.astype(r_ref.dtype), r_ref[...],
                         preferred_element_type=jnp.float32)


# ----------------------------- Pallas wrappers --------------------------------

def gated_matmul(cols, w, bias, activation, post_tanh):
    """cols: [M, K] bf16 im2col patches; w: [K_pad, 2*cout_pad] bf16;
    bias: [1, 2*cout_pad] f32.  Returns f32 [M, cout_pad]."""
    M, K = cols.shape
    K_pad = w.shape[0]
    cpad = w.shape[1] // 2
    if K_pad != K:
        cols = jnp.pad(cols, ((0, 0), (0, K_pad - K)))
    tm = _pick_tm(M)
    kernel = functools.partial(_gated_conv_kernel, cpad=cpad,
                               activation=activation, post_tanh=post_tanh)
    cost = pl.CostEstimate(
        flops=2 * M * K_pad * 2 * cpad,
        transcendentals=M * cpad * (2 if post_tanh else 1),
        bytes_accessed=(M * K_pad * 2 + K_pad * 2 * cpad * 2
                        + 2 * cpad * 4 + M * cpad * 4))
    return pl.pallas_call(
        kernel,
        out_shape=jax.ShapeDtypeStruct((M, cpad), jnp.float32),
        grid=(pl.cdiv(M, tm),),
        in_specs=[
            pl.BlockSpec((tm, K_pad), lambda i: (i, 0)),
            pl.BlockSpec((K_pad, 2 * cpad), lambda i: (0, 0)),
            pl.BlockSpec((1, 2 * cpad), lambda i: (0, 0)),
        ],
        out_specs=pl.BlockSpec((tm, cpad), lambda i: (i, 0)),
        compiler_params=pltpu.CompilerParams(dimension_semantics=("parallel",)),
        cost_estimate=cost,
    )(cols, w, bias)


def batched_score_matmul(a, b):
    """a: [N, P, K] bf16, b: [N, K, L] bf16 -> [N, P, L] f32."""
    N, P, K = a.shape
    L = b.shape[2]
    tp = P if P <= 256 else 256
    return pl.pallas_call(
        _bmm_kernel,
        out_shape=jax.ShapeDtypeStruct((N, P, L), jnp.float32),
        grid=(N, pl.cdiv(P, tp)),
        in_specs=[pl.BlockSpec((None, tp, K), lambda n, p: (n, p, 0)),
                  pl.BlockSpec((None, K, L), lambda n, p: (n, 0, 0))],
        out_specs=pl.BlockSpec((None, tp, L), lambda n, p: (n, p, 0)),
        compiler_params=pltpu.CompilerParams(
            dimension_semantics=("parallel", "parallel")),
    )(a, b)


def batched_attn_softmax_agg(scores, mm, raw, scale):
    """scores: [N, P, L] f32; mm: [1, L] f32; raw: [N, L, D] bf16 -> [N, P, D] f32."""
    N, P, L = scores.shape
    D = raw.shape[2]
    tp = P if P <= 256 else 256
    kernel = functools.partial(_attn_softmax_agg_kernel, scale=scale)
    return pl.pallas_call(
        kernel,
        out_shape=jax.ShapeDtypeStruct((N, P, D), jnp.float32),
        grid=(N, pl.cdiv(P, tp)),
        in_specs=[pl.BlockSpec((None, tp, L), lambda n, p: (n, p, 0)),
                  pl.BlockSpec((1, L), lambda n, p: (0, 0)),
                  pl.BlockSpec((None, L, D), lambda n, p: (n, 0, 0))],
        out_specs=pl.BlockSpec((None, tp, D), lambda n, p: (n, p, 0)),
        compiler_params=pltpu.CompilerParams(
            dimension_semantics=("parallel", "parallel")),
    )(scores, mm, raw)


# ----------------------------- JAX glue (layout / patches) --------------------

def nearest_resize(x, out_hw):
    """PyTorch F.interpolate(mode='nearest') semantics; x is NHWC."""
    n, h, w, c = x.shape
    oh, ow = out_hw
    hi = (jnp.arange(oh) * h) // oh
    wi = (jnp.arange(ow) * w) // ow
    return x[:, hi[:, None], wi[None, :], :]


def im2col(x, k, stride, pad, dil):
    """x: NHWC.  Emits bf16 patch columns directly (no separate cast pass).
    Returns ([N,OH,OW,k*k*C], OH, OW), per-patch ordering = ((ki,kj), c)."""
    n, h, w, c = x.shape
    x = x.astype(jnp.bfloat16)
    xp = jnp.pad(x, ((0, 0), (pad, pad), (pad, pad), (0, 0)))
    oh = (h + 2 * pad - dil * (k - 1) - 1) // stride + 1
    ow = (w + 2 * pad - dil * (k - 1) - 1) // stride + 1
    slices = []
    for i in range(k):
        for j in range(k):
            slices.append(xp[:, i * dil:i * dil + stride * (oh - 1) + 1:stride,
                              j * dil:j * dil + stride * (ow - 1) + 1:stride, :])
    cols = jnp.stack(slices, axis=3)               # [N, OH, OW, k*k, C] bf16
    return cols.reshape(n, oh, ow, k * k * c), oh, ow


def _same_pad_amounts(h, w, k, stride):
    out_r = -(-h // stride)
    out_c = -(-w // stride)
    pr = max(0, (out_r - 1) * stride + k - h)
    pc = max(0, (out_c - 1) * stride + k - w)
    return pr // 2, pr - pr // 2, pc // 2, pc - pc // 2


def extract_patches_same(x, k, stride):
    """'same'-padded patch extraction (torch unfold ordering). Returns [N, L, k, k, C]."""
    n, h, w, c = x.shape
    pt, pb, pleft, pright = _same_pad_amounts(h, w, k, stride)
    xp = jnp.pad(x, ((0, 0), (pt, pb), (pleft, pright), (0, 0)))
    hp, wp = h + pt + pb, w + pleft + pright
    oh = (hp - k) // stride + 1
    ow = (wp - k) // stride + 1
    slices = []
    for i in range(k):
        for j in range(k):
            slices.append(xp[:, i:i + stride * (oh - 1) + 1:stride,
                              j:j + stride * (ow - 1) + 1:stride, :])
    cols = jnp.stack(slices, axis=3)               # [N, OH, OW, k*k, C]
    return cols.reshape(n, oh * ow, k, k, c)


def diag_conv_batched(s):
    """3x3 identity-kernel conv with padding 1 (the 'fuse' conv), batched over dim 0."""
    sp = jnp.pad(s, ((0, 0), (1, 1), (1, 1)))
    return sp[:, :-2, :-2] + sp[:, 1:-1, 1:-1] + sp[:, 2:, 2:]


# ----------------------------- Layers ----------------------------------------

def GC(cin, cout, k, s, p, d=1, act='lrelu', post_tanh=False, typ='gc'):
    return dict(type=typ, cin=cin, cout=cout, k=k, s=s, p=p, d=d,
                act=act, post_tanh=post_tanh)


def TGC(cin, cout, k, s, p, d=1, act='lrelu'):
    return GC(cin, cout, k, s, p, d, act, False, 'tgc')


def apply_gated_conv(x, prm, cfg):
    if cfg['type'] == 'tgc':   # TransposeGatedConv2d: nearest upsample x2, then gated conv
        x = nearest_resize(x, (x.shape[1] * 2, x.shape[2] * 2))
    # TODO(synk): im2col still materialized in HBM; in-kernel haloed patch build
    #             would remove the k*k read amplification.
    cols, oh, ow = im2col(x, cfg['k'], cfg['s'], cfg['p'], cfg['d'])
    n = x.shape[0]
    out = gated_matmul(cols.reshape(n * oh * ow, -1), prm['w'], prm['b'],
                       cfg['act'], cfg['post_tanh'])
    # Strip lane-padding channels (kept only inside the Pallas output for
    # lane-dense stores); carrying them would inflate the next layer's K.
    return out[:, :cfg['cout']].reshape(n, oh, ow, cfg['cout'])


def run_seq(x, cfgs, params):
    for cfg, prm in zip(cfgs, params):
        x = apply_gated_conv(x, prm, cfg)
    return x


def contextual_attention(f, b, mask, *, ksize=3, stride=1, rate=2,
                         softmax_scale=10.0, fuse=True):
    n, hraw, wraw, c = b.shape
    kernel = 2 * rate
    raw_w = extract_patches_same(b, kernel, rate * stride)        # [N, L, kr, kr, C] f32
    f_d = f[:, ::rate, ::rate, :]
    b_d = b[:, ::rate, ::rate, :]
    mask_d = mask[:, ::rate, ::rate, :]
    hf, wf = f_d.shape[1], f_d.shape[2]
    hb, wb = b_d.shape[1], b_d.shape[2]
    P, L = hf * wf, hb * wb
    w = extract_patches_same(b_d, ksize, stride)                  # [N, L, k, k, C]
    # NOTE: matches the PyTorch reference -- only batch element 0's mask is used
    # for all images.
    m0 = extract_patches_same(mask_d, ksize, stride)[0]           # [L, k, k, 1]
    mm = (jnp.mean(m0, axis=(1, 2, 3)) == 0.0).astype(jnp.float32)   # [L]
    f_cols, _, _ = im2col(f_d, ksize, 1, ksize // 2, 1)           # bf16
    f_cols = f_cols.reshape(n, P, -1)                             # [N, P, Kc]

    # Normalized background patches (f32 norm, bf16 matmul operand).
    Kc = ksize * ksize * c
    w_flat = w.reshape(n, L, Kc)
    norm = jnp.sqrt(jnp.sum(w_flat * w_flat, axis=-1))            # [N, L]
    w_n = w_flat / jnp.maximum(norm, 1e-4)[..., None]
    w_nt = jnp.transpose(w_n, (0, 2, 1)).astype(jnp.bfloat16)     # [N, Kc, L]

    scores = batched_score_matmul(f_cols, w_nt)                   # [N, P, L] f32

    if fuse:
        # TODO(synk): fuse conv still round-trips scores through HBM via XLA.
        y = jnp.transpose(scores, (0, 2, 1))                      # [N, L, P]
        y = diag_conv_batched(y)
        y = y.reshape(n, hb, wb, hf, wf).transpose(0, 2, 1, 4, 3).reshape(n, L, P)
        y = diag_conv_batched(y)
        y = y.reshape(n, wb, hb, wf, hf).transpose(0, 2, 1, 4, 3).reshape(n, L, P)
        scores = jnp.transpose(y, (0, 2, 1))

    D = kernel * kernel * c
    raw_flat = raw_w.reshape(n, L, D).astype(jnp.bfloat16)
    contrib = batched_attn_softmax_agg(scores, mm.reshape(1, L), raw_flat,
                                       softmax_scale)             # [N, P, D] f32
    contrib = contrib.reshape(n, hf, wf, kernel, kernel, c)

    # conv_transpose2d(yi, raw_wi, stride=rate, padding=1) / 4 via batched overlap-add.
    full_h = (hf - 1) * rate + kernel
    full_w = (wf - 1) * rate + kernel
    out_full = jnp.zeros((n, full_h, full_w, c), jnp.float32)
    for i in range(kernel):
        for j in range(kernel):
            out_full = out_full.at[:, i:i + rate * (hf - 1) + 1:rate,
                                   j:j + rate * (wf - 1) + 1:rate, :].add(
                contrib[:, :, :, i, j, :])
    return out_full[:, 1:1 + hf * rate, 1:1 + wf * rate, :] / 4.0


# ----------------------------- Model definition -------------------------------

def build_configs(in_ch, out_ch, lc):
    coarse = [
        GC(in_ch, lc, 5, 1, 2),
        GC(lc, lc * 2, 3, 2, 1),
        GC(lc * 2, lc * 2, 3, 1, 1),
        GC(lc * 2, lc * 4, 3, 2, 1),
        GC(lc * 4, lc * 4, 3, 1, 1),
        GC(lc * 4, lc * 4, 3, 1, 1),
        GC(lc * 4, lc * 4, 3, 1, 2, d=2),
        GC(lc * 4, lc * 4, 3, 1, 4, d=4),
        GC(lc * 4, lc * 4, 3, 1, 8, d=8),
        GC(lc * 4, lc * 4, 3, 1, 16, d=16),
        GC(lc * 4, lc * 4, 3, 1, 1),
        GC(lc * 4, lc * 4, 3, 1, 1),
        TGC(lc * 4, lc * 2, 3, 1, 1),
        GC(lc * 2, lc * 2, 3, 1, 1),
        TGC(lc * 2, lc, 3, 1, 1),
        GC(lc, lc // 2, 3, 1, 1),
        GC(lc // 2, out_ch, 3, 1, 1, act='none', post_tanh=True),   # + nn.Tanh()
    ]
    refine_conv = [
        GC(in_ch, lc, 5, 1, 2),
        GC(lc, lc, 3, 2, 1),
        GC(lc, lc * 2, 3, 1, 1),
        GC(lc * 2, lc * 2, 3, 2, 1),
        GC(lc * 2, lc * 4, 3, 1, 1),
        GC(lc * 4, lc * 4, 3, 1, 1),
        GC(lc * 4, lc * 4, 3, 1, 2, d=2),
        GC(lc * 4, lc * 4, 3, 1, 4, d=4),
        GC(lc * 4, lc * 4, 3, 1, 8, d=8),
        GC(lc * 4, lc * 4, 3, 1, 16, d=16),
    ]
    refine_atten_1 = [
        GC(in_ch, lc, 5, 1, 2),
        GC(lc, lc, 3, 2, 1),
        GC(lc, lc * 2, 3, 1, 1),
        GC(lc * 2, lc * 4, 3, 2, 1),
        GC(lc * 4, lc * 4, 3, 1, 1),
        GC(lc * 4, lc * 4, 3, 1, 1, act='relu'),
    ]
    refine_atten_2 = [
        GC(lc * 4, lc * 4, 3, 1, 1),
        GC(lc * 4, lc * 4, 3, 1, 1),
    ]
    refine_combine = [
        GC(lc * 8, lc * 4, 3, 1, 1),
        GC(lc * 4, lc * 4, 3, 1, 1),
        TGC(lc * 4, lc * 2, 3, 1, 1),
        GC(lc * 2, lc * 2, 3, 1, 1),
        TGC(lc * 2, lc, 3, 1, 1),
        GC(lc, lc // 2, 3, 1, 1),
        GC(lc // 2, out_ch, 3, 1, 1, act='none', post_tanh=True),   # + nn.Tanh()
    ]
    return dict(coarse=coarse, refine_conv=refine_conv,
                refine_atten_1=refine_atten_1, refine_atten_2=refine_atten_2,
                refine_combine=refine_combine)


def init_gc_params(key, cfg):
    # NOTE: real PyTorch weights ([cout,cin,kh,kw]) must be transposed to
    # (kh,kw,cin,cout), reshaped to (K,cout), and placed in the [:K,:cout] /
    # [:K, cpad:cpad+cout] slots below to match im2col ordering.
    k1, k2, k3, k4 = jax.random.split(key, 4)
    K = cfg['k'] * cfg['k'] * cfg['cin']
    co = cfg['cout']
    K_pad = _round_up(K, _LANE)
    cpad = _round_up(co, _LANE)
    std = 0.1
    wc = jax.random.normal(k1, (K, co), jnp.float32) * std
    bc = jax.random.normal(k2, (1, co), jnp.float32) * std
    wm = jax.random.normal(k3, (K, co), jnp.float32) * std
    bm = jax.random.normal(k4, (1, co), jnp.float32) * std
    # Fused, lane-padded weight/bias: one [K_pad, 2*cpad] bf16 matmul operand.
    w = jnp.zeros((K_pad, 2 * cpad), jnp.float32)
    w = w.at[:K, :co].set(wc).at[:K, cpad:cpad + co].set(wm)
    b = jnp.zeros((1, 2 * cpad), jnp.float32)
    b = b.at[:, :co].set(bc).at[:, cpad:cpad + co].set(bm)
    return dict(w=w.astype(jnp.bfloat16), b=b)


def init_params(key, cfgs):
    params = {}
    for name, seq in cfgs.items():
        key, sub = jax.random.split(key)
        keys = jax.random.split(sub, len(seq))
        params[name] = [init_gc_params(k, c) for k, c in zip(keys, seq)]
    return params


def gated_generator_forward(params, cfgs, img_nchw, mask_nchw):
    # Convert to NHWC internally.
    img = jnp.transpose(img_nchw, (0, 2, 3, 1)).astype(jnp.float32)
    mask = jnp.transpose(mask_nchw, (0, 2, 3, 1)).astype(jnp.float32)
    H, W = img.shape[1], img.shape[2]

    # Coarse stage
    first_masked_img = img * (1.0 - mask) + mask
    first_in = jnp.concatenate([first_masked_img, mask], axis=-1)
    first_out = run_seq(first_in, cfgs['coarse'], params['coarse'])
    first_out = nearest_resize(first_out, (H, W))

    # Refinement stage
    second_masked_img = img * (1.0 - mask) + first_out * mask
    second_in = jnp.concatenate([second_masked_img, mask], axis=-1)
    refine_conv_out = run_seq(second_in, cfgs['refine_conv'], params['refine_conv'])
    refine_atten = run_seq(second_in, cfgs['refine_atten_1'], params['refine_atten_1'])
    mask_s = nearest_resize(mask, (refine_atten.shape[1], refine_atten.shape[2]))
    refine_atten = contextual_attention(refine_atten, refine_atten, mask_s,
                                        ksize=3, stride=1, rate=2,
                                        softmax_scale=10.0, fuse=True)
    refine_atten = run_seq(refine_atten, cfgs['refine_atten_2'], params['refine_atten_2'])
    second_out = jnp.concatenate([refine_conv_out, refine_atten], axis=-1)
    second_out = run_seq(second_out, cfgs['refine_combine'], params['refine_combine'])
    second_out = nearest_resize(second_out, (H, W))

    # Return NCHW to mirror the PyTorch module.
    return (jnp.transpose(first_out, (0, 3, 1, 2)),
            jnp.transpose(second_out, (0, 3, 1, 2)))


# ----------------------------- Main -------------------------------------------

if __name__ == "__main__":
    # opt: in_channels=4 (RGB + mask), out_channels=3, latent_channels=8,
    #      pad_type='zero', activation='lrelu', norm='none'
    IN_CH, OUT_CH, LATENT = 4, 3, 8
    N, H, W = 2, 16, 16

    cfgs = build_configs(IN_CH, OUT_CH, LATENT)
    key = jax.random.PRNGKey(0)
    key, pkey, ikey = jax.random.split(key, 3)
    params = init_params(pkey, cfgs)

    img = jax.random.uniform(ikey, (N, 3, H, W), jnp.float32)           # NCHW, like PyTorch
    mask = jnp.zeros((N, 1, H, W), jnp.float32).at[:, :, 4:12, 4:12].set(1.0)

    fwd = jax.jit(lambda p, im, mk: gated_generator_forward(p, cfgs, im, mk))
    first_out, second_out = fwd(params, img, mask)
    jax.block_until_ready(first_out)
    jax.block_until_ready(second_out)

    assert first_out.shape == (N, OUT_CH, H, W)
    assert second_out.shape == (N, OUT_CH, H, W)
    print("KERNEL_OK")
</pallas_src>

<mosaic_0001>
module attributes {stable_mosaic.version = 11 : i64} {
  func.func @_gated_conv_kernel(%arg0: i32, %arg1: memref<256x128xbf16, #tpu.memory_space<vmem>>, %arg2: memref<128x256xbf16, #tpu.memory_space<vmem>>, %arg3: memref<1x256xf32, #tpu.memory_space<vmem>>, %arg4: memref<256x128xf32, #tpu.memory_space<vmem>>) attributes {dimension_semantics = [#tpu.dimension_semantics<parallel>], iteration_bounds = array<i64: 2>, scalar_prefetch = 0 : i64, scratch_operands = 0 : i64, tpu.core_type = #tpu.core_type<tc>, window_params = [{transform_indices = @transform_0, window_bounds = array<i64: 256, 128>}, {pipeline_mode = #tpu.pipeline_mode<synchronous>, transform_indices = @transform_1, window_bounds = array<i64: 128, 256>}, {pipeline_mode = #tpu.pipeline_mode<synchronous>, transform_indices = @transform_2, window_bounds = array<i64: 1, 256>}, {transform_indices = @transform_3, window_bounds = array<i64: 256, 128>}]} {
    %c0 = arith.constant 0 : index
    %c0_0 = arith.constant 0 : index
    %0 = vector.load %arg1[%c0, %c0_0] : memref<256x128xbf16, #tpu.memory_space<vmem>>, vector<256x128xbf16>
    %c0_1 = arith.constant 0 : index
    %c0_2 = arith.constant 0 : index
    %1 = vector.load %arg2[%c0_1, %c0_2] : memref<128x256xbf16, #tpu.memory_space<vmem>>, vector<128x256xbf16>
    %cst = arith.constant dense<0.000000e+00> : vector<256x256xf32>
    %2 = tpu.matmul %0, %1, %cst {dimension_numbers = #tpu.dot_dimension_numbers<[1], [0], [0], [1], [0, 0, 1, 1], [], []>} : vector<256x128xbf16>, vector<128x256xbf16>, vector<256x256xf32> -> vector<256x256xf32>
    %c0_3 = arith.constant 0 : index
    %c0_4 = arith.constant 0 : index
    %3 = vector.load %arg3[%c0_3, %c0_4] : memref<1x256xf32, #tpu.memory_space<vmem>>, vector<1x256xf32>
    %4 = vector.broadcast %3 : vector<1x256xf32> to vector<256x256xf32>
    %5 = arith.addf %2, %4 : vector<256x256xf32>
    %6 = vector.extract_strided_slice %5 {offsets = [0, 0], sizes = [256, 128], strides = [1, 1]} : vector<256x256xf32> to vector<256x128xf32>
    %7 = vector.extract_strided_slice %5 {offsets = [0, 128], sizes = [256, 128], strides = [1, 1]} : vector<256x256xf32> to vector<256x128xf32>
    %8 = arith.negf %7 : vector<256x128xf32>
    %9 = math.exp %8 : vector<256x128xf32>
    %cst_5 = arith.constant 1.000000e+00 : f32
    %10 = vector.broadcast %cst_5 : f32 to vector<256x128xf32>
    %11 = arith.addf %10, %9 : vector<256x128xf32>
    %12 = arith.divf %10, %11 : vector<256x128xf32>
    %cst_6 = arith.constant 0.000000e+00 : f32
    %13 = vector.broadcast %cst_6 : f32 to vector<256x128xf32>
    %14 = arith.cmpf oge, %6, %13 : vector<256x128xf32>
    %cst_7 = arith.constant 2.000000e-01 : f32
    %15 = vector.broadcast %cst_7 : f32 to vector<256x128xf32>
    %16 = arith.mulf %15, %6 : vector<256x128xf32>
    %17 = arith.select %14, %6, %16 : vector<256x128xi1>, vector<256x128xf32>
    %18 = arith.mulf %17, %12 : vector<256x128xf32>
    %c0_8 = arith.constant 0 : index
    %c0_9 = arith.constant 0 : index
    %19 = vector.load %arg4[%c0_8, %c0_9] : memref<256x128xf32, #tpu.memory_space<vmem>>, vector<256x128xf32>
    tpu.vector_store %arg4[%c0_8, %c0_9], %18 {strides = array<i32>} : memref<256x128xf32, #tpu.memory_space<vmem>>, vector<256x128xf32>,
    return
  }
  func.func @transform_0(%arg0: i32) -> (i32, i32) {
    %c0_i32 = arith.constant 0 : i32
    %c0_i32_0 = arith.constant 0 : i32
    return %arg0, %c0_i32 : i32, i32
  }
  func.func @transform_1(%arg0: i32) -> (i32, i32) {
    %c0_i32 = arith.constant 0 : i32
    %c0_i32_0 = arith.constant 0 : i32
    %c0_i32_1 = arith.constant 0 : i32
    return %c0_i32, %c0_i32_0 : i32, i32
  }
  func.func @transform_2(%arg0: i32) -> (i32, i32) {
    %c0_i32 = arith.constant 0 : i32
    %c0_i32_0 = arith.constant 0 : i32
    %c0_i32_1 = arith.constant 0 : i32
    return %c0_i32, %c0_i32_0 : i32, i32
  }
  func.func @transform_3(%arg0: i32) -> (i32, i32) {
    %c0_i32 = arith.constant 0 : i32
    %c0_i32_0 = arith.constant 0 : i32
    return %arg0, %c0_i32 : i32, i32
  }
}

module attributes {stable_mosaic.version = 11 : i64} {
  func.func @_gated_conv_kernel(%arg0: i32, %arg1: memref<128x128xbf16, #tpu.memory_space<vmem>>, %arg2: memref<128x256xbf16, #tpu.memory_space<vmem>>, %arg3: memref<1x256xf32, #tpu.memory_space<vmem>>, %arg4: memref<128x128xf32, #tpu.memory_space<vmem>>) attributes {dimension_semantics = [#tpu.dimension_semantics<parallel>], iteration_bounds = array<i64: 1>, scalar_prefetch = 0 : i64, scratch_operands = 0 : i64, tpu.core_type = #tpu.core_type<tc>, window_params = [{transform_indices = @transform_0, window_bounds = array<i64: 128, 128>}, {pipeline_mode = #tpu.pipeline_mode<synchronous>, transform_indices = @transform_1, window_bounds = array<i64: 128, 256>}, {pipeline_mode = #tpu.pipeline_mode<synchronous>, transform_indices = @transform_2, window_bounds = array<i64: 1, 256>}, {transform_indices = @transform_3, window_bounds = array<i64: 128, 128>}]} {
    %c0 = arith.constant 0 : index
    %c0_0 = arith.constant 0 : index
    %0 = vector.load %arg1[%c0, %c0_0] : memref<128x128xbf16, #tpu.memory_space<vmem>>, vector<128x128xbf16>
    %c0_1 = arith.constant 0 : index
    %c0_2 = arith.constant 0 : index
    %1 = vector.load %arg2[%c0_1, %c0_2] : memref<128x256xbf16, #tpu.memory_space<vmem>>, vector<128x256xbf16>
    %cst = arith.constant dense<0.000000e+00> : vector<128x256xf32>
    %2 = tpu.matmul %0, %1, %cst {dimension_numbers = #tpu.dot_dimension_numbers<[1], [0], [0], [1], [0, 0, 1, 1], [], []>} : vector<128x128xbf16>, vector<128x256xbf16>, vector<128x256xf32> -> vector<128x256xf32>
    %c0_3 = arith.constant 0 : index
    %c0_4 = arith.constant 0 : index
    %3 = vector.load %arg3[%c0_3, %c0_4] : memref<1x256xf32, #tpu.memory_space<vmem>>, vector<1x256xf32>
    %4 = vector.broadcast %3 : vector<1x256xf32> to vector<128x256xf32>
    %5 = arith.addf %2, %4 : vector<128x256xf32>
    %6 = vector.extract_strided_slice %5 {offsets = [0, 0], sizes = [128, 128], strides = [1, 1]} : vector<128x256xf32> to vector<128x128xf32>
    %7 = vector.extract_strided_slice %5 {offsets = [0, 128], sizes = [128, 128], strides = [1, 1]} : vector<128x256xf32> to vector<128x128xf32>
    %8 = arith.negf %7 : vector<128x128xf32>
    %9 = math.exp %8 : vector<128x128xf32>
    %cst_5 = arith.constant 1.000000e+00 : f32
    %10 = vector.broadcast %cst_5 : f32 to vector<128x128xf32>
    %11 = arith.addf %10, %9 : vector<128x128xf32>
    %12 = arith.divf %10, %11 : vector<128x128xf32>
    %cst_6 = arith.constant 0.000000e+00 : f32
    %13 = vector.broadcast %cst_6 : f32 to vector<128x128xf32>
    %14 = arith.cmpf oge, %6, %13 : vector<128x128xf32>
    %cst_7 = arith.constant 2.000000e-01 : f32
    %15 = vector.broadcast %cst_7 : f32 to vector<128x128xf32>
    %16 = arith.mulf %15, %6 : vector<128x128xf32>
    %17 = arith.select %14, %6, %16 : vector<128x128xi1>, vector<128x128xf32>
    %18 = arith.mulf %17, %12 : vector<128x128xf32>
    %c0_8 = arith.constant 0 : index
    %c0_9 = arith.constant 0 : index
    %19 = vector.load %arg4[%c0_8, %c0_9] : memref<128x128xf32, #tpu.memory_space<vmem>>, vector<128x128xf32>
    tpu.vector_store %arg4[%c0_8, %c0_9], %18 {strides = array<i32>} : memref<128x128xf32, #tpu.memory_space<vmem>>, vector<128x128xf32>,
    return
  }
  func.func @transform_0(%arg0: i32) -> (i32, i32) {
    %c0_i32 = arith.constant 0 : i32
    %c0_i32_0 = arith.constant 0 : i32
    return %arg0, %c0_i32 : i32, i32
  }
  func.func @transform_1(%arg0: i32) -> (i32, i32) {
    %c0_i32 = arith.constant 0 : i32
    %c0_i32_0 = arith.constant 0 : i32
    %c0_i32_1 = arith.constant 0 : i32
    return %c0_i32, %c0_i32_0 : i32, i32
  }
  func.func @transform_2(%arg0: i32) -> (i32, i32) {
    %c0_i32 = arith.constant 0 : i32
    %c0_i32_0 = arith.constant 0 : i32
    %c0_i32_1 = arith.constant 0 : i32
    return %c0_i32, %c0_i32_0 : i32, i32
  }
  func.func @transform_3(%arg0: i32) -> (i32, i32) {
    %c0_i32 = arith.constant 0 : i32
    %c0_i32_0 = arith.constant 0 : i32
    return %arg0, %c0_i32 : i32, i32
  }
}

module attributes {stable_mosaic.version = 11 : i64} {
  func.func @_gated_conv_kernel(%arg0: i32, %arg1: memref<128x256xbf16, #tpu.memory_space<vmem>>, %arg2: memref<256x256xbf16, #tpu.memory_space<vmem>>, %arg3: memref<1x256xf32, #tpu.memory_space<vmem>>, %arg4: memref<128x128xf32, #tpu.memory_space<vmem>>) attributes {dimension_semantics = [#tpu.dimension_semantics<parallel>], iteration_bounds = array<i64: 1>, scalar_prefetch = 0 : i64, scratch_operands = 0 : i64, tpu.core_type = #tpu.core_type<tc>, window_params = [{transform_indices = @transform_0, window_bounds = array<i64: 128, 256>}, {pipeline_mode = #tpu.pipeline_mode<synchronous>, transform_indices = @transform_1, window_bounds = array<i64: 256, 256>}, {pipeline_mode = #tpu.pipeline_mode<synchronous>, transform_indices = @transform_2, window_bounds = array<i64: 1, 256>}, {transform_indices = @transform_3, window_bounds = array<i64: 128, 128>}]} {
    %c0 = arith.constant 0 : index
    %c0_0 = arith.constant 0 : index
    %0 = vector.load %arg1[%c0, %c0_0] : memref<128x256xbf16, #tpu.memory_space<vmem>>, vector<128x256xbf16>
    %c0_1 = arith.constant 0 : index
    %c0_2 = arith.constant 0 : index
    %1 = vector.load %arg2[%c0_1, %c0_2] : memref<256x256xbf16, #tpu.memory_space<vmem>>, vector<256x256xbf16>
    %cst = arith.constant dense<0.000000e+00> : vector<128x256xf32>
    %2 = tpu.matmul %0, %1, %cst {dimension_numbers = #tpu.dot_dimension_numbers<[1], [0], [0], [1], [0, 0, 1, 1], [], []>} : vector<128x256xbf16>, vector<256x256xbf16>, vector<128x256xf32> -> vector<128x256xf32>
    %c0_3 = arith.constant 0 : index
    %c0_4 = arith.constant 0 : index
    %3 = vector.load %arg3[%c0_3, %c0_4] : memref<1x256xf32, #tpu.memory_space<vmem>>, vector<1x256xf32>
    %4 = vector.broadcast %3 : vector<1x256xf32> to vector<128x256xf32>
    %5 = arith.addf %2, %4 : vector<128x256xf32>
    %6 = vector.extract_strided_slice %5 {offsets = [0, 0], sizes = [128, 128], strides = [1, 1]} : vector<128x256xf32> to vector<128x128xf32>
    %7 = vector.extract_strided_slice %5 {offsets = [0, 128], sizes = [128, 128], strides = [1, 1]} : vector<128x256xf32> to vector<128x128xf32>
    %8 = arith.negf %7 : vector<128x128xf32>
    %9 = math.exp %8 : vector<128x128xf32>
    %cst_5 = arith.constant 1.000000e+00 : f32
    %10 = vector.broadcast %cst_5 : f32 to vector<128x128xf32>
    %11 = arith.addf %10, %9 : vector<128x128xf32>
    %12 = arith.divf %10, %11 : vector<128x128xf32>
    %cst_6 = arith.constant 0.000000e+00 : f32
    %13 = vector.broadcast %cst_6 : f32 to vector<128x128xf32>
    %14 = arith.cmpf oge, %6, %13 : vector<128x128xf32>
    %cst_7 = arith.constant 2.000000e-01 : f32
    %15 = vector.broadcast %cst_7 : f32 to vector<128x128xf32>
    %16 = arith.mulf %15, %6 : vector<128x128xf32>
    %17 = arith.select %14, %6, %16 : vector<128x128xi1>, vector<128x128xf32>
    %18 = arith.mulf %17, %12 : vector<128x128xf32>
    %c0_8 = arith.constant 0 : index
    %c0_9 = arith.constant 0 : index
    %19 = vector.load %arg4[%c0_8, %c0_9] : memref<128x128xf32, #tpu.memory_space<vmem>>, vector<128x128xf32>
    tpu.vector_store %arg4[%c0_8, %c0_9], %18 {strides = array<i32>} : memref<128x128xf32, #tpu.memory_space<vmem>>, vector<128x128xf32>,
    return
  }
  func.func @transform_0(%arg0: i32) -> (i32, i32) {
    %c0_i32 = arith.constant 0 : i32
    %c0_i32_0 = arith.constant 0 : i32
    return %arg0, %c0_i32 : i32, i32
  }
  func.func @transform_1(%arg0: i32) -> (i32, i32) {
    %c0_i32 = arith.constant 0 : i32
    %c0_i32_0 = arith.constant 0 : i32
    %c0_i32_1 = arith.constant 0 : i32
    return %c0_i32, %c0_i32_0 : i32, i32
  }
  func.func @transform_2(%arg0: i32) -> (i32, i32) {
    %c0_i32 = arith.constant 0 : i32
    %c0_i32_0 = arith.constant 0 : i32
    %c0_i32_1 = arith.constant 0 : i32
    return %c0_i32, %c0_i32_0 : i32, i32
  }
  func.func @transform_3(%arg0: i32) -> (i32, i32) {
    %c0_i32 = arith.constant 0 : i32
    %c0_i32_0 = arith.constant 0 : i32
    return %arg0, %c0_i32 : i32, i32
  }
}

module attributes {stable_mosaic.version = 11 : i64} {
  func.func @_gated_conv_kernel(%arg0: i32, %arg1: memref<32x256xbf16, #tpu.memory_space<vmem>>, %arg2: memref<256x256xbf16, #tpu.memory_space<vmem>>, %arg3: memref<1x256xf32, #tpu.memory_space<vmem>>, %arg4: memref<32x128xf32, #tpu.memory_space<vmem>>) attributes {dimension_semantics = [#tpu.dimension_semantics<parallel>], iteration_bounds = array<i64: 1>, scalar_prefetch = 0 : i64, scratch_operands = 0 : i64, tpu.core_type = #tpu.core_type<tc>, window_params = [{transform_indices = @transform_0, window_bounds = array<i64: 32, 256>}, {pipeline_mode = #tpu.pipeline_mode<synchronous>, transform_indices = @transform_1, window_bounds = array<i64: 256, 256>}, {pipeline_mode = #tpu.pipeline_mode<synchronous>, transform_indices = @transform_2, window_bounds = array<i64: 1, 256>}, {transform_indices = @transform_3, window_bounds = array<i64: 32, 128>}]} {
    %c0 = arith.constant 0 : index
    %c0_0 = arith.constant 0 : index
    %0 = vector.load %arg1[%c0, %c0_0] : memref<32x256xbf16, #tpu.memory_space<vmem>>, vector<32x256xbf16>
    %c0_1 = arith.constant 0 : index
    %c0_2 = arith.constant 0 : index
    %1 = vector.load %arg2[%c0_1, %c0_2] : memref<256x256xbf16, #tpu.memory_space<vmem>>, vector<256x256xbf16>
    %cst = arith.constant dense<0.000000e+00> : vector<32x256xf32>
    %2 = tpu.matmul %0, %1, %cst {dimension_numbers = #tpu.dot_dimension_numbers<[1], [0], [0], [1], [0, 0, 1, 1], [], []>} : vector<32x256xbf16>, vector<256x256xbf16>, vector<32x256xf32> -> vector<32x256xf32>
    %c0_3 = arith.constant 0 : index
    %c0_4 = arith.constant 0 : index
    %3 = vector.load %arg3[%c0_3, %c0_4] : memref<1x256xf32, #tpu.memory_space<vmem>>, vector<1x256xf32>
    %4 = vector.broadcast %3 : vector<1x256xf32> to vector<32x256xf32>
    %5 = arith.addf %2, %4 : vector<32x256xf32>
    %6 = vector.extract_strided_slice %5 {offsets = [0, 0], sizes = [32, 128], strides = [1, 1]} : vector<32x256xf32> to vector<32x128xf32>
    %7 = vector.extract_strided_slice %5 {offsets = [0, 128], sizes = [32, 128], strides = [1, 1]} : vector<32x256xf32> to vector<32x128xf32>
    %8 = arith.negf %7 : vector<32x128xf32>
    %9 = math.exp %8 : vector<32x128xf32>
    %cst_5 = arith.constant 1.000000e+00 : f32
    %10 = vector.broadcast %cst_5 : f32 to vector<32x128xf32>
    %11 = arith.addf %10, %9 : vector<32x128xf32>
    %12 = arith.divf %10, %11 : vector<32x128xf32>
    %cst_6 = arith.constant 0.000000e+00 : f32
    %13 = vector.broadcast %cst_6 : f32 to vector<32x128xf32>
    %14 = arith.cmpf oge, %6, %13 : vector<32x128xf32>
    %cst_7 = arith.constant 2.000000e-01 : f32
    %15 = vector.broadcast %cst_7 : f32 to vector<32x128xf32>
    %16 = arith.mulf %15, %6 : vector<32x128xf32>
    %17 = arith.select %14, %6, %16 : vector<32x128xi1>, vector<32x128xf32>
    %18 = arith.mulf %17, %12 : vector<32x128xf32>
    %c0_8 = arith.constant 0 : index
    %c0_9 = arith.constant 0 : index
    %19 = vector.load %arg4[%c0_8, %c0_9] : memref<32x128xf32, #tpu.memory_space<vmem>>, vector<32x128xf32>
    tpu.vector_store %arg4[%c0_8, %c0_9], %18 {strides = array<i32>} : memref<32x128xf32, #tpu.memory_space<vmem>>, vector<32x128xf32>,
    return
  }
  func.func @transform_0(%arg0: i32) -> (i32, i32) {
    %c0_i32 = arith.constant 0 : i32
    %c0_i32_0 = arith.constant 0 : i32
    return %arg0, %c0_i32 : i32, i32
  }
  func.func @transform_1(%arg0: i32) -> (i32, i32) {
    %c0_i32 = arith.constant 0 : i32
    %c0_i32_0 = arith.constant 0 : i32
    %c0_i32_1 = arith.constant 0 : i32
    return %c0_i32, %c0_i32_0 : i32, i32
  }
  func.func @transform_2(%arg0: i32) -> (i32, i32) {
    %c0_i32 = arith.constant 0 : i32
    %c0_i32_0 = arith.constant 0 : i32
    %c0_i32_1 = arith.constant 0 : i32
    return %c0_i32, %c0_i32_0 : i32, i32
  }
  func.func @transform_3(%arg0: i32) -> (i32, i32) {
    %c0_i32 = arith.constant 0 : i32
    %c0_i32_0 = arith.constant 0 : i32
    return %arg0, %c0_i32 : i32, i32
  }
}

module attributes {stable_mosaic.version = 11 : i64} {
  func.func @_gated_conv_kernel(%arg0: i32, %arg1: memref<32x384xbf16, #tpu.memory_space<vmem>>, %arg2: memref<384x256xbf16, #tpu.memory_space<vmem>>, %arg3: memref<1x256xf32, #tpu.memory_space<vmem>>, %arg4: memref<32x128xf32, #tpu.memory_space<vmem>>) attributes {dimension_semantics = [#tpu.dimension_semantics<parallel>], iteration_bounds = array<i64: 1>, scalar_prefetch = 0 : i64, scratch_operands = 0 : i64, tpu.core_type = #tpu.core_type<tc>, window_params = [{transform_indices = @transform_0, window_bounds = array<i64: 32, 384>}, {pipeline_mode = #tpu.pipeline_mode<synchronous>, transform_indices = @transform_1, window_bounds = array<i64: 384, 256>}, {pipeline_mode = #tpu.pipeline_mode<synchronous>, transform_indices = @transform_2, window_bounds = array<i64: 1, 256>}, {transform_indices = @transform_3, window_bounds = array<i64: 32, 128>}]} {
    %c0 = arith.constant 0 : index
    %c0_0 = arith.constant 0 : index
    %0 = vector.load %arg1[%c0, %c0_0] : memref<32x384xbf16, #tpu.memory_space<vmem>>, vector<32x384xbf16>
    %c0_1 = arith.constant 0 : index
    %c0_2 = arith.constant 0 : index
    %1 = vector.load %arg2[%c0_1, %c0_2] : memref<384x256xbf16, #tpu.memory_space<vmem>>, vector<384x256xbf16>
    %cst = arith.constant dense<0.000000e+00> : vector<32x256xf32>
    %2 = tpu.matmul %0, %1, %cst {dimension_numbers = #tpu.dot_dimension_numbers<[1], [0], [0], [1], [0, 0, 1, 1], [], []>} : vector<32x384xbf16>, vector<384x256xbf16>, vector<32x256xf32> -> vector<32x256xf32>
    %c0_3 = arith.constant 0 : index
    %c0_4 = arith.constant 0 : index
    %3 = vector.load %arg3[%c0_3, %c0_4] : memref<1x256xf32, #tpu.memory_space<vmem>>, vector<1x256xf32>
    %4 = vector.broadcast %3 : vector<1x256xf32> to vector<32x256xf32>
    %5 = arith.addf %2, %4 : vector<32x256xf32>
    %6 = vector.extract_strided_slice %5 {offsets = [0, 0], sizes = [32, 128], strides = [1, 1]} : vector<32x256xf32> to vector<32x128xf32>
    %7 = vector.extract_strided_slice %5 {offsets = [0, 128], sizes = [32, 128], strides = [1, 1]} : vector<32x256xf32> to vector<32x128xf32>
    %8 = arith.negf %7 : vector<32x128xf32>
    %9 = math.exp %8 : vector<32x128xf32>
    %cst_5 = arith.constant 1.000000e+00 : f32
    %10 = vector.broadcast %cst_5 : f32 to vector<32x128xf32>
    %11 = arith.addf %10, %9 : vector<32x128xf32>
    %12 = arith.divf %10, %11 : vector<32x128xf32>
    %cst_6 = arith.constant 0.000000e+00 : f32
    %13 = vector.broadcast %cst_6 : f32 to vector<32x128xf32>
    %14 = arith.cmpf oge, %6, %13 : vector<32x128xf32>
    %cst_7 = arith.constant 2.000000e-01 : f32
    %15 = vector.broadcast %cst_7 : f32 to vector<32x128xf32>
    %16 = arith.mulf %15, %6 : vector<32x128xf32>
    %17 = arith.select %14, %6, %16 : vector<32x128xi1>, vector<32x128xf32>
    %18 = arith.mulf %17, %12 : vector<32x128xf32>
    %c0_8 = arith.constant 0 : index
    %c0_9 = arith.constant 0 : index
    %19 = vector.load %arg4[%c0_8, %c0_9] : memref<32x128xf32, #tpu.memory_space<vmem>>, vector<32x128xf32>
    tpu.vector_store %arg4[%c0_8, %c0_9], %18 {strides = array<i32>} : memref<32x128xf32, #tpu.memory_space<vmem>>, vector<32x128xf32>,
    return
  }
  func.func @transform_0(%arg0: i32) -> (i32, i32) {
    %c0_i32 = arith.constant 0 : i32
    %c0_i32_0 = arith.constant 0 : i32
    return %arg0, %c0_i32 : i32, i32
  }
  func.func @transform_1(%arg0: i32) -> (i32, i32) {
    %c0_i32 = arith.constant 0 : i32
    %c0_i32_0 = arith.constant 0 : i32
    %c0_i32_1 = arith.constant 0 : i32
    return %c0_i32, %c0_i32_0 : i32, i32
  }
  func.func @transform_2(%arg0: i32) -> (i32, i32) {
    %c0_i32 = arith.constant 0 : i32
    %c0_i32_0 = arith.constant 0 : i32
    %c0_i32_1 = arith.constant 0 : i32
    return %c0_i32, %c0_i32_0 : i32, i32
  }
  func.func @transform_3(%arg0: i32) -> (i32, i32) {
    %c0_i32 = arith.constant 0 : i32
    %c0_i32_0 = arith.constant 0 : i32
    return %arg0, %c0_i32 : i32, i32
  }
}

module attributes {stable_mosaic.version = 11 : i64} {
  func.func @_gated_conv_kernel(%arg0: i32, %arg1: memref<128x384xbf16, #tpu.memory_space<vmem>>, %arg2: memref<384x256xbf16, #tpu.memory_space<vmem>>, %arg3: memref<1x256xf32, #tpu.memory_space<vmem>>, %arg4: memref<128x128xf32, #tpu.memory_space<vmem>>) attributes {dimension_semantics = [#tpu.dimension_semantics<parallel>], iteration_bounds = array<i64: 1>, scalar_prefetch = 0 : i64, scratch_operands = 0 : i64, tpu.core_type = #tpu.core_type<tc>, window_params = [{transform_indices = @transform_0, window_bounds = array<i64: 128, 384>}, {pipeline_mode = #tpu.pipeline_mode<synchronous>, transform_indices = @transform_1, window_bounds = array<i64: 384, 256>}, {pipeline_mode = #tpu.pipeline_mode<synchronous>, transform_indices = @transform_2, window_bounds = array<i64: 1, 256>}, {transform_indices = @transform_3, window_bounds = array<i64: 128, 128>}]} {
    %c0 = arith.constant 0 : index
    %c0_0 = arith.constant 0 : index
    %0 = vector.load %arg1[%c0, %c0_0] : memref<128x384xbf16, #tpu.memory_space<vmem>>, vector<128x384xbf16>
    %c0_1 = arith.constant 0 : index
    %c0_2 = arith.constant 0 : index
    %1 = vector.load %arg2[%c0_1, %c0_2] : memref<384x256xbf16, #tpu.memory_space<vmem>>, vector<384x256xbf16>
    %cst = arith.constant dense<0.000000e+00> : vector<128x256xf32>
    %2 = tpu.matmul %0, %1, %cst {dimension_numbers = #tpu.dot_dimension_numbers<[1], [0], [0], [1], [0, 0, 1, 1], [], []>} : vector<128x384xbf16>, vector<384x256xbf16>, vector<128x256xf32> -> vector<128x256xf32>
    %c0_3 = arith.constant 0 : index
    %c0_4 = arith.constant 0 : index
    %3 = vector.load %arg3[%c0_3, %c0_4] : memref<1x256xf32, #tpu.memory_space<vmem>>, vector<1x256xf32>
    %4 = vector.broadcast %3 : vector<1x256xf32> to vector<128x256xf32>
    %5 = arith.addf %2, %4 : vector<128x256xf32>
    %6 = vector.extract_strided_slice %5 {offsets = [0, 0], sizes = [128, 128], strides = [1, 1]} : vector<128x256xf32> to vector<128x128xf32>
    %7 = vector.extract_strided_slice %5 {offsets = [0, 128], sizes = [128, 128], strides = [1, 1]} : vector<128x256xf32> to vector<128x128xf32>
    %8 = arith.negf %7 : vector<128x128xf32>
    %9 = math.exp %8 : vector<128x128xf32>
    %cst_5 = arith.constant 1.000000e+00 : f32
    %10 = vector.broadcast %cst_5 : f32 to vector<128x128xf32>
    %11 = arith.addf %10, %9 : vector<128x128xf32>
    %12 = arith.divf %10, %11 : vector<128x128xf32>
    %cst_6 = arith.constant 0.000000e+00 : f32
    %13 = vector.broadcast %cst_6 : f32 to vector<128x128xf32>
    %14 = arith.cmpf oge, %6, %13 : vector<128x128xf32>
    %cst_7 = arith.constant 2.000000e-01 : f32
    %15 = vector.broadcast %cst_7 : f32 to vector<128x128xf32>
    %16 = arith.mulf %15, %6 : vector<128x128xf32>
    %17 = arith.select %14, %6, %16 : vector<128x128xi1>, vector<128x128xf32>
    %18 = arith.mulf %17, %12 : vector<128x128xf32>
    %c0_8 = arith.constant 0 : index
    %c0_9 = arith.constant 0 : index
    %19 = vector.load %arg4[%c0_8, %c0_9] : memref<128x128xf32, #tpu.memory_space<vmem>>, vector<128x128xf32>
    tpu.vector_store %arg4[%c0_8, %c0_9], %18 {strides = array<i32>} : memref<128x128xf32, #tpu.memory_space<vmem>>, vector<128x128xf32>,
    return
  }
  func.func @transform_0(%arg0: i32) -> (i32, i32) {
    %c0_i32 = arith.constant 0 : i32
    %c0_i32_0 = arith.constant 0 : i32
    return %arg0, %c0_i32 : i32, i32
  }
  func.func @transform_1(%arg0: i32) -> (i32, i32) {
    %c0_i32 = arith.constant 0 : i32
    %c0_i32_0 = arith.constant 0 : i32
    %c0_i32_1 = arith.constant 0 : i32
    return %c0_i32, %c0_i32_0 : i32, i32
  }
  func.func @transform_2(%arg0: i32) -> (i32, i32) {
    %c0_i32 = arith.constant 0 : i32
    %c0_i32_0 = arith.constant 0 : i32
    %c0_i32_1 = arith.constant 0 : i32
    return %c0_i32, %c0_i32_0 : i32, i32
  }
  func.func @transform_3(%arg0: i32) -> (i32, i32) {
    %c0_i32 = arith.constant 0 : i32
    %c0_i32_0 = arith.constant 0 : i32
    return %arg0, %c0_i32 : i32, i32
  }
}

module attributes {stable_mosaic.version = 11 : i64} {
  func.func @_gated_conv_kernel(%arg0: i32, %arg1: memref<256x256xbf16, #tpu.memory_space<vmem>>, %arg2: memref<256x256xbf16, #tpu.memory_space<vmem>>, %arg3: memref<1x256xf32, #tpu.memory_space<vmem>>, %arg4: memref<256x128xf32, #tpu.memory_space<vmem>>) attributes {dimension_semantics = [#tpu.dimension_semantics<parallel>], iteration_bounds = array<i64: 2>, scalar_prefetch = 0 : i64, scratch_operands = 0 : i64, tpu.core_type = #tpu.core_type<tc>, window_params = [{transform_indices = @transform_0, window_bounds = array<i64: 256, 256>}, {pipeline_mode = #tpu.pipeline_mode<synchronous>, transform_indices = @transform_1, window_bounds = array<i64: 256, 256>}, {pipeline_mode = #tpu.pipeline_mode<synchronous>, transform_indices = @transform_2, window_bounds = array<i64: 1, 256>}, {transform_indices = @transform_3, window_bounds = array<i64: 256, 128>}]} {
    %c0 = arith.constant 0 : index
    %c0_0 = arith.constant 0 : index
    %0 = vector.load %arg1[%c0, %c0_0] : memref<256x256xbf16, #tpu.memory_space<vmem>>, vector<256x256xbf16>
    %c0_1 = arith.constant 0 : index
    %c0_2 = arith.constant 0 : index
    %1 = vector.load %arg2[%c0_1, %c0_2] : memref<256x256xbf16, #tpu.memory_space<vmem>>, vector<256x256xbf16>
    %cst = arith.constant dense<0.000000e+00> : vector<256x256xf32>
    %2 = tpu.matmul %0, %1, %cst {dimension_numbers = #tpu.dot_dimension_numbers<[1], [0], [0], [1], [0, 0, 1, 1], [], []>} : vector<256x256xbf16>, vector<256x256xbf16>, vector<256x256xf32> -> vector<256x256xf32>
    %c0_3 = arith.constant 0 : index
    %c0_4 = arith.constant 0 : index
    %3 = vector.load %arg3[%c0_3, %c0_4] : memref<1x256xf32, #tpu.memory_space<vmem>>, vector<1x256xf32>
    %4 = vector.broadcast %3 : vector<1x256xf32> to vector<256x256xf32>
    %5 = arith.addf %2, %4 : vector<256x256xf32>
    %6 = vector.extract_strided_slice %5 {offsets = [0, 0], sizes = [256, 128], strides = [1, 1]} : vector<256x256xf32> to vector<256x128xf32>
    %7 = vector.extract_strided_slice %5 {offsets = [0, 128], sizes = [256, 128], strides = [1, 1]} : vector<256x256xf32> to vector<256x128xf32>
    %8 = arith.negf %7 : vector<256x128xf32>
    %9 = math.exp %8 : vector<256x128xf32>
    %cst_5 = arith.constant 1.000000e+00 : f32
    %10 = vector.broadcast %cst_5 : f32 to vector<256x128xf32>
    %11 = arith.addf %10, %9 : vector<256x128xf32>
    %12 = arith.divf %10, %11 : vector<256x128xf32>
    %cst_6 = arith.constant 0.000000e+00 : f32
    %13 = vector.broadcast %cst_6 : f32 to vector<256x128xf32>
    %14 = arith.cmpf oge, %6, %13 : vector<256x128xf32>
    %cst_7 = arith.constant 2.000000e-01 : f32
    %15 = vector.broadcast %cst_7 : f32 to vector<256x128xf32>
    %16 = arith.mulf %15, %6 : vector<256x128xf32>
    %17 = arith.select %14, %6, %16 : vector<256x128xi1>, vector<256x128xf32>
    %18 = arith.mulf %17, %12 : vector<256x128xf32>
    %c0_8 = arith.constant 0 : index
    %c0_9 = arith.constant 0 : index
    %19 = vector.load %arg4[%c0_8, %c0_9] : memref<256x128xf32, #tpu.memory_space<vmem>>, vector<256x128xf32>
    tpu.vector_store %arg4[%c0_8, %c0_9], %18 {strides = array<i32>} : memref<256x128xf32, #tpu.memory_space<vmem>>, vector<256x128xf32>,
    return
  }
  func.func @transform_0(%arg0: i32) -> (i32, i32) {
    %c0_i32 = arith.constant 0 : i32
    %c0_i32_0 = arith.constant 0 : i32
    return %arg0, %c0_i32 : i32, i32
  }
  func.func @transform_1(%arg0: i32) -> (i32, i32) {
    %c0_i32 = arith.constant 0 : i32
    %c0_i32_0 = arith.constant 0 : i32
    %c0_i32_1 = arith.constant 0 : i32
    return %c0_i32, %c0_i32_0 : i32, i32
  }
  func.func @transform_2(%arg0: i32) -> (i32, i32) {
    %c0_i32 = arith.constant 0 : i32
    %c0_i32_0 = arith.constant 0 : i32
    %c0_i32_1 = arith.constant 0 : i32
    return %c0_i32, %c0_i32_0 : i32, i32
  }
  func.func @transform_3(%arg0: i32) -> (i32, i32) {
    %c0_i32 = arith.constant 0 : i32
    %c0_i32_0 = arith.constant 0 : i32
    return %arg0, %c0_i32 : i32, i32
  }
}

module attributes {stable_mosaic.version = 11 : i64} {
  func.func @_gated_conv_kernel(%arg0: i32, %arg1: memref<256x128xbf16, #tpu.memory_space<vmem>>, %arg2: memref<128x256xbf16, #tpu.memory_space<vmem>>, %arg3: memref<1x256xf32, #tpu.memory_space<vmem>>, %arg4: memref<256x128xf32, #tpu.memory_space<vmem>>) attributes {dimension_semantics = [#tpu.dimension_semantics<parallel>], iteration_bounds = array<i64: 2>, scalar_prefetch = 0 : i64, scratch_operands = 0 : i64, tpu.core_type = #tpu.core_type<tc>, window_params = [{transform_indices = @transform_0, window_bounds = array<i64: 256, 128>}, {pipeline_mode = #tpu.pipeline_mode<synchronous>, transform_indices = @transform_1, window_bounds = array<i64: 128, 256>}, {pipeline_mode = #tpu.pipeline_mode<synchronous>, transform_indices = @transform_2, window_bounds = array<i64: 1, 256>}, {transform_indices = @transform_3, window_bounds = array<i64: 256, 128>}]} {
    %c0 = arith.constant 0 : index
    %c0_0 = arith.constant 0 : index
    %0 = vector.load %arg1[%c0, %c0_0] : memref<256x128xbf16, #tpu.memory_space<vmem>>, vector<256x128xbf16>
    %c0_1 = arith.constant 0 : index
    %c0_2 = arith.constant 0 : index
    %1 = vector.load %arg2[%c0_1, %c0_2] : memref<128x256xbf16, #tpu.memory_space<vmem>>, vector<128x256xbf16>
    %cst = arith.constant dense<0.000000e+00> : vector<256x256xf32>
    %2 = tpu.matmul %0, %1, %cst {dimension_numbers = #tpu.dot_dimension_numbers<[1], [0], [0], [1], [0, 0, 1, 1], [], []>} : vector<256x128xbf16>, vector<128x256xbf16>, vector<256x256xf32> -> vector<256x256xf32>
    %c0_3 = arith.constant 0 : index
    %c0_4 = arith.constant 0 : index
    %3 = vector.load %arg3[%c0_3, %c0_4] : memref<1x256xf32, #tpu.memory_space<vmem>>, vector<1x256xf32>
    %4 = vector.broadcast %3 : vector<1x256xf32> to vector<256x256xf32>
    %5 = arith.addf %2, %4 : vector<256x256xf32>
    %6 = vector.extract_strided_slice %5 {offsets = [0, 0], sizes = [256, 128], strides = [1, 1]} : vector<256x256xf32> to vector<256x128xf32>
    %7 = vector.extract_strided_slice %5 {offsets = [0, 128], sizes = [256, 128], strides = [1, 1]} : vector<256x256xf32> to vector<256x128xf32>
    %8 = arith.negf %7 : vector<256x128xf32>
    %9 = math.exp %8 : vector<256x128xf32>
    %cst_5 = arith.constant 1.000000e+00 : f32
    %10 = vector.broadcast %cst_5 : f32 to vector<256x128xf32>
    %11 = arith.addf %10, %9 : vector<256x128xf32>
    %12 = arith.divf %10, %11 : vector<256x128xf32>
    %13 = arith.mulf %6, %12 : vector<256x128xf32>
    %14 = math.tanh %13 : vector<256x128xf32>
    %c0_6 = arith.constant 0 : index
    %c0_7 = arith.constant 0 : index
    %15 = vector.load %arg4[%c0_6, %c0_7] : memref<256x128xf32, #tpu.memory_space<vmem>>, vector<256x128xf32>
    tpu.vector_store %arg4[%c0_6, %c0_7], %14 {strides = array<i32>} : memref<256x128xf32, #tpu.memory_space<vmem>>, vector<256x128xf32>,
    return
  }
  func.func @transform_0(%arg0: i32) -> (i32, i32) {
    %c0_i32 = arith.constant 0 : i32
    %c0_i32_0 = arith.constant 0 : i32
    return %arg0, %c0_i32 : i32, i32
  }
  func.func @transform_1(%arg0: i32) -> (i32, i32) {
    %c0_i32 = arith.constant 0 : i32
    %c0_i32_0 = arith.constant 0 : i32
    %c0_i32_1 = arith.constant 0 : i32
    return %c0_i32, %c0_i32_0 : i32, i32
  }
  func.func @transform_2(%arg0: i32) -> (i32, i32) {
    %c0_i32 = arith.constant 0 : i32
    %c0_i32_0 = arith.constant 0 : i32
    %c0_i32_1 = arith.constant 0 : i32
    return %c0_i32, %c0_i32_0 : i32, i32
  }
  func.func @transform_3(%arg0: i32) -> (i32, i32) {
    %c0_i32 = arith.constant 0 : i32
    %c0_i32_0 = arith.constant 0 : i32
    return %arg0, %c0_i32 : i32, i32
  }
}

module attributes {stable_mosaic.version = 11 : i64} {
  func.func @_gated_conv_kernel(%arg0: i32, %arg1: memref<32x384xbf16, #tpu.memory_space<vmem>>, %arg2: memref<384x256xbf16, #tpu.memory_space<vmem>>, %arg3: memref<1x256xf32, #tpu.memory_space<vmem>>, %arg4: memref<32x128xf32, #tpu.memory_space<vmem>>) attributes {dimension_semantics = [#tpu.dimension_semantics<parallel>], iteration_bounds = array<i64: 1>, scalar_prefetch = 0 : i64, scratch_operands = 0 : i64, tpu.core_type = #tpu.core_type<tc>, window_params = [{transform_indices = @transform_0, window_bounds = array<i64: 32, 384>}, {pipeline_mode = #tpu.pipeline_mode<synchronous>, transform_indices = @transform_1, window_bounds = array<i64: 384, 256>}, {pipeline_mode = #tpu.pipeline_mode<synchronous>, transform_indices = @transform_2, window_bounds = array<i64: 1, 256>}, {transform_indices = @transform_3, window_bounds = array<i64: 32, 128>}]} {
    %c0 = arith.constant 0 : index
    %c0_0 = arith.constant 0 : index
    %0 = vector.load %arg1[%c0, %c0_0] : memref<32x384xbf16, #tpu.memory_space<vmem>>, vector<32x384xbf16>
    %c0_1 = arith.constant 0 : index
    %c0_2 = arith.constant 0 : index
    %1 = vector.load %arg2[%c0_1, %c0_2] : memref<384x256xbf16, #tpu.memory_space<vmem>>, vector<384x256xbf16>
    %cst = arith.constant dense<0.000000e+00> : vector<32x256xf32>
    %2 = tpu.matmul %0, %1, %cst {dimension_numbers = #tpu.dot_dimension_numbers<[1], [0], [0], [1], [0, 0, 1, 1], [], []>} : vector<32x384xbf16>, vector<384x256xbf16>, vector<32x256xf32> -> vector<32x256xf32>
    %c0_3 = arith.constant 0 : index
    %c0_4 = arith.constant 0 : index
    %3 = vector.load %arg3[%c0_3, %c0_4] : memref<1x256xf32, #tpu.memory_space<vmem>>, vector<1x256xf32>
    %4 = vector.broadcast %3 : vector<1x256xf32> to vector<32x256xf32>
    %5 = arith.addf %2, %4 : vector<32x256xf32>
    %6 = vector.extract_strided_slice %5 {offsets = [0, 0], sizes = [32, 128], strides = [1, 1]} : vector<32x256xf32> to vector<32x128xf32>
    %7 = vector.extract_strided_slice %5 {offsets = [0, 128], sizes = [32, 128], strides = [1, 1]} : vector<32x256xf32> to vector<32x128xf32>
    %8 = arith.negf %7 : vector<32x128xf32>
    %9 = math.exp %8 : vector<32x128xf32>
    %cst_5 = arith.constant 1.000000e+00 : f32
    %10 = vector.broadcast %cst_5 : f32 to vector<32x128xf32>
    %11 = arith.addf %10, %9 : vector<32x128xf32>
    %12 = arith.divf %10, %11 : vector<32x128xf32>
    %cst_6 = arith.constant 0.000000e+00 : f32
    %13 = vector.broadcast %cst_6 : f32 to vector<32x128xf32>
    %14 = arith.maximumf %6, %13 : vector<32x128xf32>
    %15 = arith.mulf %14, %12 : vector<32x128xf32>
    %c0_7 = arith.constant 0 : index
    %c0_8 = arith.constant 0 : index
    %16 = vector.load %arg4[%c0_7, %c0_8] : memref<32x128xf32, #tpu.memory_space<vmem>>, vector<32x128xf32>
    tpu.vector_store %arg4[%c0_7, %c0_8], %15 {strides = array<i32>} : memref<32x128xf32, #tpu.memory_space<vmem>>, vector<32x128xf32>,
    return
  }
  func.func @transform_0(%arg0: i32) -> (i32, i32) {
    %c0_i32 = arith.constant 0 : i32
    %c0_i32_0 = arith.constant 0 : i32
    return %arg0, %c0_i32 : i32, i32
  }
  func.func @transform_1(%arg0: i32) -> (i32, i32) {
    %c0_i32 = arith.constant 0 : i32
    %c0_i32_0 = arith.constant 0 : i32
    %c0_i32_1 = arith.constant 0 : i32
    return %c0_i32, %c0_i32_0 : i32, i32
  }
  func.func @transform_2(%arg0: i32) -> (i32, i32) {
    %c0_i32 = arith.constant 0 : i32
    %c0_i32_0 = arith.constant 0 : i32
    %c0_i32_1 = arith.constant 0 : i32
    return %c0_i32, %c0_i32_0 : i32, i32
  }
  func.func @transform_3(%arg0: i32) -> (i32, i32) {
    %c0_i32 = arith.constant 0 : i32
    %c0_i32_0 = arith.constant 0 : i32
    return %arg0, %c0_i32 : i32, i32
  }
}

module attributes {stable_mosaic.version = 11 : i64} {
  func.func @_bmm_kernel(%arg0: i32, %arg1: i32, %arg2: memref<1x4x288xbf16, #tpu.memory_space<vmem>>, %arg3: memref<1x288x4xbf16, #tpu.memory_space<vmem>>, %arg4: memref<1x4x4xf32, #tpu.memory_space<vmem>>) attributes {dimension_semantics = [#tpu.dimension_semantics<parallel>, #tpu.dimension_semantics<parallel>], iteration_bounds = array<i64: 2, 1>, scalar_prefetch = 0 : i64, scratch_operands = 0 : i64, tpu.core_type = #tpu.core_type<tc>, window_params = [{transform_indices = @transform_0, window_bounds = array<i64: 1, 4, 288>}, {transform_indices = @transform_1, window_bounds = array<i64: 1, 288, 4>}, {transform_indices = @transform_2, window_bounds = array<i64: 1, 4, 4>}]} {
    %c0 = arith.constant 0 : index
    %c0_0 = arith.constant 0 : index
    %c0_1 = arith.constant 0 : index
    %0 = vector.load %arg2[%c0, %c0_0, %c0_1] : memref<1x4x288xbf16, #tpu.memory_space<vmem>>, vector<1x4x288xbf16>
    %1 = vector.shape_cast %0 : vector<1x4x288xbf16> to vector<4x288xbf16>
    %c0_2 = arith.constant 0 : index
    %c0_3 = arith.constant 0 : index
    %c0_4 = arith.constant 0 : index
    %2 = vector.load %arg3[%c0_2, %c0_3, %c0_4] : memref<1x288x4xbf16, #tpu.memory_space<vmem>>, vector<1x288x4xbf16>
    %3 = vector.shape_cast %2 : vector<1x288x4xbf16> to vector<288x4xbf16>
    %cst = arith.constant dense<0.000000e+00> : vector<4x4xf32>
    %4 = tpu.matmul %1, %3, %cst {dimension_numbers = #tpu.dot_dimension_numbers<[1], [0], [0], [1], [0, 0, 1, 1], [], []>} : vector<4x288xbf16>, vector<288x4xbf16>, vector<4x4xf32> -> vector<4x4xf32>
    %c0_5 = arith.constant 0 : index
    %c0_6 = arith.constant 0 : index
    %c0_7 = arith.constant 0 : index
    %5 = vector.load %arg4[%c0_5, %c0_6, %c0_7] : memref<1x4x4xf32, #tpu.memory_space<vmem>>, vector<1x4x4xf32>
    %6 = vector.shape_cast %5 : vector<1x4x4xf32> to vector<4x4xf32>
    %7 = vector.shape_cast %4 : vector<4x4xf32> to vector<1x4x4xf32>
    tpu.vector_store %arg4[%c0_5, %c0_6, %c0_7], %7 {strides = array<i32>} : memref<1x4x4xf32, #tpu.memory_space<vmem>>, vector<1x4x4xf32>,
    return
  }
  func.func @transform_0(%arg0: i32, %arg1: i32) -> (i32, i32, i32) {
    %c0_i32 = arith.constant 0 : i32
    %c0_i32_0 = arith.constant 0 : i32
    return %arg0, %arg1, %c0_i32 : i32, i32, i32
  }
  func.func @transform_1(%arg0: i32, %arg1: i32) -> (i32, i32, i32) {
    %c0_i32 = arith.constant 0 : i32
    %c0_i32_0 = arith.constant 0 : i32
    %c0_i32_1 = arith.constant 0 : i32
    return %arg0, %c0_i32, %c0_i32_0 : i32, i32, i32
  }
  func.func @transform_2(%arg0: i32, %arg1: i32) -> (i32, i32, i32) {
    %c0_i32 = arith.constant 0 : i32
    %c0_i32_0 = arith.constant 0 : i32
    return %arg0, %arg1, %c0_i32 : i32, i32, i32
  }
}

module attributes {stable_mosaic.version = 11 : i64} {
  func.func @_attn_softmax_agg_kernel(%arg0: i32, %arg1: i32, %arg2: memref<1x4x4xf32, #tpu.memory_space<vmem>>, %arg3: memref<1x4xf32, #tpu.memory_space<vmem>>, %arg4: memref<1x4x512xbf16, #tpu.memory_space<vmem>>, %arg5: memref<1x4x512xf32, #tpu.memory_space<vmem>>) attributes {dimension_semantics = [#tpu.dimension_semantics<parallel>, #tpu.dimension_semantics<parallel>], iteration_bounds = array<i64: 2, 1>, scalar_prefetch = 0 : i64, scratch_operands = 0 : i64, tpu.core_type = #tpu.core_type<tc>, window_params = [{transform_indices = @transform_0, window_bounds = array<i64: 1, 4, 4>}, {pipeline_mode = #tpu.pipeline_mode<synchronous>, transform_indices = @transform_1, window_bounds = array<i64: 1, 4>}, {transform_indices = @transform_2, window_bounds = array<i64: 1, 4, 512>}, {transform_indices = @transform_3, window_bounds = array<i64: 1, 4, 512>}]} {
    %c0 = arith.constant 0 : index
    %c0_0 = arith.constant 0 : index
    %0 = vector.load %arg3[%c0, %c0_0] : memref<1x4xf32, #tpu.memory_space<vmem>>, vector<1x4xf32>
    %c0_1 = arith.constant 0 : index
    %c0_2 = arith.constant 0 : index
    %c0_3 = arith.constant 0 : index
    %1 = vector.load %arg2[%c0_1, %c0_2, %c0_3] : memref<1x4x4xf32, #tpu.memory_space<vmem>>, vector<1x4x4xf32>
    %2 = vector.shape_cast %1 : vector<1x4x4xf32> to vector<4x4xf32>
    %3 = vector.broadcast %0 : vector<1x4xf32> to vector<4x4xf32>
    %4 = arith.mulf %2, %3 : vector<4x4xf32>
    %cst = arith.constant 1.000000e+01 : f32
    %5 = vector.broadcast %cst : f32 to vector<4x4xf32>
    %6 = arith.mulf %4, %5 : vector<4x4xf32>
    %cst_4 = arith.constant dense<0xFF800000> : vector<4xf32>
    %7 = vector.multi_reduction <maximumf>, %6, %cst_4 [1] : vector<4x4xf32> to vector<4xf32>
    %8 = vector.shape_cast %7 : vector<4xf32> to vector<4x1xf32>
    %9 = vector.broadcast %8 : vector<4x1xf32> to vector<4x4xf32>
    %10 = arith.subf %6, %9 : vector<4x4xf32>
    %11 = math.exp %10 : vector<4x4xf32>
    %cst_5 = arith.constant dense<0.000000e+00> : vector<4xf32>
    %12 = vector.multi_reduction <add>, %11, %cst_5 [1] : vector<4x4xf32> to vector<4xf32>
    %13 = vector.shape_cast %12 : vector<4xf32> to vector<4x1xf32>
    %14 = tpu.reciprocal %13 {approx = true} : vector<4x1xf32> -> vector<4x1xf32>
    %15 = vector.broadcast %14 : vector<4x1xf32> to vector<4x4xf32>
    %16 = arith.mulf %11, %15 : vector<4x4xf32>
    %17 = vector.broadcast %0 : vector<1x4xf32> to vector<4x4xf32>
    %18 = arith.mulf %16, %17 : vector<4x4xf32>
    %19 = arith.truncf %18 : vector<4x4xf32> to vector<4x4xbf16>
    %c0_6 = arith.constant 0 : index
    %c0_7 = arith.constant 0 : index
    %c0_8 = arith.constant 0 : index
    %20 = vector.load %arg4[%c0_6, %c0_7, %c0_8] : memref<1x4x512xbf16, #tpu.memory_space<vmem>>, vector<1x4x512xbf16>
    %21 = vector.shape_cast %20 : vector<1x4x512xbf16> to vector<4x512xbf16>
    %cst_9 = arith.constant dense<0.000000e+00> : vector<4x512xf32>
    %22 = tpu.matmul %19, %21, %cst_9 {dimension_numbers = #tpu.dot_dimension_numbers<[1], [0], [0], [1], [0, 0, 1, 1], [], []>} : vector<4x4xbf16>, vector<4x512xbf16>, vector<4x512xf32> -> vector<4x512xf32>
    %c0_10 = arith.constant 0 : index
    %c0_11 = arith.constant 0 : index
    %c0_12 = arith.constant 0 : index
    %23 = vector.load %arg5[%c0_10, %c0_11, %c0_12] : memref<1x4x512xf32, #tpu.memory_space<vmem>>, vector<1x4x512xf32>
    %24 = vector.shape_cast %23 : vector<1x4x512xf32> to vector<4x512xf32>
    %25 = vector.shape_cast %22 : vector<4x512xf32> to vector<1x4x512xf32>
    tpu.vector_store %arg5[%c0_10, %c0_11, %c0_12], %25 {strides = array<i32>} : memref<1x4x512xf32, #tpu.memory_space<vmem>>, vector<1x4x512xf32>,
    return
  }
  func.func @transform_0(%arg0: i32, %arg1: i32) -> (i32, i32, i32) {
    %c0_i32 = arith.constant 0 : i32
    %c0_i32_0 = arith.constant 0 : i32
    return %arg0, %arg1, %c0_i32 : i32, i32, i32
  }
  func.func @transform_1(%arg0: i32, %arg1: i32) -> (i32, i32) {
    %c0_i32 = arith.constant 0 : i32
    %c0_i32_0 = arith.constant 0 : i32
    %c0_i32_1 = arith.constant 0 : i32
    return %c0_i32, %c0_i32_0 : i32, i32
  }
  func.func @transform_2(%arg0: i32, %arg1: i32) -> (i32, i32, i32) {
    %c0_i32 = arith.constant 0 : i32
    %c0_i32_0 = arith.constant 0 : i32
    %c0_i32_1 = arith.constant 0 : i32
    return %arg0, %c0_i32, %c0_i32_0 : i32, i32, i32
  }
  func.func @transform_3(%arg0: i32, %arg1: i32) -> (i32, i32, i32) {
    %c0_i32 = arith.constant 0 : i32
    %c0_i32_0 = arith.constant 0 : i32
    return %arg0, %arg1, %c0_i32 : i32, i32, i32
  }
}

module attributes {stable_mosaic.version = 11 : i64} {
  func.func @_gated_conv_kernel(%arg0: i32, %arg1: memref<32x640xbf16, #tpu.memory_space<vmem>>, %arg2: memref<640x256xbf16, #tpu.memory_space<vmem>>, %arg3: memref<1x256xf32, #tpu.memory_space<vmem>>, %arg4: memref<32x128xf32, #tpu.memory_space<vmem>>) attributes {dimension_semantics = [#tpu.dimension_semantics<parallel>], iteration_bounds = array<i64: 1>, scalar_prefetch = 0 : i64, scratch_operands = 0 : i64, tpu.core_type = #tpu.core_type<tc>, window_params = [{transform_indices = @transform_0, window_bounds = array<i64: 32, 640>}, {pipeline_mode = #tpu.pipeline_mode<synchronous>, transform_indices = @transform_1, window_bounds = array<i64: 640, 256>}, {pipeline_mode = #tpu.pipeline_mode<synchronous>, transform_indices = @transform_2, window_bounds = array<i64: 1, 256>}, {transform_indices = @transform_3, window_bounds = array<i64: 32, 128>}]} {
    %c0 = arith.constant 0 : index
    %c0_0 = arith.constant 0 : index
    %0 = vector.load %arg1[%c0, %c0_0] : memref<32x640xbf16, #tpu.memory_space<vmem>>, vector<32x640xbf16>
    %c0_1 = arith.constant 0 : index
    %c0_2 = arith.constant 0 : index
    %1 = vector.load %arg2[%c0_1, %c0_2] : memref<640x256xbf16, #tpu.memory_space<vmem>>, vector<640x256xbf16>
    %cst = arith.constant dense<0.000000e+00> : vector<32x256xf32>
    %2 = tpu.matmul %0, %1, %cst {dimension_numbers = #tpu.dot_dimension_numbers<[1], [0], [0], [1], [0, 0, 1, 1], [], []>} : vector<32x640xbf16>, vector<640x256xbf16>, vector<32x256xf32> -> vector<32x256xf32>
    %c0_3 = arith.constant 0 : index
    %c0_4 = arith.constant 0 : index
    %3 = vector.load %arg3[%c0_3, %c0_4] : memref<1x256xf32, #tpu.memory_space<vmem>>, vector<1x256xf32>
    %4 = vector.broadcast %3 : vector<1x256xf32> to vector<32x256xf32>
    %5 = arith.addf %2, %4 : vector<32x256xf32>
    %6 = vector.extract_strided_slice %5 {offsets = [0, 0], sizes = [32, 128], strides = [1, 1]} : vector<32x256xf32> to vector<32x128xf32>
    %7 = vector.extract_strided_slice %5 {offsets = [0, 128], sizes = [32, 128], strides = [1, 1]} : vector<32x256xf32> to vector<32x128xf32>
    %8 = arith.negf %7 : vector<32x128xf32>
    %9 = math.exp %8 : vector<32x128xf32>
    %cst_5 = arith.constant 1.000000e+00 : f32
    %10 = vector.broadcast %cst_5 : f32 to vector<32x128xf32>
    %11 = arith.addf %10, %9 : vector<32x128xf32>
    %12 = arith.divf %10, %11 : vector<32x128xf32>
    %cst_6 = arith.constant 0.000000e+00 : f32
    %13 = vector.broadcast %cst_6 : f32 to vector<32x128xf32>
    %14 = arith.cmpf oge, %6, %13 : vector<32x128xf32>
    %cst_7 = arith.constant 2.000000e-01 : f32
    %15 = vector.broadcast %cst_7 : f32 to vector<32x128xf32>
    %16 = arith.mulf %15, %6 : vector<32x128xf32>
    %17 = arith.select %14, %6, %16 : vector<32x128xi1>, vector<32x128xf32>
    %18 = arith.mulf %17, %12 : vector<32x128xf32>
    %c0_8 = arith.constant 0 : index
    %c0_9 = arith.constant 0 : index
    %19 = vector.load %arg4[%c0_8, %c0_9] : memref<32x128xf32, #tpu.memory_space<vmem>>, vector<32x128xf32>
    tpu.vector_store %arg4[%c0_8, %c0_9], %18 {strides = array<i32>} : memref<32x128xf32, #tpu.memory_space<vmem>>, vector<32x128xf32>,
    return
  }
  func.func @transform_0(%arg0: i32) -> (i32, i32) {
    %c0_i32 = arith.constant 0 : i32
    %c0_i32_0 = arith.constant 0 : i32
    return %arg0, %c0_i32 : i32, i32
  }
  func.func @transform_1(%arg0: i32) -> (i32, i32) {
    %c0_i32 = arith.constant 0 : i32
    %c0_i32_0 = arith.constant 0 : i32
    %c0_i32_1 = arith.constant 0 : i32
    return %c0_i32, %c0_i32_0 : i32, i32
  }
  func.func @transform_2(%arg0: i32) -> (i32, i32) {
    %c0_i32 = arith.constant 0 : i32
    %c0_i32_0 = arith.constant 0 : i32
    %c0_i32_1 = arith.constant 0 : i32
    return %c0_i32, %c0_i32_0 : i32, i32
  }
  func.func @transform_3(%arg0: i32) -> (i32, i32) {
    %c0_i32 = arith.constant 0 : i32
    %c0_i32_0 = arith.constant 0 : i32
    return %arg0, %c0_i32 : i32, i32
  }
}

</mosaic_0001>

<llo_original>
// kernel: _lambda_.44
$region0: #{_lambda_.44}
  #allocation0 [shape = 'u32[]', space=smem, size = 0x4, offset = 0x4, fixed_abs, tag = 'smem constant byte address 0x4 - core index']
  #allocation1 [shape = 'u32[72,128]{1,0:T(1,128)}', space=vmem, size = 0x9000, scoped, tag = 'internal scratch']
  %s0 = inlined_call_operand.vmem [shape: bf16[512,128], index: 0, kind: input, shape index: {}]
  %s1 = inlined_call_operand.vmem [shape: bf16[128,256], index: 1, kind: input, shape index: {}]
  %s2 = inlined_call_operand.vmem [shape: f32[1,256], index: 2, kind: input, shape index: {}]
  %s3 = inlined_call_operand.vmem [shape: f32[512,128], index: 3, kind: output, shape index: {}]
  %s4 = sld [smem:[#allocation0]]
  $region45: #{_lambda_.44} parent=0
    _
  %s6 = ssub.s32 1, %s4
  %s7 = scalar_select 0, %s6, %s4
  loop: start=0, step=1, limit=4
  $region2: #{_lambda_.44} parent=0 // loop_pre_header
    _
  $region3: #{_lambda_.44} parent=0 // loop_header
    %s9 = sphi 0, %s13
    %p10 = scmp.ge.s32.totalorder %s9, 4
    %s19 = sphi 0, %s21
    %s22 = sphi 0, %s19
    %s23 = sphi 0, %s22
    %s39 = sphi 0, %s23
    %s43 = sphi 0, %s43
    %s45 = sphi 0, %s43
    %s46 = sphi 0, %s45
    %s60 = sphi 0, %s46
    %s64 = sphi 0, %s64
    %s66 = sphi 0, %s64
    %s67 = sphi 0, %s66
    %s81 = sphi 0, %s67
    %s87 = sphi 0, %s89
    %s90 = sphi 0, %s87
    %s91 = sphi 0, %s90
    %s107 = sphi 0, %s91
  $region4: #{_lambda_.44} parent=0 // loop_header_branch
    %12 = sbr.rel (%p10) target = $region8
  $region5: #{_lambda_.44} parent=0 // loop_body
    %s14 = ssub.s32 %s9, 1
    %s15 = ssub.s32 %s9, 2
    %s16 = sadd.s32 %s9, 1
    %s17 = ssub.s32 %s9, %s16
    %p18 = scmp.eq.s32.totalorder %s17, 0
    %s20 = sadd.s32 %s19, 1
    %s21 = scalar_select %p18, %s19, %s20
    %p24 = pneg %p18
    %p25 = scmp.eq.s32.totalorder %s9, 1
    %p26 = por %p24, %p25
    %p27 = scmp.ne.s32.totalorder %s19, %s22
    %p28 = scmp.eq.s32.totalorder %s9, 0
    %p29 = por %p27, %p28
    %p30 = scmp.ne.s32.totalorder %s19, %s22
    %p31 = scmp.eq.s32.totalorder %s14, 1
    %p32 = por %p30, %p31
    %p33 = scmp.ne.s32.totalorder %s22, %s23
    %p34 = scmp.eq.s32.totalorder %s14, 0
    %p35 = por %p33, %p34
    %p36 = scmp.ne.s32.totalorder %s22, %s23
    %p37 = scmp.eq.s32.totalorder %s15, 1
    %p38 = por %p36, %p37
    %p40 = scmp.ne.s32.totalorder %s23, %s39
    %p41 = scmp.eq.s32.totalorder %s15, 0
    %p42 = por %p40, %p41
    %s44 = sadd.s32 %s43, 1
    %p47 = scmp.eq.s32.totalorder %s9, 1
    %p48 = scmp.ne.s32.totalorder %s43, %s45
    %p49 = scmp.eq.s32.totalorder %s9, 0
    %p50 = por %p48, %p49
    %p51 = scmp.ne.s32.totalorder %s43, %s45
    %p52 = scmp.eq.s32.totalorder %s14, 1
    %p53 = por %p51, %p52
    %p54 = scmp.ne.s32.totalorder %s45, %s46
    %p55 = scmp.eq.s32.totalorder %s14, 0
    %p56 = por %p54, %p55
    %p57 = scmp.ne.s32.totalorder %s45, %s46
    %p58 = scmp.eq.s32.totalorder %s15, 1
    %p59 = por %p57, %p58
    %p61 = scmp.ne.s32.totalorder %s46, %s60
    %p62 = scmp.eq.s32.totalorder %s15, 0
    %p63 = por %p61, %p62
    %s65 = sadd.s32 %s64, 1
    %p68 = scmp.eq.s32.totalorder %s9, 1
    %p69 = scmp.ne.s32.totalorder %s64, %s66
    %p70 = scmp.eq.s32.totalorder %s9, 0
    %p71 = por %p69, %p70
    %p72 = scmp.ne.s32.totalorder %s64, %s66
    %p73 = scmp.eq.s32.totalorder %s14, 1
    %p74 = por %p72, %p73
    %p75 = scmp.ne.s32.totalorder %s66, %s67
    %p76 = scmp.eq.s32.totalorder %s14, 0
    %p77 = por %p75, %p76
    %p78 = scmp.ne.s32.totalorder %s66, %s67
    %p79 = scmp.eq.s32.totalorder %s15, 1
    %p80 = por %p78, %p79
    %p82 = scmp.ne.s32.totalorder %s67, %s81
    %p83 = scmp.eq.s32.totalorder %s15, 0
    %p84 = por %p82, %p83
    %s85 = ssub.s32 %s9, %s16
    %p86 = scmp.eq.s32.totalorder %s85, 0
    %s88 = sadd.s32 %s87, 1
    %s89 = scalar_select %p86, %s87, %s88
    %p92 = pneg %p86
    %p93 = scmp.eq.s32.totalorder %s9, 1
    %p94 = por %p92, %p93
    %p95 = scmp.ne.s32.totalorder %s87, %s90
    %p96 = scmp.eq.s32.totalorder %s9, 0
    %p97 = por %p95, %p96
    %p98 = scmp.ne.s32.totalorder %s87, %s90
    %p99 = scmp.eq.s32.totalorder %s14, 1
    %p100 = por %p98, %p99
    %p101 = scmp.ne.s32.totalorder %s90, %s91
    %p102 = scmp.eq.s32.totalorder %s14, 0
    %p103 = por %p101, %p102
    %p104 = scmp.ne.s32.totalorder %s90, %s91
    %p105 = scmp.eq.s32.totalorder %s15, 1
    %p106 = por %p104, %p105
    %p108 = scmp.ne.s32.totalorder %s91, %s107
    %p109 = scmp.eq.s32.totalorder %s15, 0
    %p110 = por %p108, %p109
    %p111 = scmp.le.s32.totalorder 1, %s9
    %p112 = scmp.lt.s32.totalorder %s9, 3
    %p113 = pnand %p111, %p112
    %p114 = pneg %p113
    // Predicated region
    $region9: #{_lambda_.44} parent=5 // pred_check
      _
    $region10: #{_lambda_.44} parent=5 // pred_check_branch
      %116 = sbr.rel (%p113) target = $region12
    $region11: #{_lambda_.44} parent=5 // pred_region
      %s117 = ssub.s32 %s9, 1
      // Predicated region
      $region13: #{_lambda_.44} parent=11 // pred_check
        %p118 = pneg %p56
      $region14: #{_lambda_.44} parent=11 // pred_check_branch
        %120 = sbr.rel (%p118) target = $region16
      $region15: #{_lambda_.44} parent=11 // pred_region
        _
      $region16: #{_lambda_.44} parent=11 // pred_fallthru
        _
      // Predicated region
      $region17: #{_lambda_.44} parent=11 // pred_check
        %p121 = pneg %p77
      $region18: #{_lambda_.44} parent=11 // pred_check_branch
        %123 = sbr.rel (%p121) target = $region20
      $region19: #{_lambda_.44} parent=11 // pred_region
        _
      $region20: #{_lambda_.44} parent=11 // pred_fallthru
        _
    $region12: #{_lambda_.44} parent=5 // pred_fallthru
      _
    %p124 = scmp.lt.s32.totalorder %s9, 2
    // Predicated region
    $region21: #{_lambda_.44} parent=5 // pred_check
      %p125 = pneg %p124
    $region22: #{_lambda_.44} parent=5 // pred_check_branch
      %127 = sbr.rel (%p125) target = $region24
    $region23: #{_lambda_.44} parent=5 // pred_region
      // Predicated region
      $region25: #{_lambda_.44} parent=23 // pred_check
        %p128 = pneg %p29
      $region26: #{_lambda_.44} parent=23 // pred_check_branch
        %130 = sbr.rel (%p128) target = $region28
      $region27: #{_lambda_.44} parent=23 // pred_region
        %s131 = smul.u32 32, %s9
        %p132 = scmp.lt.s32.totalorder %s131, 63
        %s133 = scalar_select %p132, %s131, 63
        %s134 = smul.addr %s133, 4
        %s135 = scalar_lea.vmem %s0, %s134
        %s136 = smul.u32 32, %s9
      $region28: #{_lambda_.44} parent=23 // pred_fallthru
        _
    $region24: #{_lambda_.44} parent=5 // pred_fallthru
      _
    %p137 = scmp.le.s32.totalorder 1, %s9
    %p138 = scmp.lt.s32.totalorder %s9, 3
    %p139 = pnand %p137, %p138
    %p140 = pneg %p139
    // Predicated region
    $region29: #{_lambda_.44} parent=5 // pred_check
      _
    $region30: #{_lambda_.44} parent=5 // pred_check_branch
      %142 = sbr.rel (%p139) target = $region32
    $region31: #{_lambda_.44} parent=5 // pred_region
      %s143 = ssub.s32 %s9, 1
      %s144 = smul.u32 32, %s14
      %p145 = scmp.lt.s32.totalorder %s144, 63
      %s146 = scalar_select %p145, %s144, 63
      %s147 = smul.addr %s146, 4
      %s148 = scalar_lea.vmem %s0, %s147
      %p149 = pneg %p35
      %p150 = pneg %p32
      %p151 = pneg %p56
      %p152 = pneg %p53
      %p153 = pneg %p77
      %p154 = pneg %p74
      %p155 = pneg %p103
      %p156 = pneg %p100
      %s157 = smul.u32 32, %s14
      %p158 = scmp.lt.s32.totalorder %s157, 63
      %s159 = scalar_select %p158, %s157, 63
      %s160 = smul.addr %s159, 8
      %s161 = scalar_lea.vmem %s3, %s160
      %s162 = smul.u32 32, %s14
      %p163 = scmp.lt.s32.totalorder %s162, 63
      %s164 = scalar_select %p163, %s162, 63
      %s165 = smul.addr %s164, 4
      %s166 = scalar_lea.vmem %s0, %s165
      %s167 = smul.u32 32, %s14
      %s168 = smul.u32 32, %s14
      %p169 = scmp.lt.s32.totalorder %s168, 63
      %s170 = scalar_select %p169, %s168, 63
      %s171 = smul.addr %s170, 8
      %s172 = scalar_lea.vmem %s3, %s171
      %s173 = smul.u32 32, %s14
      %v174 = vld [vmem:[%s166] sm:$0xf]
      %v175 = vld [vmem:[%s166 + $0x4] sm:$0xf]
      %v176 = vld [vmem:[%s166 + $0x8] sm:$0xf]
      %v177 = vld [vmem:[%s166 + $0xc] sm:$0xf]
      %v178 = vld [vmem:[%s166 + $0x10] sm:$0xf]
      %v179 = vld [vmem:[%s166 + $0x14] sm:$0xf]
      %v180 = vld [vmem:[%s166 + $0x18] sm:$0xf]
      %v181 = vld [vmem:[%s166 + $0x1c] sm:$0xf]
      %v182 = vld [vmem:[%s166 + $0x20] sm:$0xf]
      %v183 = vld [vmem:[%s166 + $0x24] sm:$0xf]
      %v184 = vld [vmem:[%s166 + $0x28] sm:$0xf]
      %v185 = vld [vmem:[%s166 + $0x2c] sm:$0xf]
      %v186 = vld [vmem:[%s166 + $0x30] sm:$0xf]
      %v187 = vld [vmem:[%s166 + $0x34] sm:$0xf]
      %v188 = vld [vmem:[%s166 + $0x38] sm:$0xf]
      %v189 = vld [vmem:[%s166 + $0x3c] sm:$0xf]
      %v190 = vld [vmem:[%s166 + $0x40] sm:$0xf]
      %v191 = vld [vmem:[%s166 + $0x44] sm:$0xf]
      %v192 = vld [vmem:[%s166 + $0x48] sm:$0xf]
      %v193 = vld [vmem:[%s166 + $0x4c] sm:$0xf]
      %v194 = vld [vmem:[%s166 + $0x50] sm:$0xf]
      %v195 = vld [vmem:[%s166 + $0x54] sm:$0xf]
      %v196 = vld [vmem:[%s166 + $0x58] sm:$0xf]
      %v197 = vld [vmem:[%s166 + $0x5c] sm:$0xf]
      %v198 = vld [vmem:[%s166 + $0x60] sm:$0xf]
      %v199 = vld [vmem:[%s166 + $0x64] sm:$0xf]
      %v200 = vld [vmem:[%s166 + $0x68] sm:$0xf]
      %v201 = vld [vmem:[%s166 + $0x6c] sm:$0xf]
      %v202 = vld [vmem:[%s166 + $0x70] sm:$0xf]
      %v203 = vld [vmem:[%s166 + $0x74] sm:$0xf]
      %v204 = vld [vmem:[%s166 + $0x78] sm:$0xf]
      %v205 = vld [vmem:[%s166 + $0x7c] sm:$0xf]
      %v206 = vld [vmem:[%s1] sm:$0xff]
      %v207 = vld [vmem:[%s1 + $0x8] sm:$0xff]
      %v208 = vld [vmem:[%s1 + $0x10] sm:$0xff]
      %v209 = vld [vmem:[%s1 + $0x18] sm:$0xff]
      %v210 = vld [vmem:[%s1 + $0x20] sm:$0xff]
      %v211 = vld [vmem:[%s1 + $0x28] sm:$0xff]
      %v212 = vld [vmem:[%s1 + $0x30] sm:$0xff]
      %v213 = vld [vmem:[%s1 + $0x38] sm:$0xff]
      %v214 = vld [vmem:[%s1 + $0x40] sm:$0xff]
      %v215 = vld [vmem:[%s1 + $0x48] sm:$0xff]
      %v216 = vld [vmem:[%s1 + $0x50] sm:$0xff]
      %v217 = vld [vmem:[%s1 + $0x58] sm:$0xff]
      %v218 = vld [vmem:[%s1 + $0x60] sm:$0xff]
      %v219 = vld [vmem:[%s1 + $0x68] sm:$0xff]
      %v220 = vld [vmem:[%s1 + $0x70] sm:$0xff]
      %v221 = vld [vmem:[%s1 + $0x78] sm:$0xff]
      %v222 = vld [vmem:[%s2] sm:$0x3]
      %v224 = vperm.slane %v222, 0
      %v225 = vperm.slane %v222, 1
      %v260 = vunpack.c.l.b16 %v174
      %v261 = vunpack.c.l.b16 %v175
      %v262 = vunpack.c.l.b16 %v176
      %v263 = vunpack.c.l.b16 %v177
      %v264 = vunpack.c.l.b16 %v178
      %v265 = vunpack.c.l.b16 %v179
      %v266 = vunpack.c.l.b16 %v180
      %v267 = vunpack.c.l.b16 %v181
      %v268 = vunpack.c.l.b16 %v182
      %v269 = vunpack.c.l.b16 %v183
      %v270 = vunpack.c.l.b16 %v184
      %v271 = vunpack.c.l.b16 %v185
      %v272 = vunpack.c.l.b16 %v186
      %v273 = vunpack.c.l.b16 %v187
      %v274 = vunpack.c.l.b16 %v188
      %v275 = vunpack.c.l.b16 %v189
      %v276 = vunpack.c.l.b16 %v190
      %v277 = vunpack.c.l.b16 %v191
      %v278 = vunpack.c.l.b16 %v192
      %v279 = vunpack.c.l.b16 %v193
      %v280 = vunpack.c.l.b16 %v194
      %v281 = vunpack.c.l.b16 %v195
      %v282 = vunpack.c.l.b16 %v196
      %v283 = vunpack.c.l.b16 %v197
      %v284 = vunpack.c.l.b16 %v198
      %v285 = vunpack.c.l.b16 %v199
      %v286 = vunpack.c.l.b16 %v200
      %v287 = vunpack.c.l.b16 %v201
      %v288 = vunpack.c.l.b16 %v202
      %v289 = vunpack.c.l.b16 %v203
      %v290 = vunpack.c.l.b16 %v204
      %v291 = vunpack.c.l.b16 %v205
      %v292 = vpack.c.b16 %v261, %v260
      %v293 = vpack.c.b16 %v263, %v262
      %v294 = vpack.c.b16 %v265, %v264
      %v295 = vpack.c.b16 %v267, %v266
      %v296 = vpack.c.b16 %v269, %v268
      %v297 = vpack.c.b16 %v271, %v270
      %v298 = vpack.c.b16 %v273, %v272
      %v299 = vpack.c.b16 %v275, %v274
      %v300 = vpack.c.b16 %v277, %v276
      %v301 = vpack.c.b16 %v279, %v278
      %v302 = vpack.c.b16 %v281, %v280
      %v303 = vpack.c.b16 %v283, %v282
      %v304 = vpack.c.b16 %v285, %v284
      %v305 = vpack.c.b16 %v287, %v286
      %v306 = vpack.c.b16 %v289, %v288
      %v307 = vpack.c.b16 %v291, %v290
      %v340 = vunpack.c.l.b16 %v206
      %v341 = vunpack.c.h.b16 %v206
      %v342 = vunpack.c.l.b16 %v207
      %v343 = vunpack.c.h.b16 %v207
      %v344 = vunpack.c.l.b16 %v208
      %v345 = vunpack.c.h.b16 %v208
      %v346 = vunpack.c.l.b16 %v209
      %v347 = vunpack.c.h.b16 %v209
      %v348 = vunpack.c.l.b16 %v210
      %v349 = vunpack.c.h.b16 %v210
      %v350 = vunpack.c.l.b16 %v211
      %v351 = vunpack.c.h.b16 %v211
      %v352 = vunpack.c.l.b16 %v212
      %v353 = vunpack.c.h.b16 %v212
      %v354 = vunpack.c.l.b16 %v213
      %v355 = vunpack.c.h.b16 %v213
      %v356 = vunpack.c.l.b16 %v214
      %v357 = vunpack.c.h.b16 %v214
      %v358 = vunpack.c.l.b16 %v215
      %v359 = vunpack.c.h.b16 %v215
      %v360 = vunpack.c.l.b16 %v216
      %v361 = vunpack.c.h.b16 %v216
      %v362 = vunpack.c.l.b16 %v217
      %v363 = vunpack.c.h.b16 %v217
      %v364 = vunpack.c.l.b16 %v218
      %v365 = vunpack.c.h.b16 %v218
      %v366 = vunpack.c.l.b16 %v219
      %v367 = vunpack.c.h.b16 %v219
      %v368 = vunpack.c.l.b16 %v220
      %v369 = vunpack.c.h.b16 %v220
      %v370 = vunpack.c.l.b16 %v221
      %v371 = vunpack.c.h.b16 %v221
      %v372 = vpack.c.b16 %v342, %v340
      %v373 = vpack.c.b16 %v343, %v341
      %v374 = vpack.c.b16 %v346, %v344
      %v375 = vpack.c.b16 %v347, %v345
      %v376 = vpack.c.b16 %v350, %v348
      %v377 = vpack.c.b16 %v351, %v349
      %v378 = vpack.c.b16 %v354, %v352
      %v379 = vpack.c.b16 %v355, %v353
      %v380 = vpack.c.b16 %v358, %v356
      %v381 = vpack.c.b16 %v359, %v357
      %v382 = vpack.c.b16 %v362, %v360
      %v383 = vpack.c.b16 %v363, %v361
      %v384 = vpack.c.b16 %v366, %v364
      %v385 = vpack.c.b16 %v367, %v365
      %v386 = vpack.c.b16 %v370, %v368
      %v387 = vpack.c.b16 %v371, %v369
      %404 = vmatpush.bf16.msra.mxu0 %v386
      %405 = vmatpush.bf16.msra.mxu0 %v384
      %406 = vmatpush.bf16.msra.mxu0 %v382
      %407 = vmatpush.bf16.msra.mxu0 %v380
      %408 = vmatpush.bf16.msra.mxu0 %v378
      %409 = vmatpush.bf16.msra.mxu0 %v376
      %410 = vmatpush.bf16.msra.mxu0 %v374
      %411 = vmatpush.bf16.msra.mxu0 %v372
      %412 = vmatmul.bf16.gmra.mxu0 %v292
      %v413 = vpop.f32.mrf.mxu0
      %v414 = vadd.f32 %v224, %v413
      %v415 = vpop.f32.mrf.mxu0
      %v416 = vadd.f32 %v224, %v415
      %417 = vmatmul.bf16.gmra.mxu0 %v293
      %v418 = vpop.f32.mrf.mxu0
      %v419 = vadd.f32 %v224, %v418
      %v420 = vpop.f32.mrf.mxu0
      %v421 = vadd.f32 %v224, %v420
      %422 = vmatmul.bf16.gmra.mxu0 %v294
      %v423 = vpop.f32.mrf.mxu0
      %v424 = vadd.f32 %v224, %v423
      %v425 = vpop.f32.mrf.mxu0
      %v426 = vadd.f32 %v224, %v425
      %427 = vmatmul.bf16.gmra.mxu0 %v295
      %v428 = vpop.f32.mrf.mxu0
      %v429 = vadd.f32 %v224, %v428
      %v430 = vpop.f32.mrf.mxu0
      %v431 = vadd.f32 %v224, %v430
      %432 = vmatmul.bf16.gmra.mxu0 %v296
      %v433 = vpop.f32.mrf.mxu0
      %v434 = vadd.f32 %v224, %v433
      %v435 = vpop.f32.mrf.mxu0
      %v436 = vadd.f32 %v224, %v435
      %437 = vmatmul.bf16.gmra.mxu0 %v297
      %v438 = vpop.f32.mrf.mxu0
      %v439 = vadd.f32 %v224, %v438
      %v440 = vpop.f32.mrf.mxu0
      %v441 = vadd.f32 %v224, %v440
      %442 = vmatmul.bf16.gmra.mxu0 %v298
      %v443 = vpop.f32.mrf.mxu0
      %v444 = vadd.f32 %v224, %v443
      %v445 = vpop.f32.mrf.mxu0
      %v446 = vadd.f32 %v224, %v445
      %447 = vmatmul.bf16.gmra.mxu0 %v299
      %v448 = vpop.f32.mrf.mxu0
      %v449 = vadd.f32 %v224, %v448
      %v450 = vpop.f32.mrf.mxu0
      %v451 = vadd.f32 %v224, %v450
      %452 = vmatmul.bf16.gmra.mxu0 %v300
      %v453 = vpop.f32.mrf.mxu0
      %v454 = vadd.f32 %v224, %v453
      %v455 = vpop.f32.mrf.mxu0
      %v456 = vadd.f32 %v224, %v455
      %457 = vmatmul.bf16.gmra.mxu0 %v301
      %v458 = vpop.f32.mrf.mxu0
      %v459 = vadd.f32 %v224, %v458
      %v460 = vpop.f32.mrf.mxu0
      %v461 = vadd.f32 %v224, %v460
      %462 = vmatmul.bf16.gmra.mxu0 %v302
      %v463 = vpop.f32.mrf.mxu0
      %v464 = vadd.f32 %v224, %v463
      %v465 = vpop.f32.mrf.mxu0
      %v466 = vadd.f32 %v224, %v465
      %467 = vmatmul.bf16.gmra.mxu0 %v303
      %v468 = vpop.f32.mrf.mxu0
      %v469 = vadd.f32 %v224, %v468
      %v470 = vpop.f32.mrf.mxu0
      %v471 = vadd.f32 %v224, %v470
      %472 = vmatmul.bf16.gmra.mxu0 %v304
      %v473 = vpop.f32.mrf.mxu0
      %v474 = vadd.f32 %v224, %v473
      %v475 = vpop.f32.mrf.mxu0
      %v476 = vadd.f32 %v224, %v475
      %477 = vmatmul.bf16.gmra.mxu0 %v305
      %v478 = vpop.f32.mrf.mxu0
      %v479 = vadd.f32 %v224, %v478
      %v480 = vpop.f32.mrf.mxu0
      %v481 = vadd.f32 %v224, %v480
      %482 = vmatmul.bf16.gmra.mxu0 %v306
      %v483 = vpop.f32.mrf.mxu0
      %v484 = vadd.f32 %v224, %v483
      %v485 = vpop.f32.mrf.mxu0
      %v486 = vadd.f32 %v224, %v485
      %487 = vmatmul.bf16.gmra.mxu0 %v307
      %v488 = vpop.f32.mrf.mxu0
      %v489 = vadd.f32 %v224, %v488
      %v490 = vpop.f32.mrf.mxu0
      %v491 = vadd.f32 %v224, %v490
      %492 = vdwg.mxu0
      %493 = vmatpush.bf16.msra.mxu0 %v387
      %494 = vmatpush.bf16.msra.mxu0 %v385
      %495 = vmatpush.bf16.msra.mxu0 %v383
      %496 = vmatpush.bf16.msra.mxu0 %v381
      %497 = vmatpush.bf16.msra.mxu0 %v379
      %498 = vmatpush.bf16.msra.mxu0 %v377
      %499 = vmatpush.bf16.msra.mxu0 %v375
      %500 = vmatpush.bf16.msra.mxu0 %v373
      %501 = vmatmul.bf16.gmra.mxu0 %v292
      %v502 = vpop.f32.mrf.mxu0
      %v503 = vadd.f32 %v225, %v502
      %v504 = vpop.f32.mrf.mxu0
      %v505 = vadd.f32 %v225, %v504
      %506 = vmatmul.bf16.gmra.mxu0 %v293
      %v507 = vpop.f32.mrf.mxu0
      %v508 = vadd.f32 %v225, %v507
      %v509 = vpop.f32.mrf.mxu0
      %v510 = vadd.f32 %v225, %v509
      %511 = vmatmul.bf16.gmra.mxu0 %v294
      %v512 = vpop.f32.mrf.mxu0
      %v513 = vadd.f32 %v225, %v512
      %v514 = vpop.f32.mrf.mxu0
      %v515 = vadd.f32 %v225, %v514
      %516 = vmatmul.bf16.gmra.mxu0 %v295
      %v517 = vpop.f32.mrf.mxu0
      %v518 = vadd.f32 %v225, %v517
      %v519 = vpop.f32.mrf.mxu0
      %v520 = vadd.f32 %v225, %v519
      %521 = vmatmul.bf16.gmra.mxu0 %v296
      %v522 = vpop.f32.mrf.mxu0
      %v523 = vadd.f32 %v225, %v522
      %v524 = vpop.f32.mrf.mxu0
      %v525 = vadd.f32 %v225, %v524
      %526 = vmatmul.bf16.gmra.mxu0 %v297
      %v527 = vpop.f32.mrf.mxu0
      %v528 = vadd.f32 %v225, %v527
      %v529 = vpop.f32.mrf.mxu0
      %v530 = vadd.f32 %v225, %v529
      %531 = vmatmul.bf16.gmra.mxu0 %v298
      %v532 = vpop.f32.mrf.mxu0
      %v533 = vadd.f32 %v225, %v532
      %v534 = vpop.f32.mrf.mxu0
      %v535 = vadd.f32 %v225, %v534
      %536 = vmatmul.bf16.gmra.mxu0 %v299
      %v537 = vpop.f32.mrf.mxu0
      %v538 = vadd.f32 %v225, %v537
      %v539 = vpop.f32.mrf.mxu0
      %v540 = vadd.f32 %v225, %v539
      %541 = vmatmul.bf16.gmra.mxu0 %v300
      %v542 = vpop.f32.mrf.mxu0
      %v543 = vadd.f32 %v225, %v542
      %v544 = vpop.f32.mrf.mxu0
      %v545 = vadd.f32 %v225, %v544
      %546 = vmatmul.bf16.gmra.mxu0 %v301
      %v547 = vpop.f32.mrf.mxu0
      %v548 = vadd.f32 %v225, %v547
      %v549 = vpop.f32.mrf.mxu0
      %v550 = vadd.f32 %v225, %v549
      %551 = vmatmul.bf16.gmra.mxu0 %v302
      %v552 = vpop.f32.mrf.mxu0
      %v553 = vadd.f32 %v225, %v552
      %v554 = vpop.f32.mrf.mxu0
      %v555 = vadd.f32 %v225, %v554
      %556 = vmatmul.bf16.gmra.mxu0 %v303
      %v557 = vpop.f32.mrf.mxu0
      %v558 = vadd.f32 %v225, %v557
      %v559 = vpop.f32.mrf.mxu0
      %v560 = vadd.f32 %v225, %v559
      %561 = vmatmul.bf16.gmra.mxu0 %v304
      %v562 = vpop.f32.mrf.mxu0
      %v563 = vadd.f32 %v225, %v562
      %v564 = vpop.f32.mrf.mxu0
      %v565 = vadd.f32 %v225, %v564
      %566 = vmatmul.bf16.gmra.mxu0 %v305
      %v567 = vpop.f32.mrf.mxu0
      %v568 = vadd.f32 %v225, %v567
      %v569 = vpop.f32.mrf.mxu0
      %v570 = vadd.f32 %v225, %v569
      %571 = vmatmul.bf16.gmra.mxu0 %v306
      %v572 = vpop.f32.mrf.mxu0
      %v573 = vadd.f32 %v225, %v572
      %v574 = vpop.f32.mrf.mxu0
      %v575 = vadd.f32 %v225, %v574
      %576 = vmatmul.bf16.gmra.mxu0 %v307
      %v577 = vpop.f32.mrf.mxu0
      %v578 = vadd.f32 %v225, %v577
      %v579 = vpop.f32.mrf.mxu0
      %v580 = vadd.f32 %v225, %v579
      %581 = vdwg.mxu0
      %v582 = vxor.u32 %v503, 2147483648
      %v583 = vxor.u32 %v505, 2147483648
      %v584 = vxor.u32 %v508, 2147483648
      %v585 = vxor.u32 %v510, 2147483648
      %v586 = vxor.u32 %v513, 2147483648
      %v587 = vxor.u32 %v515, 2147483648
      %v588 = vxor.u32 %v518, 2147483648
      %v589 = vxor.u32 %v520, 2147483648
      %v590 = vxor.u32 %v523, 2147483648
      %v591 = vxor.u32 %v525, 2147483648
      %v592 = vxor.u32 %v528, 2147483648
      %v593 = vxor.u32 %v530, 2147483648
      %v594 = vxor.u32 %v533, 2147483648
      %v595 = vxor.u32 %v535, 2147483648
      %v596 = vxor.u32 %v538, 2147483648
      %v597 = vxor.u32 %v540, 2147483648
      %v598 = vxor.u32 %v543, 2147483648
      %v599 = vxor.u32 %v545, 2147483648
      %v600 = vxor.u32 %v548, 2147483648
      %v601 = vxor.u32 %v550, 2147483648
      %v602 = vxor.u32 %v553, 2147483648
      %v603 = vxor.u32 %v555, 2147483648
      %v604 = vxor.u32 %v558, 2147483648
      %v605 = vxor.u32 %v560, 2147483648
      %v606 = vxor.u32 %v563, 2147483648
      %v607 = vxor.u32 %v565, 2147483648
      %v608 = vxor.u32 %v568, 2147483648
      %v609 = vxor.u32 %v570, 2147483648
      %v610 = vxor.u32 %v573, 2147483648
      %v611 = vxor.u32 %v575, 2147483648
      %v612 = vxor.u32 %v578, 2147483648
      %v613 = vxor.u32 %v580, 2147483648
      %v614 = vmul.f32 %v582, 1.442695
      %v615 = vpow.pop %v614
      %v616 = vmul.f32 %v583, 1.442695
      %v617 = vpow.pop %v616
      %v618 = vmul.f32 %v584, 1.442695
      %v619 = vpow.pop %v618
      %v620 = vmul.f32 %v585, 1.442695
      %v621 = vpow.pop %v620
      %v622 = vmul.f32 %v586, 1.442695
      %v623 = vpow.pop %v622
      %v624 = vmul.f32 %v587, 1.442695
      %v625 = vpow.pop %v624
      %v626 = vmul.f32 %v588, 1.442695
      %v627 = vpow.pop %v626
      %v628 = vmul.f32 %v589, 1.442695
      %v629 = vpow.pop %v628
      %v630 = vmul.f32 %v590, 1.442695
      %v631 = vpow.pop %v630
      %v632 = vmul.f32 %v591, 1.442695
      %v633 = vpow.pop %v632
      %v634 = vmul.f32 %v592, 1.442695
      %v635 = vpow.pop %v634
      %v636 = vmul.f32 %v593, 1.442695
      %v637 = vpow.pop %v636
      %v638 = vmul.f32 %v594, 1.442695
      %v639 = vpow.pop %v638
      %v640 = vmul.f32 %v595, 1.442695
      %v641 = vpow.pop %v640
      %v642 = vmul.f32 %v596, 1.442695
      %v643 = vpow.pop %v642
      %v644 = vmul.f32 %v597, 1.442695
      %v645 = vpow.pop %v644
      %v646 = vmul.f32 %v598, 1.442695
      %v647 = vpow.pop %v646
      %v648 = vmul.f32 %v599, 1.442695
      %v649 = vpow.pop %v648
      %v650 = vmul.f32 %v600, 1.442695
      %v651 = vpow.pop %v650
      %v652 = vmul.f32 %v601, 1.442695
      %v653 = vpow.pop %v652
      %v654 = vmul.f32 %v602, 1.442695
      %v655 = vpow.pop %v654
      %v656 = vmul.f32 %v603, 1.442695
      %v657 = vpow.pop %v656
      %v658 = vmul.f32 %v604, 1.442695
      %v659 = vpow.pop %v658
      %v660 = vmul.f32 %v605, 1.442695
      %v661 = vpow.pop %v660
      %v662 = vmul.f32 %v606, 1.442695
      %v663 = vpow.pop %v662
      %v664 = vmul.f32 %v607, 1.442695
      %v665 = vpow.pop %v664
      %v666 = vmul.f32 %v608, 1.442695
      %v667 = vpow.pop %v666
      %v668 = vmul.f32 %v609, 1.442695
      %v669 = vpow.pop %v668
      %v670 = vmul.f32 %v610, 1.442695
      %v671 = vpow.pop %v670
      %v672 = vmul.f32 %v611, 1.442695
      %v673 = vpow.pop %v672
      %v674 = vmul.f32 %v612, 1.442695
      %v675 = vpow.pop %v674
      %v676 = vmul.f32 %v613, 1.442695
      %v677 = vpow.pop %v676
      %v678 = vadd.f32 %v615, 1.0
      %v679 = vadd.f32 %v617, 1.0
      %v680 = vadd.f32 %v619, 1.0
      %v681 = vadd.f32 %v621, 1.0
      %v682 = vadd.f32 %v623, 1.0
      %v683 = vadd.f32 %v625, 1.0
      %v684 = vadd.f32 %v627, 1.0
      %v685 = vadd.f32 %v629, 1.0
      %v686 = vadd.f32 %v631, 1.0
      %v687 = vadd.f32 %v633, 1.0
      %v688 = vadd.f32 %v635, 1.0
      %v689 = vadd.f32 %v637, 1.0
      %v690 = vadd.f32 %v639, 1.0
      %v691 = vadd.f32 %v641, 1.0
      %v692 = vadd.f32 %v643, 1.0
      %v693 = vadd.f32 %v645, 1.0
      %v694 = vadd.f32 %v647, 1.0
      %v695 = vadd.f32 %v649, 1.0
      %v696 = vadd.f32 %v651, 1.0
      %v697 = vadd.f32 %v653, 1.0
      %v698 = vadd.f32 %v655, 1.0
      %v699 = vadd.f32 %v657, 1.0
      %v700 = vadd.f32 %v659, 1.0
      %v701 = vadd.f32 %v661, 1.0
      %v702 = vadd.f32 %v663, 1.0
      %v703 = vadd.f32 %v665, 1.0
      %v704 = vadd.f32 %v667, 1.0
      %v705 = vadd.f32 %v669, 1.0
      %v706 = vadd.f32 %v671, 1.0
      %v707 = vadd.f32 %v673, 1.0
      %v708 = vadd.f32 %v675, 1.0
      %v709 = vadd.f32 %v677, 1.0
      %v710 = vrcp.pop %v678
      %v711 = vmul.f32 %v678, %v710
      %v712 = vsub.f32 1.0, %v711
      %v713 = vmul.f32 %v710, %v712
      %v714 = vadd.f32 %v710, %v713
      %vm715 = vweird.f32 %v678
      %vm716 = vweird.f32 %v710
      %vm717 = vmor %vm715, %vm716
      %v718 = vsel %vm717, %v710, %v714
      %v719 = vand.u32 2147483647, %v678
      %vm720 = vcmp.eq.f32.partialorder %v719, 8.507059e+37
      %v721 = vand.u32 %v678, 2147483648
      %v722 = vor.u32 1.1754944e-38, %v721
      %v723 = vsel %vm720, %v722, %v718
      %v724 = vmul.f32 1.0, %v723
      %v725 = vrcp.pop %v679
      %v726 = vmul.f32 %v679, %v725
      %v727 = vsub.f32 1.0, %v726
      %v728 = vmul.f32 %v725, %v727
      %v729 = vadd.f32 %v725, %v728
      %vm730 = vweird.f32 %v679
      %vm731 = vweird.f32 %v725
      %vm732 = vmor %vm730, %vm731
      %v733 = vsel %vm732, %v725, %v729
      %v734 = vand.u32 2147483647, %v679
      %vm735 = vcmp.eq.f32.partialorder %v734, 8.507059e+37
      %v736 = vand.u32 %v679, 2147483648
      %v737 = vor.u32 1.1754944e-38, %v736
      %v738 = vsel %vm735, %v737, %v733
      %v739 = vmul.f32 1.0, %v738
      %v740 = vrcp.pop %v680
      %v741 = vmul.f32 %v680, %v740
      %v742 = vsub.f32 1.0, %v741
      %v743 = vmul.f32 %v740, %v742
      %v744 = vadd.f32 %v740, %v743
      %vm745 = vweird.f32 %v680
      %vm746 = vweird.f32 %v740
      %vm747 = vmor %vm745, %vm746
      %v748 = vsel %vm747, %v740, %v744
      %v749 = vand.u32 2147483647, %v680
      %vm750 = vcmp.eq.f32.partialorder %v749, 8.507059e+37
      %v751 = vand.u32 %v680, 2147483648
      %v752 = vor.u32 1.1754944e-38, %v751
      %v753 = vsel %vm750, %v752, %v748
      %v754 = vmul.f32 1.0, %v753
      %v755 = vrcp.pop %v681
      %v756 = vmul.f32 %v681, %v755
      %v757 = vsub.f32 1.0, %v756
      %v758 = vmul.f32 %v755, %v757
      %v759 = vadd.f32 %v755, %v758
      %vm760 = vweird.f32 %v681
      %vm761 = vweird.f32 %v755
      %vm762 = vmor %vm760, %vm761
      %v763 = vsel %vm762, %v755, %v759
      %v764 = vand.u32 2147483647, %v681
      %vm765 = vcmp.eq.f32.partialorder %v764, 8.507059e+37
      %v766 = vand.u32 %v681, 2147483648
      %v767 = vor.u32 1.1754944e-38, %v766
      %v768 = vsel %vm765, %v767, %v763
      %v769 = vmul.f32 1.0, %v768
      %v770 = vrcp.pop %v682
      %v771 = vmul.f32 %v682, %v770
      %v772 = vsub.f32 1.0, %v771
      %v773 = vmul.f32 %v770, %v772
      %v774 = vadd.f32 %v770, %v773
      %vm775 = vweird.f32 %v682
      %vm776 = vweird.f32 %v770
      %vm777 = vmor %vm775, %vm776
      %v778 = vsel %vm777, %v770, %v774
      %v779 = vand.u32 2147483647, %v682
      %vm780 = vcmp.eq.f32.partialorder %v779, 8.507059e+37
      %v781 = vand.u32 %v682, 2147483648
      %v782 = vor.u32 1.1754944e-38, %v781
      %v783 = vsel %vm780, %v782, %v778
      %v784 = vmul.f32 1.0, %v783
      %v785 = vrcp.pop %v683
      %v786 = vmul.f32 %v683, %v785
      %v787 = vsub.f32 1.0, %v786
      %v788 = vmul.f32 %v785, %v787
      %v789 = vadd.f32 %v785, %v788
      %vm790 = vweird.f32 %v683
      %vm791 = vweird.f32 %v785
      %vm792 = vmor %vm790, %vm791
      %v793 = vsel %vm792, %v785, %v789
      %v794 = vand.u32 2147483647, %v683
      %vm795 = vcmp.eq.f32.partialorder %v794, 8.507059e+37
      %v796 = vand.u32 %v683, 2147483648
      %v797 = vor.u32 1.1754944e-38, %v796
      %v798 = vsel %vm795, %v797, %v793
      %v799 = vmul.f32 1.0, %v798
      %v800 = vrcp.pop %v684
      %v801 = vmul.f32 %v684, %v800
      %v802 = vsub.f32 1.0, %v801
      %v803 = vmul.f32 %v800, %v802
      %v804 = vadd.f32 %v800, %v803
      %vm805 = vweird.f32 %v684
      %vm806 = vweird.f32 %v800
      %vm807 = vmor %vm805, %vm806
      %v808 = vsel %vm807, %v800, %v804
      %v809 = vand.u32 2147483647, %v684
      %vm810 = vcmp.eq.f32.partialorder %v809, 8.507059e+37
      %v811 = vand.u32 %v684, 2147483648
      %v812 = vor.u32 1.1754944e-38, %v811
      %v813 = vsel %vm810, %v812, %v808
      %v814 = vmul.f32 1.0, %v813
      %v815 = vrcp.pop %v685
      %v816 = vmul.f32 %v685, %v815
      %v817 = vsub.f32 1.0, %v816
      %v818 = vmul.f32 %v815, %v817
      %v819 = vadd.f32 %v815, %v818
      %vm820 = vweird.f32 %v685
      %vm821 = vweird.f32 %v815
      %vm822 = vmor %vm820, %vm821
      %v823 = vsel %vm822, %v815, %v819
      %v824 = vand.u32 2147483647, %v685
      %vm825 = vcmp.eq.f32.partialorder %v824, 8.507059e+37
      %v826 = vand.u32 %v685, 2147483648
      %v827 = vor.u32 1.1754944e-38, %v826
      %v828 = vsel %vm825, %v827, %v823
      %v829 = vmul.f32 1.0, %v828
      %v830 = vrcp.pop %v686
      %v831 = vmul.f32 %v686, %v830
      %v832 = vsub.f32 1.0, %v831
      %v833 = vmul.f32 %v830, %v832
      %v834 = vadd.f32 %v830, %v833
      %vm835 = vweird.f32 %v686
      %vm836 = vweird.f32 %v830
      %vm837 = vmor %vm835, %vm836
      %v838 = vsel %vm837, %v830, %v834
      %v839 = vand.u32 2147483647, %v686
      %vm840 = vcmp.eq.f32.partialorder %v839, 8.507059e+37
      %v841 = vand.u32 %v686, 2147483648
      %v842 = vor.u32 1.1754944e-38, %v841
      %v843 = vsel %vm840, %v842, %v838
      %v844 = vmul.f32 1.0, %v843
      %v845 = vrcp.pop %v687
      %v846 = vmul.f32 %v687, %v845
      %v847 = vsub.f32 1.0, %v846
      %v848 = vmul.f32 %v845, %v847
      %v849 = vadd.f32 %v845, %v848
      %vm850 = vweird.f32 %v687
      %vm851 = vweird.f32 %v845
      %vm852 = vmor %vm850, %vm851
      %v853 = vsel %vm852, %v845, %v849
      %v854 = vand.u32 2147483647, %v687
      %vm855 = vcmp.eq.f32.partialorder %v854, 8.507059e+37
      %v856 = vand.u32 %v687, 2147483648
      %v857 = vor.u32 1.1754944e-38, %v856
      %v858 = vsel %vm855, %v857, %v853
      %v859 = vmul.f32 1.0, %v858
      %v860 = vrcp.pop %v688
      %v861 = vmul.f32 %v688, %v860
      %v862 = vsub.f32 1.0, %v861
      %v863 = vmul.f32 %v860, %v862
      %v864 = vadd.f32 %v860, %v863
      %vm865 = vweird.f32 %v688
      %vm866 = vweird.f32 %v860
      %vm867 = vmor %vm865, %vm866
      %v868 = vsel %vm867, %v860, %v864
      %v869 = vand.u32 2147483647, %v688
      %vm870 = vcmp.eq.f32.partialorder %v869, 8.507059e+37
      %v871 = vand.u32 %v688, 2147483648
      %v872 = vor.u32 1.1754944e-38, %v871
      %v873 = vsel %vm870, %v872, %v868
      %v874 = vmul.f32 1.0, %v873
      %v875 = vrcp.pop %v689
      %v876 = vmul.f32 %v689, %v875
      %v877 = vsub.f32 1.0, %v876
      %v878 = vmul.f32 %v875, %v877
      %v879 = vadd.f32 %v875, %v878
      %vm880 = vweird.f32 %v689
      %vm881 = vweird.f32 %v875
      %vm882 = vmor %vm880, %vm881
      %v883 = vsel %vm882, %v875, %v879
      %v884 = vand.u32 2147483647, %v689
      %vm885 = vcmp.eq.f32.partialorder %v884, 8.507059e+37
      %v886 = vand.u32 %v689, 2147483648
      %v887 = vor.u32 1.1754944e-38, %v886
      %v888 = vsel %vm885, %v887, %v883
      %v889 = vmul.f32 1.0, %v888
      %v890 = vrcp.pop %v690
      %v891 = vmul.f32 %v690, %v890
      %v892 = vsub.f32 1.0, %v891
      %v893 = vmul.f32 %v890, %v892
      %v894 = vadd.f32 %v890, %v893
      %vm895 = vweird.f32 %v690
      %vm896 = vweird.f32 %v890
      %vm897 = vmor %vm895, %vm896
      %v898 = vsel %vm897, %v890, %v894
      %v899 = vand.u32 2147483647, %v690
      %vm900 = vcmp.eq.f32.partialorder %v899, 8.507059e+37
      %v901 = vand.u32 %v690, 2147483648
      %v902 = vor.u32 1.1754944e-38, %v901
      %v903 = vsel %vm900, %v902, %v898
      %v904 = vmul.f32 1.0, %v903
      %v905 = vrcp.pop %v691
      %v906 = vmul.f32 %v691, %v905
      %v907 = vsub.f32 1.0, %v906
      %v908 = vmul.f32 %v905, %v907
      %v909 = vadd.f32 %v905, %v908
      %vm910 = vweird.f32 %v691
      %vm911 = vweird.f32 %v905
      %vm912 = vmor %vm910, %vm911
      %v913 = vsel %vm912, %v905, %v909
      %v914 = vand.u32 2147483647, %v691
      %vm915 = vcmp.eq.f32.partialorder %v914, 8.507059e+37
      %v916 = vand.u32 %v691, 2147483648
      %v917 = vor.u32 1.1754944e-38, %v916
      %v918 = vsel %vm915, %v917, %v913
      %v919 = vmul.f32 1.0, %v918
      %v920 = vrcp.pop %v692
      %v921 = vmul.f32 %v692, %v920
      %v922 = vsub.f32 1.0, %v921
      %v923 = vmul.f32 %v920, %v922
      %v924 = vadd.f32 %v920, %v923
      %vm925 = vweird.f32 %v692
      %vm926 = vweird.f32 %v920
      %vm927 = vmor %vm925, %vm926
      %v928 = vsel %vm927, %v920, %v924
      %v929 = vand.u32 2147483647, %v692
      %vm930 = vcmp.eq.f32.partialorder %v929, 8.507059e+37
      %v931 = vand.u32 %v692, 2147483648
      %v932 = vor.u32 1.1754944e-38, %v931
      %v933 = vsel %vm930, %v932, %v928
      %v934 = vmul.f32 1.0, %v933
      %v935 = vrcp.pop %v693
      %v936 = vmul.f32 %v693, %v935
      %v937 = vsub.f32 1.0, %v936
      %v938 = vmul.f32 %v935, %v937
      %v939 = vadd.f32 %v935, %v938
      %vm940 = vweird.f32 %v693
      %vm941 = vweird.f32 %v935
      %vm942 = vmor %vm940, %vm941
      %v943 = vsel %vm942, %v935, %v939
      %v944 = vand.u32 2147483647, %v693
      %vm945 = vcmp.eq.f32.partialorder %v944, 8.507059e+37
      %v946 = vand.u32 %v693, 2147483648
      %v947 = vor.u32 1.1754944e-38, %v946
      %v948 = vsel %vm945, %v947, %v943
      %v949 = vmul.f32 1.0, %v948
      %v950 = vrcp.pop %v694
      %v951 = vmul.f32 %v694, %v950
      %v952 = vsub.f32 1.0, %v951
      %v953 = vmul.f32 %v950, %v952
      %v954 = vadd.f32 %v950, %v953
      %vm955 = vweird.f32 %v694
      %vm956 = vweird.f32 %v950
      %vm957 = vmor %vm955, %vm956
      %v958 = vsel %vm957, %v950, %v954
      %v959 = vand.u32 2147483647, %v694
      %vm960 = vcmp.eq.f32.partialorder %v959, 8.507059e+37
      %v961 = vand.u32 %v694, 2147483648
      %v962 = vor.u32 1.1754944e-38, %v961
      %v963 = vsel %vm960, %v962, %v958
      %v964 = vmul.f32 1.0, %v963
      %v965 = vrcp.pop %v695
      %v966 = vmul.f32 %v695, %v965
      %v967 = vsub.f32 1.0, %v966
      %v968 = vmul.f32 %v965, %v967
      %v969 = vadd.f32 %v965, %v968
      %vm970 = vweird.f32 %v695
      %vm971 = vweird.f32 %v965
      %vm972 = vmor %vm970, %vm971
      %v973 = vsel %vm972, %v965, %v969
      %v974 = vand.u32 2147483647, %v695
      %vm975 = vcmp.eq.f32.partialorder %v974, 8.507059e+37
      %v976 = vand.u32 %v695, 2147483648
      %v977 = vor.u32 1.1754944e-38, %v976
      %v978 = vsel %vm975, %v977, %v973
      %v979 = vmul.f32 1.0, %v978
      %v980 = vrcp.pop %v696
      %v981 = vmul.f32 %v696, %v980
      %v982 = vsub.f32 1.0, %v981
      %v983 = vmul.f32 %v980, %v982
      %v984 = vadd.f32 %v980, %v983
      %vm985 = vweird.f32 %v696
      %vm986 = vweird.f32 %v980
      %vm987 = vmor %vm985, %vm986
      %v988 = vsel %vm987, %v980, %v984
      %v989 = vand.u32 2147483647, %v696
      %vm990 = vcmp.eq.f32.partialorder %v989, 8.507059e+37
      %v991 = vand.u32 %v696, 2147483648
      %v992 = vor.u32 1.1754944e-38, %v991
      %v993 = vsel %vm990, %v992, %v988
      %v994 = vmul.f32 1.0, %v993
      %v995 = vrcp.pop %v697
      %v996 = vmul.f32 %v697, %v995
      %v997 = vsub.f32 1.0, %v996
      %v998 = vmul.f32 %v995, %v997
      %v999 = vadd.f32 %v995, %v998
      %vm1000 = vweird.f32 %v697
      %vm1001 = vweird.f32 %v995
      %vm1002 = vmor %vm1000, %vm1001
      %v1003 = vsel %vm1002, %v995, %v999
      %v1004 = vand.u32 2147483647, %v697
      %vm1005 = vcmp.eq.f32.partialorder %v1004, 8.507059e+37
      %v1006 = vand.u32 %v697, 2147483648
      %v1007 = vor.u32 1.1754944e-38, %v1006
      %v1008 = vsel %vm1005, %v1007, %v1003
      %v1009 = vmul.f32 1.0, %v1008
      %v1010 = vrcp.pop %v698
      %v1011 = vmul.f32 %v698, %v1010
      %v1012 = vsub.f32 1.0, %v1011
      %v1013 = vmul.f32 %v1010, %v1012
      %v1014 = vadd.f32 %v1010, %v1013
      %vm1015 = vweird.f32 %v698
      %vm1016 = vweird.f32 %v1010
      %vm1017 = vmor %vm1015, %vm1016
      %v1018 = vsel %vm1017, %v1010, %v1014
      %v1019 = vand.u32 2147483647, %v698
      %vm1020 = vcmp.eq.f32.partialorder %v1019, 8.507059e+37
      %v1021 = vand.u32 %v698, 2147483648
      %v1022 = vor.u32 1.1754944e-38, %v1021
      %v1023 = vsel %vm1020, %v1022, %v1018
      %v1024 = vmul.f32 1.0, %v1023
      %v1025 = vrcp.pop %v699
      %v1026 = vmul.f32 %v699, %v1025
      %v1027 = vsub.f32 1.0, %v1026
      %v1028 = vmul.f32 %v1025, %v1027
      %v1029 = vadd.f32 %v1025, %v1028
      %vm1030 = vweird.f32 %v699
      %vm1031 = vweird.f32 %v1025
      %vm1032 = vmor %vm1030, %vm1031
      %v1033 = vsel %vm1032, %v1025, %v1029
      %v1034 = vand.u32 2147483647, %v699
      %vm1035 = vcmp.eq.f32.partialorder %v1034, 8.507059e+37
      %v1036 = vand.u32 %v699, 2147483648
      %v1037 = vor.u32 1.1754944e-38, %v1036
      %v1038 = vsel %vm1035, %v1037, %v1033
      %v1039 = vmul.f32 1.0, %v1038
      %v1040 = vrcp.pop %v700
      %v1041 = vmul.f32 %v700, %v1040
      %v1042 = vsub.f32 1.0, %v1041
      %v1043 = vmul.f32 %v1040, %v1042
      %v1044 = vadd.f32 %v1040, %v1043
      %vm1045 = vweird.f32 %v700
      %vm1046 = vweird.f32 %v1040
      %vm1047 = vmor %vm1045, %vm1046
      %v1048 = vsel %vm1047, %v1040, %v1044
      %v1049 = vand.u32 2147483647, %v700
      %vm1050 = vcmp.eq.f32.partialorder %v1049, 8.507059e+37
      %v1051 = vand.u32 %v700, 2147483648
      %v1052 = vor.u32 1.1754944e-38, %v1051
      %v1053 = vsel %vm1050, %v1052, %v1048
      %v1054 = vmul.f32 1.0, %v1053
      %v1055 = vrcp.pop %v701
      %v1056 = vmul.f32 %v701, %v1055
      %v1057 = vsub.f32 1.0, %v1056
      %v1058 = vmul.f32 %v1055, %v1057
      %v1059 = vadd.f32 %v1055, %v1058
      %vm1060 = vweird.f32 %v701
      %vm1061 = vweird.f32 %v1055
      %vm1062 = vmor %vm1060, %vm1061
      %v1063 = vsel %vm1062, %v1055, %v1059
      %v1064 = vand.u32 2147483647, %v701
      %vm1065 = vcmp.eq.f32.partialorder %v1064, 8.507059e+37
      %v1066 = vand.u32 %v701, 2147483648
      %v1067 = vor.u32 1.1754944e-38, %v1066
      %v1068 = vsel %vm1065, %v1067, %v1063
      %v1069 = vmul.f32 1.0, %v1068
      %v1070 = vrcp.pop %v702
      %v1071 = vmul.f32 %v702, %v1070
      %v1072 = vsub.f32 1.0, %v1071
      %v1073 = vmul.f32 %v1070, %v1072
      %v1074 = vadd.f32 %v1070, %v1073
      %vm1075 = vweird.f32 %v702
      %vm1076 = vweird.f32 %v1070
      %vm1077 = vmor %vm1075, %vm1076
      %v1078 = vsel %vm1077, %v1070, %v1074
      %v1079 = vand.u32 2147483647, %v702
      %vm1080 = vcmp.eq.f32.partialorder %v1079, 8.507059e+37
      %v1081 = vand.u32 %v702, 2147483648
      %v1082 = vor.u32 1.1754944e-38, %v1081
      %v1083 = vsel %vm1080, %v1082, %v1078
      %v1084 = vmul.f32 1.0, %v1083
      %v1085 = vrcp.pop %v703
      %v1086 = vmul.f32 %v703, %v1085
      %v1087 = vsub.f32 1.0, %v1086
      %v1088 = vmul.f32 %v1085, %v1087
      %v1089 = vadd.f32 %v1085, %v1088
      %vm1090 = vweird.f32 %v703
      %vm1091 = vweird.f32 %v1085
      %vm1092 = vmor %vm1090, %vm1091
      %v1093 = vsel %vm1092, %v1085, %v1089
      %v1094 = vand.u32 2147483647, %v703
      %vm1095 = vcmp.eq.f32.partialorder %v1094, 8.507059e+37
      %v1096 = vand.u32 %v703, 2147483648
      %v1097 = vor.u32 1.1754944e-38, %v1096
      %v1098 = vsel %vm1095, %v1097, %v1093
      %v1099 = vmul.f32 1.0, %v1098
      %v1100 = vrcp.pop %v704
      %v1101 = vmul.f32 %v704, %v1100
      %v1102 = vsub.f32 1.0, %v1101
      %v1103 = vmul.f32 %v1100, %v1102
      %v1104 = vadd.f32 %v1100, %v1103
      %vm1105 = vweird.f32 %v704
      %vm1106 = vweird.f32 %v1100
      %vm1107 = vmor %vm1105, %vm1106
      %v1108 = vsel %vm1107, %v1100, %v1104
      %v1109 = vand.u32 2147483647, %v704
      %vm1110 = vcmp.eq.f32.partialorder %v1109, 8.507059e+37
      %v1111 = vand.u32 %v704, 2147483648
      %v1112 = vor.u32 1.1754944e-38, %v1111
      %v1113 = vsel %vm1110, %v1112, %v1108
      %v1114 = vmul.f32 1.0, %v1113
      %v1115 = vrcp.pop %v705
      %v1116 = vmul.f32 %v705, %v1115
      %v1117 = vsub.f32 1.0, %v1116
      %v1118 = vmul.f32 %v1115, %v1117
      %v1119 = vadd.f32 %v1115, %v1118
      %vm1120 = vweird.f32 %v705
      %vm1121 = vweird.f32 %v1115
      %vm1122 = vmor %vm1120, %vm1121
      %v1123 = vsel %vm1122, %v1115, %v1119
      %v1124 = vand.u32 2147483647, %v705
      %vm1125 = vcmp.eq.f32.partialorder %v1124, 8.507059e+37
      %v1126 = vand.u32 %v705, 2147483648
      %v1127 = vor.u32 1.1754944e-38, %v1126
      %v1128 = vsel %vm1125, %v1127, %v1123
      %v1129 = vmul.f32 1.0, %v1128
      %v1130 = vrcp.pop %v706
      %v1131 = vmul.f32 %v706, %v1130
      %v1132 = vsub.f32 1.0, %v1131
      %v1133 = vmul.f32 %v1130, %v1132
      %v1134 = vadd.f32 %v1130, %v1133
      %vm1135 = vweird.f32 %v706
      %vm1136 = vweird.f32 %v1130
      %vm1137 = vmor %vm1135, %vm1136
      %v1138 = vsel %vm1137, %v1130, %v1134
      %v1139 = vand.u32 2147483647, %v706
      %vm1140 = vcmp.eq.f32.partialorder %v1139, 8.507059e+37
      %v1141 = vand.u32 %v706, 2147483648
      %v1142 = vor.u32 1.1754944e-38, %v1141
      %v1143 = vsel %vm1140, %v1142, %v1138
      %v1144 = vmul.f32 1.0, %v1143
      %v1145 = vrcp.pop %v707
      %v1146 = vmul.f32 %v707, %v1145
      %v1147 = vsub.f32 1.0, %v1146
      %v1148 = vmul.f32 %v1145, %v1147
      %v1149 = vadd.f32 %v1145, %v1148
      %vm1150 = vweird.f32 %v707
      %vm1151 = vweird.f32 %v1145
      %vm1152 = vmor %vm1150, %vm1151
      %v1153 = vsel %vm1152, %v1145, %v1149
      %v1154 = vand.u32 2147483647, %v707
      %vm1155 = vcmp.eq.f32.partialorder %v1154, 8.507059e+37
      %v1156 = vand.u32 %v707, 2147483648
      %v1157 = vor.u32 1.1754944e-38, %v1156
      %v1158 = vsel %vm1155, %v1157, %v1153
      %v1159 = vmul.f32 1.0, %v1158
      %v1160 = vrcp.pop %v708
      %v1161 = vmul.f32 %v708, %v1160
      %v1162 = vsub.f32 1.0, %v1161
      %v1163 = vmul.f32 %v1160, %v1162
      %v1164 = vadd.f32 %v1160, %v1163
      %vm1165 = vweird.f32 %v708
      %vm1166 = vweird.f32 %v1160
      %vm1167 = vmor %vm1165, %vm1166
      %v1168 = vsel %vm1167, %v1160, %v1164
      %v1169 = vand.u32 2147483647, %v708
      %vm1170 = vcmp.eq.f32.partialorder %v1169, 8.507059e+37
      %v1171 = vand.u32 %v708, 2147483648
      %v1172 = vor.u32 1.1754944e-38, %v1171
      %v1173 = vsel %vm1170, %v1172, %v1168
      %v1174 = vmul.f32 1.0, %v1173
      %v1175 = vrcp.pop %v709
      %v1176 = vmul.f32 %v709, %v1175
      %v1177 = vsub.f32 1.0, %v1176
      %v1178 = vmul.f32 %v1175, %v1177
      %v1179 = vadd.f32 %v1175, %v1178
      %vm1180 = vweird.f32 %v709
      %vm1181 = vweird.f32 %v1175
      %vm1182 = vmor %vm1180, %vm1181
      %v1183 = vsel %vm1182, %v1175, %v1179
      %v1184 = vand.u32 2147483647, %v709
      %vm1185 = vcmp.eq.f32.partialorder %v1184, 8.507059e+37
      %v1186 = vand.u32 %v709, 2147483648
      %v1187 = vor.u32 1.1754944e-38, %v1186
      %v1188 = vsel %vm1185, %v1187, %v1183
      %v1189 = vmul.f32 1.0, %v1188
      %vm1190 = vcmp.ge.f32.partialorder %v414, 0.0
      %vm1191 = vcmp.ge.f32.partialorder %v416, 0.0
      %vm1192 = vcmp.ge.f32.partialorder %v419, 0.0
      %vm1193 = vcmp.ge.f32.partialorder %v421, 0.0
      %vm1194 = vcmp.ge.f32.partialorder %v424, 0.0
      %vm1195 = vcmp.ge.f32.partialorder %v426, 0.0
      %vm1196 = vcmp.ge.f32.partialorder %v429, 0.0
      %vm1197 = vcmp.ge.f32.partialorder %v431, 0.0
      %vm1198 = vcmp.ge.f32.partialorder %v434, 0.0
      %vm1199 = vcmp.ge.f32.partialorder %v436, 0.0
      %vm1200 = vcmp.ge.f32.partialorder %v439, 0.0
      %vm1201 = vcmp.ge.f32.partialorder %v441, 0.0
      %vm1202 = vcmp.ge.f32.partialorder %v444, 0.0
      %vm1203 = vcmp.ge.f32.partialorder %v446, 0.0
      %vm1204 = vcmp.ge.f32.partialorder %v449, 0.0
      %vm1205 = vcmp.ge.f32.partialorder %v451, 0.0
      %vm1206 = vcmp.ge.f32.partialorder %v454, 0.0
      %vm1207 = vcmp.ge.f32.partialorder %v456, 0.0
      %vm1208 = vcmp.ge.f32.partialorder %v459, 0.0
      %vm1209 = vcmp.ge.f32.partialorder %v461, 0.0
      %vm1210 = vcmp.ge.f32.partialorder %v464, 0.0
      %vm1211 = vcmp.ge.f32.partialorder %v466, 0.0
      %vm1212 = vcmp.ge.f32.partialorder %v469, 0.0
      %vm1213 = vcmp.ge.f32.partialorder %v471, 0.0
      %vm1214 = vcmp.ge.f32.partialorder %v474, 0.0
      %vm1215 = vcmp.ge.f32.partialorder %v476, 0.0
      %vm1216 = vcmp.ge.f32.partialorder %v479, 0.0
      %vm1217 = vcmp.ge.f32.partialorder %v481, 0.0
      %vm1218 = vcmp.ge.f32.partialorder %v484, 0.0
      %vm1219 = vcmp.ge.f32.partialorder %v486, 0.0
      %vm1220 = vcmp.ge.f32.partialorder %v489, 0.0
      %vm1221 = vcmp.ge.f32.partialorder %v491, 0.0
      %v1222 = vmul.f32 %v414, 0.2
      %v1223 = vmul.f32 %v416, 0.2
      %v1224 = vmul.f32 %v419, 0.2
      %v1225 = vmul.f32 %v421, 0.2
      %v1226 = vmul.f32 %v424, 0.2
      %v1227 = vmul.f32 %v426, 0.2
      %v1228 = vmul.f32 %v429, 0.2
      %v1229 = vmul.f32 %v431, 0.2
      %v1230 = vmul.f32 %v434, 0.2
      %v1231 = vmul.f32 %v436, 0.2
      %v1232 = vmul.f32 %v439, 0.2
      %v1233 = vmul.f32 %v441, 0.2
      %v1234 = vmul.f32 %v444, 0.2
      %v1235 = vmul.f32 %v446, 0.2
      %v1236 = vmul.f32 %v449, 0.2
      %v1237 = vmul.f32 %v451, 0.2
      %v1238 = vmul.f32 %v454, 0.2
      %v1239 = vmul.f32 %v456, 0.2
      %v1240 = vmul.f32 %v459, 0.2
      %v1241 = vmul.f32 %v461, 0.2
      %v1242 = vmul.f32 %v464, 0.2
      %v1243 = vmul.f32 %v466, 0.2
      %v1244 = vmul.f32 %v469, 0.2
      %v1245 = vmul.f32 %v471, 0.2
      %v1246 = vmul.f32 %v474, 0.2
      %v1247 = vmul.f32 %v476, 0.2
      %v1248 = vmul.f32 %v479, 0.2
      %v1249 = vmul.f32 %v481, 0.2
      %v1250 = vmul.f32 %v484, 0.2
      %v1251 = vmul.f32 %v486, 0.2
      %v1252 = vmul.f32 %v489, 0.2
      %v1253 = vmul.f32 %v491, 0.2
      %v1254 = vsel %vm1190, %v414, %v1222
      %v1255 = vsel %vm1191, %v416, %v1223
      %v1256 = vsel %vm1192, %v419, %v1224
      %v1257 = vsel %vm1193, %v421, %v1225
      %v1258 = vsel %vm1194, %v424, %v1226
      %v1259 = vsel %vm1195, %v426, %v1227
      %v1260 = vsel %vm1196, %v429, %v1228
      %v1261 = vsel %vm1197, %v431, %v1229
      %v1262 = vsel %vm1198, %v434, %v1230
      %v1263 = vsel %vm1199, %v436, %v1231
      %v1264 = vsel %vm1200, %v439, %v1232
      %v1265 = vsel %vm1201, %v441, %v1233
      %v1266 = vsel %vm1202, %v444, %v1234
      %v1267 = vsel %vm1203, %v446, %v1235
      %v1268 = vsel %vm1204, %v449, %v1236
      %v1269 = vsel %vm1205, %v451, %v1237
      %v1270 = vsel %vm1206, %v454, %v1238
      %v1271 = vsel %vm1207, %v456, %v1239
      %v1272 = vsel %vm1208, %v459, %v1240
      %v1273 = vsel %vm1209, %v461, %v1241
      %v1274 = vsel %vm1210, %v464, %v1242
      %v1275 = vsel %vm1211, %v466, %v1243
      %v1276 = vsel %vm1212, %v469, %v1244
      %v1277 = vsel %vm1213, %v471, %v1245
      %v1278 = vsel %vm1214, %v474, %v1246
      %v1279 = vsel %vm1215, %v476, %v1247
      %v1280 = vsel %vm1216, %v479, %v1248
      %v1281 = vsel %vm1217, %v481, %v1249
      %v1282 = vsel %vm1218, %v484, %v1250
      %v1283 = vsel %vm1219, %v486, %v1251
      %v1284 = vsel %vm1220, %v489, %v1252
      %v1285 = vsel %vm1221, %v491, %v1253
      %v1286 = vmul.f32 %v1254, %v724
      %v1287 = vmul.f32 %v1255, %v739
      %v1288 = vmul.f32 %v1256, %v754
      %v1289 = vmul.f32 %v1257, %v769
      %v1290 = vmul.f32 %v1258, %v784
      %v1291 = vmul.f32 %v1259, %v799
      %v1292 = vmul.f32 %v1260, %v814
      %v1293 = vmul.f32 %v1261, %v829
      %v1294 = vmul.f32 %v1262, %v844
      %v1295 = vmul.f32 %v1263, %v859
      %v1296 = vmul.f32 %v1264, %v874
      %v1297 = vmul.f32 %v1265, %v889
      %v1298 = vmul.f32 %v1266, %v904
      %v1299 = vmul.f32 %v1267, %v919
      %v1300 = vmul.f32 %v1268, %v934
      %v1301 = vmul.f32 %v1269, %v949
      %v1302 = vmul.f32 %v1270, %v964
      %v1303 = vmul.f32 %v1271, %v979
      %v1304 = vmul.f32 %v1272, %v994
      %v1305 = vmul.f32 %v1273, %v1009
      %v1306 = vmul.f32 %v1274, %v1024
      %v1307 = vmul.f32 %v1275, %v1039
      %v1308 = vmul.f32 %v1276, %v1054
      %v1309 = vmul.f32 %v1277, %v1069
      %v1310 = vmul.f32 %v1278, %v1084
      %v1311 = vmul.f32 %v1279, %v1099
      %v1312 = vmul.f32 %v1280, %v1114
      %v1313 = vmul.f32 %v1281, %v1129
      %v1314 = vmul.f32 %v1282, %v1144
      %v1315 = vmul.f32 %v1283, %v1159
      %v1316 = vmul.f32 %v1284, %v1174
      %v1317 = vmul.f32 %v1285, %v1189
      %1318 = vst [vmem:[%s172] sm:$0xff] %v1286
      %1319 = vst [vmem:[%s172 + $0x8] sm:$0xff] %v1287
      %1320 = vst [vmem:[%s172 + $0x10] sm:$0xff] %v1288
      %1321 = vst [vmem:[%s172 + $0x18] sm:$0xff] %v1289
      %1322 = vst [vmem:[%s172 + $0x20] sm:$0xff] %v1290
      %1323 = vst [vmem:[%s172 + $0x28] sm:$0xff] %v1291
      %1324 = vst [vmem:[%s172 + $0x30] sm:$0xff] %v1292
      %1325 = vst [vmem:[%s172 + $0x38] sm:$0xff] %v1293
      %1326 = vst [vmem:[%s172 + $0x40] sm:$0xff] %v1294
      %1327 = vst [vmem:[%s172 + $0x48] sm:$0xff] %v1295
      %1328 = vst [vmem:[%s172 + $0x50] sm:$0xff] %v1296
      %1329 = vst [vmem:[%s172 + $0x58] sm:$0xff] %v1297
      %1330 = vst [vmem:[%s172 + $0x60] sm:$0xff] %v1298
      %1331 = vst [vmem:[%s172 + $0x68] sm:$0xff] %v1299
      %1332 = vst [vmem:[%s172 + $0x70] sm:$0xff] %v1300
      %1333 = vst [vmem:[%s172 + $0x78] sm:$0xff] %v1301
      %1334 = vst [vmem:[%s172 + $0x80] sm:$0xff] %v1302
      %1335 = vst [vmem:[%s172 + $0x88] sm:$0xff] %v1303
      %1336 = vst [vmem:[%s172 + $0x90] sm:$0xff] %v1304
      %1337 = vst [vmem:[%s172 + $0x98] sm:$0xff] %v1305
      %1338 = vst [vmem:[%s172 + $0xa0] sm:$0xff] %v1306
      %1339 = vst [vmem:[%s172 + $0xa8] sm:$0xff] %v1307
      %1340 = vst [vmem:[%s172 + $0xb0] sm:$0xff] %v1308
      %1341 = vst [vmem:[%s172 + $0xb8] sm:$0xff] %v1309
      %1342 = vst [vmem:[%s172 + $0xc0] sm:$0xff] %v1310
      %1343 = vst [vmem:[%s172 + $0xc8] sm:$0xff] %v1311
      %1344 = vst [vmem:[%s172 + $0xd0] sm:$0xff] %v1312
      %1345 = vst [vmem:[%s172 + $0xd8] sm:$0xff] %v1313
      %1346 = vst [vmem:[%s172 + $0xe0] sm:$0xff] %v1314
      %1347 = vst [vmem:[%s172 + $0xe8] sm:$0xff] %v1315
      %1348 = vst [vmem:[%s172 + $0xf0] sm:$0xff] %v1316
      %1349 = vst [vmem:[%s172 + $0xf8] sm:$0xff] %v1317
      %s1350 = smul.u32 32, %s14
      %p1351 = scmp.lt.s32.totalorder %s1350, 63
      %s1352 = scalar_select %p1351, %s1350, 63
      %s1353 = smul.addr %s1352, 8
      %s1354 = scalar_lea.vmem %s3, %s1353
      // Predicated region
      $region33: #{_lambda_.44} parent=31 // pred_check
        %p1355 = pneg %p100
      $region34: #{_lambda_.44} parent=31 // pred_check_branch
        %1357 = sbr.rel (%p1355) target = $region36
      $region35: #{_lambda_.44} parent=31 // pred_region
        %s1358 = smul.u32 32, %s14
      $region36: #{_lambda_.44} parent=31 // pred_fallthru
        _
    $region32: #{_lambda_.44} parent=5 // pred_fallthru
      _
    %p1359 = scmp.le.s32.totalorder 2, %s9
    // Predicated region
    $region37: #{_lambda_.44} parent=5 // pred_check
      %p1360 = pneg %p1359
    $region38: #{_lambda_.44} parent=5 // pred_check_branch
      %1362 = sbr.rel (%p1360) target = $region40
    $region39: #{_lambda_.44} parent=5 // pred_region
      %s1363 = ssub.s32 %s9, 2
      // Predicated region
      $region41: #{_lambda_.44} parent=39 // pred_check
        %p1364 = pneg %p106
      $region42: #{_lambda_.44} parent=39 // pred_check_branch
        %1366 = sbr.rel (%p1364) target = $region44
      $region43: #{_lambda_.44} parent=39 // pred_region
        %s1367 = smul.u32 32, %s15
        %p1368 = scmp.lt.s32.totalorder %s1367, 63
        %s1369 = scalar_select %p1368, %s1367, 63
        %s1370 = smul.addr %s1369, 8
        %s1371 = scalar_lea.vmem %s3, %s1370
      $region44: #{_lambda_.44} parent=39 // pred_fallthru
        _
    $region40: #{_lambda_.44} parent=5 // pred_fallthru
      _
  $region6: #{_lambda_.44} parent=0 // loop_footer
    %s13 = sadd.s32 1, %s9
  $region7: #{_lambda_.44} parent=0 // loop_footer_branch
    %8 = sbr.rel target = $region3
  $region8: #{_lambda_.44} parent=0 // loop_exit
    _

// kernel: _lambda_.45
$region0: #{_lambda_.45}
  #allocation0 [shape = 'u32[]', space=smem, size = 0x4, offset = 0x4, fixed_abs, tag = 'smem constant byte address 0x4 - core index']
  #allocation1 [shape = 'u32[72,128]{1,0:T(1,128)}', space=vmem, size = 0x9000, scoped, tag = 'internal scratch']
  %s0 = inlined_call_operand.vmem [shape: bf16[128,128], index: 0, kind: input, shape index: {}]
  %s1 = inlined_call_operand.vmem [shape: bf16[128,256], index: 1, kind: input, shape index: {}]
  %s2 = inlined_call_operand.vmem [shape: f32[1,256], index: 2, kind: input, shape index: {}]
  %s3 = inlined_call_operand.vmem [shape: f32[128,128], index: 3, kind: output, shape index: {}]
  %s4 = sld [smem:[#allocation0]]
  $region22: #{_lambda_.45} parent=0
    _
  %s6 = ssub.s32 1, %s4
  %s7 = scalar_select 0, %s6, %s4
  // Predicated region
  $region2: #{_lambda_.45} parent=0 // pred_check
    _
  $region3: #{_lambda_.45} parent=0 // pred_check_branch
    %9 = sbr.rel (0) target = $region5
  $region4: #{_lambda_.45} parent=0 // pred_region
    _
  $region5: #{_lambda_.45} parent=0 // pred_fallthru
    _
  // Predicated region
  $region6: #{_lambda_.45} parent=0 // pred_check
    _
  $region7: #{_lambda_.45} parent=0 // pred_check_branch
    %11 = sbr.rel (0) target = $region9
  $region8: #{_lambda_.45} parent=0 // pred_region
    _
  $region9: #{_lambda_.45} parent=0 // pred_fallthru
    _
  // Predicated region
  $region10: #{_lambda_.45} parent=0 // pred_check
    _
  $region11: #{_lambda_.45} parent=0 // pred_check_branch
    %13 = sbr.rel (0) target = $region13
  $region12: #{_lambda_.45} parent=0 // pred_region
    _
  $region13: #{_lambda_.45} parent=0 // pred_fallthru
    _
  %v14 = vld [vmem:[%s0] sm:$0xf]
  %v15 = vld [vmem:[%s0 + $0x4] sm:$0xf]
  %v16 = vld [vmem:[%s0 + $0x8] sm:$0xf]
  %v17 = vld [vmem:[%s0 + $0xc] sm:$0xf]
  %v18 = vld [vmem:[%s0 + $0x10] sm:$0xf]
  %v19 = vld [vmem:[%s0 + $0x14] sm:$0xf]
  %v20 = vld [vmem:[%s0 + $0x18] sm:$0xf]
  %v21 = vld [vmem:[%s0 + $0x1c] sm:$0xf]
  %v22 = vld [vmem:[%s0 + $0x20] sm:$0xf]
  %v23 = vld [vmem:[%s0 + $0x24] sm:$0xf]
  %v24 = vld [vmem:[%s0 + $0x28] sm:$0xf]
  %v25 = vld [vmem:[%s0 + $0x2c] sm:$0xf]
  %v26 = vld [vmem:[%s0 + $0x30] sm:$0xf]
  %v27 = vld [vmem:[%s0 + $0x34] sm:$0xf]
  %v28 = vld [vmem:[%s0 + $0x38] sm:$0xf]
  %v29 = vld [vmem:[%s0 + $0x3c] sm:$0xf]
  %v30 = vld [vmem:[%s1] sm:$0xff]
  %v31 = vld [vmem:[%s1 + $0x8] sm:$0xff]
  %v32 = vld [vmem:[%s1 + $0x10] sm:$0xff]
  %v33 = vld [vmem:[%s1 + $0x18] sm:$0xff]
  %v34 = vld [vmem:[%s1 + $0x20] sm:$0xff]
  %v35 = vld [vmem:[%s1 + $0x28] sm:$0xff]
  %v36 = vld [vmem:[%s1 + $0x30] sm:$0xff]
  %v37 = vld [vmem:[%s1 + $0x38] sm:$0xff]
  %v38 = vld [vmem:[%s1 + $0x40] sm:$0xff]
  %v39 = vld [vmem:[%s1 + $0x48] sm:$0xff]
  %v40 = vld [vmem:[%s1 + $0x50] sm:$0xff]
  %v41 = vld [vmem:[%s1 + $0x58] sm:$0xff]
  %v42 = vld [vmem:[%s1 + $0x60] sm:$0xff]
  %v43 = vld [vmem:[%s1 + $0x68] sm:$0xff]
  %v44 = vld [vmem:[%s1 + $0x70] sm:$0xff]
  %v45 = vld [vmem:[%s1 + $0x78] sm:$0xff]
  %v46 = vld [vmem:[%s2] sm:$0x3]
  %v48 = vperm.slane %v46, 0
  %v49 = vperm.slane %v46, 1
  %v68 = vunpack.c.l.b16 %v14
  %v69 = vunpack.c.l.b16 %v15
  %v70 = vunpack.c.l.b16 %v16
  %v71 = vunpack.c.l.b16 %v17
  %v72 = vunpack.c.l.b16 %v18
  %v73 = vunpack.c.l.b16 %v19
  %v74 = vunpack.c.l.b16 %v20
  %v75 = vunpack.c.l.b16 %v21
  %v76 = vunpack.c.l.b16 %v22
  %v77 = vunpack.c.l.b16 %v23
  %v78 = vunpack.c.l.b16 %v24
  %v79 = vunpack.c.l.b16 %v25
  %v80 = vunpack.c.l.b16 %v26
  %v81 = vunpack.c.l.b16 %v27
  %v82 = vunpack.c.l.b16 %v28
  %v83 = vunpack.c.l.b16 %v29
  %v84 = vpack.c.b16 %v69, %v68
  %v85 = vpack.c.b16 %v71, %v70
  %v86 = vpack.c.b16 %v73, %v72
  %v87 = vpack.c.b16 %v75, %v74
  %v88 = vpack.c.b16 %v77, %v76
  %v89 = vpack.c.b16 %v79, %v78
  %v90 = vpack.c.b16 %v81, %v80
  %v91 = vpack.c.b16 %v83, %v82
  %v116 = vunpack.c.l.b16 %v30
  %v117 = vunpack.c.h.b16 %v30
  %v118 = vunpack.c.l.b16 %v31
  %v119 = vunpack.c.h.b16 %v31
  %v120 = vunpack.c.l.b16 %v32
  %v121 = vunpack.c.h.b16 %v32
  %v122 = vunpack.c.l.b16 %v33
  %v123 = vunpack.c.h.b16 %v33
  %v124 = vunpack.c.l.b16 %v34
  %v125 = vunpack.c.h.b16 %v34
  %v126 = vunpack.c.l.b16 %v35
  %v127 = vunpack.c.h.b16 %v35
  %v128 = vunpack.c.l.b16 %v36
  %v129 = vunpack.c.h.b16 %v36
  %v130 = vunpack.c.l.b16 %v37
  %v131 = vunpack.c.h.b16 %v37
  %v132 = vunpack.c.l.b16 %v38
  %v133 = vunpack.c.h.b16 %v38
  %v134 = vunpack.c.l.b16 %v39
  %v135 = vunpack.c.h.b16 %v39
  %v136 = vunpack.c.l.b16 %v40
  %v137 = vunpack.c.h.b16 %v40
  %v138 = vunpack.c.l.b16 %v41
  %v139 = vunpack.c.h.b16 %v41
  %v140 = vunpack.c.l.b16 %v42
  %v141 = vunpack.c.h.b16 %v42
  %v142 = vunpack.c.l.b16 %v43
  %v143 = vunpack.c.h.b16 %v43
  %v144 = vunpack.c.l.b16 %v44
  %v145 = vunpack.c.h.b16 %v44
  %v146 = vunpack.c.l.b16 %v45
  %v147 = vunpack.c.h.b16 %v45
  %v148 = vpack.c.b16 %v118, %v116
  %v149 = vpack.c.b16 %v119, %v117
  %v150 = vpack.c.b16 %v122, %v120
  %v151 = vpack.c.b16 %v123, %v121
  %v152 = vpack.c.b16 %v126, %v124
  %v153 = vpack.c.b16 %v127, %v125
  %v154 = vpack.c.b16 %v130, %v128
  %v155 = vpack.c.b16 %v131, %v129
  %v156 = vpack.c.b16 %v134, %v132
  %v157 = vpack.c.b16 %v135, %v133
  %v158 = vpack.c.b16 %v138, %v136
  %v159 = vpack.c.b16 %v139, %v137
  %v160 = vpack.c.b16 %v142, %v140
  %v161 = vpack.c.b16 %v143, %v141
  %v162 = vpack.c.b16 %v146, %v144
  %v163 = vpack.c.b16 %v147, %v145
  %180 = vmatpush.bf16.msra.mxu0 %v162
  %181 = vmatpush.bf16.msra.mxu0 %v160
  %182 = vmatpush.bf16.msra.mxu0 %v158
  %183 = vmatpush.bf16.msra.mxu0 %v156
  %184 = vmatpush.bf16.msra.mxu0 %v154
  %185 = vmatpush.bf16.msra.mxu0 %v152
  %186 = vmatpush.bf16.msra.mxu0 %v150
  %187 = vmatpush.bf16.msra.mxu0 %v148
  %188 = vmatmul.bf16.gmra.mxu0 %v84
  %v189 = vpop.f32.mrf.mxu0
  %v190 = vadd.f32 %v48, %v189
  %v191 = vpop.f32.mrf.mxu0
  %v192 = vadd.f32 %v48, %v191
  %193 = vmatmul.bf16.gmra.mxu0 %v85
  %v194 = vpop.f32.mrf.mxu0
  %v195 = vadd.f32 %v48, %v194
  %v196 = vpop.f32.mrf.mxu0
  %v197 = vadd.f32 %v48, %v196
  %198 = vmatmul.bf16.gmra.mxu0 %v86
  %v199 = vpop.f32.mrf.mxu0
  %v200 = vadd.f32 %v48, %v199
  %v201 = vpop.f32.mrf.mxu0
  %v202 = vadd.f32 %v48, %v201
  %203 = vmatmul.bf16.gmra.mxu0 %v87
  %v204 = vpop.f32.mrf.mxu0
  %v205 = vadd.f32 %v48, %v204
  %v206 = vpop.f32.mrf.mxu0
  %v207 = vadd.f32 %v48, %v206
  %208 = vmatmul.bf16.gmra.mxu0 %v88
  %v209 = vpop.f32.mrf.mxu0
  %v210 = vadd.f32 %v48, %v209
  %v211 = vpop.f32.mrf.mxu0
  %v212 = vadd.f32 %v48, %v211
  %213 = vmatmul.bf16.gmra.mxu0 %v89
  %v214 = vpop.f32.mrf.mxu0
  %v215 = vadd.f32 %v48, %v214
  %v216 = vpop.f32.mrf.mxu0
  %v217 = vadd.f32 %v48, %v216
  %218 = vmatmul.bf16.gmra.mxu0 %v90
  %v219 = vpop.f32.mrf.mxu0
  %v220 = vadd.f32 %v48, %v219
  %v221 = vpop.f32.mrf.mxu0
  %v222 = vadd.f32 %v48, %v221
  %223 = vmatmul.bf16.gmra.mxu0 %v91
  %v224 = vpop.f32.mrf.mxu0
  %v225 = vadd.f32 %v48, %v224
  %v226 = vpop.f32.mrf.mxu0
  %v227 = vadd.f32 %v48, %v226
  %228 = vdwg.mxu0
  %229 = vmatpush.bf16.msra.mxu0 %v163
  %230 = vmatpush.bf16.msra.mxu0 %v161
  %231 = vmatpush.bf16.msra.mxu0 %v159
  %232 = vmatpush.bf16.msra.mxu0 %v157
  %233 = vmatpush.bf16.msra.mxu0 %v155
  %234 = vmatpush.bf16.msra.mxu0 %v153
  %235 = vmatpush.bf16.msra.mxu0 %v151
  %236 = vmatpush.bf16.msra.mxu0 %v149
  %237 = vmatmul.bf16.gmra.mxu0 %v84
  %v238 = vpop.f32.mrf.mxu0
  %v239 = vadd.f32 %v49, %v238
  %v240 = vpop.f32.mrf.mxu0
  %v241 = vadd.f32 %v49, %v240
  %242 = vmatmul.bf16.gmra.mxu0 %v85
  %v243 = vpop.f32.mrf.mxu0
  %v244 = vadd.f32 %v49, %v243
  %v245 = vpop.f32.mrf.mxu0
  %v246 = vadd.f32 %v49, %v245
  %247 = vmatmul.bf16.gmra.mxu0 %v86
  %v248 = vpop.f32.mrf.mxu0
  %v249 = vadd.f32 %v49, %v248
  %v250 = vpop.f32.mrf.mxu0
  %v251 = vadd.f32 %v49, %v250
  %252 = vmatmul.bf16.gmra.mxu0 %v87
  %v253 = vpop.f32.mrf.mxu0
  %v254 = vadd.f32 %v49, %v253
  %v255 = vpop.f32.mrf.mxu0
  %v256 = vadd.f32 %v49, %v255
  %257 = vmatmul.bf16.gmra.mxu0 %v88
  %v258 = vpop.f32.mrf.mxu0
  %v259 = vadd.f32 %v49, %v258
  %v260 = vpop.f32.mrf.mxu0
  %v261 = vadd.f32 %v49, %v260
  %262 = vmatmul.bf16.gmra.mxu0 %v89
  %v263 = vpop.f32.mrf.mxu0
  %v264 = vadd.f32 %v49, %v263
  %v265 = vpop.f32.mrf.mxu0
  %v266 = vadd.f32 %v49, %v265
  %267 = vmatmul.bf16.gmra.mxu0 %v90
  %v268 = vpop.f32.mrf.mxu0
  %v269 = vadd.f32 %v49, %v268
  %v270 = vpop.f32.mrf.mxu0
  %v271 = vadd.f32 %v49, %v270
  %272 = vmatmul.bf16.gmra.mxu0 %v91
  %v273 = vpop.f32.mrf.mxu0
  %v274 = vadd.f32 %v49, %v273
  %v275 = vpop.f32.mrf.mxu0
  %v276 = vadd.f32 %v49, %v275
  %277 = vdwg.mxu0
  %v278 = vxor.u32 %v239, 2147483648
  %v279 = vxor.u32 %v241, 2147483648
  %v280 = vxor.u32 %v244, 2147483648
  %v281 = vxor.u32 %v246, 2147483648
  %v282 = vxor.u32 %v249, 2147483648
  %v283 = vxor.u32 %v251, 2147483648
  %v284 = vxor.u32 %v254, 2147483648
  %v285 = vxor.u32 %v256, 2147483648
  %v286 = vxor.u32 %v259, 2147483648
  %v287 = vxor.u32 %v261, 2147483648
  %v288 = vxor.u32 %v264, 2147483648
  %v289 = vxor.u32 %v266, 2147483648
  %v290 = vxor.u32 %v269, 2147483648
  %v291 = vxor.u32 %v271, 2147483648
  %v292 = vxor.u32 %v274, 2147483648
  %v293 = vxor.u32 %v276, 2147483648
  %v294 = vmul.f32 %v278, 1.442695
  %v295 = vpow.pop %v294
  %v296 = vmul.f32 %v279, 1.442695
  %v297 = vpow.pop %v296
  %v298 = vmul.f32 %v280, 1.442695
  %v299 = vpow.pop %v298
  %v300 = vmul.f32 %v281, 1.442695
  %v301 = vpow.pop %v300
  %v302 = vmul.f32 %v282, 1.442695
  %v303 = vpow.pop %v302
  %v304 = vmul.f32 %v283, 1.442695
  %v305 = vpow.pop %v304
  %v306 = vmul.f32 %v284, 1.442695
  %v307 = vpow.pop %v306
  %v308 = vmul.f32 %v285, 1.442695
  %v309 = vpow.pop %v308
  %v310 = vmul.f32 %v286, 1.442695
  %v311 = vpow.pop %v310
  %v312 = vmul.f32 %v287, 1.442695
  %v313 = vpow.pop %v312
  %v314 = vmul.f32 %v288, 1.442695
  %v315 = vpow.pop %v314
  %v316 = vmul.f32 %v289, 1.442695
  %v317 = vpow.pop %v316
  %v318 = vmul.f32 %v290, 1.442695
  %v319 = vpow.pop %v318
  %v320 = vmul.f32 %v291, 1.442695
  %v321 = vpow.pop %v320
  %v322 = vmul.f32 %v292, 1.442695
  %v323 = vpow.pop %v322
  %v324 = vmul.f32 %v293, 1.442695
  %v325 = vpow.pop %v324
  %v326 = vadd.f32 %v295, 1.0
  %v327 = vadd.f32 %v297, 1.0
  %v328 = vadd.f32 %v299, 1.0
  %v329 = vadd.f32 %v301, 1.0
  %v330 = vadd.f32 %v303, 1.0
  %v331 = vadd.f32 %v305, 1.0
  %v332 = vadd.f32 %v307, 1.0
  %v333 = vadd.f32 %v309, 1.0
  %v334 = vadd.f32 %v311, 1.0
  %v335 = vadd.f32 %v313, 1.0
  %v336 = vadd.f32 %v315, 1.0
  %v337 = vadd.f32 %v317, 1.0
  %v338 = vadd.f32 %v319, 1.0
  %v339 = vadd.f32 %v321, 1.0
  %v340 = vadd.f32 %v323, 1.0
  %v341 = vadd.f32 %v325, 1.0
  %v342 = vrcp.pop %v326
  %v343 = vmul.f32 %v326, %v342
  %v344 = vsub.f32 1.0, %v343
  %v345 = vmul.f32 %v342, %v344
  %v346 = vadd.f32 %v342, %v345
  %vm347 = vweird.f32 %v326
  %vm348 = vweird.f32 %v342
  %vm349 = vmor %vm347, %vm348
  %v350 = vsel %vm349, %v342, %v346
  %v351 = vand.u32 2147483647, %v326
  %vm352 = vcmp.eq.f32.partialorder %v351, 8.507059e+37
  %v353 = vand.u32 %v326, 2147483648
  %v354 = vor.u32 1.1754944e-38, %v353
  %v355 = vsel %vm352, %v354, %v350
  %v356 = vmul.f32 1.0, %v355
  %v357 = vrcp.pop %v327
  %v358 = vmul.f32 %v327, %v357
  %v359 = vsub.f32 1.0, %v358
  %v360 = vmul.f32 %v357, %v359
  %v361 = vadd.f32 %v357, %v360
  %vm362 = vweird.f32 %v327
  %vm363 = vweird.f32 %v357
  %vm364 = vmor %vm362, %vm363
  %v365 = vsel %vm364, %v357, %v361
  %v366 = vand.u32 2147483647, %v327
  %vm367 = vcmp.eq.f32.partialorder %v366, 8.507059e+37
  %v368 = vand.u32 %v327, 2147483648
  %v369 = vor.u32 1.1754944e-38, %v368
  %v370 = vsel %vm367, %v369, %v365
  %v371 = vmul.f32 1.0, %v370
  %v372 = vrcp.pop %v328
  %v373 = vmul.f32 %v328, %v372
  %v374 = vsub.f32 1.0, %v373
  %v375 = vmul.f32 %v372, %v374
  %v376 = vadd.f32 %v372, %v375
  %vm377 = vweird.f32 %v328
  %vm378 = vweird.f32 %v372
  %vm379 = vmor %vm377, %vm378
  %v380 = vsel %vm379, %v372, %v376
  %v381 = vand.u32 2147483647, %v328
  %vm382 = vcmp.eq.f32.partialorder %v381, 8.507059e+37
  %v383 = vand.u32 %v328, 2147483648
  %v384 = vor.u32 1.1754944e-38, %v383
  %v385 = vsel %vm382, %v384, %v380
  %v386 = vmul.f32 1.0, %v385
  %v387 = vrcp.pop %v329
  %v388 = vmul.f32 %v329, %v387
  %v389 = vsub.f32 1.0, %v388
  %v390 = vmul.f32 %v387, %v389
  %v391 = vadd.f32 %v387, %v390
  %vm392 = vweird.f32 %v329
  %vm393 = vweird.f32 %v387
  %vm394 = vmor %vm392, %vm393
  %v395 = vsel %vm394, %v387, %v391
  %v396 = vand.u32 2147483647, %v329
  %vm397 = vcmp.eq.f32.partialorder %v396, 8.507059e+37
  %v398 = vand.u32 %v329, 2147483648
  %v399 = vor.u32 1.1754944e-38, %v398
  %v400 = vsel %vm397, %v399, %v395
  %v401 = vmul.f32 1.0, %v400
  %v402 = vrcp.pop %v330
  %v403 = vmul.f32 %v330, %v402
  %v404 = vsub.f32 1.0, %v403
  %v405 = vmul.f32 %v402, %v404
  %v406 = vadd.f32 %v402, %v405
  %vm407 = vweird.f32 %v330
  %vm408 = vweird.f32 %v402
  %vm409 = vmor %vm407, %vm408
  %v410 = vsel %vm409, %v402, %v406
  %v411 = vand.u32 2147483647, %v330
  %vm412 = vcmp.eq.f32.partialorder %v411, 8.507059e+37
  %v413 = vand.u32 %v330, 2147483648
  %v414 = vor.u32 1.1754944e-38, %v413
  %v415 = vsel %vm412, %v414, %v410
  %v416 = vmul.f32 1.0, %v415
  %v417 = vrcp.pop %v331
  %v418 = vmul.f32 %v331, %v417
  %v419 = vsub.f32 1.0, %v418
  %v420 = vmul.f32 %v417, %v419
  %v421 = vadd.f32 %v417, %v420
  %vm422 = vweird.f32 %v331
  %vm423 = vweird.f32 %v417
  %vm424 = vmor %vm422, %vm423
  %v425 = vsel %vm424, %v417, %v421
  %v426 = vand.u32 2147483647, %v331
  %vm427 = vcmp.eq.f32.partialorder %v426, 8.507059e+37
  %v428 = vand.u32 %v331, 2147483648
  %v429 = vor.u32 1.1754944e-38, %v428
  %v430 = vsel %vm427, %v429, %v425
  %v431 = vmul.f32 1.0, %v430
  %v432 = vrcp.pop %v332
  %v433 = vmul.f32 %v332, %v432
  %v434 = vsub.f32 1.0, %v433
  %v435 = vmul.f32 %v432, %v434
  %v436 = vadd.f32 %v432, %v435
  %vm437 = vweird.f32 %v332
  %vm438 = vweird.f32 %v432
  %vm439 = vmor %vm437, %vm438
  %v440 = vsel %vm439, %v432, %v436
  %v441 = vand.u32 2147483647, %v332
  %vm442 = vcmp.eq.f32.partialorder %v441, 8.507059e+37
  %v443 = vand.u32 %v332, 2147483648
  %v444 = vor.u32 1.1754944e-38, %v443
  %v445 = vsel %vm442, %v444, %v440
  %v446 = vmul.f32 1.0, %v445
  %v447 = vrcp.pop %v333
  %v448 = vmul.f32 %v333, %v447
  %v449 = vsub.f32 1.0, %v448
  %v450 = vmul.f32 %v447, %v449
  %v451 = vadd.f32 %v447, %v450
  %vm452 = vweird.f32 %v333
  %vm453 = vweird.f32 %v447
  %vm454 = vmor %vm452, %vm453
  %v455 = vsel %vm454, %v447, %v451
  %v456 = vand.u32 2147483647, %v333
  %vm457 = vcmp.eq.f32.partialorder %v456, 8.507059e+37
  %v458 = vand.u32 %v333, 2147483648
  %v459 = vor.u32 1.1754944e-38, %v458
  %v460 = vsel %vm457, %v459, %v455
  %v461 = vmul.f32 1.0, %v460
  %v462 = vrcp.pop %v334
  %v463 = vmul.f32 %v334, %v462
  %v464 = vsub.f32 1.0, %v463
  %v465 = vmul.f32 %v462, %v464
  %v466 = vadd.f32 %v462, %v465
  %vm467 = vweird.f32 %v334
  %vm468 = vweird.f32 %v462
  %vm469 = vmor %vm467, %vm468
  %v470 = vsel %vm469, %v462, %v466
  %v471 = vand.u32 2147483647, %v334
  %vm472 = vcmp.eq.f32.partialorder %v471, 8.507059e+37
  %v473 = vand.u32 %v334, 2147483648
  %v474 = vor.u32 1.1754944e-38, %v473
  %v475 = vsel %vm472, %v474, %v470
  %v476 = vmul.f32 1.0, %v475
  %v477 = vrcp.pop %v335
  %v478 = vmul.f32 %v335, %v477
  %v479 = vsub.f32 1.0, %v478
  %v480 = vmul.f32 %v477, %v479
  %v481 = vadd.f32 %v477, %v480
  %vm482 = vweird.f32 %v335
  %vm483 = vweird.f32 %v477
  %vm484 = vmor %vm482, %vm483
  %v485 = vsel %vm484, %v477, %v481
  %v486 = vand.u32 2147483647, %v335
  %vm487 = vcmp.eq.f32.partialorder %v486, 8.507059e+37
  %v488 = vand.u32 %v335, 2147483648
  %v489 = vor.u32 1.1754944e-38, %v488
  %v490 = vsel %vm487, %v489, %v485
  %v491 = vmul.f32 1.0, %v490
  %v492 = vrcp.pop %v336
  %v493 = vmul.f32 %v336, %v492
  %v494 = vsub.f32 1.0, %v493
  %v495 = vmul.f32 %v492, %v494
  %v496 = vadd.f32 %v492, %v495
  %vm497 = vweird.f32 %v336
  %vm498 = vweird.f32 %v492
  %vm499 = vmor %vm497, %vm498
  %v500 = vsel %vm499, %v492, %v496
  %v501 = vand.u32 2147483647, %v336
  %vm502 = vcmp.eq.f32.partialorder %v501, 8.507059e+37
  %v503 = vand.u32 %v336, 2147483648
  %v504 = vor.u32 1.1754944e-38, %v503
  %v505 = vsel %vm502, %v504, %v500
  %v506 = vmul.f32 1.0, %v505
  %v507 = vrcp.pop %v337
  %v508 = vmul.f32 %v337, %v507
  %v509 = vsub.f32 1.0, %v508
  %v510 = vmul.f32 %v507, %v509
  %v511 = vadd.f32 %v507, %v510
  %vm512 = vweird.f32 %v337
  %vm513 = vweird.f32 %v507
  %vm514 = vmor %vm512, %vm513
  %v515 = vsel %vm514, %v507, %v511
  %v516 = vand.u32 2147483647, %v337
  %vm517 = vcmp.eq.f32.partialorder %v516, 8.507059e+37
  %v518 = vand.u32 %v337, 2147483648
  %v519 = vor.u32 1.1754944e-38, %v518
  %v520 = vsel %vm517, %v519, %v515
  %v521 = vmul.f32 1.0, %v520
  %v522 = vrcp.pop %v338
  %v523 = vmul.f32 %v338, %v522
  %v524 = vsub.f32 1.0, %v523
  %v525 = vmul.f32 %v522, %v524
  %v526 = vadd.f32 %v522, %v525
  %vm527 = vweird.f32 %v338
  %vm528 = vweird.f32 %v522
  %vm529 = vmor %vm527, %vm528
  %v530 = vsel %vm529, %v522, %v526
  %v531 = vand.u32 2147483647, %v338
  %vm532 = vcmp.eq.f32.partialorder %v531, 8.507059e+37
  %v533 = vand.u32 %v338, 2147483648
  %v534 = vor.u32 1.1754944e-38, %v533
  %v535 = vsel %vm532, %v534, %v530
  %v536 = vmul.f32 1.0, %v535
  %v537 = vrcp.pop %v339
  %v538 = vmul.f32 %v339, %v537
  %v539 = vsub.f32 1.0, %v538
  %v540 = vmul.f32 %v537, %v539
  %v541 = vadd.f32 %v537, %v540
  %vm542 = vweird.f32 %v339
  %vm543 = vweird.f32 %v537
  %vm544 = vmor %vm542, %vm543
  %v545 = vsel %vm544, %v537, %v541
  %v546 = vand.u32 2147483647, %v339
  %vm547 = vcmp.eq.f32.partialorder %v546, 8.507059e+37
  %v548 = vand.u32 %v339, 2147483648
  %v549 = vor.u32 1.1754944e-38, %v548
  %v550 = vsel %vm547, %v549, %v545
  %v551 = vmul.f32 1.0, %v550
  %v552 = vrcp.pop %v340
  %v553 = vmul.f32 %v340, %v552
  %v554 = vsub.f32 1.0, %v553
  %v555 = vmul.f32 %v552, %v554
  %v556 = vadd.f32 %v552, %v555
  %vm557 = vweird.f32 %v340
  %vm558 = vweird.f32 %v552
  %vm559 = vmor %vm557, %vm558
  %v560 = vsel %vm559, %v552, %v556
  %v561 = vand.u32 2147483647, %v340
  %vm562 = vcmp.eq.f32.partialorder %v561, 8.507059e+37
  %v563 = vand.u32 %v340, 2147483648
  %v564 = vor.u32 1.1754944e-38, %v563
  %v565 = vsel %vm562, %v564, %v560
  %v566 = vmul.f32 1.0, %v565
  %v567 = vrcp.pop %v341
  %v568 = vmul.f32 %v341, %v567
  %v569 = vsub.f32 1.0, %v568
  %v570 = vmul.f32 %v567, %v569
  %v571 = vadd.f32 %v567, %v570
  %vm572 = vweird.f32 %v341
  %vm573 = vweird.f32 %v567
  %vm574 = vmor %vm572, %vm573
  %v575 = vsel %vm574, %v567, %v571
  %v576 = vand.u32 2147483647, %v341
  %vm577 = vcmp.eq.f32.partialorder %v576, 8.507059e+37
  %v578 = vand.u32 %v341, 2147483648
  %v579 = vor.u32 1.1754944e-38, %v578
  %v580 = vsel %vm577, %v579, %v575
  %v581 = vmul.f32 1.0, %v580
  %vm582 = vcmp.ge.f32.partialorder %v190, 0.0
  %vm583 = vcmp.ge.f32.partialorder %v192, 0.0
  %vm584 = vcmp.ge.f32.partialorder %v195, 0.0
  %vm585 = vcmp.ge.f32.partialorder %v197, 0.0
  %vm586 = vcmp.ge.f32.partialorder %v200, 0.0
  %vm587 = vcmp.ge.f32.partialorder %v202, 0.0
  %vm588 = vcmp.ge.f32.partialorder %v205, 0.0
  %vm589 = vcmp.ge.f32.partialorder %v207, 0.0
  %vm590 = vcmp.ge.f32.partialorder %v210, 0.0
  %vm591 = vcmp.ge.f32.partialorder %v212, 0.0
  %vm592 = vcmp.ge.f32.partialorder %v215, 0.0
  %vm593 = vcmp.ge.f32.partialorder %v217, 0.0
  %vm594 = vcmp.ge.f32.partialorder %v220, 0.0
  %vm595 = vcmp.ge.f32.partialorder %v222, 0.0
  %vm596 = vcmp.ge.f32.partialorder %v225, 0.0
  %vm597 = vcmp.ge.f32.partialorder %v227, 0.0
  %v598 = vmul.f32 %v190, 0.2
  %v599 = vmul.f32 %v192, 0.2
  %v600 = vmul.f32 %v195, 0.2
  %v601 = vmul.f32 %v197, 0.2
  %v602 = vmul.f32 %v200, 0.2
  %v603 = vmul.f32 %v202, 0.2
  %v604 = vmul.f32 %v205, 0.2
  %v605 = vmul.f32 %v207, 0.2
  %v606 = vmul.f32 %v210, 0.2
  %v607 = vmul.f32 %v212, 0.2
  %v608 = vmul.f32 %v215, 0.2
  %v609 = vmul.f32 %v217, 0.2
  %v610 = vmul.f32 %v220, 0.2
  %v611 = vmul.f32 %v222, 0.2
  %v612 = vmul.f32 %v225, 0.2
  %v613 = vmul.f32 %v227, 0.2
  %v614 = vsel %vm582, %v190, %v598
  %v615 = vsel %vm583, %v192, %v599
  %v616 = vsel %vm584, %v195, %v600
  %v617 = vsel %vm585, %v197, %v601
  %v618 = vsel %vm586, %v200, %v602
  %v619 = vsel %vm587, %v202, %v603
  %v620 = vsel %vm588, %v205, %v604
  %v621 = vsel %vm589, %v207, %v605
  %v622 = vsel %vm590, %v210, %v606
  %v623 = vsel %vm591, %v212, %v607
  %v624 = vsel %vm592, %v215, %v608
  %v625 = vsel %vm593, %v217, %v609
  %v626 = vsel %vm594, %v220, %v610
  %v627 = vsel %vm595, %v222, %v611
  %v628 = vsel %vm596, %v225, %v612
  %v629 = vsel %vm597, %v227, %v613
  %v630 = vmul.f32 %v614, %v356
  %v631 = vmul.f32 %v615, %v371
  %v632 = vmul.f32 %v616, %v386
  %v633 = vmul.f32 %v617, %v401
  %v634 = vmul.f32 %v618, %v416
  %v635 = vmul.f32 %v619, %v431
  %v636 = vmul.f32 %v620, %v446
  %v637 = vmul.f32 %v621, %v461
  %v638 = vmul.f32 %v622, %v476
  %v639 = vmul.f32 %v623, %v491
  %v640 = vmul.f32 %v624, %v506
  %v641 = vmul.f32 %v625, %v521
  %v642 = vmul.f32 %v626, %v536
  %v643 = vmul.f32 %v627, %v551
  %v644 = vmul.f32 %v628, %v566
  %v645 = vmul.f32 %v629, %v581
  %646 = vst [vmem:[%s3] sm:$0xff] %v630
  %647 = vst [vmem:[%s3 + $0x8] sm:$0xff] %v631
  %648 = vst [vmem:[%s3 + $0x10] sm:$0xff] %v632
  %649 = vst [vmem:[%s3 + $0x18] sm:$0xff] %v633
  %650 = vst [vmem:[%s3 + $0x20] sm:$0xff] %v634
  %651 = vst [vmem:[%s3 + $0x28] sm:$0xff] %v635
  %652 = vst [vmem:[%s3 + $0x30] sm:$0xff] %v636
  %653 = vst [vmem:[%s3 + $0x38] sm:$0xff] %v637
  %654 = vst [vmem:[%s3 + $0x40] sm:$0xff] %v638
  %655 = vst [vmem:[%s3 + $0x48] sm:$0xff] %v639
  %656 = vst [vmem:[%s3 + $0x50] sm:$0xff] %v640
  %657 = vst [vmem:[%s3 + $0x58] sm:$0xff] %v641
  %658 = vst [vmem:[%s3 + $0x60] sm:$0xff] %v642
  %659 = vst [vmem:[%s3 + $0x68] sm:$0xff] %v643
  %660 = vst [vmem:[%s3 + $0x70] sm:$0xff] %v644
  %661 = vst [vmem:[%s3 + $0x78] sm:$0xff] %v645
  // Predicated region
  $region14: #{_lambda_.45} parent=0 // pred_check
    _
  $region15: #{_lambda_.45} parent=0 // pred_check_branch
    %663 = sbr.rel (0) target = $region17
  $region16: #{_lambda_.45} parent=0 // pred_region
    _
  $region17: #{_lambda_.45} parent=0 // pred_fallthru
    _
  // Predicated region
  $region18: #{_lambda_.45} parent=0 // pred_check
    _
  $region19: #{_lambda_.45} parent=0 // pred_check_branch
    %665 = sbr.rel (0) target = $region21
  $region20: #{_lambda_.45} parent=0 // pred_region
    _
  $region21: #{_lambda_.45} parent=0 // pred_fallthru
    _

// kernel: _lambda_.46
$region0: #{_lambda_.46}
  #allocation0 [shape = 'u32[]', space=smem, size = 0x4, offset = 0x4, fixed_abs, tag = 'smem constant byte address 0x4 - core index']
  #allocation1 [shape = 'u32[72,128]{1,0:T(1,128)}', space=vmem, size = 0x9000, scoped, tag = 'internal scratch']
  %s0 = inlined_call_operand.vmem [shape: bf16[128,256], index: 0, kind: input, shape index: {}]
  %s1 = inlined_call_operand.vmem [shape: bf16[256,256], index: 1, kind: input, shape index: {}]
  %s2 = inlined_call_operand.vmem [shape: f32[1,256], index: 2, kind: input, shape index: {}]
  %s3 = inlined_call_operand.vmem [shape: f32[128,128], index: 3, kind: output, shape index: {}]
  %s4 = sld [smem:[#allocation0]]
  $region22: #{_lambda_.46} parent=0
    _
  %s6 = ssub.s32 1, %s4
  %s7 = scalar_select 0, %s6, %s4
  // Predicated region
  $region2: #{_lambda_.46} parent=0 // pred_check
    _
  $region3: #{_lambda_.46} parent=0 // pred_check_branch
    %9 = sbr.rel (0) target = $region5
  $region4: #{_lambda_.46} parent=0 // pred_region
    _
  $region5: #{_lambda_.46} parent=0 // pred_fallthru
    _
  // Predicated region
  $region6: #{_lambda_.46} parent=0 // pred_check
    _
  $region7: #{_lambda_.46} parent=0 // pred_check_branch
    %11 = sbr.rel (0) target = $region9
  $region8: #{_lambda_.46} parent=0 // pred_region
    _
  $region9: #{_lambda_.46} parent=0 // pred_fallthru
    _
  // Predicated region
  $region10: #{_lambda_.46} parent=0 // pred_check
    _
  $region11: #{_lambda_.46} parent=0 // pred_check_branch
    %13 = sbr.rel (0) target = $region13
  $region12: #{_lambda_.46} parent=0 // pred_region
    _
  $region13: #{_lambda_.46} parent=0 // pred_fallthru
    _
  %v14 = vld [vmem:[%s0] sm:$0xff]
  %v15 = vld [vmem:[%s0 + $0x8] sm:$0xff]
  %v16 = vld [vmem:[%s0 + $0x10] sm:$0xff]
  %v17 = vld [vmem:[%s0 + $0x18] sm:$0xff]
  %v18 = vld [vmem:[%s0 + $0x20] sm:$0xff]
  %v19 = vld [vmem:[%s0 + $0x28] sm:$0xff]
  %v20 = vld [vmem:[%s0 + $0x30] sm:$0xff]
  %v21 = vld [vmem:[%s0 + $0x38] sm:$0xff]
  %v22 = vld [vmem:[%s0 + $0x40] sm:$0xff]
  %v23 = vld [vmem:[%s0 + $0x48] sm:$0xff]
  %v24 = vld [vmem:[%s0 + $0x50] sm:$0xff]
  %v25 = vld [vmem:[%s0 + $0x58] sm:$0xff]
  %v26 = vld [vmem:[%s0 + $0x60] sm:$0xff]
  %v27 = vld [vmem:[%s0 + $0x68] sm:$0xff]
  %v28 = vld [vmem:[%s0 + $0x70] sm:$0xff]
  %v29 = vld [vmem:[%s0 + $0x78] sm:$0xff]
  %v30 = vld [vmem:[%s1] sm:$0xff]
  %v31 = vld [vmem:[%s1 + $0x8] sm:$0xff]
  %v32 = vld [vmem:[%s1 + $0x10] sm:$0xff]
  %v33 = vld [vmem:[%s1 + $0x18] sm:$0xff]
  %v34 = vld [vmem:[%s1 + $0x20] sm:$0xff]
  %v35 = vld [vmem:[%s1 + $0x28] sm:$0xff]
  %v36 = vld [vmem:[%s1 + $0x30] sm:$0xff]
  %v37 = vld [vmem:[%s1 + $0x38] sm:$0xff]
  %v38 = vld [vmem:[%s1 + $0x40] sm:$0xff]
  %v39 = vld [vmem:[%s1 + $0x48] sm:$0xff]
  %v40 = vld [vmem:[%s1 + $0x50] sm:$0xff]
  %v41 = vld [vmem:[%s1 + $0x58] sm:$0xff]
  %v42 = vld [vmem:[%s1 + $0x60] sm:$0xff]
  %v43 = vld [vmem:[%s1 + $0x68] sm:$0xff]
  %v44 = vld [vmem:[%s1 + $0x70] sm:$0xff]
  %v45 = vld [vmem:[%s1 + $0x78] sm:$0xff]
  %v46 = vld [vmem:[%s1 + $0x80] sm:$0xff]
  %v47 = vld [vmem:[%s1 + $0x88] sm:$0xff]
  %v48 = vld [vmem:[%s1 + $0x90] sm:$0xff]
  %v49 = vld [vmem:[%s1 + $0x98] sm:$0xff]
  %v50 = vld [vmem:[%s1 + $0xa0] sm:$0xff]
  %v51 = vld [vmem:[%s1 + $0xa8] sm:$0xff]
  %v52 = vld [vmem:[%s1 + $0xb0] sm:$0xff]
  %v53 = vld [vmem:[%s1 + $0xb8] sm:$0xff]
  %v54 = vld [vmem:[%s1 + $0xc0] sm:$0xff]
  %v55 = vld [vmem:[%s1 + $0xc8] sm:$0xff]
  %v56 = vld [vmem:[%s1 + $0xd0] sm:$0xff]
  %v57 = vld [vmem:[%s1 + $0xd8] sm:$0xff]
  %v58 = vld [vmem:[%s1 + $0xe0] sm:$0xff]
  %v59 = vld [vmem:[%s1 + $0xe8] sm:$0xff]
  %v60 = vld [vmem:[%s1 + $0xf0] sm:$0xff]
  %v61 = vld [vmem:[%s1 + $0xf8] sm:$0xff]
  %v62 = vld [vmem:[%s2] sm:$0x3]
  %v64 = vperm.slane %v62, 0
  %v65 = vperm.slane %v62, 1
  %v84 = vunpack.c.l.b16 %v14
  %v85 = vunpack.c.h.b16 %v14
  %v86 = vunpack.c.l.b16 %v15
  %v87 = vunpack.c.h.b16 %v15
  %v88 = vunpack.c.l.b16 %v16
  %v89 = vunpack.c.h.b16 %v16
  %v90 = vunpack.c.l.b16 %v17
  %v91 = vunpack.c.h.b16 %v17
  %v92 = vunpack.c.l.b16 %v18
  %v93 = vunpack.c.h.b16 %v18
  %v94 = vunpack.c.l.b16 %v19
  %v95 = vunpack.c.h.b16 %v19
  %v96 = vunpack.c.l.b16 %v20
  %v97 = vunpack.c.h.b16 %v20
  %v98 = vunpack.c.l.b16 %v21
  %v99 = vunpack.c.h.b16 %v21
  %v100 = vunpack.c.l.b16 %v22
  %v101 = vunpack.c.h.b16 %v22
  %v102 = vunpack.c.l.b16 %v23
  %v103 = vunpack.c.h.b16 %v23
  %v104 = vunpack.c.l.b16 %v24
  %v105 = vunpack.c.h.b16 %v24
  %v106 = vunpack.c.l.b16 %v25
  %v107 = vunpack.c.h.b16 %v25
  %v108 = vunpack.c.l.b16 %v26
  %v109 = vunpack.c.h.b16 %v26
  %v110 = vunpack.c.l.b16 %v27
  %v111 = vunpack.c.h.b16 %v27
  %v112 = vunpack.c.l.b16 %v28
  %v113 = vunpack.c.h.b16 %v28
  %v114 = vunpack.c.l.b16 %v29
  %v115 = vunpack.c.h.b16 %v29
  %v116 = vpack.c.b16 %v86, %v84
  %v117 = vpack.c.b16 %v87, %v85
  %v118 = vpack.c.b16 %v90, %v88
  %v119 = vpack.c.b16 %v91, %v89
  %v120 = vpack.c.b16 %v94, %v92
  %v121 = vpack.c.b16 %v95, %v93
  %v122 = vpack.c.b16 %v98, %v96
  %v123 = vpack.c.b16 %v99, %v97
  %v124 = vpack.c.b16 %v102, %v100
  %v125 = vpack.c.b16 %v103, %v101
  %v126 = vpack.c.b16 %v106, %v104
  %v127 = vpack.c.b16 %v107, %v105
  %v128 = vpack.c.b16 %v110, %v108
  %v129 = vpack.c.b16 %v111, %v109
  %v130 = vpack.c.b16 %v114, %v112
  %v131 = vpack.c.b16 %v115, %v113
  %v180 = vunpack.c.l.b16 %v30
  %v181 = vunpack.c.h.b16 %v30
  %v182 = vunpack.c.l.b16 %v31
  %v183 = vunpack.c.h.b16 %v31
  %v184 = vunpack.c.l.b16 %v32
  %v185 = vunpack.c.h.b16 %v32
  %v186 = vunpack.c.l.b16 %v33
  %v187 = vunpack.c.h.b16 %v33
  %v188 = vunpack.c.l.b16 %v34
  %v189 = vunpack.c.h.b16 %v34
  %v190 = vunpack.c.l.b16 %v35
  %v191 = vunpack.c.h.b16 %v35
  %v192 = vunpack.c.l.b16 %v36
  %v193 = vunpack.c.h.b16 %v36
  %v194 = vunpack.c.l.b16 %v37
  %v195 = vunpack.c.h.b16 %v37
  %v196 = vunpack.c.l.b16 %v38
  %v197 = vunpack.c.h.b16 %v38
  %v198 = vunpack.c.l.b16 %v39
  %v199 = vunpack.c.h.b16 %v39
  %v200 = vunpack.c.l.b16 %v40
  %v201 = vunpack.c.h.b16 %v40
  %v202 = vunpack.c.l.b16 %v41
  %v203 = vunpack.c.h.b16 %v41
  %v204 = vunpack.c.l.b16 %v42
  %v205 = vunpack.c.h.b16 %v42
  %v206 = vunpack.c.l.b16 %v43
  %v207 = vunpack.c.h.b16 %v43
  %v208 = vunpack.c.l.b16 %v44
  %v209 = vunpack.c.h.b16 %v44
  %v210 = vunpack.c.l.b16 %v45
  %v211 = vunpack.c.h.b16 %v45
  %v212 = vunpack.c.l.b16 %v46
  %v213 = vunpack.c.h.b16 %v46
  %v214 = vunpack.c.l.b16 %v47
  %v215 = vunpack.c.h.b16 %v47
  %v216 = vunpack.c.l.b16 %v48
  %v217 = vunpack.c.h.b16 %v48
  %v218 = vunpack.c.l.b16 %v49
  %v219 = vunpack.c.h.b16 %v49
  %v220 = vunpack.c.l.b16 %v50
  %v221 = vunpack.c.h.b16 %v50
  %v222 = vunpack.c.l.b16 %v51
  %v223 = vunpack.c.h.b16 %v51
  %v224 = vunpack.c.l.b16 %v52
  %v225 = vunpack.c.h.b16 %v52
  %v226 = vunpack.c.l.b16 %v53
  %v227 = vunpack.c.h.b16 %v53
  %v228 = vunpack.c.l.b16 %v54
  %v229 = vunpack.c.h.b16 %v54
  %v230 = vunpack.c.l.b16 %v55
  %v231 = vunpack.c.h.b16 %v55
  %v232 = vunpack.c.l.b16 %v56
  %v233 = vunpack.c.h.b16 %v56
  %v234 = vunpack.c.l.b16 %v57
  %v235 = vunpack.c.h.b16 %v57
  %v236 = vunpack.c.l.b16 %v58
  %v237 = vunpack.c.h.b16 %v58
  %v238 = vunpack.c.l.b16 %v59
  %v239 = vunpack.c.h.b16 %v59
  %v240 = vunpack.c.l.b16 %v60
  %v241 = vunpack.c.h.b16 %v60
  %v242 = vunpack.c.l.b16 %v61
  %v243 = vunpack.c.h.b16 %v61
  %v244 = vpack.c.b16 %v182, %v180
  %v245 = vpack.c.b16 %v183, %v181
  %v246 = vpack.c.b16 %v186, %v184
  %v247 = vpack.c.b16 %v187, %v185
  %v248 = vpack.c.b16 %v190, %v188
  %v249 = vpack.c.b16 %v191, %v189
  %v250 = vpack.c.b16 %v194, %v192
  %v251 = vpack.c.b16 %v195, %v193
  %v252 = vpack.c.b16 %v198, %v196
  %v253 = vpack.c.b16 %v199, %v197
  %v254 = vpack.c.b16 %v202, %v200
  %v255 = vpack.c.b16 %v203, %v201
  %v256 = vpack.c.b16 %v206, %v204
  %v257 = vpack.c.b16 %v207, %v205
  %v258 = vpack.c.b16 %v210, %v208
  %v259 = vpack.c.b16 %v211, %v209
  %v260 = vpack.c.b16 %v214, %v212
  %v261 = vpack.c.b16 %v215, %v213
  %v262 = vpack.c.b16 %v218, %v216
  %v263 = vpack.c.b16 %v219, %v217
  %v264 = vpack.c.b16 %v222, %v220
  %v265 = vpack.c.b16 %v223, %v221
  %v266 = vpack.c.b16 %v226, %v224
  %v267 = vpack.c.b16 %v227, %v225
  %v268 = vpack.c.b16 %v230, %v228
  %v269 = vpack.c.b16 %v231, %v229
  %v270 = vpack.c.b16 %v234, %v232
  %v271 = vpack.c.b16 %v235, %v233
  %v272 = vpack.c.b16 %v238, %v236
  %v273 = vpack.c.b16 %v239, %v237
  %v274 = vpack.c.b16 %v242, %v240
  %v275 = vpack.c.b16 %v243, %v241
  %308 = vmatpush.bf16.msra.mxu0 %v258
  %309 = vmatpush.bf16.msra.mxu0 %v256
  %310 = vmatpush.bf16.msra.mxu0 %v254
  %311 = vmatpush.bf16.msra.mxu0 %v252
  %312 = vmatpush.bf16.msra.mxu0 %v250
  %313 = vmatpush.bf16.msra.mxu0 %v248
  %314 = vmatpush.bf16.msra.mxu0 %v246
  %315 = vmatpush.bf16.msra.mxu0 %v244
  %316 = vmatmul.bf16.gmra.mxu0 %v116
  %v317 = vpop.f32.mrf.mxu0
  %v318 = vadd.f32 %v64, %v317
  %v319 = vpop.f32.mrf.mxu0
  %v320 = vadd.f32 %v64, %v319
  %321 = vmatmul.bf16.gmra.mxu0 %v118
  %v322 = vpop.f32.mrf.mxu0
  %v323 = vadd.f32 %v64, %v322
  %v324 = vpop.f32.mrf.mxu0
  %v325 = vadd.f32 %v64, %v324
  %326 = vmatmul.bf16.gmra.mxu0 %v120
  %v327 = vpop.f32.mrf.mxu0
  %v328 = vadd.f32 %v64, %v327
  %v329 = vpop.f32.mrf.mxu0
  %v330 = vadd.f32 %v64, %v329
  %331 = vmatmul.bf16.gmra.mxu0 %v122
  %v332 = vpop.f32.mrf.mxu0
  %v333 = vadd.f32 %v64, %v332
  %v334 = vpop.f32.mrf.mxu0
  %v335 = vadd.f32 %v64, %v334
  %336 = vmatmul.bf16.gmra.mxu0 %v124
  %v337 = vpop.f32.mrf.mxu0
  %v338 = vadd.f32 %v64, %v337
  %v339 = vpop.f32.mrf.mxu0
  %v340 = vadd.f32 %v64, %v339
  %341 = vmatmul.bf16.gmra.mxu0 %v126
  %v342 = vpop.f32.mrf.mxu0
  %v343 = vadd.f32 %v64, %v342
  %v344 = vpop.f32.mrf.mxu0
  %v345 = vadd.f32 %v64, %v344
  %346 = vmatmul.bf16.gmra.mxu0 %v128
  %v347 = vpop.f32.mrf.mxu0
  %v348 = vadd.f32 %v64, %v347
  %v349 = vpop.f32.mrf.mxu0
  %v350 = vadd.f32 %v64, %v349
  %351 = vmatmul.bf16.gmra.mxu0 %v130
  %v352 = vpop.f32.mrf.mxu0
  %v353 = vadd.f32 %v64, %v352
  %v354 = vpop.f32.mrf.mxu0
  %v355 = vadd.f32 %v64, %v354
  %356 = vdwg.mxu0
  %357 = vmatpush.bf16.msra.mxu0 %v274
  %358 = vmatpush.bf16.msra.mxu0 %v272
  %359 = vmatpush.bf16.msra.mxu0 %v270
  %360 = vmatpush.bf16.msra.mxu0 %v268
  %361 = vmatpush.bf16.msra.mxu0 %v266
  %362 = vmatpush.bf16.msra.mxu0 %v264
  %363 = vmatpush.bf16.msra.mxu0 %v262
  %364 = vmatpush.bf16.msra.mxu0 %v260
  %365 = vmatmul.bf16.gmra.mxu0 %v117
  %v366 = vpop.f32.mrf.mxu0
  %v367 = vadd.f32 %v318, %v366
  %v368 = vpop.f32.mrf.mxu0
  %v369 = vadd.f32 %v320, %v368
  %370 = vmatmul.bf16.gmra.mxu0 %v119
  %v371 = vpop.f32.mrf.mxu0
  %v372 = vadd.f32 %v323, %v371
  %v373 = vpop.f32.mrf.mxu0
  %v374 = vadd.f32 %v325, %v373
  %375 = vmatmul.bf16.gmra.mxu0 %v121
  %v376 = vpop.f32.mrf.mxu0
  %v377 = vadd.f32 %v328, %v376
  %v378 = vpop.f32.mrf.mxu0
  %v379 = vadd.f32 %v330, %v378
  %380 = vmatmul.bf16.gmra.mxu0 %v123
  %v381 = vpop.f32.mrf.mxu0
  %v382 = vadd.f32 %v333, %v381
  %v383 = vpop.f32.mrf.mxu0
  %v384 = vadd.f32 %v335, %v383
  %385 = vmatmul.bf16.gmra.mxu0 %v125
  %v386 = vpop.f32.mrf.mxu0
  %v387 = vadd.f32 %v338, %v386
  %v388 = vpop.f32.mrf.mxu0
  %v389 = vadd.f32 %v340, %v388
  %390 = vmatmul.bf16.gmra.mxu0 %v127
  %v391 = vpop.f32.mrf.mxu0
  %v392 = vadd.f32 %v343, %v391
  %v393 = vpop.f32.mrf.mxu0
  %v394 = vadd.f32 %v345, %v393
  %395 = vmatmul.bf16.gmra.mxu0 %v129
  %v396 = vpop.f32.mrf.mxu0
  %v397 = vadd.f32 %v348, %v396
  %v398 = vpop.f32.mrf.mxu0
  %v399 = vadd.f32 %v350, %v398
  %400 = vmatmul.bf16.gmra.mxu0 %v131
  %v401 = vpop.f32.mrf.mxu0
  %v402 = vadd.f32 %v353, %v401
  %v403 = vpop.f32.mrf.mxu0
  %v404 = vadd.f32 %v355, %v403
  %405 = vdwg.mxu0
  %406 = vmatpush.bf16.msra.mxu0 %v259
  %407 = vmatpush.bf16.msra.mxu0 %v257
  %408 = vmatpush.bf16.msra.mxu0 %v255
  %409 = vmatpush.bf16.msra.mxu0 %v253
  %410 = vmatpush.bf16.msra.mxu0 %v251
  %411 = vmatpush.bf16.msra.mxu0 %v249
  %412 = vmatpush.bf16.msra.mxu0 %v247
  %413 = vmatpush.bf16.msra.mxu0 %v245
  %414 = vmatmul.bf16.gmra.mxu0 %v116
  %v415 = vpop.f32.mrf.mxu0
  %v416 = vadd.f32 %v65, %v415
  %v417 = vpop.f32.mrf.mxu0
  %v418 = vadd.f32 %v65, %v417
  %419 = vmatmul.bf16.gmra.mxu0 %v118
  %v420 = vpop.f32.mrf.mxu0
  %v421 = vadd.f32 %v65, %v420
  %v422 = vpop.f32.mrf.mxu0
  %v423 = vadd.f32 %v65, %v422
  %424 = vmatmul.bf16.gmra.mxu0 %v120
  %v425 = vpop.f32.mrf.mxu0
  %v426 = vadd.f32 %v65, %v425
  %v427 = vpop.f32.mrf.mxu0
  %v428 = vadd.f32 %v65, %v427
  %429 = vmatmul.bf16.gmra.mxu0 %v122
  %v430 = vpop.f32.mrf.mxu0
  %v431 = vadd.f32 %v65, %v430
  %v432 = vpop.f32.mrf.mxu0
  %v433 = vadd.f32 %v65, %v432
  %434 = vmatmul.bf16.gmra.mxu0 %v124
  %v435 = vpop.f32.mrf.mxu0
  %v436 = vadd.f32 %v65, %v435
  %v437 = vpop.f32.mrf.mxu0
  %v438 = vadd.f32 %v65, %v437
  %439 = vmatmul.bf16.gmra.mxu0 %v126
  %v440 = vpop.f32.mrf.mxu0
  %v441 = vadd.f32 %v65, %v440
  %v442 = vpop.f32.mrf.mxu0
  %v443 = vadd.f32 %v65, %v442
  %444 = vmatmul.bf16.gmra.mxu0 %v128
  %v445 = vpop.f32.mrf.mxu0
  %v446 = vadd.f32 %v65, %v445
  %v447 = vpop.f32.mrf.mxu0
  %v448 = vadd.f32 %v65, %v447
  %449 = vmatmul.bf16.gmra.mxu0 %v130
  %v450 = vpop.f32.mrf.mxu0
  %v451 = vadd.f32 %v65, %v450
  %v452 = vpop.f32.mrf.mxu0
  %v453 = vadd.f32 %v65, %v452
  %454 = vdwg.mxu0
  %455 = vmatpush.bf16.msra.mxu0 %v275
  %456 = vmatpush.bf16.msra.mxu0 %v273
  %457 = vmatpush.bf16.msra.mxu0 %v271
  %458 = vmatpush.bf16.msra.mxu0 %v269
  %459 = vmatpush.bf16.msra.mxu0 %v267
  %460 = vmatpush.bf16.msra.mxu0 %v265
  %461 = vmatpush.bf16.msra.mxu0 %v263
  %462 = vmatpush.bf16.msra.mxu0 %v261
  %463 = vmatmul.bf16.gmra.mxu0 %v117
  %v464 = vpop.f32.mrf.mxu0
  %v465 = vadd.f32 %v416, %v464
  %v466 = vpop.f32.mrf.mxu0
  %v467 = vadd.f32 %v418, %v466
  %468 = vmatmul.bf16.gmra.mxu0 %v119
  %v469 = vpop.f32.mrf.mxu0
  %v470 = vadd.f32 %v421, %v469
  %v471 = vpop.f32.mrf.mxu0
  %v472 = vadd.f32 %v423, %v471
  %473 = vmatmul.bf16.gmra.mxu0 %v121
  %v474 = vpop.f32.mrf.mxu0
  %v475 = vadd.f32 %v426, %v474
  %v476 = vpop.f32.mrf.mxu0
  %v477 = vadd.f32 %v428, %v476
  %478 = vmatmul.bf16.gmra.mxu0 %v123
  %v479 = vpop.f32.mrf.mxu0
  %v480 = vadd.f32 %v431, %v479
  %v481 = vpop.f32.mrf.mxu0
  %v482 = vadd.f32 %v433, %v481
  %483 = vmatmul.bf16.gmra.mxu0 %v125
  %v484 = vpop.f32.mrf.mxu0
  %v485 = vadd.f32 %v436, %v484
  %v486 = vpop.f32.mrf.mxu0
  %v487 = vadd.f32 %v438, %v486
  %488 = vmatmul.bf16.gmra.mxu0 %v127
  %v489 = vpop.f32.mrf.mxu0
  %v490 = vadd.f32 %v441, %v489
  %v491 = vpop.f32.mrf.mxu0
  %v492 = vadd.f32 %v443, %v491
  %493 = vmatmul.bf16.gmra.mxu0 %v129
  %v494 = vpop.f32.mrf.mxu0
  %v495 = vadd.f32 %v446, %v494
  %v496 = vpop.f32.mrf.mxu0
  %v497 = vadd.f32 %v448, %v496
  %498 = vmatmul.bf16.gmra.mxu0 %v131
  %v499 = vpop.f32.mrf.mxu0
  %v500 = vadd.f32 %v451, %v499
  %v501 = vpop.f32.mrf.mxu0
  %v502 = vadd.f32 %v453, %v501
  %503 = vdwg.mxu0
  %v504 = vxor.u32 %v465, 2147483648
  %v505 = vxor.u32 %v467, 2147483648
  %v506 = vxor.u32 %v470, 2147483648
  %v507 = vxor.u32 %v472, 2147483648
  %v508 = vxor.u32 %v475, 2147483648
  %v509 = vxor.u32 %v477, 2147483648
  %v510 = vxor.u32 %v480, 2147483648
  %v511 = vxor.u32 %v482, 2147483648
  %v512 = vxor.u32 %v485, 2147483648
  %v513 = vxor.u32 %v487, 2147483648
  %v514 = vxor.u32 %v490, 2147483648
  %v515 = vxor.u32 %v492, 2147483648
  %v516 = vxor.u32 %v495, 2147483648
  %v517 = vxor.u32 %v497, 2147483648
  %v518 = vxor.u32 %v500, 2147483648
  %v519 = vxor.u32 %v502, 2147483648
  %v520 = vmul.f32 %v504, 1.442695
  %v521 = vpow.pop %v520
  %v522 = vmul.f32 %v505, 1.442695
  %v523 = vpow.pop %v522
  %v524 = vmul.f32 %v506, 1.442695
  %v525 = vpow.pop %v524
  %v526 = vmul.f32 %v507, 1.442695
  %v527 = vpow.pop %v526
  %v528 = vmul.f32 %v508, 1.442695
  %v529 = vpow.pop %v528
  %v530 = vmul.f32 %v509, 1.442695
  %v531 = vpow.pop %v530
  %v532 = vmul.f32 %v510, 1.442695
  %v533 = vpow.pop %v532
  %v534 = vmul.f32 %v511, 1.442695
  %v535 = vpow.pop %v534
  %v536 = vmul.f32 %v512, 1.442695
  %v537 = vpow.pop %v536
  %v538 = vmul.f32 %v513, 1.442695
  %v539 = vpow.pop %v538
  %v540 = vmul.f32 %v514, 1.442695
  %v541 = vpow.pop %v540
  %v542 = vmul.f32 %v515, 1.442695
  %v543 = vpow.pop %v542
  %v544 = vmul.f32 %v516, 1.442695
  %v545 = vpow.pop %v544
  %v546 = vmul.f32 %v517, 1.442695
  %v547 = vpow.pop %v546
  %v548 = vmul.f32 %v518, 1.442695
  %v549 = vpow.pop %v548
  %v550 = vmul.f32 %v519, 1.442695
  %v551 = vpow.pop %v550
  %v552 = vadd.f32 %v521, 1.0
  %v553 = vadd.f32 %v523, 1.0
  %v554 = vadd.f32 %v525, 1.0
  %v555 = vadd.f32 %v527, 1.0
  %v556 = vadd.f32 %v529, 1.0
  %v557 = vadd.f32 %v531, 1.0
  %v558 = vadd.f32 %v533, 1.0
  %v559 = vadd.f32 %v535, 1.0
  %v560 = vadd.f32 %v537, 1.0
  %v561 = vadd.f32 %v539, 1.0
  %v562 = vadd.f32 %v541, 1.0
  %v563 = vadd.f32 %v543, 1.0
  %v564 = vadd.f32 %v545, 1.0
  %v565 = vadd.f32 %v547, 1.0
  %v566 = vadd.f32 %v549, 1.0
  %v567 = vadd.f32 %v551, 1.0
  %v568 = vrcp.pop %v552
  %v569 = vmul.f32 %v552, %v568
  %v570 = vsub.f32 1.0, %v569
  %v571 = vmul.f32 %v568, %v570
  %v572 = vadd.f32 %v568, %v571
  %vm573 = vweird.f32 %v552
  %vm574 = vweird.f32 %v568
  %vm575 = vmor %vm573, %vm574
  %v576 = vsel %vm575, %v568, %v572
  %v577 = vand.u32 2147483647, %v552
  %vm578 = vcmp.eq.f32.partialorder %v577, 8.507059e+37
  %v579 = vand.u32 %v552, 2147483648
  %v580 = vor.u32 1.1754944e-38, %v579
  %v581 = vsel %vm578, %v580, %v576
  %v582 = vmul.f32 1.0, %v581
  %v583 = vrcp.pop %v553
  %v584 = vmul.f32 %v553, %v583
  %v585 = vsub.f32 1.0, %v584
  %v586 = vmul.f32 %v583, %v585
  %v587 = vadd.f32 %v583, %v586
  %vm588 = vweird.f32 %v553
  %vm589 = vweird.f32 %v583
  %vm590 = vmor %vm588, %vm589
  %v591 = vsel %vm590, %v583, %v587
  %v592 = vand.u32 2147483647, %v553
  %vm593 = vcmp.eq.f32.partialorder %v592, 8.507059e+37
  %v594 = vand.u32 %v553, 2147483648
  %v595 = vor.u32 1.1754944e-38, %v594
  %v596 = vsel %vm593, %v595, %v591
  %v597 = vmul.f32 1.0, %v596
  %v598 = vrcp.pop %v554
  %v599 = vmul.f32 %v554, %v598
  %v600 = vsub.f32 1.0, %v599
  %v601 = vmul.f32 %v598, %v600
  %v602 = vadd.f32 %v598, %v601
  %vm603 = vweird.f32 %v554
  %vm604 = vweird.f32 %v598
  %vm605 = vmor %vm603, %vm604
  %v606 = vsel %vm605, %v598, %v602
  %v607 = vand.u32 2147483647, %v554
  %vm608 = vcmp.eq.f32.partialorder %v607, 8.507059e+37
  %v609 = vand.u32 %v554, 2147483648
  %v610 = vor.u32 1.1754944e-38, %v609
  %v611 = vsel %vm608, %v610, %v606
  %v612 = vmul.f32 1.0, %v611
  %v613 = vrcp.pop %v555
  %v614 = vmul.f32 %v555, %v613
  %v615 = vsub.f32 1.0, %v614
  %v616 = vmul.f32 %v613, %v615
  %v617 = vadd.f32 %v613, %v616
  %vm618 = vweird.f32 %v555
  %vm619 = vweird.f32 %v613
  %vm620 = vmor %vm618, %vm619
  %v621 = vsel %vm620, %v613, %v617
  %v622 = vand.u32 2147483647, %v555
  %vm623 = vcmp.eq.f32.partialorder %v622, 8.507059e+37
  %v624 = vand.u32 %v555, 2147483648
  %v625 = vor.u32 1.1754944e-38, %v624
  %v626 = vsel %vm623, %v625, %v621
  %v627 = vmul.f32 1.0, %v626
  %v628 = vrcp.pop %v556
  %v629 = vmul.f32 %v556, %v628
  %v630 = vsub.f32 1.0, %v629
  %v631 = vmul.f32 %v628, %v630
  %v632 = vadd.f32 %v628, %v631
  %vm633 = vweird.f32 %v556
  %vm634 = vweird.f32 %v628
  %vm635 = vmor %vm633, %vm634
  %v636 = vsel %vm635, %v628, %v632
  %v637 = vand.u32 2147483647, %v556
  %vm638 = vcmp.eq.f32.partialorder %v637, 8.507059e+37
  %v639 = vand.u32 %v556, 2147483648
  %v640 = vor.u32 1.1754944e-38, %v639
  %v641 = vsel %vm638, %v640, %v636
  %v642 = vmul.f32 1.0, %v641
  %v643 = vrcp.pop %v557
  %v644 = vmul.f32 %v557, %v643
  %v645 = vsub.f32 1.0, %v644
  %v646 = vmul.f32 %v643, %v645
  %v647 = vadd.f32 %v643, %v646
  %vm648 = vweird.f32 %v557
  %vm649 = vweird.f32 %v643
  %vm650 = vmor %vm648, %vm649
  %v651 = vsel %vm650, %v643, %v647
  %v652 = vand.u32 2147483647, %v557
  %vm653 = vcmp.eq.f32.partialorder %v652, 8.507059e+37
  %v654 = vand.u32 %v557, 2147483648
  %v655 = vor.u32 1.1754944e-38, %v654
  %v656 = vsel %vm653, %v655, %v651
  %v657 = vmul.f32 1.0, %v656
  %v658 = vrcp.pop %v558
  %v659 = vmul.f32 %v558, %v658
  %v660 = vsub.f32 1.0, %v659
  %v661 = vmul.f32 %v658, %v660
  %v662 = vadd.f32 %v658, %v661
  %vm663 = vweird.f32 %v558
  %vm664 = vweird.f32 %v658
  %vm665 = vmor %vm663, %vm664
  %v666 = vsel %vm665, %v658, %v662
  %v667 = vand.u32 2147483647, %v558
  %vm668 = vcmp.eq.f32.partialorder %v667, 8.507059e+37
  %v669 = vand.u32 %v558, 2147483648
  %v670 = vor.u32 1.1754944e-38, %v669
  %v671 = vsel %vm668, %v670, %v666
  %v672 = vmul.f32 1.0, %v671
  %v673 = vrcp.pop %v559
  %v674 = vmul.f32 %v559, %v673
  %v675 = vsub.f32 1.0, %v674
  %v676 = vmul.f32 %v673, %v675
  %v677 = vadd.f32 %v673, %v676
  %vm678 = vweird.f32 %v559
  %vm679 = vweird.f32 %v673
  %vm680 = vmor %vm678, %vm679
  %v681 = vsel %vm680, %v673, %v677
  %v682 = vand.u32 2147483647, %v559
  %vm683 = vcmp.eq.f32.partialorder %v682, 8.507059e+37
  %v684 = vand.u32 %v559, 2147483648
  %v685 = vor.u32 1.1754944e-38, %v684
  %v686 = vsel %vm683, %v685, %v681
  %v687 = vmul.f32 1.0, %v686
  %v688 = vrcp.pop %v560
  %v689 = vmul.f32 %v560, %v688
  %v690 = vsub.f32 1.0, %v689
  %v691 = vmul.f32 %v688, %v690
  %v692 = vadd.f32 %v688, %v691
  %vm693 = vweird.f32 %v560
  %vm694 = vweird.f32 %v688
  %vm695 = vmor %vm693, %vm694
  %v696 = vsel %vm695, %v688, %v692
  %v697 = vand.u32 2147483647, %v560
  %vm698 = vcmp.eq.f32.partialorder %v697, 8.507059e+37
  %v699 = vand.u32 %v560, 2147483648
  %v700 = vor.u32 1.1754944e-38, %v699
  %v701 = vsel %vm698, %v700, %v696
  %v702 = vmul.f32 1.0, %v701
  %v703 = vrcp.pop %v561
  %v704 = vmul.f32 %v561, %v703
  %v705 = vsub.f32 1.0, %v704
  %v706 = vmul.f32 %v703, %v705
  %v707 = vadd.f32 %v703, %v706
  %vm708 = vweird.f32 %v561
  %vm709 = vweird.f32 %v703
  %vm710 = vmor %vm708, %vm709
  %v711 = vsel %vm710, %v703, %v707
  %v712 = vand.u32 2147483647, %v561
  %vm713 = vcmp.eq.f32.partialorder %v712, 8.507059e+37
  %v714 = vand.u32 %v561, 2147483648
  %v715 = vor.u32 1.1754944e-38, %v714
  %v716 = vsel %vm713, %v715, %v711
  %v717 = vmul.f32 1.0, %v716
  %v718 = vrcp.pop %v562
  %v719 = vmul.f32 %v562, %v718
  %v720 = vsub.f32 1.0, %v719
  %v721 = vmul.f32 %v718, %v720
  %v722 = vadd.f32 %v718, %v721
  %vm723 = vweird.f32 %v562
  %vm724 = vweird.f32 %v718
  %vm725 = vmor %vm723, %vm724
  %v726 = vsel %vm725, %v718, %v722
  %v727 = vand.u32 2147483647, %v562
  %vm728 = vcmp.eq.f32.partialorder %v727, 8.507059e+37
  %v729 = vand.u32 %v562, 2147483648
  %v730 = vor.u32 1.1754944e-38, %v729
  %v731 = vsel %vm728, %v730, %v726
  %v732 = vmul.f32 1.0, %v731
  %v733 = vrcp.pop %v563
  %v734 = vmul.f32 %v563, %v733
  %v735 = vsub.f32 1.0, %v734
  %v736 = vmul.f32 %v733, %v735
  %v737 = vadd.f32 %v733, %v736
  %vm738 = vweird.f32 %v563
  %vm739 = vweird.f32 %v733
  %vm740 = vmor %vm738, %vm739
  %v741 = vsel %vm740, %v733, %v737
  %v742 = vand.u32 2147483647, %v563
  %vm743 = vcmp.eq.f32.partialorder %v742, 8.507059e+37
  %v744 = vand.u32 %v563, 2147483648
  %v745 = vor.u32 1.1754944e-38, %v744
  %v746 = vsel %vm743, %v745, %v741
  %v747 = vmul.f32 1.0, %v746
  %v748 = vrcp.pop %v564
  %v749 = vmul.f32 %v564, %v748
  %v750 = vsub.f32 1.0, %v749
  %v751 = vmul.f32 %v748, %v750
  %v752 = vadd.f32 %v748, %v751
  %vm753 = vweird.f32 %v564
  %vm754 = vweird.f32 %v748
  %vm755 = vmor %vm753, %vm754
  %v756 = vsel %vm755, %v748, %v752
  %v757 = vand.u32 2147483647, %v564
  %vm758 = vcmp.eq.f32.partialorder %v757, 8.507059e+37
  %v759 = vand.u32 %v564, 2147483648
  %v760 = vor.u32 1.1754944e-38, %v759
  %v761 = vsel %vm758, %v760, %v756
  %v762 = vmul.f32 1.0, %v761
  %v763 = vrcp.pop %v565
  %v764 = vmul.f32 %v565, %v763
  %v765 = vsub.f32 1.0, %v764
  %v766 = vmul.f32 %v763, %v765
  %v767 = vadd.f32 %v763, %v766
  %vm768 = vweird.f32 %v565
  %vm769 = vweird.f32 %v763
  %vm770 = vmor %vm768, %vm769
  %v771 = vsel %vm770, %v763, %v767
  %v772 = vand.u32 2147483647, %v565
  %vm773 = vcmp.eq.f32.partialorder %v772, 8.507059e+37
  %v774 = vand.u32 %v565, 2147483648
  %v775 = vor.u32 1.1754944e-38, %v774
  %v776 = vsel %vm773, %v775, %v771
  %v777 = vmul.f32 1.0, %v776
  %v778 = vrcp.pop %v566
  %v779 = vmul.f32 %v566, %v778
  %v780 = vsub.f32 1.0, %v779
  %v781 = vmul.f32 %v778, %v780
  %v782 = vadd.f32 %v778, %v781
  %vm783 = vweird.f32 %v566
  %vm784 = vweird.f32 %v778
  %vm785 = vmor %vm783, %vm784
  %v786 = vsel %vm785, %v778, %v782
  %v787 = vand.u32 2147483647, %v566
  %vm788 = vcmp.eq.f32.partialorder %v787, 8.507059e+37
  %v789 = vand.u32 %v566, 2147483648
  %v790 = vor.u32 1.1754944e-38, %v789
  %v791 = vsel %vm788, %v790, %v786
  %v792 = vmul.f32 1.0, %v791
  %v793 = vrcp.pop %v567
  %v794 = vmul.f32 %v567, %v793
  %v795 = vsub.f32 1.0, %v794
  %v796 = vmul.f32 %v793, %v795
  %v797 = vadd.f32 %v793, %v796
  %vm798 = vweird.f32 %v567
  %vm799 = vweird.f32 %v793
  %vm800 = vmor %vm798, %vm799
  %v801 = vsel %vm800, %v793, %v797
  %v802 = vand.u32 2147483647, %v567
  %vm803 = vcmp.eq.f32.partialorder %v802, 8.507059e+37
  %v804 = vand.u32 %v567, 2147483648
  %v805 = vor.u32 1.1754944e-38, %v804
  %v806 = vsel %vm803, %v805, %v801
  %v807 = vmul.f32 1.0, %v806
  %vm808 = vcmp.ge.f32.partialorder %v367, 0.0
  %vm809 = vcmp.ge.f32.partialorder %v369, 0.0
  %vm810 = vcmp.ge.f32.partialorder %v372, 0.0
  %vm811 = vcmp.ge.f32.partialorder %v374, 0.0
  %vm812 = vcmp.ge.f32.partialorder %v377, 0.0
  %vm813 = vcmp.ge.f32.partialorder %v379, 0.0
  %vm814 = vcmp.ge.f32.partialorder %v382, 0.0
  %vm815 = vcmp.ge.f32.partialorder %v384, 0.0
  %vm816 = vcmp.ge.f32.partialorder %v387, 0.0
  %vm817 = vcmp.ge.f32.partialorder %v389, 0.0
  %vm818 = vcmp.ge.f32.partialorder %v392, 0.0
  %vm819 = vcmp.ge.f32.partialorder %v394, 0.0
  %vm820 = vcmp.ge.f32.partialorder %v397, 0.0
  %vm821 = vcmp.ge.f32.partialorder %v399, 0.0
  %vm822 = vcmp.ge.f32.partialorder %v402, 0.0
  %vm823 = vcmp.ge.f32.partialorder %v404, 0.0
  %v824 = vmul.f32 %v367, 0.2
  %v825 = vmul.f32 %v369, 0.2
  %v826 = vmul.f32 %v372, 0.2
  %v827 = vmul.f32 %v374, 0.2
  %v828 = vmul.f32 %v377, 0.2
  %v829 = vmul.f32 %v379, 0.2
  %v830 = vmul.f32 %v382, 0.2
  %v831 = vmul.f32 %v384, 0.2
  %v832 = vmul.f32 %v387, 0.2
  %v833 = vmul.f32 %v389, 0.2
  %v834 = vmul.f32 %v392, 0.2
  %v835 = vmul.f32 %v394, 0.2
  %v836 = vmul.f32 %v397, 0.2
  %v837 = vmul.f32 %v399, 0.2
  %v838 = vmul.f32 %v402, 0.2
  %v839 = vmul.f32 %v404, 0.2
  %v840 = vsel %vm808, %v367, %v824
  %v841 = vsel %vm809, %v369, %v825
  %v842 = vsel %vm810, %v372, %v826
  %v843 = vsel %vm811, %v374, %v827
  %v844 = vsel %vm812, %v377, %v828
  %v845 = vsel %vm813, %v379, %v829
  %v846 = vsel %vm814, %v382, %v830
  %v847 = vsel %vm815, %v384, %v831
  %v848 = vsel %vm816, %v387, %v832
  %v849 = vsel %vm817, %v389, %v833
  %v850 = vsel %vm818, %v392, %v834
  %v851 = vsel %vm819, %v394, %v835
  %v852 = vsel %vm820, %v397, %v836
  %v853 = vsel %vm821, %v399, %v837
  %v854 = vsel %vm822, %v402, %v838
  %v855 = vsel %vm823, %v404, %v839
  %v856 = vmul.f32 %v840, %v582
  %v857 = vmul.f32 %v841, %v597
  %v858 = vmul.f32 %v842, %v612
  %v859 = vmul.f32 %v843, %v627
  %v860 = vmul.f32 %v844, %v642
  %v861 = vmul.f32 %v845, %v657
  %v862 = vmul.f32 %v846, %v672
  %v863 = vmul.f32 %v847, %v687
  %v864 = vmul.f32 %v848, %v702
  %v865 = vmul.f32 %v849, %v717
  %v866 = vmul.f32 %v850, %v732
  %v867 = vmul.f32 %v851, %v747
  %v868 = vmul.f32 %v852, %v762
  %v869 = vmul.f32 %v853, %v777
  %v870 = vmul.f32 %v854, %v792
  %v871 = vmul.f32 %v855, %v807
  %872 = vst [vmem:[%s3] sm:$0xff] %v856
  %873 = vst [vmem:[%s3 + $0x8] sm:$0xff] %v857
  %874 = vst [vmem:[%s3 + $0x10] sm:$0xff] %v858
  %875 = vst [vmem:[%s3 + $0x18] sm:$0xff] %v859
  %876 = vst [vmem:[%s3 + $0x20] sm:$0xff] %v860
  %877 = vst [vmem:[%s3 + $0x28] sm:$0xff] %v861
  %878 = vst [vmem:[%s3 + $0x30] sm:$0xff] %v862
  %879 = vst [vmem:[%s3 + $0x38] sm:$0xff] %v863
  %880 = vst [vmem:[%s3 + $0x40] sm:$0xff] %v864
  %881 = vst [vmem:[%s3 + $0x48] sm:$0xff] %v865
  %882 = vst [vmem:[%s3 + $0x50] sm:$0xff] %v866
  %883 = vst [vmem:[%s3 + $0x58] sm:$0xff] %v867
  %884 = vst [vmem:[%s3 + $0x60] sm:$0xff] %v868
  %885 = vst [vmem:[%s3 + $0x68] sm:$0xff] %v869
  %886 = vst [vmem:[%s3 + $0x70] sm:$0xff] %v870
  %887 = vst [vmem:[%s3 + $0x78] sm:$0xff] %v871
  // Predicated region
  $region14: #{_lambda_.46} parent=0 // pred_check
    _
  $region15: #{_lambda_.46} parent=0 // pred_check_branch
    %889 = sbr.rel (0) target = $region17
  $region16: #{_lambda_.46} parent=0 // pred_region
    _
  $region17: #{_lambda_.46} parent=0 // pred_fallthru
    _
  // Predicated region
  $region18: #{_lambda_.46} parent=0 // pred_check
    _
  $region19: #{_lambda_.46} parent=0 // pred_check_branch
    %891 = sbr.rel (0) target = $region21
  $region20: #{_lambda_.46} parent=0 // pred_region
    _
  $region21: #{_lambda_.46} parent=0 // pred_fallthru
    _

// kernel: _lambda_.47
$region0: #{_lambda_.47}
  #allocation0 [shape = 'u32[]', space=smem, size = 0x4, offset = 0x4, fixed_abs, tag = 'smem constant byte address 0x4 - core index']
  #allocation1 [shape = 'u32[72,128]{1,0:T(1,128)}', space=vmem, size = 0x9000, scoped, tag = 'internal scratch']
  %s0 = inlined_call_operand.vmem [shape: bf16[32,256], index: 0, kind: input, shape index: {}]
  %s1 = inlined_call_operand.vmem [shape: bf16[256,256], index: 1, kind: input, shape index: {}]
  %s2 = inlined_call_operand.vmem [shape: f32[1,256], index: 2, kind: input, shape index: {}]
  %s3 = inlined_call_operand.vmem [shape: f32[32,128], index: 3, kind: output, shape index: {}]
  %s4 = sld [smem:[#allocation0]]
  $region22: #{_lambda_.47} parent=0
    _
  %s6 = ssub.s32 1, %s4
  %s7 = scalar_select 0, %s6, %s4
  // Predicated region
  $region2: #{_lambda_.47} parent=0 // pred_check
    _
  $region3: #{_lambda_.47} parent=0 // pred_check_branch
    %9 = sbr.rel (0) target = $region5
  $region4: #{_lambda_.47} parent=0 // pred_region
    _
  $region5: #{_lambda_.47} parent=0 // pred_fallthru
    _
  // Predicated region
  $region6: #{_lambda_.47} parent=0 // pred_check
    _
  $region7: #{_lambda_.47} parent=0 // pred_check_branch
    %11 = sbr.rel (0) target = $region9
  $region8: #{_lambda_.47} parent=0 // pred_region
    _
  $region9: #{_lambda_.47} parent=0 // pred_fallthru
    _
  // Predicated region
  $region10: #{_lambda_.47} parent=0 // pred_check
    _
  $region11: #{_lambda_.47} parent=0 // pred_check_branch
    %13 = sbr.rel (0) target = $region13
  $region12: #{_lambda_.47} parent=0 // pred_region
    _
  $region13: #{_lambda_.47} parent=0 // pred_fallthru
    _
  %v14 = vld [vmem:[%s0] sm:$0xff]
  %v15 = vld [vmem:[%s0 + $0x8] sm:$0xff]
  %v16 = vld [vmem:[%s0 + $0x10] sm:$0xff]
  %v17 = vld [vmem:[%s0 + $0x18] sm:$0xff]
  %v18 = vld [vmem:[%s1] sm:$0xff]
  %v19 = vld [vmem:[%s1 + $0x8] sm:$0xff]
  %v20 = vld [vmem:[%s1 + $0x10] sm:$0xff]
  %v21 = vld [vmem:[%s1 + $0x18] sm:$0xff]
  %v22 = vld [vmem:[%s1 + $0x20] sm:$0xff]
  %v23 = vld [vmem:[%s1 + $0x28] sm:$0xff]
  %v24 = vld [vmem:[%s1 + $0x30] sm:$0xff]
  %v25 = vld [vmem:[%s1 + $0x38] sm:$0xff]
  %v26 = vld [vmem:[%s1 + $0x40] sm:$0xff]
  %v27 = vld [vmem:[%s1 + $0x48] sm:$0xff]
  %v28 = vld [vmem:[%s1 + $0x50] sm:$0xff]
  %v29 = vld [vmem:[%s1 + $0x58] sm:$0xff]
  %v30 = vld [vmem:[%s1 + $0x60] sm:$0xff]
  %v31 = vld [vmem:[%s1 + $0x68] sm:$0xff]
  %v32 = vld [vmem:[%s1 + $0x70] sm:$0xff]
  %v33 = vld [vmem:[%s1 + $0x78] sm:$0xff]
  %v34 = vld [vmem:[%s1 + $0x80] sm:$0xff]
  %v35 = vld [vmem:[%s1 + $0x88] sm:$0xff]
  %v36 = vld [vmem:[%s1 + $0x90] sm:$0xff]
  %v37 = vld [vmem:[%s1 + $0x98] sm:$0xff]
  %v38 = vld [vmem:[%s1 + $0xa0] sm:$0xff]
  %v39 = vld [vmem:[%s1 + $0xa8] sm:$0xff]
  %v40 = vld [vmem:[%s1 + $0xb0] sm:$0xff]
  %v41 = vld [vmem:[%s1 + $0xb8] sm:$0xff]
  %v42 = vld [vmem:[%s1 + $0xc0] sm:$0xff]
  %v43 = vld [vmem:[%s1 + $0xc8] sm:$0xff]
  %v44 = vld [vmem:[%s1 + $0xd0] sm:$0xff]
  %v45 = vld [vmem:[%s1 + $0xd8] sm:$0xff]
  %v46 = vld [vmem:[%s1 + $0xe0] sm:$0xff]
  %v47 = vld [vmem:[%s1 + $0xe8] sm:$0xff]
  %v48 = vld [vmem:[%s1 + $0xf0] sm:$0xff]
  %v49 = vld [vmem:[%s1 + $0xf8] sm:$0xff]
  %v50 = vld [vmem:[%s2] sm:$0x3]
  %v52 = vperm.slane %v50, 0
  %v53 = vperm.slane %v50, 1
  %v60 = vunpack.c.l.b16 %v14
  %v61 = vunpack.c.h.b16 %v14
  %v62 = vunpack.c.l.b16 %v15
  %v63 = vunpack.c.h.b16 %v15
  %v64 = vunpack.c.l.b16 %v16
  %v65 = vunpack.c.h.b16 %v16
  %v66 = vunpack.c.l.b16 %v17
  %v67 = vunpack.c.h.b16 %v17
  %v68 = vpack.c.b16 %v62, %v60
  %v69 = vpack.c.b16 %v63, %v61
  %v70 = vpack.c.b16 %v66, %v64
  %v71 = vpack.c.b16 %v67, %v65
  %v108 = vunpack.c.l.b16 %v18
  %v109 = vunpack.c.h.b16 %v18
  %v110 = vunpack.c.l.b16 %v19
  %v111 = vunpack.c.h.b16 %v19
  %v112 = vunpack.c.l.b16 %v20
  %v113 = vunpack.c.h.b16 %v20
  %v114 = vunpack.c.l.b16 %v21
  %v115 = vunpack.c.h.b16 %v21
  %v116 = vunpack.c.l.b16 %v22
  %v117 = vunpack.c.h.b16 %v22
  %v118 = vunpack.c.l.b16 %v23
  %v119 = vunpack.c.h.b16 %v23
  %v120 = vunpack.c.l.b16 %v24
  %v121 = vunpack.c.h.b16 %v24
  %v122 = vunpack.c.l.b16 %v25
  %v123 = vunpack.c.h.b16 %v25
  %v124 = vunpack.c.l.b16 %v26
  %v125 = vunpack.c.h.b16 %v26
  %v126 = vunpack.c.l.b16 %v27
  %v127 = vunpack.c.h.b16 %v27
  %v128 = vunpack.c.l.b16 %v28
  %v129 = vunpack.c.h.b16 %v28
  %v130 = vunpack.c.l.b16 %v29
  %v131 = vunpack.c.h.b16 %v29
  %v132 = vunpack.c.l.b16 %v30
  %v133 = vunpack.c.h.b16 %v30
  %v134 = vunpack.c.l.b16 %v31
  %v135 = vunpack.c.h.b16 %v31
  %v136 = vunpack.c.l.b16 %v32
  %v137 = vunpack.c.h.b16 %v32
  %v138 = vunpack.c.l.b16 %v33
  %v139 = vunpack.c.h.b16 %v33
  %v140 = vunpack.c.l.b16 %v34
  %v141 = vunpack.c.h.b16 %v34
  %v142 = vunpack.c.l.b16 %v35
  %v143 = vunpack.c.h.b16 %v35
  %v144 = vunpack.c.l.b16 %v36
  %v145 = vunpack.c.h.b16 %v36
  %v146 = vunpack.c.l.b16 %v37
  %v147 = vunpack.c.h.b16 %v37
  %v148 = vunpack.c.l.b16 %v38
  %v149 = vunpack.c.h.b16 %v38
  %v150 = vunpack.c.l.b16 %v39
  %v151 = vunpack.c.h.b16 %v39
  %v152 = vunpack.c.l.b16 %v40
  %v153 = vunpack.c.h.b16 %v40
  %v154 = vunpack.c.l.b16 %v41
  %v155 = vunpack.c.h.b16 %v41
  %v156 = vunpack.c.l.b16 %v42
  %v157 = vunpack.c.h.b16 %v42
  %v158 = vunpack.c.l.b16 %v43
  %v159 = vunpack.c.h.b16 %v43
  %v160 = vunpack.c.l.b16 %v44
  %v161 = vunpack.c.h.b16 %v44
  %v162 = vunpack.c.l.b16 %v45
  %v163 = vunpack.c.h.b16 %v45
  %v164 = vunpack.c.l.b16 %v46
  %v165 = vunpack.c.h.b16 %v46
  %v166 = vunpack.c.l.b16 %v47
  %v167 = vunpack.c.h.b16 %v47
  %v168 = vunpack.c.l.b16 %v48
  %v169 = vunpack.c.h.b16 %v48
  %v170 = vunpack.c.l.b16 %v49
  %v171 = vunpack.c.h.b16 %v49
  %v172 = vpack.c.b16 %v110, %v108
  %v173 = vpack.c.b16 %v111, %v109
  %v174 = vpack.c.b16 %v114, %v112
  %v175 = vpack.c.b16 %v115, %v113
  %v176 = vpack.c.b16 %v118, %v116
  %v177 = vpack.c.b16 %v119, %v117
  %v178 = vpack.c.b16 %v122, %v120
  %v179 = vpack.c.b16 %v123, %v121
  %v180 = vpack.c.b16 %v126, %v124
  %v181 = vpack.c.b16 %v127, %v125
  %v182 = vpack.c.b16 %v130, %v128
  %v183 = vpack.c.b16 %v131, %v129
  %v184 = vpack.c.b16 %v134, %v132
  %v185 = vpack.c.b16 %v135, %v133
  %v186 = vpack.c.b16 %v138, %v136
  %v187 = vpack.c.b16 %v139, %v137
  %v188 = vpack.c.b16 %v142, %v140
  %v189 = vpack.c.b16 %v143, %v141
  %v190 = vpack.c.b16 %v146, %v144
  %v191 = vpack.c.b16 %v147, %v145
  %v192 = vpack.c.b16 %v150, %v148
  %v193 = vpack.c.b16 %v151, %v149
  %v194 = vpack.c.b16 %v154, %v152
  %v195 = vpack.c.b16 %v155, %v153
  %v196 = vpack.c.b16 %v158, %v156
  %v197 = vpack.c.b16 %v159, %v157
  %v198 = vpack.c.b16 %v162, %v160
  %v199 = vpack.c.b16 %v163, %v161
  %v200 = vpack.c.b16 %v166, %v164
  %v201 = vpack.c.b16 %v167, %v165
  %v202 = vpack.c.b16 %v170, %v168
  %v203 = vpack.c.b16 %v171, %v169
  %236 = vmatpush.bf16.msra.mxu0 %v186
  %237 = vmatpush.bf16.msra.mxu0 %v184
  %238 = vmatpush.bf16.msra.mxu0 %v182
  %239 = vmatpush.bf16.msra.mxu0 %v180
  %240 = vmatpush.bf16.msra.mxu0 %v178
  %241 = vmatpush.bf16.msra.mxu0 %v176
  %242 = vmatpush.bf16.msra.mxu0 %v174
  %243 = vmatpush.bf16.msra.mxu0 %v172
  %244 = vmatmul.bf16.gmra.mxu0 %v68
  %v245 = vpop.f32.mrf.mxu0
  %v246 = vadd.f32 %v52, %v245
  %v247 = vpop.f32.mrf.mxu0
  %v248 = vadd.f32 %v52, %v247
  %249 = vmatmul.bf16.gmra.mxu0 %v70
  %v250 = vpop.f32.mrf.mxu0
  %v251 = vadd.f32 %v52, %v250
  %v252 = vpop.f32.mrf.mxu0
  %v253 = vadd.f32 %v52, %v252
  %254 = vdwg.mxu0
  %255 = vmatpush.bf16.msra.mxu0 %v202
  %256 = vmatpush.bf16.msra.mxu0 %v200
  %257 = vmatpush.bf16.msra.mxu0 %v198
  %258 = vmatpush.bf16.msra.mxu0 %v196
  %259 = vmatpush.bf16.msra.mxu0 %v194
  %260 = vmatpush.bf16.msra.mxu0 %v192
  %261 = vmatpush.bf16.msra.mxu0 %v190
  %262 = vmatpush.bf16.msra.mxu0 %v188
  %263 = vmatmul.bf16.gmra.mxu0 %v69
  %v264 = vpop.f32.mrf.mxu0
  %v265 = vadd.f32 %v246, %v264
  %v266 = vpop.f32.mrf.mxu0
  %v267 = vadd.f32 %v248, %v266
  %268 = vmatmul.bf16.gmra.mxu0 %v71
  %v269 = vpop.f32.mrf.mxu0
  %v270 = vadd.f32 %v251, %v269
  %v271 = vpop.f32.mrf.mxu0
  %v272 = vadd.f32 %v253, %v271
  %273 = vdwg.mxu0
  %274 = vmatpush.bf16.msra.mxu0 %v187
  %275 = vmatpush.bf16.msra.mxu0 %v185
  %276 = vmatpush.bf16.msra.mxu0 %v183
  %277 = vmatpush.bf16.msra.mxu0 %v181
  %278 = vmatpush.bf16.msra.mxu0 %v179
  %279 = vmatpush.bf16.msra.mxu0 %v177
  %280 = vmatpush.bf16.msra.mxu0 %v175
  %281 = vmatpush.bf16.msra.mxu0 %v173
  %282 = vmatmul.bf16.gmra.mxu0 %v68
  %v283 = vpop.f32.mrf.mxu0
  %v284 = vadd.f32 %v53, %v283
  %v285 = vpop.f32.mrf.mxu0
  %v286 = vadd.f32 %v53, %v285
  %287 = vmatmul.bf16.gmra.mxu0 %v70
  %v288 = vpop.f32.mrf.mxu0
  %v289 = vadd.f32 %v53, %v288
  %v290 = vpop.f32.mrf.mxu0
  %v291 = vadd.f32 %v53, %v290
  %292 = vdwg.mxu0
  %293 = vmatpush.bf16.msra.mxu0 %v203
  %294 = vmatpush.bf16.msra.mxu0 %v201
  %295 = vmatpush.bf16.msra.mxu0 %v199
  %296 = vmatpush.bf16.msra.mxu0 %v197
  %297 = vmatpush.bf16.msra.mxu0 %v195
  %298 = vmatpush.bf16.msra.mxu0 %v193
  %299 = vmatpush.bf16.msra.mxu0 %v191
  %300 = vmatpush.bf16.msra.mxu0 %v189
  %301 = vmatmul.bf16.gmra.mxu0 %v69
  %v302 = vpop.f32.mrf.mxu0
  %v303 = vadd.f32 %v284, %v302
  %v304 = vpop.f32.mrf.mxu0
  %v305 = vadd.f32 %v286, %v304
  %306 = vmatmul.bf16.gmra.mxu0 %v71
  %v307 = vpop.f32.mrf.mxu0
  %v308 = vadd.f32 %v289, %v307
  %v309 = vpop.f32.mrf.mxu0
  %v310 = vadd.f32 %v291, %v309
  %311 = vdwg.mxu0
  %v312 = vxor.u32 %v303, 2147483648
  %v313 = vxor.u32 %v305, 2147483648
  %v314 = vxor.u32 %v308, 2147483648
  %v315 = vxor.u32 %v310, 2147483648
  %v316 = vmul.f32 %v312, 1.442695
  %v317 = vpow.pop %v316
  %v318 = vmul.f32 %v313, 1.442695
  %v319 = vpow.pop %v318
  %v320 = vmul.f32 %v314, 1.442695
  %v321 = vpow.pop %v320
  %v322 = vmul.f32 %v315, 1.442695
  %v323 = vpow.pop %v322
  %v324 = vadd.f32 %v317, 1.0
  %v325 = vadd.f32 %v319, 1.0
  %v326 = vadd.f32 %v321, 1.0
  %v327 = vadd.f32 %v323, 1.0
  %v328 = vrcp.pop %v324
  %v329 = vmul.f32 %v324, %v328
  %v330 = vsub.f32 1.0, %v329
  %v331 = vmul.f32 %v328, %v330
  %v332 = vadd.f32 %v328, %v331
  %vm333 = vweird.f32 %v324
  %vm334 = vweird.f32 %v328
  %vm335 = vmor %vm333, %vm334
  %v336 = vsel %vm335, %v328, %v332
  %v337 = vand.u32 2147483647, %v324
  %vm338 = vcmp.eq.f32.partialorder %v337, 8.507059e+37
  %v339 = vand.u32 %v324, 2147483648
  %v340 = vor.u32 1.1754944e-38, %v339
  %v341 = vsel %vm338, %v340, %v336
  %v342 = vmul.f32 1.0, %v341
  %v343 = vrcp.pop %v325
  %v344 = vmul.f32 %v325, %v343
  %v345 = vsub.f32 1.0, %v344
  %v346 = vmul.f32 %v343, %v345
  %v347 = vadd.f32 %v343, %v346
  %vm348 = vweird.f32 %v325
  %vm349 = vweird.f32 %v343
  %vm350 = vmor %vm348, %vm349
  %v351 = vsel %vm350, %v343, %v347
  %v352 = vand.u32 2147483647, %v325
  %vm353 = vcmp.eq.f32.partialorder %v352, 8.507059e+37
  %v354 = vand.u32 %v325, 2147483648
  %v355 = vor.u32 1.1754944e-38, %v354
  %v356 = vsel %vm353, %v355, %v351
  %v357 = vmul.f32 1.0, %v356
  %v358 = vrcp.pop %v326
  %v359 = vmul.f32 %v326, %v358
  %v360 = vsub.f32 1.0, %v359
  %v361 = vmul.f32 %v358, %v360
  %v362 = vadd.f32 %v358, %v361
  %vm363 = vweird.f32 %v326
  %vm364 = vweird.f32 %v358
  %vm365 = vmor %vm363, %vm364
  %v366 = vsel %vm365, %v358, %v362
  %v367 = vand.u32 2147483647, %v326
  %vm368 = vcmp.eq.f32.partialorder %v367, 8.507059e+37
  %v369 = vand.u32 %v326, 2147483648
  %v370 = vor.u32 1.1754944e-38, %v369
  %v371 = vsel %vm368, %v370, %v366
  %v372 = vmul.f32 1.0, %v371
  %v373 = vrcp.pop %v327
  %v374 = vmul.f32 %v327, %v373
  %v375 = vsub.f32 1.0, %v374
  %v376 = vmul.f32 %v373, %v375
  %v377 = vadd.f32 %v373, %v376
  %vm378 = vweird.f32 %v327
  %vm379 = vweird.f32 %v373
  %vm380 = vmor %vm378, %vm379
  %v381 = vsel %vm380, %v373, %v377
  %v382 = vand.u32 2147483647, %v327
  %vm383 = vcmp.eq.f32.partialorder %v382, 8.507059e+37
  %v384 = vand.u32 %v327, 2147483648
  %v385 = vor.u32 1.1754944e-38, %v384
  %v386 = vsel %vm383, %v385, %v381
  %v387 = vmul.f32 1.0, %v386
  %vm388 = vcmp.ge.f32.partialorder %v265, 0.0
  %vm389 = vcmp.ge.f32.partialorder %v267, 0.0
  %vm390 = vcmp.ge.f32.partialorder %v270, 0.0
  %vm391 = vcmp.ge.f32.partialorder %v272, 0.0
  %v392 = vmul.f32 %v265, 0.2
  %v393 = vmul.f32 %v267, 0.2
  %v394 = vmul.f32 %v270, 0.2
  %v395 = vmul.f32 %v272, 0.2
  %v396 = vsel %vm388, %v265, %v392
  %v397 = vsel %vm389, %v267, %v393
  %v398 = vsel %vm390, %v270, %v394
  %v399 = vsel %vm391, %v272, %v395
  %v400 = vmul.f32 %v396, %v342
  %v401 = vmul.f32 %v397, %v357
  %v402 = vmul.f32 %v398, %v372
  %v403 = vmul.f32 %v399, %v387
  %404 = vst [vmem:[%s3] sm:$0xff] %v400
  %405 = vst [vmem:[%s3 + $0x8] sm:$0xff] %v401
  %406 = vst [vmem:[%s3 + $0x10] sm:$0xff] %v402
  %407 = vst [vmem:[%s3 + $0x18] sm:$0xff] %v403
  // Predicated region
  $region14: #{_lambda_.47} parent=0 // pred_check
    _
  $region15: #{_lambda_.47} parent=0 // pred_check_branch
    %409 = sbr.rel (0) target = $region17
  $region16: #{_lambda_.47} parent=0 // pred_region
    _
  $region17: #{_lambda_.47} parent=0 // pred_fallthru
    _
  // Predicated region
  $region18: #{_lambda_.47} parent=0 // pred_check
    _
  $region19: #{_lambda_.47} parent=0 // pred_check_branch
    %411 = sbr.rel (0) target = $region21
  $region20: #{_lambda_.47} parent=0 // pred_region
    _
  $region21: #{_lambda_.47} parent=0 // pred_fallthru
    _

// kernel: _lambda_.48
$region0: #{_lambda_.48}
  #allocation0 [shape = 'u32[]', space=smem, size = 0x4, offset = 0x4, fixed_abs, tag = 'smem constant byte address 0x4 - core index']
  #allocation1 [shape = 'u32[72,128]{1,0:T(1,128)}', space=vmem, size = 0x9000, scoped, tag = 'internal scratch']
  %s0 = inlined_call_operand.vmem [shape: bf16[32,384], index: 0, kind: input, shape index: {}]
  %s1 = inlined_call_operand.vmem [shape: bf16[384,256], index: 1, kind: input, shape index: {}]
  %s2 = inlined_call_operand.vmem [shape: f32[1,256], index: 2, kind: input, shape index: {}]
  %s3 = inlined_call_operand.vmem [shape: f32[32,128], index: 3, kind: output, shape index: {}]
  %s4 = sld [smem:[#allocation0]]
  $region22: #{_lambda_.48} parent=0
    _
  %s6 = ssub.s32 1, %s4
  %s7 = scalar_select 0, %s6, %s4
  // Predicated region
  $region2: #{_lambda_.48} parent=0 // pred_check
    _
  $region3: #{_lambda_.48} parent=0 // pred_check_branch
    %9 = sbr.rel (0) target = $region5
  $region4: #{_lambda_.48} parent=0 // pred_region
    _
  $region5: #{_lambda_.48} parent=0 // pred_fallthru
    _
  // Predicated region
  $region6: #{_lambda_.48} parent=0 // pred_check
    _
  $region7: #{_lambda_.48} parent=0 // pred_check_branch
    %11 = sbr.rel (0) target = $region9
  $region8: #{_lambda_.48} parent=0 // pred_region
    _
  $region9: #{_lambda_.48} parent=0 // pred_fallthru
    _
  // Predicated region
  $region10: #{_lambda_.48} parent=0 // pred_check
    _
  $region11: #{_lambda_.48} parent=0 // pred_check_branch
    %13 = sbr.rel (0) target = $region13
  $region12: #{_lambda_.48} parent=0 // pred_region
    _
  $region13: #{_lambda_.48} parent=0 // pred_fallthru
    _
  %v14 = vld [vmem:[%s0] sm:$0xff]
  %v15 = vld [vmem:[%s0 + $0x8] sm:$0xf]
  %v16 = vld [vmem:[%s0 + $0xc] sm:$0xff]
  %v17 = vld [vmem:[%s0 + $0x14] sm:$0xf]
  %v18 = vld [vmem:[%s0 + $0x18] sm:$0xff]
  %v19 = vld [vmem:[%s0 + $0x20] sm:$0xf]
  %v20 = vld [vmem:[%s0 + $0x24] sm:$0xff]
  %v21 = vld [vmem:[%s0 + $0x2c] sm:$0xf]
  %v22 = vld [vmem:[%s1] sm:$0xff]
  %v23 = vld [vmem:[%s1 + $0x8] sm:$0xff]
  %v24 = vld [vmem:[%s1 + $0x10] sm:$0xff]
  %v25 = vld [vmem:[%s1 + $0x18] sm:$0xff]
  %v26 = vld [vmem:[%s1 + $0x20] sm:$0xff]
  %v27 = vld [vmem:[%s1 + $0x28] sm:$0xff]
  %v28 = vld [vmem:[%s1 + $0x30] sm:$0xff]
  %v29 = vld [vmem:[%s1 + $0x38] sm:$0xff]
  %v30 = vld [vmem:[%s1 + $0x40] sm:$0xff]
  %v31 = vld [vmem:[%s1 + $0x48] sm:$0xff]
  %v32 = vld [vmem:[%s1 + $0x50] sm:$0xff]
  %v33 = vld [vmem:[%s1 + $0x58] sm:$0xff]
  %v34 = vld [vmem:[%s1 + $0x60] sm:$0xff]
  %v35 = vld [vmem:[%s1 + $0x68] sm:$0xff]
  %v36 = vld [vmem:[%s1 + $0x70] sm:$0xff]
  %v37 = vld [vmem:[%s1 + $0x78] sm:$0xff]
  %v38 = vld [vmem:[%s1 + $0x80] sm:$0xff]
  %v39 = vld [vmem:[%s1 + $0x88] sm:$0xff]
  %v40 = vld [vmem:[%s1 + $0x90] sm:$0xff]
  %v41 = vld [vmem:[%s1 + $0x98] sm:$0xff]
  %v42 = vld [vmem:[%s1 + $0xa0] sm:$0xff]
  %v43 = vld [vmem:[%s1 + $0xa8] sm:$0xff]
  %v44 = vld [vmem:[%s1 + $0xb0] sm:$0xff]
  %v45 = vld [vmem:[%s1 + $0xb8] sm:$0xff]
  %v46 = vld [vmem:[%s1 + $0xc0] sm:$0xff]
  %v47 = vld [vmem:[%s1 + $0xc8] sm:$0xff]
  %v48 = vld [vmem:[%s1 + $0xd0] sm:$0xff]
  %v49 = vld [vmem:[%s1 + $0xd8] sm:$0xff]
  %v50 = vld [vmem:[%s1 + $0xe0] sm:$0xff]
  %v51 = vld [vmem:[%s1 + $0xe8] sm:$0xff]
  %v52 = vld [vmem:[%s1 + $0xf0] sm:$0xff]
  %v53 = vld [vmem:[%s1 + $0xf8] sm:$0xff]
  %v54 = vld [vmem:[%s1 + $0x100] sm:$0xff]
  %v55 = vld [vmem:[%s1 + $0x108] sm:$0xff]
  %v56 = vld [vmem:[%s1 + $0x110] sm:$0xff]
  %v57 = vld [vmem:[%s1 + $0x118] sm:$0xff]
  %v58 = vld [vmem:[%s1 + $0x120] sm:$0xff]
  %v59 = vld [vmem:[%s1 + $0x128] sm:$0xff]
  %v60 = vld [vmem:[%s1 + $0x130] sm:$0xff]
  %v61 = vld [vmem:[%s1 + $0x138] sm:$0xff]
  %v62 = vld [vmem:[%s1 + $0x140] sm:$0xff]
  %v63 = vld [vmem:[%s1 + $0x148] sm:$0xff]
  %v64 = vld [vmem:[%s1 + $0x150] sm:$0xff]
  %v65 = vld [vmem:[%s1 + $0x158] sm:$0xff]
  %v66 = vld [vmem:[%s1 + $0x160] sm:$0xff]
  %v67 = vld [vmem:[%s1 + $0x168] sm:$0xff]
  %v68 = vld [vmem:[%s1 + $0x170] sm:$0xff]
  %v69 = vld [vmem:[%s1 + $0x178] sm:$0xff]
  %v70 = vld [vmem:[%s2] sm:$0x3]
  %v72 = vperm.slane %v70, 0
  %v73 = vperm.slane %v70, 1
  %v84 = vunpack.c.l.b16 %v14
  %v85 = vunpack.c.h.b16 %v14
  %v86 = vunpack.c.l.b16 %v15
  %v87 = vunpack.c.l.b16 %v16
  %v88 = vunpack.c.h.b16 %v16
  %v89 = vunpack.c.l.b16 %v17
  %v90 = vunpack.c.l.b16 %v18
  %v91 = vunpack.c.h.b16 %v18
  %v92 = vunpack.c.l.b16 %v19
  %v93 = vunpack.c.l.b16 %v20
  %v94 = vunpack.c.h.b16 %v20
  %v95 = vunpack.c.l.b16 %v21
  %v96 = vpack.c.b16 %v87, %v84
  %v97 = vpack.c.b16 %v88, %v85
  %v98 = vpack.c.b16 %v89, %v86
  %v99 = vpack.c.b16 %v93, %v90
  %v100 = vpack.c.b16 %v94, %v91
  %v101 = vpack.c.b16 %v95, %v92
  %v156 = vunpack.c.l.b16 %v22
  %v157 = vunpack.c.h.b16 %v22
  %v158 = vunpack.c.l.b16 %v23
  %v159 = vunpack.c.h.b16 %v23
  %v160 = vunpack.c.l.b16 %v24
  %v161 = vunpack.c.h.b16 %v24
  %v162 = vunpack.c.l.b16 %v25
  %v163 = vunpack.c.h.b16 %v25
  %v164 = vunpack.c.l.b16 %v26
  %v165 = vunpack.c.h.b16 %v26
  %v166 = vunpack.c.l.b16 %v27
  %v167 = vunpack.c.h.b16 %v27
  %v168 = vunpack.c.l.b16 %v28
  %v169 = vunpack.c.h.b16 %v28
  %v170 = vunpack.c.l.b16 %v29
  %v171 = vunpack.c.h.b16 %v29
  %v172 = vunpack.c.l.b16 %v30
  %v173 = vunpack.c.h.b16 %v30
  %v174 = vunpack.c.l.b16 %v31
  %v175 = vunpack.c.h.b16 %v31
  %v176 = vunpack.c.l.b16 %v32
  %v177 = vunpack.c.h.b16 %v32
  %v178 = vunpack.c.l.b16 %v33
  %v179 = vunpack.c.h.b16 %v33
  %v180 = vunpack.c.l.b16 %v34
  %v181 = vunpack.c.h.b16 %v34
  %v182 = vunpack.c.l.b16 %v35
  %v183 = vunpack.c.h.b16 %v35
  %v184 = vunpack.c.l.b16 %v36
  %v185 = vunpack.c.h.b16 %v36
  %v186 = vunpack.c.l.b16 %v37
  %v187 = vunpack.c.h.b16 %v37
  %v188 = vunpack.c.l.b16 %v38
  %v189 = vunpack.c.h.b16 %v38
  %v190 = vunpack.c.l.b16 %v39
  %v191 = vunpack.c.h.b16 %v39
  %v192 = vunpack.c.l.b16 %v40
  %v193 = vunpack.c.h.b16 %v40
  %v194 = vunpack.c.l.b16 %v41
  %v195 = vunpack.c.h.b16 %v41
  %v196 = vunpack.c.l.b16 %v42
  %v197 = vunpack.c.h.b16 %v42
  %v198 = vunpack.c.l.b16 %v43
  %v199 = vunpack.c.h.b16 %v43
  %v200 = vunpack.c.l.b16 %v44
  %v201 = vunpack.c.h.b16 %v44
  %v202 = vunpack.c.l.b16 %v45
  %v203 = vunpack.c.h.b16 %v45
  %v204 = vunpack.c.l.b16 %v46
  %v205 = vunpack.c.h.b16 %v46
  %v206 = vunpack.c.l.b16 %v47
  %v207 = vunpack.c.h.b16 %v47
  %v208 = vunpack.c.l.b16 %v48
  %v209 = vunpack.c.h.b16 %v48
  %v210 = vunpack.c.l.b16 %v49
  %v211 = vunpack.c.h.b16 %v49
  %v212 = vunpack.c.l.b16 %v50
  %v213 = vunpack.c.h.b16 %v50
  %v214 = vunpack.c.l.b16 %v51
  %v215 = vunpack.c.h.b16 %v51
  %v216 = vunpack.c.l.b16 %v52
  %v217 = vunpack.c.h.b16 %v52
  %v218 = vunpack.c.l.b16 %v53
  %v219 = vunpack.c.h.b16 %v53
  %v220 = vunpack.c.l.b16 %v54
  %v221 = vunpack.c.h.b16 %v54
  %v222 = vunpack.c.l.b16 %v55
  %v223 = vunpack.c.h.b16 %v55
  %v224 = vunpack.c.l.b16 %v56
  %v225 = vunpack.c.h.b16 %v56
  %v226 = vunpack.c.l.b16 %v57
  %v227 = vunpack.c.h.b16 %v57
  %v228 = vunpack.c.l.b16 %v58
  %v229 = vunpack.c.h.b16 %v58
  %v230 = vunpack.c.l.b16 %v59
  %v231 = vunpack.c.h.b16 %v59
  %v232 = vunpack.c.l.b16 %v60
  %v233 = vunpack.c.h.b16 %v60
  %v234 = vunpack.c.l.b16 %v61
  %v235 = vunpack.c.h.b16 %v61
  %v236 = vunpack.c.l.b16 %v62
  %v237 = vunpack.c.h.b16 %v62
  %v238 = vunpack.c.l.b16 %v63
  %v239 = vunpack.c.h.b16 %v63
  %v240 = vunpack.c.l.b16 %v64
  %v241 = vunpack.c.h.b16 %v64
  %v242 = vunpack.c.l.b16 %v65
  %v243 = vunpack.c.h.b16 %v65
  %v244 = vunpack.c.l.b16 %v66
  %v245 = vunpack.c.h.b16 %v66
  %v246 = vunpack.c.l.b16 %v67
  %v247 = vunpack.c.h.b16 %v67
  %v248 = vunpack.c.l.b16 %v68
  %v249 = vunpack.c.h.b16 %v68
  %v250 = vunpack.c.l.b16 %v69
  %v251 = vunpack.c.h.b16 %v69
  %v252 = vpack.c.b16 %v158, %v156
  %v253 = vpack.c.b16 %v159, %v157
  %v254 = vpack.c.b16 %v162, %v160
  %v255 = vpack.c.b16 %v163, %v161
  %v256 = vpack.c.b16 %v166, %v164
  %v257 = vpack.c.b16 %v167, %v165
  %v258 = vpack.c.b16 %v170, %v168
  %v259 = vpack.c.b16 %v171, %v169
  %v260 = vpack.c.b16 %v174, %v172
  %v261 = vpack.c.b16 %v175, %v173
  %v262 = vpack.c.b16 %v178, %v176
  %v263 = vpack.c.b16 %v179, %v177
  %v264 = vpack.c.b16 %v182, %v180
  %v265 = vpack.c.b16 %v183, %v181
  %v266 = vpack.c.b16 %v186, %v184
  %v267 = vpack.c.b16 %v187, %v185
  %v268 = vpack.c.b16 %v190, %v188
  %v269 = vpack.c.b16 %v191, %v189
  %v270 = vpack.c.b16 %v194, %v192
  %v271 = vpack.c.b16 %v195, %v193
  %v272 = vpack.c.b16 %v198, %v196
  %v273 = vpack.c.b16 %v199, %v197
  %v274 = vpack.c.b16 %v202, %v200
  %v275 = vpack.c.b16 %v203, %v201
  %v276 = vpack.c.b16 %v206, %v204
  %v277 = vpack.c.b16 %v207, %v205
  %v278 = vpack.c.b16 %v210, %v208
  %v279 = vpack.c.b16 %v211, %v209
  %v280 = vpack.c.b16 %v214, %v212
  %v281 = vpack.c.b16 %v215, %v213
  %v282 = vpack.c.b16 %v218, %v216
  %v283 = vpack.c.b16 %v219, %v217
  %v284 = vpack.c.b16 %v222, %v220
  %v285 = vpack.c.b16 %v223, %v221
  %v286 = vpack.c.b16 %v226, %v224
  %v287 = vpack.c.b16 %v227, %v225
  %v288 = vpack.c.b16 %v230, %v228
  %v289 = vpack.c.b16 %v231, %v229
  %v290 = vpack.c.b16 %v234, %v232
  %v291 = vpack.c.b16 %v235, %v233
  %v292 = vpack.c.b16 %v238, %v236
  %v293 = vpack.c.b16 %v239, %v237
  %v294 = vpack.c.b16 %v242, %v240
  %v295 = vpack.c.b16 %v243, %v241
  %v296 = vpack.c.b16 %v246, %v244
  %v297 = vpack.c.b16 %v247, %v245
  %v298 = vpack.c.b16 %v250, %v248
  %v299 = vpack.c.b16 %v251, %v249
  %348 = vmatpush.bf16.msra.mxu0 %v266
  %349 = vmatpush.bf16.msra.mxu0 %v264
  %350 = vmatpush.bf16.msra.mxu0 %v262
  %351 = vmatpush.bf16.msra.mxu0 %v260
  %352 = vmatpush.bf16.msra.mxu0 %v258
  %353 = vmatpush.bf16.msra.mxu0 %v256
  %354 = vmatpush.bf16.msra.mxu0 %v254
  %355 = vmatpush.bf16.msra.mxu0 %v252
  %356 = vmatmul.bf16.gmra.mxu0 %v96
  %v357 = vpop.f32.mrf.mxu0
  %v358 = vadd.f32 %v72, %v357
  %v359 = vpop.f32.mrf.mxu0
  %v360 = vadd.f32 %v72, %v359
  %361 = vmatmul.bf16.gmra.mxu0 %v99
  %v362 = vpop.f32.mrf.mxu0
  %v363 = vadd.f32 %v72, %v362
  %v364 = vpop.f32.mrf.mxu0
  %v365 = vadd.f32 %v72, %v364
  %366 = vdwg.mxu0
  %367 = vmatpush.bf16.msra.mxu0 %v282
  %368 = vmatpush.bf16.msra.mxu0 %v280
  %369 = vmatpush.bf16.msra.mxu0 %v278
  %370 = vmatpush.bf16.msra.mxu0 %v276
  %371 = vmatpush.bf16.msra.mxu0 %v274
  %372 = vmatpush.bf16.msra.mxu0 %v272
  %373 = vmatpush.bf16.msra.mxu0 %v270
  %374 = vmatpush.bf16.msra.mxu0 %v268
  %375 = vmatmul.bf16.gmra.mxu0 %v97
  %v376 = vpop.f32.mrf.mxu0
  %v377 = vadd.f32 %v358, %v376
  %v378 = vpop.f32.mrf.mxu0
  %v379 = vadd.f32 %v360, %v378
  %380 = vmatmul.bf16.gmra.mxu0 %v100
  %v381 = vpop.f32.mrf.mxu0
  %v382 = vadd.f32 %v363, %v381
  %v383 = vpop.f32.mrf.mxu0
  %v384 = vadd.f32 %v365, %v383
  %385 = vdwg.mxu0
  %386 = vmatpush.bf16.msra.mxu0 %v298
  %387 = vmatpush.bf16.msra.mxu0 %v296
  %388 = vmatpush.bf16.msra.mxu0 %v294
  %389 = vmatpush.bf16.msra.mxu0 %v292
  %390 = vmatpush.bf16.msra.mxu0 %v290
  %391 = vmatpush.bf16.msra.mxu0 %v288
  %392 = vmatpush.bf16.msra.mxu0 %v286
  %393 = vmatpush.bf16.msra.mxu0 %v284
  %394 = vmatmul.bf16.gmra.mxu0 %v98
  %v395 = vpop.f32.mrf.mxu0
  %v396 = vadd.f32 %v377, %v395
  %v397 = vpop.f32.mrf.mxu0
  %v398 = vadd.f32 %v379, %v397
  %399 = vmatmul.bf16.gmra.mxu0 %v101
  %v400 = vpop.f32.mrf.mxu0
  %v401 = vadd.f32 %v382, %v400
  %v402 = vpop.f32.mrf.mxu0
  %v403 = vadd.f32 %v384, %v402
  %404 = vdwg.mxu0
  %405 = vmatpush.bf16.msra.mxu0 %v267
  %406 = vmatpush.bf16.msra.mxu0 %v265
  %407 = vmatpush.bf16.msra.mxu0 %v263
  %408 = vmatpush.bf16.msra.mxu0 %v261
  %409 = vmatpush.bf16.msra.mxu0 %v259
  %410 = vmatpush.bf16.msra.mxu0 %v257
  %411 = vmatpush.bf16.msra.mxu0 %v255
  %412 = vmatpush.bf16.msra.mxu0 %v253
  %413 = vmatmul.bf16.gmra.mxu0 %v96
  %v414 = vpop.f32.mrf.mxu0
  %v415 = vadd.f32 %v73, %v414
  %v416 = vpop.f32.mrf.mxu0
  %v417 = vadd.f32 %v73, %v416
  %418 = vmatmul.bf16.gmra.mxu0 %v99
  %v419 = vpop.f32.mrf.mxu0
  %v420 = vadd.f32 %v73, %v419
  %v421 = vpop.f32.mrf.mxu0
  %v422 = vadd.f32 %v73, %v421
  %423 = vdwg.mxu0
  %424 = vmatpush.bf16.msra.mxu0 %v283
  %425 = vmatpush.bf16.msra.mxu0 %v281
  %426 = vmatpush.bf16.msra.mxu0 %v279
  %427 = vmatpush.bf16.msra.mxu0 %v277
  %428 = vmatpush.bf16.msra.mxu0 %v275
  %429 = vmatpush.bf16.msra.mxu0 %v273
  %430 = vmatpush.bf16.msra.mxu0 %v271
  %431 = vmatpush.bf16.msra.mxu0 %v269
  %432 = vmatmul.bf16.gmra.mxu0 %v97
  %v433 = vpop.f32.mrf.mxu0
  %v434 = vadd.f32 %v415, %v433
  %v435 = vpop.f32.mrf.mxu0
  %v436 = vadd.f32 %v417, %v435
  %437 = vmatmul.bf16.gmra.mxu0 %v100
  %v438 = vpop.f32.mrf.mxu0
  %v439 = vadd.f32 %v420, %v438
  %v440 = vpop.f32.mrf.mxu0
  %v441 = vadd.f32 %v422, %v440
  %442 = vdwg.mxu0
  %443 = vmatpush.bf16.msra.mxu0 %v299
  %444 = vmatpush.bf16.msra.mxu0 %v297
  %445 = vmatpush.bf16.msra.mxu0 %v295
  %446 = vmatpush.bf16.msra.mxu0 %v293
  %447 = vmatpush.bf16.msra.mxu0 %v291
  %448 = vmatpush.bf16.msra.mxu0 %v289
  %449 = vmatpush.bf16.msra.mxu0 %v287
  %450 = vmatpush.bf16.msra.mxu0 %v285
  %451 = vmatmul.bf16.gmra.mxu0 %v98
  %v452 = vpop.f32.mrf.mxu0
  %v453 = vadd.f32 %v434, %v452
  %v454 = vpop.f32.mrf.mxu0
  %v455 = vadd.f32 %v436, %v454
  %456 = vmatmul.bf16.gmra.mxu0 %v101
  %v457 = vpop.f32.mrf.mxu0
  %v458 = vadd.f32 %v439, %v457
  %v459 = vpop.f32.mrf.mxu0
  %v460 = vadd.f32 %v441, %v459
  %461 = vdwg.mxu0
  %v462 = vxor.u32 %v453, 2147483648
  %v463 = vxor.u32 %v455, 2147483648
  %v464 = vxor.u32 %v458, 2147483648
  %v465 = vxor.u32 %v460, 2147483648
  %v466 = vmul.f32 %v462, 1.442695
  %v467 = vpow.pop %v466
  %v468 = vmul.f32 %v463, 1.442695
  %v469 = vpow.pop %v468
  %v470 = vmul.f32 %v464, 1.442695
  %v471 = vpow.pop %v470
  %v472 = vmul.f32 %v465, 1.442695
  %v473 = vpow.pop %v472
  %v474 = vadd.f32 %v467, 1.0
  %v475 = vadd.f32 %v469, 1.0
  %v476 = vadd.f32 %v471, 1.0
  %v477 = vadd.f32 %v473, 1.0
  %v478 = vrcp.pop %v474
  %v479 = vmul.f32 %v474, %v478
  %v480 = vsub.f32 1.0, %v479
  %v481 = vmul.f32 %v478, %v480
  %v482 = vadd.f32 %v478, %v481
  %vm483 = vweird.f32 %v474
  %vm484 = vweird.f32 %v478
  %vm485 = vmor %vm483, %vm484
  %v486 = vsel %vm485, %v478, %v482
  %v487 = vand.u32 2147483647, %v474
  %vm488 = vcmp.eq.f32.partialorder %v487, 8.507059e+37
  %v489 = vand.u32 %v474, 2147483648
  %v490 = vor.u32 1.1754944e-38, %v489
  %v491 = vsel %vm488, %v490, %v486
  %v492 = vmul.f32 1.0, %v491
  %v493 = vrcp.pop %v475
  %v494 = vmul.f32 %v475, %v493
  %v495 = vsub.f32 1.0, %v494
  %v496 = vmul.f32 %v493, %v495
  %v497 = vadd.f32 %v493, %v496
  %vm498 = vweird.f32 %v475
  %vm499 = vweird.f32 %v493
  %vm500 = vmor %vm498, %vm499
  %v501 = vsel %vm500, %v493, %v497
  %v502 = vand.u32 2147483647, %v475
  %vm503 = vcmp.eq.f32.partialorder %v502, 8.507059e+37
  %v504 = vand.u32 %v475, 2147483648
  %v505 = vor.u32 1.1754944e-38, %v504
  %v506 = vsel %vm503, %v505, %v501
  %v507 = vmul.f32 1.0, %v506
  %v508 = vrcp.pop %v476
  %v509 = vmul.f32 %v476, %v508
  %v510 = vsub.f32 1.0, %v509
  %v511 = vmul.f32 %v508, %v510
  %v512 = vadd.f32 %v508, %v511
  %vm513 = vweird.f32 %v476
  %vm514 = vweird.f32 %v508
  %vm515 = vmor %vm513, %vm514
  %v516 = vsel %vm515, %v508, %v512
  %v517 = vand.u32 2147483647, %v476
  %vm518 = vcmp.eq.f32.partialorder %v517, 8.507059e+37
  %v519 = vand.u32 %v476, 2147483648
  %v520 = vor.u32 1.1754944e-38, %v519
  %v521 = vsel %vm518, %v520, %v516
  %v522 = vmul.f32 1.0, %v521
  %v523 = vrcp.pop %v477
  %v524 = vmul.f32 %v477, %v523
  %v525 = vsub.f32 1.0, %v524
  %v526 = vmul.f32 %v523, %v525
  %v527 = vadd.f32 %v523, %v526
  %vm528 = vweird.f32 %v477
  %vm529 = vweird.f32 %v523
  %vm530 = vmor %vm528, %vm529
  %v531 = vsel %vm530, %v523, %v527
  %v532 = vand.u32 2147483647, %v477
  %vm533 = vcmp.eq.f32.partialorder %v532, 8.507059e+37
  %v534 = vand.u32 %v477, 2147483648
  %v535 = vor.u32 1.1754944e-38, %v534
  %v536 = vsel %vm533, %v535, %v531
  %v537 = vmul.f32 1.0, %v536
  %vm538 = vcmp.ge.f32.partialorder %v396, 0.0
  %vm539 = vcmp.ge.f32.partialorder %v398, 0.0
  %vm540 = vcmp.ge.f32.partialorder %v401, 0.0
  %vm541 = vcmp.ge.f32.partialorder %v403, 0.0
  %v542 = vmul.f32 %v396, 0.2
  %v543 = vmul.f32 %v398, 0.2
  %v544 = vmul.f32 %v401, 0.2
  %v545 = vmul.f32 %v403, 0.2
  %v546 = vsel %vm538, %v396, %v542
  %v547 = vsel %vm539, %v398, %v543
  %v548 = vsel %vm540, %v401, %v544
  %v549 = vsel %vm541, %v403, %v545
  %v550 = vmul.f32 %v546, %v492
  %v551 = vmul.f32 %v547, %v507
  %v552 = vmul.f32 %v548, %v522
  %v553 = vmul.f32 %v549, %v537
  %554 = vst [vmem:[%s3] sm:$0xff] %v550
  %555 = vst [vmem:[%s3 + $0x8] sm:$0xff] %v551
  %556 = vst [vmem:[%s3 + $0x10] sm:$0xff] %v552
  %557 = vst [vmem:[%s3 + $0x18] sm:$0xff] %v553
  // Predicated region
  $region14: #{_lambda_.48} parent=0 // pred_check
    _
  $region15: #{_lambda_.48} parent=0 // pred_check_branch
    %559 = sbr.rel (0) target = $region17
  $region16: #{_lambda_.48} parent=0 // pred_region
    _
  $region17: #{_lambda_.48} parent=0 // pred_fallthru
    _
  // Predicated region
  $region18: #{_lambda_.48} parent=0 // pred_check
    _
  $region19: #{_lambda_.48} parent=0 // pred_check_branch
    %561 = sbr.rel (0) target = $region21
  $region20: #{_lambda_.48} parent=0 // pred_region
    _
  $region21: #{_lambda_.48} parent=0 // pred_fallthru
    _

// kernel: _lambda_.56
$region0: #{_lambda_.56}
  #allocation0 [shape = 'u32[]', space=smem, size = 0x4, offset = 0x4, fixed_abs, tag = 'smem constant byte address 0x4 - core index']
  #allocation1 [shape = 'u32[72,128]{1,0:T(1,128)}', space=vmem, size = 0x9000, scoped, tag = 'internal scratch']
  %s0 = inlined_call_operand.vmem [shape: bf16[128,384], index: 0, kind: input, shape index: {}]
  %s1 = inlined_call_operand.vmem [shape: bf16[384,256], index: 1, kind: input, shape index: {}]
  %s2 = inlined_call_operand.vmem [shape: f32[1,256], index: 2, kind: input, shape index: {}]
  %s3 = inlined_call_operand.vmem [shape: f32[128,128], index: 3, kind: output, shape index: {}]
  %s4 = sld [smem:[#allocation0]]
  $region22: #{_lambda_.56} parent=0
    _
  %s6 = ssub.s32 1, %s4
  %s7 = scalar_select 0, %s6, %s4
  // Predicated region
  $region2: #{_lambda_.56} parent=0 // pred_check
    _
  $region3: #{_lambda_.56} parent=0 // pred_check_branch
    %9 = sbr.rel (0) target = $region5
  $region4: #{_lambda_.56} parent=0 // pred_region
    _
  $region5: #{_lambda_.56} parent=0 // pred_fallthru
    _
  // Predicated region
  $region6: #{_lambda_.56} parent=0 // pred_check
    _
  $region7: #{_lambda_.56} parent=0 // pred_check_branch
    %11 = sbr.rel (0) target = $region9
  $region8: #{_lambda_.56} parent=0 // pred_region
    _
  $region9: #{_lambda_.56} parent=0 // pred_fallthru
    _
  // Predicated region
  $region10: #{_lambda_.56} parent=0 // pred_check
    _
  $region11: #{_lambda_.56} parent=0 // pred_check_branch
    %13 = sbr.rel (0) target = $region13
  $region12: #{_lambda_.56} parent=0 // pred_region
    _
  $region13: #{_lambda_.56} parent=0 // pred_fallthru
    _
  %v14 = vld [vmem:[%s0] sm:$0xff]
  %v15 = vld [vmem:[%s0 + $0x8] sm:$0xf]
  %v16 = vld [vmem:[%s0 + $0xc] sm:$0xff]
  %v17 = vld [vmem:[%s0 + $0x14] sm:$0xf]
  %v18 = vld [vmem:[%s0 + $0x18] sm:$0xff]
  %v19 = vld [vmem:[%s0 + $0x20] sm:$0xf]
  %v20 = vld [vmem:[%s0 + $0x24] sm:$0xff]
  %v21 = vld [vmem:[%s0 + $0x2c] sm:$0xf]
  %v22 = vld [vmem:[%s0 + $0x30] sm:$0xff]
  %v23 = vld [vmem:[%s0 + $0x38] sm:$0xf]
  %v24 = vld [vmem:[%s0 + $0x3c] sm:$0xff]
  %v25 = vld [vmem:[%s0 + $0x44] sm:$0xf]
  %v26 = vld [vmem:[%s0 + $0x48] sm:$0xff]
  %v27 = vld [vmem:[%s0 + $0x50] sm:$0xf]
  %v28 = vld [vmem:[%s0 + $0x54] sm:$0xff]
  %v29 = vld [vmem:[%s0 + $0x5c] sm:$0xf]
  %v30 = vld [vmem:[%s0 + $0x60] sm:$0xff]
  %v31 = vld [vmem:[%s0 + $0x68] sm:$0xf]
  %v32 = vld [vmem:[%s0 + $0x6c] sm:$0xff]
  %v33 = vld [vmem:[%s0 + $0x74] sm:$0xf]
  %v34 = vld [vmem:[%s0 + $0x78] sm:$0xff]
  %v35 = vld [vmem:[%s0 + $0x80] sm:$0xf]
  %v36 = vld [vmem:[%s0 + $0x84] sm:$0xff]
  %v37 = vld [vmem:[%s0 + $0x8c] sm:$0xf]
  %v38 = vld [vmem:[%s0 + $0x90] sm:$0xff]
  %v39 = vld [vmem:[%s0 + $0x98] sm:$0xf]
  %v40 = vld [vmem:[%s0 + $0x9c] sm:$0xff]
  %v41 = vld [vmem:[%s0 + $0xa4] sm:$0xf]
  %v42 = vld [vmem:[%s0 + $0xa8] sm:$0xff]
  %v43 = vld [vmem:[%s0 + $0xb0] sm:$0xf]
  %v44 = vld [vmem:[%s0 + $0xb4] sm:$0xff]
  %v45 = vld [vmem:[%s0 + $0xbc] sm:$0xf]
  %v46 = vld [vmem:[%s1] sm:$0xff]
  %v47 = vld [vmem:[%s1 + $0x8] sm:$0xff]
  %v48 = vld [vmem:[%s1 + $0x10] sm:$0xff]
  %v49 = vld [vmem:[%s1 + $0x18] sm:$0xff]
  %v50 = vld [vmem:[%s1 + $0x20] sm:$0xff]
  %v51 = vld [vmem:[%s1 + $0x28] sm:$0xff]
  %v52 = vld [vmem:[%s1 + $0x30] sm:$0xff]
  %v53 = vld [vmem:[%s1 + $0x38] sm:$0xff]
  %v54 = vld [vmem:[%s1 + $0x40] sm:$0xff]
  %v55 = vld [vmem:[%s1 + $0x48] sm:$0xff]
  %v56 = vld [vmem:[%s1 + $0x50] sm:$0xff]
  %v57 = vld [vmem:[%s1 + $0x58] sm:$0xff]
  %v58 = vld [vmem:[%s1 + $0x60] sm:$0xff]
  %v59 = vld [vmem:[%s1 + $0x68] sm:$0xff]
  %v60 = vld [vmem:[%s1 + $0x70] sm:$0xff]
  %v61 = vld [vmem:[%s1 + $0x78] sm:$0xff]
  %v62 = vld [vmem:[%s1 + $0x80] sm:$0xff]
  %v63 = vld [vmem:[%s1 + $0x88] sm:$0xff]
  %v64 = vld [vmem:[%s1 + $0x90] sm:$0xff]
  %v65 = vld [vmem:[%s1 + $0x98] sm:$0xff]
  %v66 = vld [vmem:[%s1 + $0xa0] sm:$0xff]
  %v67 = vld [vmem:[%s1 + $0xa8] sm:$0xff]
  %v68 = vld [vmem:[%s1 + $0xb0] sm:$0xff]
  %v69 = vld [vmem:[%s1 + $0xb8] sm:$0xff]
  %v70 = vld [vmem:[%s1 + $0xc0] sm:$0xff]
  %v71 = vld [vmem:[%s1 + $0xc8] sm:$0xff]
  %v72 = vld [vmem:[%s1 + $0xd0] sm:$0xff]
  %v73 = vld [vmem:[%s1 + $0xd8] sm:$0xff]
  %v74 = vld [vmem:[%s1 + $0xe0] sm:$0xff]
  %v75 = vld [vmem:[%s1 + $0xe8] sm:$0xff]
  %v76 = vld [vmem:[%s1 + $0xf0] sm:$0xff]
  %v77 = vld [vmem:[%s1 + $0xf8] sm:$0xff]
  %v78 = vld [vmem:[%s1 + $0x100] sm:$0xff]
  %v79 = vld [vmem:[%s1 + $0x108] sm:$0xff]
  %v80 = vld [vmem:[%s1 + $0x110] sm:$0xff]
  %v81 = vld [vmem:[%s1 + $0x118] sm:$0xff]
  %v82 = vld [vmem:[%s1 + $0x120] sm:$0xff]
  %v83 = vld [vmem:[%s1 + $0x128] sm:$0xff]
  %v84 = vld [vmem:[%s1 + $0x130] sm:$0xff]
  %v85 = vld [vmem:[%s1 + $0x138] sm:$0xff]
  %v86 = vld [vmem:[%s1 + $0x140] sm:$0xff]
  %v87 = vld [vmem:[%s1 + $0x148] sm:$0xff]
  %v88 = vld [vmem:[%s1 + $0x150] sm:$0xff]
  %v89 = vld [vmem:[%s1 + $0x158] sm:$0xff]
  %v90 = vld [vmem:[%s1 + $0x160] sm:$0xff]
  %v91 = vld [vmem:[%s1 + $0x168] sm:$0xff]
  %v92 = vld [vmem:[%s1 + $0x170] sm:$0xff]
  %v93 = vld [vmem:[%s1 + $0x178] sm:$0xff]
  %v94 = vld [vmem:[%s2] sm:$0x3]
  %v96 = vperm.slane %v94, 0
  %v97 = vperm.slane %v94, 1
  %v132 = vunpack.c.l.b16 %v14
  %v133 = vunpack.c.h.b16 %v14
  %v134 = vunpack.c.l.b16 %v15
  %v135 = vunpack.c.l.b16 %v16
  %v136 = vunpack.c.h.b16 %v16
  %v137 = vunpack.c.l.b16 %v17
  %v138 = vunpack.c.l.b16 %v18
  %v139 = vunpack.c.h.b16 %v18
  %v140 = vunpack.c.l.b16 %v19
  %v141 = vunpack.c.l.b16 %v20
  %v142 = vunpack.c.h.b16 %v20
  %v143 = vunpack.c.l.b16 %v21
  %v144 = vunpack.c.l.b16 %v22
  %v145 = vunpack.c.h.b16 %v22
  %v146 = vunpack.c.l.b16 %v23
  %v147 = vunpack.c.l.b16 %v24
  %v148 = vunpack.c.h.b16 %v24
  %v149 = vunpack.c.l.b16 %v25
  %v150 = vunpack.c.l.b16 %v26
  %v151 = vunpack.c.h.b16 %v26
  %v152 = vunpack.c.l.b16 %v27
  %v153 = vunpack.c.l.b16 %v28
  %v154 = vunpack.c.h.b16 %v28
  %v155 = vunpack.c.l.b16 %v29
  %v156 = vunpack.c.l.b16 %v30
  %v157 = vunpack.c.h.b16 %v30
  %v158 = vunpack.c.l.b16 %v31
  %v159 = vunpack.c.l.b16 %v32
  %v160 = vunpack.c.h.b16 %v32
  %v161 = vunpack.c.l.b16 %v33
  %v162 = vunpack.c.l.b16 %v34
  %v163 = vunpack.c.h.b16 %v34
  %v164 = vunpack.c.l.b16 %v35
  %v165 = vunpack.c.l.b16 %v36
  %v166 = vunpack.c.h.b16 %v36
  %v167 = vunpack.c.l.b16 %v37
  %v168 = vunpack.c.l.b16 %v38
  %v169 = vunpack.c.h.b16 %v38
  %v170 = vunpack.c.l.b16 %v39
  %v171 = vunpack.c.l.b16 %v40
  %v172 = vunpack.c.h.b16 %v40
  %v173 = vunpack.c.l.b16 %v41
  %v174 = vunpack.c.l.b16 %v42
  %v175 = vunpack.c.h.b16 %v42
  %v176 = vunpack.c.l.b16 %v43
  %v177 = vunpack.c.l.b16 %v44
  %v178 = vunpack.c.h.b16 %v44
  %v179 = vunpack.c.l.b16 %v45
  %v180 = vpack.c.b16 %v135, %v132
  %v181 = vpack.c.b16 %v136, %v133
  %v182 = vpack.c.b16 %v137, %v134
  %v183 = vpack.c.b16 %v141, %v138
  %v184 = vpack.c.b16 %v142, %v139
  %v185 = vpack.c.b16 %v143, %v140
  %v186 = vpack.c.b16 %v147, %v144
  %v187 = vpack.c.b16 %v148, %v145
  %v188 = vpack.c.b16 %v149, %v146
  %v189 = vpack.c.b16 %v153, %v150
  %v190 = vpack.c.b16 %v154, %v151
  %v191 = vpack.c.b16 %v155, %v152
  %v192 = vpack.c.b16 %v159, %v156
  %v193 = vpack.c.b16 %v160, %v157
  %v194 = vpack.c.b16 %v161, %v158
  %v195 = vpack.c.b16 %v165, %v162
  %v196 = vpack.c.b16 %v166, %v163
  %v197 = vpack.c.b16 %v167, %v164
  %v198 = vpack.c.b16 %v171, %v168
  %v199 = vpack.c.b16 %v172, %v169
  %v200 = vpack.c.b16 %v173, %v170
  %v201 = vpack.c.b16 %v177, %v174
  %v202 = vpack.c.b16 %v178, %v175
  %v203 = vpack.c.b16 %v179, %v176
  %v276 = vunpack.c.l.b16 %v46
  %v277 = vunpack.c.h.b16 %v46
  %v278 = vunpack.c.l.b16 %v47
  %v279 = vunpack.c.h.b16 %v47
  %v280 = vunpack.c.l.b16 %v48
  %v281 = vunpack.c.h.b16 %v48
  %v282 = vunpack.c.l.b16 %v49
  %v283 = vunpack.c.h.b16 %v49
  %v284 = vunpack.c.l.b16 %v50
  %v285 = vunpack.c.h.b16 %v50
  %v286 = vunpack.c.l.b16 %v51
  %v287 = vunpack.c.h.b16 %v51
  %v288 = vunpack.c.l.b16 %v52
  %v289 = vunpack.c.h.b16 %v52
  %v290 = vunpack.c.l.b16 %v53
  %v291 = vunpack.c.h.b16 %v53
  %v292 = vunpack.c.l.b16 %v54
  %v293 = vunpack.c.h.b16 %v54
  %v294 = vunpack.c.l.b16 %v55
  %v295 = vunpack.c.h.b16 %v55
  %v296 = vunpack.c.l.b16 %v56
  %v297 = vunpack.c.h.b16 %v56
  %v298 = vunpack.c.l.b16 %v57
  %v299 = vunpack.c.h.b16 %v57
  %v300 = vunpack.c.l.b16 %v58
  %v301 = vunpack.c.h.b16 %v58
  %v302 = vunpack.c.l.b16 %v59
  %v303 = vunpack.c.h.b16 %v59
  %v304 = vunpack.c.l.b16 %v60
  %v305 = vunpack.c.h.b16 %v60
  %v306 = vunpack.c.l.b16 %v61
  %v307 = vunpack.c.h.b16 %v61
  %v308 = vunpack.c.l.b16 %v62
  %v309 = vunpack.c.h.b16 %v62
  %v310 = vunpack.c.l.b16 %v63
  %v311 = vunpack.c.h.b16 %v63
  %v312 = vunpack.c.l.b16 %v64
  %v313 = vunpack.c.h.b16 %v64
  %v314 = vunpack.c.l.b16 %v65
  %v315 = vunpack.c.h.b16 %v65
  %v316 = vunpack.c.l.b16 %v66
  %v317 = vunpack.c.h.b16 %v66
  %v318 = vunpack.c.l.b16 %v67
  %v319 = vunpack.c.h.b16 %v67
  %v320 = vunpack.c.l.b16 %v68
  %v321 = vunpack.c.h.b16 %v68
  %v322 = vunpack.c.l.b16 %v69
  %v323 = vunpack.c.h.b16 %v69
  %v324 = vunpack.c.l.b16 %v70
  %v325 = vunpack.c.h.b16 %v70
  %v326 = vunpack.c.l.b16 %v71
  %v327 = vunpack.c.h.b16 %v71
  %v328 = vunpack.c.l.b16 %v72
  %v329 = vunpack.c.h.b16 %v72
  %v330 = vunpack.c.l.b16 %v73
  %v331 = vunpack.c.h.b16 %v73
  %v332 = vunpack.c.l.b16 %v74
  %v333 = vunpack.c.h.b16 %v74
  %v334 = vunpack.c.l.b16 %v75
  %v335 = vunpack.c.h.b16 %v75
  %v336 = vunpack.c.l.b16 %v76
  %v337 = vunpack.c.h.b16 %v76
  %v338 = vunpack.c.l.b16 %v77
  %v339 = vunpack.c.h.b16 %v77
  %v340 = vunpack.c.l.b16 %v78
  %v341 = vunpack.c.h.b16 %v78
  %v342 = vunpack.c.l.b16 %v79
  %v343 = vunpack.c.h.b16 %v79
  %v344 = vunpack.c.l.b16 %v80
  %v345 = vunpack.c.h.b16 %v80
  %v346 = vunpack.c.l.b16 %v81
  %v347 = vunpack.c.h.b16 %v81
  %v348 = vunpack.c.l.b16 %v82
  %v349 = vunpack.c.h.b16 %v82
  %v350 = vunpack.c.l.b16 %v83
  %v351 = vunpack.c.h.b16 %v83
  %v352 = vunpack.c.l.b16 %v84
  %v353 = vunpack.c.h.b16 %v84
  %v354 = vunpack.c.l.b16 %v85
  %v355 = vunpack.c.h.b16 %v85
  %v356 = vunpack.c.l.b16 %v86
  %v357 = vunpack.c.h.b16 %v86
  %v358 = vunpack.c.l.b16 %v87
  %v359 = vunpack.c.h.b16 %v87
  %v360 = vunpack.c.l.b16 %v88
  %v361 = vunpack.c.h.b16 %v88
  %v362 = vunpack.c.l.b16 %v89
  %v363 = vunpack.c.h.b16 %v89
  %v364 = vunpack.c.l.b16 %v90
  %v365 = vunpack.c.h.b16 %v90
  %v366 = vunpack.c.l.b16 %v91
  %v367 = vunpack.c.h.b16 %v91
  %v368 = vunpack.c.l.b16 %v92
  %v369 = vunpack.c.h.b16 %v92
  %v370 = vunpack.c.l.b16 %v93
  %v371 = vunpack.c.h.b16 %v93
  %v372 = vpack.c.b16 %v278, %v276
  %v373 = vpack.c.b16 %v279, %v277
  %v374 = vpack.c.b16 %v282, %v280
  %v375 = vpack.c.b16 %v283, %v281
  %v376 = vpack.c.b16 %v286, %v284
  %v377 = vpack.c.b16 %v287, %v285
  %v378 = vpack.c.b16 %v290, %v288
  %v379 = vpack.c.b16 %v291, %v289
  %v380 = vpack.c.b16 %v294, %v292
  %v381 = vpack.c.b16 %v295, %v293
  %v382 = vpack.c.b16 %v298, %v296
  %v383 = vpack.c.b16 %v299, %v297
  %v384 = vpack.c.b16 %v302, %v300
  %v385 = vpack.c.b16 %v303, %v301
  %v386 = vpack.c.b16 %v306, %v304
  %v387 = vpack.c.b16 %v307, %v305
  %v388 = vpack.c.b16 %v310, %v308
  %v389 = vpack.c.b16 %v311, %v309
  %v390 = vpack.c.b16 %v314, %v312
  %v391 = vpack.c.b16 %v315, %v313
  %v392 = vpack.c.b16 %v318, %v316
  %v393 = vpack.c.b16 %v319, %v317
  %v394 = vpack.c.b16 %v322, %v320
  %v395 = vpack.c.b16 %v323, %v321
  %v396 = vpack.c.b16 %v326, %v324
  %v397 = vpack.c.b16 %v327, %v325
  %v398 = vpack.c.b16 %v330, %v328
  %v399 = vpack.c.b16 %v331, %v329
  %v400 = vpack.c.b16 %v334, %v332
  %v401 = vpack.c.b16 %v335, %v333
  %v402 = vpack.c.b16 %v338, %v336
  %v403 = vpack.c.b16 %v339, %v337
  %v404 = vpack.c.b16 %v342, %v340
  %v405 = vpack.c.b16 %v343, %v341
  %v406 = vpack.c.b16 %v346, %v344
  %v407 = vpack.c.b16 %v347, %v345
  %v408 = vpack.c.b16 %v350, %v348
  %v409 = vpack.c.b16 %v351, %v349
  %v410 = vpack.c.b16 %v354, %v352
  %v411 = vpack.c.b16 %v355, %v353
  %v412 = vpack.c.b16 %v358, %v356
  %v413 = vpack.c.b16 %v359, %v357
  %v414 = vpack.c.b16 %v362, %v360
  %v415 = vpack.c.b16 %v363, %v361
  %v416 = vpack.c.b16 %v366, %v364
  %v417 = vpack.c.b16 %v367, %v365
  %v418 = vpack.c.b16 %v370, %v368
  %v419 = vpack.c.b16 %v371, %v369
  %468 = vmatpush.bf16.msra.mxu0 %v386
  %469 = vmatpush.bf16.msra.mxu0 %v384
  %470 = vmatpush.bf16.msra.mxu0 %v382
  %471 = vmatpush.bf16.msra.mxu0 %v380
  %472 = vmatpush.bf16.msra.mxu0 %v378
  %473 = vmatpush.bf16.msra.mxu0 %v376
  %474 = vmatpush.bf16.msra.mxu0 %v374
  %475 = vmatpush.bf16.msra.mxu0 %v372
  %476 = vmatmul.bf16.gmra.mxu0 %v180
  %v477 = vpop.f32.mrf.mxu0
  %v478 = vadd.f32 %v96, %v477
  %v479 = vpop.f32.mrf.mxu0
  %v480 = vadd.f32 %v96, %v479
  %481 = vmatmul.bf16.gmra.mxu0 %v183
  %v482 = vpop.f32.mrf.mxu0
  %v483 = vadd.f32 %v96, %v482
  %v484 = vpop.f32.mrf.mxu0
  %v485 = vadd.f32 %v96, %v484
  %486 = vmatmul.bf16.gmra.mxu0 %v186
  %v487 = vpop.f32.mrf.mxu0
  %v488 = vadd.f32 %v96, %v487
  %v489 = vpop.f32.mrf.mxu0
  %v490 = vadd.f32 %v96, %v489
  %491 = vmatmul.bf16.gmra.mxu0 %v189
  %v492 = vpop.f32.mrf.mxu0
  %v493 = vadd.f32 %v96, %v492
  %v494 = vpop.f32.mrf.mxu0
  %v495 = vadd.f32 %v96, %v494
  %496 = vmatmul.bf16.gmra.mxu0 %v192
  %v497 = vpop.f32.mrf.mxu0
  %v498 = vadd.f32 %v96, %v497
  %v499 = vpop.f32.mrf.mxu0
  %v500 = vadd.f32 %v96, %v499
  %501 = vmatmul.bf16.gmra.mxu0 %v195
  %v502 = vpop.f32.mrf.mxu0
  %v503 = vadd.f32 %v96, %v502
  %v504 = vpop.f32.mrf.mxu0
  %v505 = vadd.f32 %v96, %v504
  %506 = vmatmul.bf16.gmra.mxu0 %v198
  %v507 = vpop.f32.mrf.mxu0
  %v508 = vadd.f32 %v96, %v507
  %v509 = vpop.f32.mrf.mxu0
  %v510 = vadd.f32 %v96, %v509
  %511 = vmatmul.bf16.gmra.mxu0 %v201
  %v512 = vpop.f32.mrf.mxu0
  %v513 = vadd.f32 %v96, %v512
  %v514 = vpop.f32.mrf.mxu0
  %v515 = vadd.f32 %v96, %v514
  %516 = vdwg.mxu0
  %517 = vmatpush.bf16.msra.mxu0 %v402
  %518 = vmatpush.bf16.msra.mxu0 %v400
  %519 = vmatpush.bf16.msra.mxu0 %v398
  %520 = vmatpush.bf16.msra.mxu0 %v396
  %521 = vmatpush.bf16.msra.mxu0 %v394
  %522 = vmatpush.bf16.msra.mxu0 %v392
  %523 = vmatpush.bf16.msra.mxu0 %v390
  %524 = vmatpush.bf16.msra.mxu0 %v388
  %525 = vmatmul.bf16.gmra.mxu0 %v181
  %v526 = vpop.f32.mrf.mxu0
  %v527 = vadd.f32 %v478, %v526
  %v528 = vpop.f32.mrf.mxu0
  %v529 = vadd.f32 %v480, %v528
  %530 = vmatmul.bf16.gmra.mxu0 %v184
  %v531 = vpop.f32.mrf.mxu0
  %v532 = vadd.f32 %v483, %v531
  %v533 = vpop.f32.mrf.mxu0
  %v534 = vadd.f32 %v485, %v533
  %535 = vmatmul.bf16.gmra.mxu0 %v187
  %v536 = vpop.f32.mrf.mxu0
  %v537 = vadd.f32 %v488, %v536
  %v538 = vpop.f32.mrf.mxu0
  %v539 = vadd.f32 %v490, %v538
  %540 = vmatmul.bf16.gmra.mxu0 %v190
  %v541 = vpop.f32.mrf.mxu0
  %v542 = vadd.f32 %v493, %v541
  %v543 = vpop.f32.mrf.mxu0
  %v544 = vadd.f32 %v495, %v543
  %545 = vmatmul.bf16.gmra.mxu0 %v193
  %v546 = vpop.f32.mrf.mxu0
  %v547 = vadd.f32 %v498, %v546
  %v548 = vpop.f32.mrf.mxu0
  %v549 = vadd.f32 %v500, %v548
  %550 = vmatmul.bf16.gmra.mxu0 %v196
  %v551 = vpop.f32.mrf.mxu0
  %v552 = vadd.f32 %v503, %v551
  %v553 = vpop.f32.mrf.mxu0
  %v554 = vadd.f32 %v505, %v553
  %555 = vmatmul.bf16.gmra.mxu0 %v199
  %v556 = vpop.f32.mrf.mxu0
  %v557 = vadd.f32 %v508, %v556
  %v558 = vpop.f32.mrf.mxu0
  %v559 = vadd.f32 %v510, %v558
  %560 = vmatmul.bf16.gmra.mxu0 %v202
  %v561 = vpop.f32.mrf.mxu0
  %v562 = vadd.f32 %v513, %v561
  %v563 = vpop.f32.mrf.mxu0
  %v564 = vadd.f32 %v515, %v563
  %565 = vdwg.mxu0
  %566 = vmatpush.bf16.msra.mxu0 %v418
  %567 = vmatpush.bf16.msra.mxu0 %v416
  %568 = vmatpush.bf16.msra.mxu0 %v414
  %569 = vmatpush.bf16.msra.mxu0 %v412
  %570 = vmatpush.bf16.msra.mxu0 %v410
  %571 = vmatpush.bf16.msra.mxu0 %v408
  %572 = vmatpush.bf16.msra.mxu0 %v406
  %573 = vmatpush.bf16.msra.mxu0 %v404
  %574 = vmatmul.bf16.gmra.mxu0 %v182
  %v575 = vpop.f32.mrf.mxu0
  %v576 = vadd.f32 %v527, %v575
  %v577 = vpop.f32.mrf.mxu0
  %v578 = vadd.f32 %v529, %v577
  %579 = vmatmul.bf16.gmra.mxu0 %v185
  %v580 = vpop.f32.mrf.mxu0
  %v581 = vadd.f32 %v532, %v580
  %v582 = vpop.f32.mrf.mxu0
  %v583 = vadd.f32 %v534, %v582
  %584 = vmatmul.bf16.gmra.mxu0 %v188
  %v585 = vpop.f32.mrf.mxu0
  %v586 = vadd.f32 %v537, %v585
  %v587 = vpop.f32.mrf.mxu0
  %v588 = vadd.f32 %v539, %v587
  %589 = vmatmul.bf16.gmra.mxu0 %v191
  %v590 = vpop.f32.mrf.mxu0
  %v591 = vadd.f32 %v542, %v590
  %v592 = vpop.f32.mrf.mxu0
  %v593 = vadd.f32 %v544, %v592
  %594 = vmatmul.bf16.gmra.mxu0 %v194
  %v595 = vpop.f32.mrf.mxu0
  %v596 = vadd.f32 %v547, %v595
  %v597 = vpop.f32.mrf.mxu0
  %v598 = vadd.f32 %v549, %v597
  %599 = vmatmul.bf16.gmra.mxu0 %v197
  %v600 = vpop.f32.mrf.mxu0
  %v601 = vadd.f32 %v552, %v600
  %v602 = vpop.f32.mrf.mxu0
  %v603 = vadd.f32 %v554, %v602
  %604 = vmatmul.bf16.gmra.mxu0 %v200
  %v605 = vpop.f32.mrf.mxu0
  %v606 = vadd.f32 %v557, %v605
  %v607 = vpop.f32.mrf.mxu0
  %v608 = vadd.f32 %v559, %v607
  %609 = vmatmul.bf16.gmra.mxu0 %v203
  %v610 = vpop.f32.mrf.mxu0
  %v611 = vadd.f32 %v562, %v610
  %v612 = vpop.f32.mrf.mxu0
  %v613 = vadd.f32 %v564, %v612
  %614 = vdwg.mxu0
  %615 = vmatpush.bf16.msra.mxu0 %v387
  %616 = vmatpush.bf16.msra.mxu0 %v385
  %617 = vmatpush.bf16.msra.mxu0 %v383
  %618 = vmatpush.bf16.msra.mxu0 %v381
  %619 = vmatpush.bf16.msra.mxu0 %v379
  %620 = vmatpush.bf16.msra.mxu0 %v377
  %621 = vmatpush.bf16.msra.mxu0 %v375
  %622 = vmatpush.bf16.msra.mxu0 %v373
  %623 = vmatmul.bf16.gmra.mxu0 %v180
  %v624 = vpop.f32.mrf.mxu0
  %v625 = vadd.f32 %v97, %v624
  %v626 = vpop.f32.mrf.mxu0
  %v627 = vadd.f32 %v97, %v626
  %628 = vmatmul.bf16.gmra.mxu0 %v183
  %v629 = vpop.f32.mrf.mxu0
  %v630 = vadd.f32 %v97, %v629
  %v631 = vpop.f32.mrf.mxu0
  %v632 = vadd.f32 %v97, %v631
  %633 = vmatmul.bf16.gmra.mxu0 %v186
  %v634 = vpop.f32.mrf.mxu0
  %v635 = vadd.f32 %v97, %v634
  %v636 = vpop.f32.mrf.mxu0
  %v637 = vadd.f32 %v97, %v636
  %638 = vmatmul.bf16.gmra.mxu0 %v189
  %v639 = vpop.f32.mrf.mxu0
  %v640 = vadd.f32 %v97, %v639
  %v641 = vpop.f32.mrf.mxu0
  %v642 = vadd.f32 %v97, %v641
  %643 = vmatmul.bf16.gmra.mxu0 %v192
  %v644 = vpop.f32.mrf.mxu0
  %v645 = vadd.f32 %v97, %v644
  %v646 = vpop.f32.mrf.mxu0
  %v647 = vadd.f32 %v97, %v646
  %648 = vmatmul.bf16.gmra.mxu0 %v195
  %v649 = vpop.f32.mrf.mxu0
  %v650 = vadd.f32 %v97, %v649
  %v651 = vpop.f32.mrf.mxu0
  %v652 = vadd.f32 %v97, %v651
  %653 = vmatmul.bf16.gmra.mxu0 %v198
  %v654 = vpop.f32.mrf.mxu0
  %v655 = vadd.f32 %v97, %v654
  %v656 = vpop.f32.mrf.mxu0
  %v657 = vadd.f32 %v97, %v656
  %658 = vmatmul.bf16.gmra.mxu0 %v201
  %v659 = vpop.f32.mrf.mxu0
  %v660 = vadd.f32 %v97, %v659
  %v661 = vpop.f32.mrf.mxu0
  %v662 = vadd.f32 %v97, %v661
  %663 = vdwg.mxu0
  %664 = vmatpush.bf16.msra.mxu0 %v403
  %665 = vmatpush.bf16.msra.mxu0 %v401
  %666 = vmatpush.bf16.msra.mxu0 %v399
  %667 = vmatpush.bf16.msra.mxu0 %v397
  %668 = vmatpush.bf16.msra.mxu0 %v395
  %669 = vmatpush.bf16.msra.mxu0 %v393
  %670 = vmatpush.bf16.msra.mxu0 %v391
  %671 = vmatpush.bf16.msra.mxu0 %v389
  %672 = vmatmul.bf16.gmra.mxu0 %v181
  %v673 = vpop.f32.mrf.mxu0
  %v674 = vadd.f32 %v625, %v673
  %v675 = vpop.f32.mrf.mxu0
  %v676 = vadd.f32 %v627, %v675
  %677 = vmatmul.bf16.gmra.mxu0 %v184
  %v678 = vpop.f32.mrf.mxu0
  %v679 = vadd.f32 %v630, %v678
  %v680 = vpop.f32.mrf.mxu0
  %v681 = vadd.f32 %v632, %v680
  %682 = vmatmul.bf16.gmra.mxu0 %v187
  %v683 = vpop.f32.mrf.mxu0
  %v684 = vadd.f32 %v635, %v683
  %v685 = vpop.f32.mrf.mxu0
  %v686 = vadd.f32 %v637, %v685
  %687 = vmatmul.bf16.gmra.mxu0 %v190
  %v688 = vpop.f32.mrf.mxu0
  %v689 = vadd.f32 %v640, %v688
  %v690 = vpop.f32.mrf.mxu0
  %v691 = vadd.f32 %v642, %v690
  %692 = vmatmul.bf16.gmra.mxu0 %v193
  %v693 = vpop.f32.mrf.mxu0
  %v694 = vadd.f32 %v645, %v693
  %v695 = vpop.f32.mrf.mxu0
  %v696 = vadd.f32 %v647, %v695
  %697 = vmatmul.bf16.gmra.mxu0 %v196
  %v698 = vpop.f32.mrf.mxu0
  %v699 = vadd.f32 %v650, %v698
  %v700 = vpop.f32.mrf.mxu0
  %v701 = vadd.f32 %v652, %v700
  %702 = vmatmul.bf16.gmra.mxu0 %v199
  %v703 = vpop.f32.mrf.mxu0
  %v704 = vadd.f32 %v655, %v703
  %v705 = vpop.f32.mrf.mxu0
  %v706 = vadd.f32 %v657, %v705
  %707 = vmatmul.bf16.gmra.mxu0 %v202
  %v708 = vpop.f32.mrf.mxu0
  %v709 = vadd.f32 %v660, %v708
  %v710 = vpop.f32.mrf.mxu0
  %v711 = vadd.f32 %v662, %v710
  %712 = vdwg.mxu0
  %713 = vmatpush.bf16.msra.mxu0 %v419
  %714 = vmatpush.bf16.msra.mxu0 %v417
  %715 = vmatpush.bf16.msra.mxu0 %v415
  %716 = vmatpush.bf16.msra.mxu0 %v413
  %717 = vmatpush.bf16.msra.mxu0 %v411
  %718 = vmatpush.bf16.msra.mxu0 %v409
  %719 = vmatpush.bf16.msra.mxu0 %v407
  %720 = vmatpush.bf16.msra.mxu0 %v405
  %721 = vmatmul.bf16.gmra.mxu0 %v182
  %v722 = vpop.f32.mrf.mxu0
  %v723 = vadd.f32 %v674, %v722
  %v724 = vpop.f32.mrf.mxu0
  %v725 = vadd.f32 %v676, %v724
  %726 = vmatmul.bf16.gmra.mxu0 %v185
  %v727 = vpop.f32.mrf.mxu0
  %v728 = vadd.f32 %v679, %v727
  %v729 = vpop.f32.mrf.mxu0
  %v730 = vadd.f32 %v681, %v729
  %731 = vmatmul.bf16.gmra.mxu0 %v188
  %v732 = vpop.f32.mrf.mxu0
  %v733 = vadd.f32 %v684, %v732
  %v734 = vpop.f32.mrf.mxu0
  %v735 = vadd.f32 %v686, %v734
  %736 = vmatmul.bf16.gmra.mxu0 %v191
  %v737 = vpop.f32.mrf.mxu0
  %v738 = vadd.f32 %v689, %v737
  %v739 = vpop.f32.mrf.mxu0
  %v740 = vadd.f32 %v691, %v739
  %741 = vmatmul.bf16.gmra.mxu0 %v194
  %v742 = vpop.f32.mrf.mxu0
  %v743 = vadd.f32 %v694, %v742
  %v744 = vpop.f32.mrf.mxu0
  %v745 = vadd.f32 %v696, %v744
  %746 = vmatmul.bf16.gmra.mxu0 %v197
  %v747 = vpop.f32.mrf.mxu0
  %v748 = vadd.f32 %v699, %v747
  %v749 = vpop.f32.mrf.mxu0
  %v750 = vadd.f32 %v701, %v749
  %751 = vmatmul.bf16.gmra.mxu0 %v200
  %v752 = vpop.f32.mrf.mxu0
  %v753 = vadd.f32 %v704, %v752
  %v754 = vpop.f32.mrf.mxu0
  %v755 = vadd.f32 %v706, %v754
  %756 = vmatmul.bf16.gmra.mxu0 %v203
  %v757 = vpop.f32.mrf.mxu0
  %v758 = vadd.f32 %v709, %v757
  %v759 = vpop.f32.mrf.mxu0
  %v760 = vadd.f32 %v711, %v759
  %761 = vdwg.mxu0
  %v762 = vxor.u32 %v723, 2147483648
  %v763 = vxor.u32 %v725, 2147483648
  %v764 = vxor.u32 %v728, 2147483648
  %v765 = vxor.u32 %v730, 2147483648
  %v766 = vxor.u32 %v733, 2147483648
  %v767 = vxor.u32 %v735, 2147483648
  %v768 = vxor.u32 %v738, 2147483648
  %v769 = vxor.u32 %v740, 2147483648
  %v770 = vxor.u32 %v743, 2147483648
  %v771 = vxor.u32 %v745, 2147483648
  %v772 = vxor.u32 %v748, 2147483648
  %v773 = vxor.u32 %v750, 2147483648
  %v774 = vxor.u32 %v753, 2147483648
  %v775 = vxor.u32 %v755, 2147483648
  %v776 = vxor.u32 %v758, 2147483648
  %v777 = vxor.u32 %v760, 2147483648
  %v778 = vmul.f32 %v762, 1.442695
  %v779 = vpow.pop %v778
  %v780 = vmul.f32 %v763, 1.442695
  %v781 = vpow.pop %v780
  %v782 = vmul.f32 %v764, 1.442695
  %v783 = vpow.pop %v782
  %v784 = vmul.f32 %v765, 1.442695
  %v785 = vpow.pop %v784
  %v786 = vmul.f32 %v766, 1.442695
  %v787 = vpow.pop %v786
  %v788 = vmul.f32 %v767, 1.442695
  %v789 = vpow.pop %v788
  %v790 = vmul.f32 %v768, 1.442695
  %v791 = vpow.pop %v790
  %v792 = vmul.f32 %v769, 1.442695
  %v793 = vpow.pop %v792
  %v794 = vmul.f32 %v770, 1.442695
  %v795 = vpow.pop %v794
  %v796 = vmul.f32 %v771, 1.442695
  %v797 = vpow.pop %v796
  %v798 = vmul.f32 %v772, 1.442695
  %v799 = vpow.pop %v798
  %v800 = vmul.f32 %v773, 1.442695
  %v801 = vpow.pop %v800
  %v802 = vmul.f32 %v774, 1.442695
  %v803 = vpow.pop %v802
  %v804 = vmul.f32 %v775, 1.442695
  %v805 = vpow.pop %v804
  %v806 = vmul.f32 %v776, 1.442695
  %v807 = vpow.pop %v806
  %v808 = vmul.f32 %v777, 1.442695
  %v809 = vpow.pop %v808
  %v810 = vadd.f32 %v779, 1.0
  %v811 = vadd.f32 %v781, 1.0
  %v812 = vadd.f32 %v783, 1.0
  %v813 = vadd.f32 %v785, 1.0
  %v814 = vadd.f32 %v787, 1.0
  %v815 = vadd.f32 %v789, 1.0
  %v816 = vadd.f32 %v791, 1.0
  %v817 = vadd.f32 %v793, 1.0
  %v818 = vadd.f32 %v795, 1.0
  %v819 = vadd.f32 %v797, 1.0
  %v820 = vadd.f32 %v799, 1.0
  %v821 = vadd.f32 %v801, 1.0
  %v822 = vadd.f32 %v803, 1.0
  %v823 = vadd.f32 %v805, 1.0
  %v824 = vadd.f32 %v807, 1.0
  %v825 = vadd.f32 %v809, 1.0
  %v826 = vrcp.pop %v810
  %v827 = vmul.f32 %v810, %v826
  %v828 = vsub.f32 1.0, %v827
  %v829 = vmul.f32 %v826, %v828
  %v830 = vadd.f32 %v826, %v829
  %vm831 = vweird.f32 %v810
  %vm832 = vweird.f32 %v826
  %vm833 = vmor %vm831, %vm832
  %v834 = vsel %vm833, %v826, %v830
  %v835 = vand.u32 2147483647, %v810
  %vm836 = vcmp.eq.f32.partialorder %v835, 8.507059e+37
  %v837 = vand.u32 %v810, 2147483648
  %v838 = vor.u32 1.1754944e-38, %v837
  %v839 = vsel %vm836, %v838, %v834
  %v840 = vmul.f32 1.0, %v839
  %v841 = vrcp.pop %v811
  %v842 = vmul.f32 %v811, %v841
  %v843 = vsub.f32 1.0, %v842
  %v844 = vmul.f32 %v841, %v843
  %v845 = vadd.f32 %v841, %v844
  %vm846 = vweird.f32 %v811
  %vm847 = vweird.f32 %v841
  %vm848 = vmor %vm846, %vm847
  %v849 = vsel %vm848, %v841, %v845
  %v850 = vand.u32 2147483647, %v811
  %vm851 = vcmp.eq.f32.partialorder %v850, 8.507059e+37
  %v852 = vand.u32 %v811, 2147483648
  %v853 = vor.u32 1.1754944e-38, %v852
  %v854 = vsel %vm851, %v853, %v849
  %v855 = vmul.f32 1.0, %v854
  %v856 = vrcp.pop %v812
  %v857 = vmul.f32 %v812, %v856
  %v858 = vsub.f32 1.0, %v857
  %v859 = vmul.f32 %v856, %v858
  %v860 = vadd.f32 %v856, %v859
  %vm861 = vweird.f32 %v812
  %vm862 = vweird.f32 %v856
  %vm863 = vmor %vm861, %vm862
  %v864 = vsel %vm863, %v856, %v860
  %v865 = vand.u32 2147483647, %v812
  %vm866 = vcmp.eq.f32.partialorder %v865, 8.507059e+37
  %v867 = vand.u32 %v812, 2147483648
  %v868 = vor.u32 1.1754944e-38, %v867
  %v869 = vsel %vm866, %v868, %v864
  %v870 = vmul.f32 1.0, %v869
  %v871 = vrcp.pop %v813
  %v872 = vmul.f32 %v813, %v871
  %v873 = vsub.f32 1.0, %v872
  %v874 = vmul.f32 %v871, %v873
  %v875 = vadd.f32 %v871, %v874
  %vm876 = vweird.f32 %v813
  %vm877 = vweird.f32 %v871
  %vm878 = vmor %vm876, %vm877
  %v879 = vsel %vm878, %v871, %v875
  %v880 = vand.u32 2147483647, %v813
  %vm881 = vcmp.eq.f32.partialorder %v880, 8.507059e+37
  %v882 = vand.u32 %v813, 2147483648
  %v883 = vor.u32 1.1754944e-38, %v882
  %v884 = vsel %vm881, %v883, %v879
  %v885 = vmul.f32 1.0, %v884
  %v886 = vrcp.pop %v814
  %v887 = vmul.f32 %v814, %v886
  %v888 = vsub.f32 1.0, %v887
  %v889 = vmul.f32 %v886, %v888
  %v890 = vadd.f32 %v886, %v889
  %vm891 = vweird.f32 %v814
  %vm892 = vweird.f32 %v886
  %vm893 = vmor %vm891, %vm892
  %v894 = vsel %vm893, %v886, %v890
  %v895 = vand.u32 2147483647, %v814
  %vm896 = vcmp.eq.f32.partialorder %v895, 8.507059e+37
  %v897 = vand.u32 %v814, 2147483648
  %v898 = vor.u32 1.1754944e-38, %v897
  %v899 = vsel %vm896, %v898, %v894
  %v900 = vmul.f32 1.0, %v899
  %v901 = vrcp.pop %v815
  %v902 = vmul.f32 %v815, %v901
  %v903 = vsub.f32 1.0, %v902
  %v904 = vmul.f32 %v901, %v903
  %v905 = vadd.f32 %v901, %v904
  %vm906 = vweird.f32 %v815
  %vm907 = vweird.f32 %v901
  %vm908 = vmor %vm906, %vm907
  %v909 = vsel %vm908, %v901, %v905
  %v910 = vand.u32 2147483647, %v815
  %vm911 = vcmp.eq.f32.partialorder %v910, 8.507059e+37
  %v912 = vand.u32 %v815, 2147483648
  %v913 = vor.u32 1.1754944e-38, %v912
  %v914 = vsel %vm911, %v913, %v909
  %v915 = vmul.f32 1.0, %v914
  %v916 = vrcp.pop %v816
  %v917 = vmul.f32 %v816, %v916
  %v918 = vsub.f32 1.0, %v917
  %v919 = vmul.f32 %v916, %v918
  %v920 = vadd.f32 %v916, %v919
  %vm921 = vweird.f32 %v816
  %vm922 = vweird.f32 %v916
  %vm923 = vmor %vm921, %vm922
  %v924 = vsel %vm923, %v916, %v920
  %v925 = vand.u32 2147483647, %v816
  %vm926 = vcmp.eq.f32.partialorder %v925, 8.507059e+37
  %v927 = vand.u32 %v816, 2147483648
  %v928 = vor.u32 1.1754944e-38, %v927
  %v929 = vsel %vm926, %v928, %v924
  %v930 = vmul.f32 1.0, %v929
  %v931 = vrcp.pop %v817
  %v932 = vmul.f32 %v817, %v931
  %v933 = vsub.f32 1.0, %v932
  %v934 = vmul.f32 %v931, %v933
  %v935 = vadd.f32 %v931, %v934
  %vm936 = vweird.f32 %v817
  %vm937 = vweird.f32 %v931
  %vm938 = vmor %vm936, %vm937
  %v939 = vsel %vm938, %v931, %v935
  %v940 = vand.u32 2147483647, %v817
  %vm941 = vcmp.eq.f32.partialorder %v940, 8.507059e+37
  %v942 = vand.u32 %v817, 2147483648
  %v943 = vor.u32 1.1754944e-38, %v942
  %v944 = vsel %vm941, %v943, %v939
  %v945 = vmul.f32 1.0, %v944
  %v946 = vrcp.pop %v818
  %v947 = vmul.f32 %v818, %v946
  %v948 = vsub.f32 1.0, %v947
  %v949 = vmul.f32 %v946, %v948
  %v950 = vadd.f32 %v946, %v949
  %vm951 = vweird.f32 %v818
  %vm952 = vweird.f32 %v946
  %vm953 = vmor %vm951, %vm952
  %v954 = vsel %vm953, %v946, %v950
  %v955 = vand.u32 2147483647, %v818
  %vm956 = vcmp.eq.f32.partialorder %v955, 8.507059e+37
  %v957 = vand.u32 %v818, 2147483648
  %v958 = vor.u32 1.1754944e-38, %v957
  %v959 = vsel %vm956, %v958, %v954
  %v960 = vmul.f32 1.0, %v959
  %v961 = vrcp.pop %v819
  %v962 = vmul.f32 %v819, %v961
  %v963 = vsub.f32 1.0, %v962
  %v964 = vmul.f32 %v961, %v963
  %v965 = vadd.f32 %v961, %v964
  %vm966 = vweird.f32 %v819
  %vm967 = vweird.f32 %v961
  %vm968 = vmor %vm966, %vm967
  %v969 = vsel %vm968, %v961, %v965
  %v970 = vand.u32 2147483647, %v819
  %vm971 = vcmp.eq.f32.partialorder %v970, 8.507059e+37
  %v972 = vand.u32 %v819, 2147483648
  %v973 = vor.u32 1.1754944e-38, %v972
  %v974 = vsel %vm971, %v973, %v969
  %v975 = vmul.f32 1.0, %v974
  %v976 = vrcp.pop %v820
  %v977 = vmul.f32 %v820, %v976
  %v978 = vsub.f32 1.0, %v977
  %v979 = vmul.f32 %v976, %v978
  %v980 = vadd.f32 %v976, %v979
  %vm981 = vweird.f32 %v820
  %vm982 = vweird.f32 %v976
  %vm983 = vmor %vm981, %vm982
  %v984 = vsel %vm983, %v976, %v980
  %v985 = vand.u32 2147483647, %v820
  %vm986 = vcmp.eq.f32.partialorder %v985, 8.507059e+37
  %v987 = vand.u32 %v820, 2147483648
  %v988 = vor.u32 1.1754944e-38, %v987
  %v989 = vsel %vm986, %v988, %v984
  %v990 = vmul.f32 1.0, %v989
  %v991 = vrcp.pop %v821
  %v992 = vmul.f32 %v821, %v991
  %v993 = vsub.f32 1.0, %v992
  %v994 = vmul.f32 %v991, %v993
  %v995 = vadd.f32 %v991, %v994
  %vm996 = vweird.f32 %v821
  %vm997 = vweird.f32 %v991
  %vm998 = vmor %vm996, %vm997
  %v999 = vsel %vm998, %v991, %v995
  %v1000 = vand.u32 2147483647, %v821
  %vm1001 = vcmp.eq.f32.partialorder %v1000, 8.507059e+37
  %v1002 = vand.u32 %v821, 2147483648
  %v1003 = vor.u32 1.1754944e-38, %v1002
  %v1004 = vsel %vm1001, %v1003, %v999
  %v1005 = vmul.f32 1.0, %v1004
  %v1006 = vrcp.pop %v822
  %v1007 = vmul.f32 %v822, %v1006
  %v1008 = vsub.f32 1.0, %v1007
  %v1009 = vmul.f32 %v1006, %v1008
  %v1010 = vadd.f32 %v1006, %v1009
  %vm1011 = vweird.f32 %v822
  %vm1012 = vweird.f32 %v1006
  %vm1013 = vmor %vm1011, %vm1012
  %v1014 = vsel %vm1013, %v1006, %v1010
  %v1015 = vand.u32 2147483647, %v822
  %vm1016 = vcmp.eq.f32.partialorder %v1015, 8.507059e+37
  %v1017 = vand.u32 %v822, 2147483648
  %v1018 = vor.u32 1.1754944e-38, %v1017
  %v1019 = vsel %vm1016, %v1018, %v1014
  %v1020 = vmul.f32 1.0, %v1019
  %v1021 = vrcp.pop %v823
  %v1022 = vmul.f32 %v823, %v1021
  %v1023 = vsub.f32 1.0, %v1022
  %v1024 = vmul.f32 %v1021, %v1023
  %v1025 = vadd.f32 %v1021, %v1024
  %vm1026 = vweird.f32 %v823
  %vm1027 = vweird.f32 %v1021
  %vm1028 = vmor %vm1026, %vm1027
  %v1029 = vsel %vm1028, %v1021, %v1025
  %v1030 = vand.u32 2147483647, %v823
  %vm1031 = vcmp.eq.f32.partialorder %v1030, 8.507059e+37
  %v1032 = vand.u32 %v823, 2147483648
  %v1033 = vor.u32 1.1754944e-38, %v1032
  %v1034 = vsel %vm1031, %v1033, %v1029
  %v1035 = vmul.f32 1.0, %v1034
  %v1036 = vrcp.pop %v824
  %v1037 = vmul.f32 %v824, %v1036
  %v1038 = vsub.f32 1.0, %v1037
  %v1039 = vmul.f32 %v1036, %v1038
  %v1040 = vadd.f32 %v1036, %v1039
  %vm1041 = vweird.f32 %v824
  %vm1042 = vweird.f32 %v1036
  %vm1043 = vmor %vm1041, %vm1042
  %v1044 = vsel %vm1043, %v1036, %v1040
  %v1045 = vand.u32 2147483647, %v824
  %vm1046 = vcmp.eq.f32.partialorder %v1045, 8.507059e+37
  %v1047 = vand.u32 %v824, 2147483648
  %v1048 = vor.u32 1.1754944e-38, %v1047
  %v1049 = vsel %vm1046, %v1048, %v1044
  %v1050 = vmul.f32 1.0, %v1049
  %v1051 = vrcp.pop %v825
  %v1052 = vmul.f32 %v825, %v1051
  %v1053 = vsub.f32 1.0, %v1052
  %v1054 = vmul.f32 %v1051, %v1053
  %v1055 = vadd.f32 %v1051, %v1054
  %vm1056 = vweird.f32 %v825
  %vm1057 = vweird.f32 %v1051
  %vm1058 = vmor %vm1056, %vm1057
  %v1059 = vsel %vm1058, %v1051, %v1055
  %v1060 = vand.u32 2147483647, %v825
  %vm1061 = vcmp.eq.f32.partialorder %v1060, 8.507059e+37
  %v1062 = vand.u32 %v825, 2147483648
  %v1063 = vor.u32 1.1754944e-38, %v1062
  %v1064 = vsel %vm1061, %v1063, %v1059
  %v1065 = vmul.f32 1.0, %v1064
  %vm1066 = vcmp.ge.f32.partialorder %v576, 0.0
  %vm1067 = vcmp.ge.f32.partialorder %v578, 0.0
  %vm1068 = vcmp.ge.f32.partialorder %v581, 0.0
  %vm1069 = vcmp.ge.f32.partialorder %v583, 0.0
  %vm1070 = vcmp.ge.f32.partialorder %v586, 0.0
  %vm1071 = vcmp.ge.f32.partialorder %v588, 0.0
  %vm1072 = vcmp.ge.f32.partialorder %v591, 0.0
  %vm1073 = vcmp.ge.f32.partialorder %v593, 0.0
  %vm1074 = vcmp.ge.f32.partialorder %v596, 0.0
  %vm1075 = vcmp.ge.f32.partialorder %v598, 0.0
  %vm1076 = vcmp.ge.f32.partialorder %v601, 0.0
  %vm1077 = vcmp.ge.f32.partialorder %v603, 0.0
  %vm1078 = vcmp.ge.f32.partialorder %v606, 0.0
  %vm1079 = vcmp.ge.f32.partialorder %v608, 0.0
  %vm1080 = vcmp.ge.f32.partialorder %v611, 0.0
  %vm1081 = vcmp.ge.f32.partialorder %v613, 0.0
  %v1082 = vmul.f32 %v576, 0.2
  %v1083 = vmul.f32 %v578, 0.2
  %v1084 = vmul.f32 %v581, 0.2
  %v1085 = vmul.f32 %v583, 0.2
  %v1086 = vmul.f32 %v586, 0.2
  %v1087 = vmul.f32 %v588, 0.2
  %v1088 = vmul.f32 %v591, 0.2
  %v1089 = vmul.f32 %v593, 0.2
  %v1090 = vmul.f32 %v596, 0.2
  %v1091 = vmul.f32 %v598, 0.2
  %v1092 = vmul.f32 %v601, 0.2
  %v1093 = vmul.f32 %v603, 0.2
  %v1094 = vmul.f32 %v606, 0.2
  %v1095 = vmul.f32 %v608, 0.2
  %v1096 = vmul.f32 %v611, 0.2
  %v1097 = vmul.f32 %v613, 0.2
  %v1098 = vsel %vm1066, %v576, %v1082
  %v1099 = vsel %vm1067, %v578, %v1083
  %v1100 = vsel %vm1068, %v581, %v1084
  %v1101 = vsel %vm1069, %v583, %v1085
  %v1102 = vsel %vm1070, %v586, %v1086
  %v1103 = vsel %vm1071, %v588, %v1087
  %v1104 = vsel %vm1072, %v591, %v1088
  %v1105 = vsel %vm1073, %v593, %v1089
  %v1106 = vsel %vm1074, %v596, %v1090
  %v1107 = vsel %vm1075, %v598, %v1091
  %v1108 = vsel %vm1076, %v601, %v1092
  %v1109 = vsel %vm1077, %v603, %v1093
  %v1110 = vsel %vm1078, %v606, %v1094
  %v1111 = vsel %vm1079, %v608, %v1095
  %v1112 = vsel %vm1080, %v611, %v1096
  %v1113 = vsel %vm1081, %v613, %v1097
  %v1114 = vmul.f32 %v1098, %v840
  %v1115 = vmul.f32 %v1099, %v855
  %v1116 = vmul.f32 %v1100, %v870
  %v1117 = vmul.f32 %v1101, %v885
  %v1118 = vmul.f32 %v1102, %v900
  %v1119 = vmul.f32 %v1103, %v915
  %v1120 = vmul.f32 %v1104, %v930
  %v1121 = vmul.f32 %v1105, %v945
  %v1122 = vmul.f32 %v1106, %v960
  %v1123 = vmul.f32 %v1107, %v975
  %v1124 = vmul.f32 %v1108, %v990
  %v1125 = vmul.f32 %v1109, %v1005
  %v1126 = vmul.f32 %v1110, %v1020
  %v1127 = vmul.f32 %v1111, %v1035
  %v1128 = vmul.f32 %v1112, %v1050
  %v1129 = vmul.f32 %v1113, %v1065
  %1130 = vst [vmem:[%s3] sm:$0xff] %v1114
  %1131 = vst [vmem:[%s3 + $0x8] sm:$0xff] %v1115
  %1132 = vst [vmem:[%s3 + $0x10] sm:$0xff] %v1116
  %1133 = vst [vmem:[%s3 + $0x18] sm:$0xff] %v1117
  %1134 = vst [vmem:[%s3 + $0x20] sm:$0xff] %v1118
  %1135 = vst [vmem:[%s3 + $0x28] sm:$0xff] %v1119
  %1136 = vst [vmem:[%s3 + $0x30] sm:$0xff] %v1120
  %1137 = vst [vmem:[%s3 + $0x38] sm:$0xff] %v1121
  %1138 = vst [vmem:[%s3 + $0x40] sm:$0xff] %v1122
  %1139 = vst [vmem:[%s3 + $0x48] sm:$0xff] %v1123
  %1140 = vst [vmem:[%s3 + $0x50] sm:$0xff] %v1124
  %1141 = vst [vmem:[%s3 + $0x58] sm:$0xff] %v1125
  %1142 = vst [vmem:[%s3 + $0x60] sm:$0xff] %v1126
  %1143 = vst [vmem:[%s3 + $0x68] sm:$0xff] %v1127
  %1144 = vst [vmem:[%s3 + $0x70] sm:$0xff] %v1128
  %1145 = vst [vmem:[%s3 + $0x78] sm:$0xff] %v1129
  // Predicated region
  $region14: #{_lambda_.56} parent=0 // pred_check
    _
  $region15: #{_lambda_.56} parent=0 // pred_check_branch
    %1147 = sbr.rel (0) target = $region17
  $region16: #{_lambda_.56} parent=0 // pred_region
    _
  $region17: #{_lambda_.56} parent=0 // pred_fallthru
    _
  // Predicated region
  $region18: #{_lambda_.56} parent=0 // pred_check
    _
  $region19: #{_lambda_.56} parent=0 // pred_check_branch
    %1149 = sbr.rel (0) target = $region21
  $region20: #{_lambda_.56} parent=0 // pred_region
    _
  $region21: #{_lambda_.56} parent=0 // pred_fallthru
    _

// kernel: _lambda_.58
$region0: #{_lambda_.58}
  #allocation0 [shape = 'u32[]', space=smem, size = 0x4, offset = 0x4, fixed_abs, tag = 'smem constant byte address 0x4 - core index']
  #allocation1 [shape = 'u32[72,128]{1,0:T(1,128)}', space=vmem, size = 0x9000, scoped, tag = 'internal scratch']
  %s0 = inlined_call_operand.vmem [shape: bf16[512,256], index: 0, kind: input, shape index: {}]
  %s1 = inlined_call_operand.vmem [shape: bf16[256,256], index: 1, kind: input, shape index: {}]
  %s2 = inlined_call_operand.vmem [shape: f32[1,256], index: 2, kind: input, shape index: {}]
  %s3 = inlined_call_operand.vmem [shape: f32[512,128], index: 3, kind: output, shape index: {}]
  %s4 = sld [smem:[#allocation0]]
  $region45: #{_lambda_.58} parent=0
    _
  %s6 = ssub.s32 1, %s4
  %s7 = scalar_select 0, %s6, %s4
  loop: start=0, step=1, limit=4
  $region2: #{_lambda_.58} parent=0 // loop_pre_header
    _
  $region3: #{_lambda_.58} parent=0 // loop_header
    %s9 = sphi 0, %s13
    %p10 = scmp.ge.s32.totalorder %s9, 4
    %s19 = sphi 0, %s21
    %s22 = sphi 0, %s19
    %s23 = sphi 0, %s22
    %s39 = sphi 0, %s23
    %s43 = sphi 0, %s43
    %s45 = sphi 0, %s43
    %s46 = sphi 0, %s45
    %s60 = sphi 0, %s46
    %s64 = sphi 0, %s64
    %s66 = sphi 0, %s64
    %s67 = sphi 0, %s66
    %s81 = sphi 0, %s67
    %s87 = sphi 0, %s89
    %s90 = sphi 0, %s87
    %s91 = sphi 0, %s90
    %s107 = sphi 0, %s91
  $region4: #{_lambda_.58} parent=0 // loop_header_branch
    %12 = sbr.rel (%p10) target = $region8
  $region5: #{_lambda_.58} parent=0 // loop_body
    %s14 = ssub.s32 %s9, 1
    %s15 = ssub.s32 %s9, 2
    %s16 = sadd.s32 %s9, 1
    %s17 = ssub.s32 %s9, %s16
    %p18 = scmp.eq.s32.totalorder %s17, 0
    %s20 = sadd.s32 %s19, 1
    %s21 = scalar_select %p18, %s19, %s20
    %p24 = pneg %p18
    %p25 = scmp.eq.s32.totalorder %s9, 1
    %p26 = por %p24, %p25
    %p27 = scmp.ne.s32.totalorder %s19, %s22
    %p28 = scmp.eq.s32.totalorder %s9, 0
    %p29 = por %p27, %p28
    %p30 = scmp.ne.s32.totalorder %s19, %s22
    %p31 = scmp.eq.s32.totalorder %s14, 1
    %p32 = por %p30, %p31
    %p33 = scmp.ne.s32.totalorder %s22, %s23
    %p34 = scmp.eq.s32.totalorder %s14, 0
    %p35 = por %p33, %p34
    %p36 = scmp.ne.s32.totalorder %s22, %s23
    %p37 = scmp.eq.s32.totalorder %s15, 1
    %p38 = por %p36, %p37
    %p40 = scmp.ne.s32.totalorder %s23, %s39
    %p41 = scmp.eq.s32.totalorder %s15, 0
    %p42 = por %p40, %p41
    %s44 = sadd.s32 %s43, 1
    %p47 = scmp.eq.s32.totalorder %s9, 1
    %p48 = scmp.ne.s32.totalorder %s43, %s45
    %p49 = scmp.eq.s32.totalorder %s9, 0
    %p50 = por %p48, %p49
    %p51 = scmp.ne.s32.totalorder %s43, %s45
    %p52 = scmp.eq.s32.totalorder %s14, 1
    %p53 = por %p51, %p52
    %p54 = scmp.ne.s32.totalorder %s45, %s46
    %p55 = scmp.eq.s32.totalorder %s14, 0
    %p56 = por %p54, %p55
    %p57 = scmp.ne.s32.totalorder %s45, %s46
    %p58 = scmp.eq.s32.totalorder %s15, 1
    %p59 = por %p57, %p58
    %p61 = scmp.ne.s32.totalorder %s46, %s60
    %p62 = scmp.eq.s32.totalorder %s15, 0
    %p63 = por %p61, %p62
    %s65 = sadd.s32 %s64, 1
    %p68 = scmp.eq.s32.totalorder %s9, 1
    %p69 = scmp.ne.s32.totalorder %s64, %s66
    %p70 = scmp.eq.s32.totalorder %s9, 0
    %p71 = por %p69, %p70
    %p72 = scmp.ne.s32.totalorder %s64, %s66
    %p73 = scmp.eq.s32.totalorder %s14, 1
    %p74 = por %p72, %p73
    %p75 = scmp.ne.s32.totalorder %s66, %s67
    %p76 = scmp.eq.s32.totalorder %s14, 0
    %p77 = por %p75, %p76
    %p78 = scmp.ne.s32.totalorder %s66, %s67
    %p79 = scmp.eq.s32.totalorder %s15, 1
    %p80 = por %p78, %p79
    %p82 = scmp.ne.s32.totalorder %s67, %s81
    %p83 = scmp.eq.s32.totalorder %s15, 0
    %p84 = por %p82, %p83
    %s85 = ssub.s32 %s9, %s16
    %p86 = scmp.eq.s32.totalorder %s85, 0
    %s88 = sadd.s32 %s87, 1
    %s89 = scalar_select %p86, %s87, %s88
    %p92 = pneg %p86
    %p93 = scmp.eq.s32.totalorder %s9, 1
    %p94 = por %p92, %p93
    %p95 = scmp.ne.s32.totalorder %s87, %s90
    %p96 = scmp.eq.s32.totalorder %s9, 0
    %p97 = por %p95, %p96
    %p98 = scmp.ne.s32.totalorder %s87, %s90
    %p99 = scmp.eq.s32.totalorder %s14, 1
    %p100 = por %p98, %p99
    %p101 = scmp.ne.s32.totalorder %s90, %s91
    %p102 = scmp.eq.s32.totalorder %s14, 0
    %p103 = por %p101, %p102
    %p104 = scmp.ne.s32.totalorder %s90, %s91
    %p105 = scmp.eq.s32.totalorder %s15, 1
    %p106 = por %p104, %p105
    %p108 = scmp.ne.s32.totalorder %s91, %s107
    %p109 = scmp.eq.s32.totalorder %s15, 0
    %p110 = por %p108, %p109
    %p111 = scmp.le.s32.totalorder 1, %s9
    %p112 = scmp.lt.s32.totalorder %s9, 3
    %p113 = pnand %p111, %p112
    %p114 = pneg %p113
    // Predicated region
    $region9: #{_lambda_.58} parent=5 // pred_check
      _
    $region10: #{_lambda_.58} parent=5 // pred_check_branch
      %116 = sbr.rel (%p113) target = $region12
    $region11: #{_lambda_.58} parent=5 // pred_region
      %s117 = ssub.s32 %s9, 1
      // Predicated region
      $region13: #{_lambda_.58} parent=11 // pred_check
        %p118 = pneg %p56
      $region14: #{_lambda_.58} parent=11 // pred_check_branch
        %120 = sbr.rel (%p118) target = $region16
      $region15: #{_lambda_.58} parent=11 // pred_region
        _
      $region16: #{_lambda_.58} parent=11 // pred_fallthru
        _
      // Predicated region
      $region17: #{_lambda_.58} parent=11 // pred_check
        %p121 = pneg %p77
      $region18: #{_lambda_.58} parent=11 // pred_check_branch
        %123 = sbr.rel (%p121) target = $region20
      $region19: #{_lambda_.58} parent=11 // pred_region
        _
      $region20: #{_lambda_.58} parent=11 // pred_fallthru
        _
    $region12: #{_lambda_.58} parent=5 // pred_fallthru
      _
    %p124 = scmp.lt.s32.totalorder %s9, 2
    // Predicated region
    $region21: #{_lambda_.58} parent=5 // pred_check
      %p125 = pneg %p124
    $region22: #{_lambda_.58} parent=5 // pred_check_branch
      %127 = sbr.rel (%p125) target = $region24
    $region23: #{_lambda_.58} parent=5 // pred_region
      // Predicated region
      $region25: #{_lambda_.58} parent=23 // pred_check
        %p128 = pneg %p29
      $region26: #{_lambda_.58} parent=23 // pred_check_branch
        %130 = sbr.rel (%p128) target = $region28
      $region27: #{_lambda_.58} parent=23 // pred_region
        %s131 = smul.u32 32, %s9
        %p132 = scmp.lt.s32.totalorder %s131, 63
        %s133 = scalar_select %p132, %s131, 63
        %s134 = smul.addr %s133, 2
        %s135 = smul.addr %s134, 4
        %s136 = scalar_lea.vmem %s0, %s135
        %s137 = smul.u32 32, %s9
      $region28: #{_lambda_.58} parent=23 // pred_fallthru
        _
    $region24: #{_lambda_.58} parent=5 // pred_fallthru
      _
    %p138 = scmp.le.s32.totalorder 1, %s9
    %p139 = scmp.lt.s32.totalorder %s9, 3
    %p140 = pnand %p138, %p139
    %p141 = pneg %p140
    // Predicated region
    $region29: #{_lambda_.58} parent=5 // pred_check
      _
    $region30: #{_lambda_.58} parent=5 // pred_check_branch
      %143 = sbr.rel (%p140) target = $region32
    $region31: #{_lambda_.58} parent=5 // pred_region
      %s144 = ssub.s32 %s9, 1
      %s145 = smul.u32 32, %s14
      %p146 = scmp.lt.s32.totalorder %s145, 63
      %s147 = scalar_select %p146, %s145, 63
      %s148 = smul.addr %s147, 2
      %s149 = smul.addr %s148, 4
      %s150 = scalar_lea.vmem %s0, %s149
      %p151 = pneg %p35
      %p152 = pneg %p32
      %p153 = pneg %p56
      %p154 = pneg %p53
      %p155 = pneg %p77
      %p156 = pneg %p74
      %p157 = pneg %p103
      %p158 = pneg %p100
      %s159 = smul.u32 32, %s14
      %p160 = scmp.lt.s32.totalorder %s159, 63
      %s161 = scalar_select %p160, %s159, 63
      %s162 = smul.addr %s161, 8
      %s163 = scalar_lea.vmem %s3, %s162
      %s164 = smul.u32 32, %s14
      %p165 = scmp.lt.s32.totalorder %s164, 63
      %s166 = scalar_select %p165, %s164, 63
      %s167 = smul.addr %s166, 2
      %s168 = smul.addr %s167, 4
      %s169 = scalar_lea.vmem %s0, %s168
      %s170 = smul.u32 32, %s14
      %s171 = smul.u32 32, %s14
      %p172 = scmp.lt.s32.totalorder %s171, 63
      %s173 = scalar_select %p172, %s171, 63
      %s174 = smul.addr %s173, 8
      %s175 = scalar_lea.vmem %s3, %s174
      %s176 = smul.u32 32, %s14
      %v177 = vld [vmem:[%s169] sm:$0xff]
      %v178 = vld [vmem:[%s169 + $0x8] sm:$0xff]
      %v179 = vld [vmem:[%s169 + $0x10] sm:$0xff]
      %v180 = vld [vmem:[%s169 + $0x18] sm:$0xff]
      %v181 = vld [vmem:[%s169 + $0x20] sm:$0xff]
      %v182 = vld [vmem:[%s169 + $0x28] sm:$0xff]
      %v183 = vld [vmem:[%s169 + $0x30] sm:$0xff]
      %v184 = vld [vmem:[%s169 + $0x38] sm:$0xff]
      %v185 = vld [vmem:[%s169 + $0x40] sm:$0xff]
      %v186 = vld [vmem:[%s169 + $0x48] sm:$0xff]
      %v187 = vld [vmem:[%s169 + $0x50] sm:$0xff]
      %v188 = vld [vmem:[%s169 + $0x58] sm:$0xff]
      %v189 = vld [vmem:[%s169 + $0x60] sm:$0xff]
      %v190 = vld [vmem:[%s169 + $0x68] sm:$0xff]
      %v191 = vld [vmem:[%s169 + $0x70] sm:$0xff]
      %v192 = vld [vmem:[%s169 + $0x78] sm:$0xff]
      %v193 = vld [vmem:[%s169 + $0x80] sm:$0xff]
      %v194 = vld [vmem:[%s169 + $0x88] sm:$0xff]
      %v195 = vld [vmem:[%s169 + $0x90] sm:$0xff]
      %v196 = vld [vmem:[%s169 + $0x98] sm:$0xff]
      %v197 = vld [vmem:[%s169 + $0xa0] sm:$0xff]
      %v198 = vld [vmem:[%s169 + $0xa8] sm:$0xff]
      %v199 = vld [vmem:[%s169 + $0xb0] sm:$0xff]
      %v200 = vld [vmem:[%s169 + $0xb8] sm:$0xff]
      %v201 = vld [vmem:[%s169 + $0xc0] sm:$0xff]
      %v202 = vld [vmem:[%s169 + $0xc8] sm:$0xff]
      %v203 = vld [vmem:[%s169 + $0xd0] sm:$0xff]
      %v204 = vld [vmem:[%s169 + $0xd8] sm:$0xff]
      %v205 = vld [vmem:[%s169 + $0xe0] sm:$0xff]
      %v206 = vld [vmem:[%s169 + $0xe8] sm:$0xff]
      %v207 = vld [vmem:[%s169 + $0xf0] sm:$0xff]
      %v208 = vld [vmem:[%s169 + $0xf8] sm:$0xff]
      %v209 = vld [vmem:[%s1] sm:$0xff]
      %v210 = vld [vmem:[%s1 + $0x8] sm:$0xff]
      %v211 = vld [vmem:[%s1 + $0x10] sm:$0xff]
      %v212 = vld [vmem:[%s1 + $0x18] sm:$0xff]
      %v213 = vld [vmem:[%s1 + $0x20] sm:$0xff]
      %v214 = vld [vmem:[%s1 + $0x28] sm:$0xff]
      %v215 = vld [vmem:[%s1 + $0x30] sm:$0xff]
      %v216 = vld [vmem:[%s1 + $0x38] sm:$0xff]
      %v217 = vld [vmem:[%s1 + $0x40] sm:$0xff]
      %v218 = vld [vmem:[%s1 + $0x48] sm:$0xff]
      %v219 = vld [vmem:[%s1 + $0x50] sm:$0xff]
      %v220 = vld [vmem:[%s1 + $0x58] sm:$0xff]
      %v221 = vld [vmem:[%s1 + $0x60] sm:$0xff]
      %v222 = vld [vmem:[%s1 + $0x68] sm:$0xff]
      %v223 = vld [vmem:[%s1 + $0x70] sm:$0xff]
      %v224 = vld [vmem:[%s1 + $0x78] sm:$0xff]
      %v225 = vld [vmem:[%s1 + $0x80] sm:$0xff]
      %v226 = vld [vmem:[%s1 + $0x88] sm:$0xff]
      %v227 = vld [vmem:[%s1 + $0x90] sm:$0xff]
      %v228 = vld [vmem:[%s1 + $0x98] sm:$0xff]
      %v229 = vld [vmem:[%s1 + $0xa0] sm:$0xff]
      %v230 = vld [vmem:[%s1 + $0xa8] sm:$0xff]
      %v231 = vld [vmem:[%s1 + $0xb0] sm:$0xff]
      %v232 = vld [vmem:[%s1 + $0xb8] sm:$0xff]
      %v233 = vld [vmem:[%s1 + $0xc0] sm:$0xff]
      %v234 = vld [vmem:[%s1 + $0xc8] sm:$0xff]
      %v235 = vld [vmem:[%s1 + $0xd0] sm:$0xff]
      %v236 = vld [vmem:[%s1 + $0xd8] sm:$0xff]
      %v237 = vld [vmem:[%s1 + $0xe0] sm:$0xff]
      %v238 = vld [vmem:[%s1 + $0xe8] sm:$0xff]
      %v239 = vld [vmem:[%s1 + $0xf0] sm:$0xff]
      %v240 = vld [vmem:[%s1 + $0xf8] sm:$0xff]
      %v241 = vld [vmem:[%s2] sm:$0x3]
      %v243 = vperm.slane %v241, 0
      %v244 = vperm.slane %v241, 1
      %v279 = vunpack.c.l.b16 %v177
      %v280 = vunpack.c.h.b16 %v177
      %v281 = vunpack.c.l.b16 %v178
      %v282 = vunpack.c.h.b16 %v178
      %v283 = vunpack.c.l.b16 %v179
      %v284 = vunpack.c.h.b16 %v179
      %v285 = vunpack.c.l.b16 %v180
      %v286 = vunpack.c.h.b16 %v180
      %v287 = vunpack.c.l.b16 %v181
      %v288 = vunpack.c.h.b16 %v181
      %v289 = vunpack.c.l.b16 %v182
      %v290 = vunpack.c.h.b16 %v182
      %v291 = vunpack.c.l.b16 %v183
      %v292 = vunpack.c.h.b16 %v183
      %v293 = vunpack.c.l.b16 %v184
      %v294 = vunpack.c.h.b16 %v184
      %v295 = vunpack.c.l.b16 %v185
      %v296 = vunpack.c.h.b16 %v185
      %v297 = vunpack.c.l.b16 %v186
      %v298 = vunpack.c.h.b16 %v186
      %v299 = vunpack.c.l.b16 %v187
      %v300 = vunpack.c.h.b16 %v187
      %v301 = vunpack.c.l.b16 %v188
      %v302 = vunpack.c.h.b16 %v188
      %v303 = vunpack.c.l.b16 %v189
      %v304 = vunpack.c.h.b16 %v189
      %v305 = vunpack.c.l.b16 %v190
      %v306 = vunpack.c.h.b16 %v190
      %v307 = vunpack.c.l.b16 %v191
      %v308 = vunpack.c.h.b16 %v191
      %v309 = vunpack.c.l.b16 %v192
      %v310 = vunpack.c.h.b16 %v192
      %v311 = vunpack.c.l.b16 %v193
      %v312 = vunpack.c.h.b16 %v193
      %v313 = vunpack.c.l.b16 %v194
      %v314 = vunpack.c.h.b16 %v194
      %v315 = vunpack.c.l.b16 %v195
      %v316 = vunpack.c.h.b16 %v195
      %v317 = vunpack.c.l.b16 %v196
      %v318 = vunpack.c.h.b16 %v196
      %v319 = vunpack.c.l.b16 %v197
      %v320 = vunpack.c.h.b16 %v197
      %v321 = vunpack.c.l.b16 %v198
      %v322 = vunpack.c.h.b16 %v198
      %v323 = vunpack.c.l.b16 %v199
      %v324 = vunpack.c.h.b16 %v199
      %v325 = vunpack.c.l.b16 %v200
      %v326 = vunpack.c.h.b16 %v200
      %v327 = vunpack.c.l.b16 %v201
      %v328 = vunpack.c.h.b16 %v201
      %v329 = vunpack.c.l.b16 %v202
      %v330 = vunpack.c.h.b16 %v202
      %v331 = vunpack.c.l.b16 %v203
      %v332 = vunpack.c.h.b16 %v203
      %v333 = vunpack.c.l.b16 %v204
      %v334 = vunpack.c.h.b16 %v204
      %v335 = vunpack.c.l.b16 %v205
      %v336 = vunpack.c.h.b16 %v205
      %v337 = vunpack.c.l.b16 %v206
      %v338 = vunpack.c.h.b16 %v206
      %v339 = vunpack.c.l.b16 %v207
      %v340 = vunpack.c.h.b16 %v207
      %v341 = vunpack.c.l.b16 %v208
      %v342 = vunpack.c.h.b16 %v208
      %v343 = vpack.c.b16 %v281, %v279
      %v344 = vpack.c.b16 %v282, %v280
      %v345 = vpack.c.b16 %v285, %v283
      %v346 = vpack.c.b16 %v286, %v284
      %v347 = vpack.c.b16 %v289, %v287
      %v348 = vpack.c.b16 %v290, %v288
      %v349 = vpack.c.b16 %v293, %v291
      %v350 = vpack.c.b16 %v294, %v292
      %v351 = vpack.c.b16 %v297, %v295
      %v352 = vpack.c.b16 %v298, %v296
      %v353 = vpack.c.b16 %v301, %v299
      %v354 = vpack.c.b16 %v302, %v300
      %v355 = vpack.c.b16 %v305, %v303
      %v356 = vpack.c.b16 %v306, %v304
      %v357 = vpack.c.b16 %v309, %v307
      %v358 = vpack.c.b16 %v310, %v308
      %v359 = vpack.c.b16 %v313, %v311
      %v360 = vpack.c.b16 %v314, %v312
      %v361 = vpack.c.b16 %v317, %v315
      %v362 = vpack.c.b16 %v318, %v316
      %v363 = vpack.c.b16 %v321, %v319
      %v364 = vpack.c.b16 %v322, %v320
      %v365 = vpack.c.b16 %v325, %v323
      %v366 = vpack.c.b16 %v326, %v324
      %v367 = vpack.c.b16 %v329, %v327
      %v368 = vpack.c.b16 %v330, %v328
      %v369 = vpack.c.b16 %v333, %v331
      %v370 = vpack.c.b16 %v334, %v332
      %v371 = vpack.c.b16 %v337, %v335
      %v372 = vpack.c.b16 %v338, %v336
      %v373 = vpack.c.b16 %v341, %v339
      %v374 = vpack.c.b16 %v342, %v340
      %v439 = vunpack.c.l.b16 %v209
      %v440 = vunpack.c.h.b16 %v209
      %v441 = vunpack.c.l.b16 %v210
      %v442 = vunpack.c.h.b16 %v210
      %v443 = vunpack.c.l.b16 %v211
      %v444 = vunpack.c.h.b16 %v211
      %v445 = vunpack.c.l.b16 %v212
      %v446 = vunpack.c.h.b16 %v212
      %v447 = vunpack.c.l.b16 %v213
      %v448 = vunpack.c.h.b16 %v213
      %v449 = vunpack.c.l.b16 %v214
      %v450 = vunpack.c.h.b16 %v214
      %v451 = vunpack.c.l.b16 %v215
      %v452 = vunpack.c.h.b16 %v215
      %v453 = vunpack.c.l.b16 %v216
      %v454 = vunpack.c.h.b16 %v216
      %v455 = vunpack.c.l.b16 %v217
      %v456 = vunpack.c.h.b16 %v217
      %v457 = vunpack.c.l.b16 %v218
      %v458 = vunpack.c.h.b16 %v218
      %v459 = vunpack.c.l.b16 %v219
      %v460 = vunpack.c.h.b16 %v219
      %v461 = vunpack.c.l.b16 %v220
      %v462 = vunpack.c.h.b16 %v220
      %v463 = vunpack.c.l.b16 %v221
      %v464 = vunpack.c.h.b16 %v221
      %v465 = vunpack.c.l.b16 %v222
      %v466 = vunpack.c.h.b16 %v222
      %v467 = vunpack.c.l.b16 %v223
      %v468 = vunpack.c.h.b16 %v223
      %v469 = vunpack.c.l.b16 %v224
      %v470 = vunpack.c.h.b16 %v224
      %v471 = vunpack.c.l.b16 %v225
      %v472 = vunpack.c.h.b16 %v225
      %v473 = vunpack.c.l.b16 %v226
      %v474 = vunpack.c.h.b16 %v226
      %v475 = vunpack.c.l.b16 %v227
      %v476 = vunpack.c.h.b16 %v227
      %v477 = vunpack.c.l.b16 %v228
      %v478 = vunpack.c.h.b16 %v228
      %v479 = vunpack.c.l.b16 %v229
      %v480 = vunpack.c.h.b16 %v229
      %v481 = vunpack.c.l.b16 %v230
      %v482 = vunpack.c.h.b16 %v230
      %v483 = vunpack.c.l.b16 %v231
      %v484 = vunpack.c.h.b16 %v231
      %v485 = vunpack.c.l.b16 %v232
      %v486 = vunpack.c.h.b16 %v232
      %v487 = vunpack.c.l.b16 %v233
      %v488 = vunpack.c.h.b16 %v233
      %v489 = vunpack.c.l.b16 %v234
      %v490 = vunpack.c.h.b16 %v234
      %v491 = vunpack.c.l.b16 %v235
      %v492 = vunpack.c.h.b16 %v235
      %v493 = vunpack.c.l.b16 %v236
      %v494 = vunpack.c.h.b16 %v236
      %v495 = vunpack.c.l.b16 %v237
      %v496 = vunpack.c.h.b16 %v237
      %v497 = vunpack.c.l.b16 %v238
      %v498 = vunpack.c.h.b16 %v238
      %v499 = vunpack.c.l.b16 %v239
      %v500 = vunpack.c.h.b16 %v239
      %v501 = vunpack.c.l.b16 %v240
      %v502 = vunpack.c.h.b16 %v240
      %v503 = vpack.c.b16 %v441, %v439
      %v504 = vpack.c.b16 %v442, %v440
      %v505 = vpack.c.b16 %v445, %v443
      %v506 = vpack.c.b16 %v446, %v444
      %v507 = vpack.c.b16 %v449, %v447
      %v508 = vpack.c.b16 %v450, %v448
      %v509 = vpack.c.b16 %v453, %v451
      %v510 = vpack.c.b16 %v454, %v452
      %v511 = vpack.c.b16 %v457, %v455
      %v512 = vpack.c.b16 %v458, %v456
      %v513 = vpack.c.b16 %v461, %v459
      %v514 = vpack.c.b16 %v462, %v460
      %v515 = vpack.c.b16 %v465, %v463
      %v516 = vpack.c.b16 %v466, %v464
      %v517 = vpack.c.b16 %v469, %v467
      %v518 = vpack.c.b16 %v470, %v468
      %v519 = vpack.c.b16 %v473, %v471
      %v520 = vpack.c.b16 %v474, %v472
      %v521 = vpack.c.b16 %v477, %v475
      %v522 = vpack.c.b16 %v478, %v476
      %v523 = vpack.c.b16 %v481, %v479
      %v524 = vpack.c.b16 %v482, %v480
      %v525 = vpack.c.b16 %v485, %v483
      %v526 = vpack.c.b16 %v486, %v484
      %v527 = vpack.c.b16 %v489, %v487
      %v528 = vpack.c.b16 %v490, %v488
      %v529 = vpack.c.b16 %v493, %v491
      %v530 = vpack.c.b16 %v494, %v492
      %v531 = vpack.c.b16 %v497, %v495
      %v532 = vpack.c.b16 %v498, %v496
      %v533 = vpack.c.b16 %v501, %v499
      %v534 = vpack.c.b16 %v502, %v500
      %567 = vmatpush.bf16.msra.mxu0 %v517
      %568 = vmatpush.bf16.msra.mxu0 %v515
      %569 = vmatpush.bf16.msra.mxu0 %v513
      %570 = vmatpush.bf16.msra.mxu0 %v511
      %571 = vmatpush.bf16.msra.mxu0 %v509
      %572 = vmatpush.bf16.msra.mxu0 %v507
      %573 = vmatpush.bf16.msra.mxu0 %v505
      %574 = vmatpush.bf16.msra.mxu0 %v503
      %575 = vmatmul.bf16.gmra.mxu0 %v343
      %v576 = vpop.f32.mrf.mxu0
      %v577 = vadd.f32 %v243, %v576
      %v578 = vpop.f32.mrf.mxu0
      %v579 = vadd.f32 %v243, %v578
      %580 = vmatmul.bf16.gmra.mxu0 %v345
      %v581 = vpop.f32.mrf.mxu0
      %v582 = vadd.f32 %v243, %v581
      %v583 = vpop.f32.mrf.mxu0
      %v584 = vadd.f32 %v243, %v583
      %585 = vmatmul.bf16.gmra.mxu0 %v347
      %v586 = vpop.f32.mrf.mxu0
      %v587 = vadd.f32 %v243, %v586
      %v588 = vpop.f32.mrf.mxu0
      %v589 = vadd.f32 %v243, %v588
      %590 = vmatmul.bf16.gmra.mxu0 %v349
      %v591 = vpop.f32.mrf.mxu0
      %v592 = vadd.f32 %v243, %v591
      %v593 = vpop.f32.mrf.mxu0
      %v594 = vadd.f32 %v243, %v593
      %595 = vmatmul.bf16.gmra.mxu0 %v351
      %v596 = vpop.f32.mrf.mxu0
      %v597 = vadd.f32 %v243, %v596
      %v598 = vpop.f32.mrf.mxu0
      %v599 = vadd.f32 %v243, %v598
      %600 = vmatmul.bf16.gmra.mxu0 %v353
      %v601 = vpop.f32.mrf.mxu0
      %v602 = vadd.f32 %v243, %v601
      %v603 = vpop.f32.mrf.mxu0
      %v604 = vadd.f32 %v243, %v603
      %605 = vmatmul.bf16.gmra.mxu0 %v355
      %v606 = vpop.f32.mrf.mxu0
      %v607 = vadd.f32 %v243, %v606
      %v608 = vpop.f32.mrf.mxu0
      %v609 = vadd.f32 %v243, %v608
      %610 = vmatmul.bf16.gmra.mxu0 %v357
      %v611 = vpop.f32.mrf.mxu0
      %v612 = vadd.f32 %v243, %v611
      %v613 = vpop.f32.mrf.mxu0
      %v614 = vadd.f32 %v243, %v613
      %615 = vmatmul.bf16.gmra.mxu0 %v359
      %v616 = vpop.f32.mrf.mxu0
      %v617 = vadd.f32 %v243, %v616
      %v618 = vpop.f32.mrf.mxu0
      %v619 = vadd.f32 %v243, %v618
      %620 = vmatmul.bf16.gmra.mxu0 %v361
      %v621 = vpop.f32.mrf.mxu0
      %v622 = vadd.f32 %v243, %v621
      %v623 = vpop.f32.mrf.mxu0
      %v624 = vadd.f32 %v243, %v623
      %625 = vmatmul.bf16.gmra.mxu0 %v363
      %v626 = vpop.f32.mrf.mxu0
      %v627 = vadd.f32 %v243, %v626
      %v628 = vpop.f32.mrf.mxu0
      %v629 = vadd.f32 %v243, %v628
      %630 = vmatmul.bf16.gmra.mxu0 %v365
      %v631 = vpop.f32.mrf.mxu0
      %v632 = vadd.f32 %v243, %v631
      %v633 = vpop.f32.mrf.mxu0
      %v634 = vadd.f32 %v243, %v633
      %635 = vmatmul.bf16.gmra.mxu0 %v367
      %v636 = vpop.f32.mrf.mxu0
      %v637 = vadd.f32 %v243, %v636
      %v638 = vpop.f32.mrf.mxu0
      %v639 = vadd.f32 %v243, %v638
      %640 = vmatmul.bf16.gmra.mxu0 %v369
      %v641 = vpop.f32.mrf.mxu0
      %v642 = vadd.f32 %v243, %v641
      %v643 = vpop.f32.mrf.mxu0
      %v644 = vadd.f32 %v243, %v643
      %645 = vmatmul.bf16.gmra.mxu0 %v371
      %v646 = vpop.f32.mrf.mxu0
      %v647 = vadd.f32 %v243, %v646
      %v648 = vpop.f32.mrf.mxu0
      %v649 = vadd.f32 %v243, %v648
      %650 = vmatmul.bf16.gmra.mxu0 %v373
      %v651 = vpop.f32.mrf.mxu0
      %v652 = vadd.f32 %v243, %v651
      %v653 = vpop.f32.mrf.mxu0
      %v654 = vadd.f32 %v243, %v653
      %655 = vdwg.mxu0
      %656 = vmatpush.bf16.msra.mxu0 %v533
      %657 = vmatpush.bf16.msra.mxu0 %v531
      %658 = vmatpush.bf16.msra.mxu0 %v529
      %659 = vmatpush.bf16.msra.mxu0 %v527
      %660 = vmatpush.bf16.msra.mxu0 %v525
      %661 = vmatpush.bf16.msra.mxu0 %v523
      %662 = vmatpush.bf16.msra.mxu0 %v521
      %663 = vmatpush.bf16.msra.mxu0 %v519
      %664 = vmatmul.bf16.gmra.mxu0 %v344
      %v665 = vpop.f32.mrf.mxu0
      %v666 = vadd.f32 %v577, %v665
      %v667 = vpop.f32.mrf.mxu0
      %v668 = vadd.f32 %v579, %v667
      %669 = vmatmul.bf16.gmra.mxu0 %v346
      %v670 = vpop.f32.mrf.mxu0
      %v671 = vadd.f32 %v582, %v670
      %v672 = vpop.f32.mrf.mxu0
      %v673 = vadd.f32 %v584, %v672
      %674 = vmatmul.bf16.gmra.mxu0 %v348
      %v675 = vpop.f32.mrf.mxu0
      %v676 = vadd.f32 %v587, %v675
      %v677 = vpop.f32.mrf.mxu0
      %v678 = vadd.f32 %v589, %v677
      %679 = vmatmul.bf16.gmra.mxu0 %v350
      %v680 = vpop.f32.mrf.mxu0
      %v681 = vadd.f32 %v592, %v680
      %v682 = vpop.f32.mrf.mxu0
      %v683 = vadd.f32 %v594, %v682
      %684 = vmatmul.bf16.gmra.mxu0 %v352
      %v685 = vpop.f32.mrf.mxu0
      %v686 = vadd.f32 %v597, %v685
      %v687 = vpop.f32.mrf.mxu0
      %v688 = vadd.f32 %v599, %v687
      %689 = vmatmul.bf16.gmra.mxu0 %v354
      %v690 = vpop.f32.mrf.mxu0
      %v691 = vadd.f32 %v602, %v690
      %v692 = vpop.f32.mrf.mxu0
      %v693 = vadd.f32 %v604, %v692
      %694 = vmatmul.bf16.gmra.mxu0 %v356
      %v695 = vpop.f32.mrf.mxu0
      %v696 = vadd.f32 %v607, %v695
      %v697 = vpop.f32.mrf.mxu0
      %v698 = vadd.f32 %v609, %v697
      %699 = vmatmul.bf16.gmra.mxu0 %v358
      %v700 = vpop.f32.mrf.mxu0
      %v701 = vadd.f32 %v612, %v700
      %v702 = vpop.f32.mrf.mxu0
      %v703 = vadd.f32 %v614, %v702
      %704 = vmatmul.bf16.gmra.mxu0 %v360
      %v705 = vpop.f32.mrf.mxu0
      %v706 = vadd.f32 %v617, %v705
      %v707 = vpop.f32.mrf.mxu0
      %v708 = vadd.f32 %v619, %v707
      %709 = vmatmul.bf16.gmra.mxu0 %v362
      %v710 = vpop.f32.mrf.mxu0
      %v711 = vadd.f32 %v622, %v710
      %v712 = vpop.f32.mrf.mxu0
      %v713 = vadd.f32 %v624, %v712
      %714 = vmatmul.bf16.gmra.mxu0 %v364
      %v715 = vpop.f32.mrf.mxu0
      %v716 = vadd.f32 %v627, %v715
      %v717 = vpop.f32.mrf.mxu0
      %v718 = vadd.f32 %v629, %v717
      %719 = vmatmul.bf16.gmra.mxu0 %v366
      %v720 = vpop.f32.mrf.mxu0
      %v721 = vadd.f32 %v632, %v720
      %v722 = vpop.f32.mrf.mxu0
      %v723 = vadd.f32 %v634, %v722
      %724 = vmatmul.bf16.gmra.mxu0 %v368
      %v725 = vpop.f32.mrf.mxu0
      %v726 = vadd.f32 %v637, %v725
      %v727 = vpop.f32.mrf.mxu0
      %v728 = vadd.f32 %v639, %v727
      %729 = vmatmul.bf16.gmra.mxu0 %v370
      %v730 = vpop.f32.mrf.mxu0
      %v731 = vadd.f32 %v642, %v730
      %v732 = vpop.f32.mrf.mxu0
      %v733 = vadd.f32 %v644, %v732
      %734 = vmatmul.bf16.gmra.mxu0 %v372
      %v735 = vpop.f32.mrf.mxu0
      %v736 = vadd.f32 %v647, %v735
      %v737 = vpop.f32.mrf.mxu0
      %v738 = vadd.f32 %v649, %v737
      %739 = vmatmul.bf16.gmra.mxu0 %v374
      %v740 = vpop.f32.mrf.mxu0
      %v741 = vadd.f32 %v652, %v740
      %v742 = vpop.f32.mrf.mxu0
      %v743 = vadd.f32 %v654, %v742
      %744 = vdwg.mxu0
      %745 = vmatpush.bf16.msra.mxu0 %v518
      %746 = vmatpush.bf16.msra.mxu0 %v516
      %747 = vmatpush.bf16.msra.mxu0 %v514
      %748 = vmatpush.bf16.msra.mxu0 %v512
      %749 = vmatpush.bf16.msra.mxu0 %v510
      %750 = vmatpush.bf16.msra.mxu0 %v508
      %751 = vmatpush.bf16.msra.mxu0 %v506
      %752 = vmatpush.bf16.msra.mxu0 %v504
      %753 = vmatmul.bf16.gmra.mxu0 %v343
      %v754 = vpop.f32.mrf.mxu0
      %v755 = vadd.f32 %v244, %v754
      %v756 = vpop.f32.mrf.mxu0
      %v757 = vadd.f32 %v244, %v756
      %758 = vmatmul.bf16.gmra.mxu0 %v345
      %v759 = vpop.f32.mrf.mxu0
      %v760 = vadd.f32 %v244, %v759
      %v761 = vpop.f32.mrf.mxu0
      %v762 = vadd.f32 %v244, %v761
      %763 = vmatmul.bf16.gmra.mxu0 %v347
      %v764 = vpop.f32.mrf.mxu0
      %v765 = vadd.f32 %v244, %v764
      %v766 = vpop.f32.mrf.mxu0
      %v767 = vadd.f32 %v244, %v766
      %768 = vmatmul.bf16.gmra.mxu0 %v349
      %v769 = vpop.f32.mrf.mxu0
      %v770 = vadd.f32 %v244, %v769
      %v771 = vpop.f32.mrf.mxu0
      %v772 = vadd.f32 %v244, %v771
      %773 = vmatmul.bf16.gmra.mxu0 %v351
      %v774 = vpop.f32.mrf.mxu0
      %v775 = vadd.f32 %v244, %v774
      %v776 = vpop.f32.mrf.mxu0
      %v777 = vadd.f32 %v244, %v776
      %778 = vmatmul.bf16.gmra.mxu0 %v353
      %v779 = vpop.f32.mrf.mxu0
      %v780 = vadd.f32 %v244, %v779
      %v781 = vpop.f32.mrf.mxu0
      %v782 = vadd.f32 %v244, %v781
      %783 = vmatmul.bf16.gmra.mxu0 %v355
      %v784 = vpop.f32.mrf.mxu0
      %v785 = vadd.f32 %v244, %v784
      %v786 = vpop.f32.mrf.mxu0
      %v787 = vadd.f32 %v244, %v786
      %788 = vmatmul.bf16.gmra.mxu0 %v357
      %v789 = vpop.f32.mrf.mxu0
      %v790 = vadd.f32 %v244, %v789
      %v791 = vpop.f32.mrf.mxu0
      %v792 = vadd.f32 %v244, %v791
      %793 = vmatmul.bf16.gmra.mxu0 %v359
      %v794 = vpop.f32.mrf.mxu0
      %v795 = vadd.f32 %v244, %v794
      %v796 = vpop.f32.mrf.mxu0
      %v797 = vadd.f32 %v244, %v796
      %798 = vmatmul.bf16.gmra.mxu0 %v361
      %v799 = vpop.f32.mrf.mxu0
      %v800 = vadd.f32 %v244, %v799
      %v801 = vpop.f32.mrf.mxu0
      %v802 = vadd.f32 %v244, %v801
      %803 = vmatmul.bf16.gmra.mxu0 %v363
      %v804 = vpop.f32.mrf.mxu0
      %v805 = vadd.f32 %v244, %v804
      %v806 = vpop.f32.mrf.mxu0
      %v807 = vadd.f32 %v244, %v806
      %808 = vmatmul.bf16.gmra.mxu0 %v365
      %v809 = vpop.f32.mrf.mxu0
      %v810 = vadd.f32 %v244, %v809
      %v811 = vpop.f32.mrf.mxu0
      %v812 = vadd.f32 %v244, %v811
      %813 = vmatmul.bf16.gmra.mxu0 %v367
      %v814 = vpop.f32.mrf.mxu0
      %v815 = vadd.f32 %v244, %v814
      %v816 = vpop.f32.mrf.mxu0
      %v817 = vadd.f32 %v244, %v816
      %818 = vmatmul.bf16.gmra.mxu0 %v369
      %v819 = vpop.f32.mrf.mxu0
      %v820 = vadd.f32 %v244, %v819
      %v821 = vpop.f32.mrf.mxu0
      %v822 = vadd.f32 %v244, %v821
      %823 = vmatmul.bf16.gmra.mxu0 %v371
      %v824 = vpop.f32.mrf.mxu0
      %v825 = vadd.f32 %v244, %v824
      %v826 = vpop.f32.mrf.mxu0
      %v827 = vadd.f32 %v244, %v826
      %828 = vmatmul.bf16.gmra.mxu0 %v373
      %v829 = vpop.f32.mrf.mxu0
      %v830 = vadd.f32 %v244, %v829
      %v831 = vpop.f32.mrf.mxu0
      %v832 = vadd.f32 %v244, %v831
      %833 = vdwg.mxu0
      %834 = vmatpush.bf16.msra.mxu0 %v534
      %835 = vmatpush.bf16.msra.mxu0 %v532
      %836 = vmatpush.bf16.msra.mxu0 %v530
      %837 = vmatpush.bf16.msra.mxu0 %v528
      %838 = vmatpush.bf16.msra.mxu0 %v526
      %839 = vmatpush.bf16.msra.mxu0 %v524
      %840 = vmatpush.bf16.msra.mxu0 %v522
      %841 = vmatpush.bf16.msra.mxu0 %v520
      %842 = vmatmul.bf16.gmra.mxu0 %v344
      %v843 = vpop.f32.mrf.mxu0
      %v844 = vadd.f32 %v755, %v843
      %v845 = vpop.f32.mrf.mxu0
      %v846 = vadd.f32 %v757, %v845
      %847 = vmatmul.bf16.gmra.mxu0 %v346
      %v848 = vpop.f32.mrf.mxu0
      %v849 = vadd.f32 %v760, %v848
      %v850 = vpop.f32.mrf.mxu0
      %v851 = vadd.f32 %v762, %v850
      %852 = vmatmul.bf16.gmra.mxu0 %v348
      %v853 = vpop.f32.mrf.mxu0
      %v854 = vadd.f32 %v765, %v853
      %v855 = vpop.f32.mrf.mxu0
      %v856 = vadd.f32 %v767, %v855
      %857 = vmatmul.bf16.gmra.mxu0 %v350
      %v858 = vpop.f32.mrf.mxu0
      %v859 = vadd.f32 %v770, %v858
      %v860 = vpop.f32.mrf.mxu0
      %v861 = vadd.f32 %v772, %v860
      %862 = vmatmul.bf16.gmra.mxu0 %v352
      %v863 = vpop.f32.mrf.mxu0
      %v864 = vadd.f32 %v775, %v863
      %v865 = vpop.f32.mrf.mxu0
      %v866 = vadd.f32 %v777, %v865
      %867 = vmatmul.bf16.gmra.mxu0 %v354
      %v868 = vpop.f32.mrf.mxu0
      %v869 = vadd.f32 %v780, %v868
      %v870 = vpop.f32.mrf.mxu0
      %v871 = vadd.f32 %v782, %v870
      %872 = vmatmul.bf16.gmra.mxu0 %v356
      %v873 = vpop.f32.mrf.mxu0
      %v874 = vadd.f32 %v785, %v873
      %v875 = vpop.f32.mrf.mxu0
      %v876 = vadd.f32 %v787, %v875
      %877 = vmatmul.bf16.gmra.mxu0 %v358
      %v878 = vpop.f32.mrf.mxu0
      %v879 = vadd.f32 %v790, %v878
      %v880 = vpop.f32.mrf.mxu0
      %v881 = vadd.f32 %v792, %v880
      %882 = vmatmul.bf16.gmra.mxu0 %v360
      %v883 = vpop.f32.mrf.mxu0
      %v884 = vadd.f32 %v795, %v883
      %v885 = vpop.f32.mrf.mxu0
      %v886 = vadd.f32 %v797, %v885
      %887 = vmatmul.bf16.gmra.mxu0 %v362
      %v888 = vpop.f32.mrf.mxu0
      %v889 = vadd.f32 %v800, %v888
      %v890 = vpop.f32.mrf.mxu0
      %v891 = vadd.f32 %v802, %v890
      %892 = vmatmul.bf16.gmra.mxu0 %v364
      %v893 = vpop.f32.mrf.mxu0
      %v894 = vadd.f32 %v805, %v893
      %v895 = vpop.f32.mrf.mxu0
      %v896 = vadd.f32 %v807, %v895
      %897 = vmatmul.bf16.gmra.mxu0 %v366
      %v898 = vpop.f32.mrf.mxu0
      %v899 = vadd.f32 %v810, %v898
      %v900 = vpop.f32.mrf.mxu0
      %v901 = vadd.f32 %v812, %v900
      %902 = vmatmul.bf16.gmra.mxu0 %v368
      %v903 = vpop.f32.mrf.mxu0
      %v904 = vadd.f32 %v815, %v903
      %v905 = vpop.f32.mrf.mxu0
      %v906 = vadd.f32 %v817, %v905
      %907 = vmatmul.bf16.gmra.mxu0 %v370
      %v908 = vpop.f32.mrf.mxu0
      %v909 = vadd.f32 %v820, %v908
      %v910 = vpop.f32.mrf.mxu0
      %v911 = vadd.f32 %v822, %v910
      %912 = vmatmul.bf16.gmra.mxu0 %v372
      %v913 = vpop.f32.mrf.mxu0
      %v914 = vadd.f32 %v825, %v913
      %v915 = vpop.f32.mrf.mxu0
      %v916 = vadd.f32 %v827, %v915
      %917 = vmatmul.bf16.gmra.mxu0 %v374
      %v918 = vpop.f32.mrf.mxu0
      %v919 = vadd.f32 %v830, %v918
      %v920 = vpop.f32.mrf.mxu0
      %v921 = vadd.f32 %v832, %v920
      %922 = vdwg.mxu0
      %v923 = vxor.u32 %v844, 2147483648
      %v924 = vxor.u32 %v846, 2147483648
      %v925 = vxor.u32 %v849, 2147483648
      %v926 = vxor.u32 %v851, 2147483648
      %v927 = vxor.u32 %v854, 2147483648
      %v928 = vxor.u32 %v856, 2147483648
      %v929 = vxor.u32 %v859, 2147483648
      %v930 = vxor.u32 %v861, 2147483648
      %v931 = vxor.u32 %v864, 2147483648
      %v932 = vxor.u32 %v866, 2147483648
      %v933 = vxor.u32 %v869, 2147483648
      %v934 = vxor.u32 %v871, 2147483648
      %v935 = vxor.u32 %v874, 2147483648
      %v936 = vxor.u32 %v876, 2147483648
      %v937 = vxor.u32 %v879, 2147483648
      %v938 = vxor.u32 %v881, 2147483648
      %v939 = vxor.u32 %v884, 2147483648
      %v940 = vxor.u32 %v886, 2147483648
      %v941 = vxor.u32 %v889, 2147483648
      %v942 = vxor.u32 %v891, 2147483648
      %v943 = vxor.u32 %v894, 2147483648
      %v944 = vxor.u32 %v896, 2147483648
      %v945 = vxor.u32 %v899, 2147483648
      %v946 = vxor.u32 %v901, 2147483648
      %v947 = vxor.u32 %v904, 2147483648
      %v948 = vxor.u32 %v906, 2147483648
      %v949 = vxor.u32 %v909, 2147483648
      %v950 = vxor.u32 %v911, 2147483648
      %v951 = vxor.u32 %v914, 2147483648
      %v952 = vxor.u32 %v916, 2147483648
      %v953 = vxor.u32 %v919, 2147483648
      %v954 = vxor.u32 %v921, 2147483648
      %v955 = vmul.f32 %v923, 1.442695
      %v956 = vpow.pop %v955
      %v957 = vmul.f32 %v924, 1.442695
      %v958 = vpow.pop %v957
      %v959 = vmul.f32 %v925, 1.442695
      %v960 = vpow.pop %v959
      %v961 = vmul.f32 %v926, 1.442695
      %v962 = vpow.pop %v961
      %v963 = vmul.f32 %v927, 1.442695
      %v964 = vpow.pop %v963
      %v965 = vmul.f32 %v928, 1.442695
      %v966 = vpow.pop %v965
      %v967 = vmul.f32 %v929, 1.442695
      %v968 = vpow.pop %v967
      %v969 = vmul.f32 %v930, 1.442695
      %v970 = vpow.pop %v969
      %v971 = vmul.f32 %v931, 1.442695
      %v972 = vpow.pop %v971
      %v973 = vmul.f32 %v932, 1.442695
      %v974 = vpow.pop %v973
      %v975 = vmul.f32 %v933, 1.442695
      %v976 = vpow.pop %v975
      %v977 = vmul.f32 %v934, 1.442695
      %v978 = vpow.pop %v977
      %v979 = vmul.f32 %v935, 1.442695
      %v980 = vpow.pop %v979
      %v981 = vmul.f32 %v936, 1.442695
      %v982 = vpow.pop %v981
      %v983 = vmul.f32 %v937, 1.442695
      %v984 = vpow.pop %v983
      %v985 = vmul.f32 %v938, 1.442695
      %v986 = vpow.pop %v985
      %v987 = vmul.f32 %v939, 1.442695
      %v988 = vpow.pop %v987
      %v989 = vmul.f32 %v940, 1.442695
      %v990 = vpow.pop %v989
      %v991 = vmul.f32 %v941, 1.442695
      %v992 = vpow.pop %v991
      %v993 = vmul.f32 %v942, 1.442695
      %v994 = vpow.pop %v993
      %v995 = vmul.f32 %v943, 1.442695
      %v996 = vpow.pop %v995
      %v997 = vmul.f32 %v944, 1.442695
      %v998 = vpow.pop %v997
      %v999 = vmul.f32 %v945, 1.442695
      %v1000 = vpow.pop %v999
      %v1001 = vmul.f32 %v946, 1.442695
      %v1002 = vpow.pop %v1001
      %v1003 = vmul.f32 %v947, 1.442695
      %v1004 = vpow.pop %v1003
      %v1005 = vmul.f32 %v948, 1.442695
      %v1006 = vpow.pop %v1005
      %v1007 = vmul.f32 %v949, 1.442695
      %v1008 = vpow.pop %v1007
      %v1009 = vmul.f32 %v950, 1.442695
      %v1010 = vpow.pop %v1009
      %v1011 = vmul.f32 %v951, 1.442695
      %v1012 = vpow.pop %v1011
      %v1013 = vmul.f32 %v952, 1.442695
      %v1014 = vpow.pop %v1013
      %v1015 = vmul.f32 %v953, 1.442695
      %v1016 = vpow.pop %v1015
      %v1017 = vmul.f32 %v954, 1.442695
      %v1018 = vpow.pop %v1017
      %v1019 = vadd.f32 %v956, 1.0
      %v1020 = vadd.f32 %v958, 1.0
      %v1021 = vadd.f32 %v960, 1.0
      %v1022 = vadd.f32 %v962, 1.0
      %v1023 = vadd.f32 %v964, 1.0
      %v1024 = vadd.f32 %v966, 1.0
      %v1025 = vadd.f32 %v968, 1.0
      %v1026 = vadd.f32 %v970, 1.0
      %v1027 = vadd.f32 %v972, 1.0
      %v1028 = vadd.f32 %v974, 1.0
      %v1029 = vadd.f32 %v976, 1.0
      %v1030 = vadd.f32 %v978, 1.0
      %v1031 = vadd.f32 %v980, 1.0
      %v1032 = vadd.f32 %v982, 1.0
      %v1033 = vadd.f32 %v984, 1.0
      %v1034 = vadd.f32 %v986, 1.0
      %v1035 = vadd.f32 %v988, 1.0
      %v1036 = vadd.f32 %v990, 1.0
      %v1037 = vadd.f32 %v992, 1.0
      %v1038 = vadd.f32 %v994, 1.0
      %v1039 = vadd.f32 %v996, 1.0
      %v1040 = vadd.f32 %v998, 1.0
      %v1041 = vadd.f32 %v1000, 1.0
      %v1042 = vadd.f32 %v1002, 1.0
      %v1043 = vadd.f32 %v1004, 1.0
      %v1044 = vadd.f32 %v1006, 1.0
      %v1045 = vadd.f32 %v1008, 1.0
      %v1046 = vadd.f32 %v1010, 1.0
      %v1047 = vadd.f32 %v1012, 1.0
      %v1048 = vadd.f32 %v1014, 1.0
      %v1049 = vadd.f32 %v1016, 1.0
      %v1050 = vadd.f32 %v1018, 1.0
      %v1051 = vrcp.pop %v1019
      %v1052 = vmul.f32 %v1019, %v1051
      %v1053 = vsub.f32 1.0, %v1052
      %v1054 = vmul.f32 %v1051, %v1053
      %v1055 = vadd.f32 %v1051, %v1054
      %vm1056 = vweird.f32 %v1019
      %vm1057 = vweird.f32 %v1051
      %vm1058 = vmor %vm1056, %vm1057
      %v1059 = vsel %vm1058, %v1051, %v1055
      %v1060 = vand.u32 2147483647, %v1019
      %vm1061 = vcmp.eq.f32.partialorder %v1060, 8.507059e+37
      %v1062 = vand.u32 %v1019, 2147483648
      %v1063 = vor.u32 1.1754944e-38, %v1062
      %v1064 = vsel %vm1061, %v1063, %v1059
      %v1065 = vmul.f32 1.0, %v1064
      %v1066 = vrcp.pop %v1020
      %v1067 = vmul.f32 %v1020, %v1066
      %v1068 = vsub.f32 1.0, %v1067
      %v1069 = vmul.f32 %v1066, %v1068
      %v1070 = vadd.f32 %v1066, %v1069
      %vm1071 = vweird.f32 %v1020
      %vm1072 = vweird.f32 %v1066
      %vm1073 = vmor %vm1071, %vm1072
      %v1074 = vsel %vm1073, %v1066, %v1070
      %v1075 = vand.u32 2147483647, %v1020
      %vm1076 = vcmp.eq.f32.partialorder %v1075, 8.507059e+37
      %v1077 = vand.u32 %v1020, 2147483648
      %v1078 = vor.u32 1.1754944e-38, %v1077
      %v1079 = vsel %vm1076, %v1078, %v1074
      %v1080 = vmul.f32 1.0, %v1079
      %v1081 = vrcp.pop %v1021
      %v1082 = vmul.f32 %v1021, %v1081
      %v1083 = vsub.f32 1.0, %v1082
      %v1084 = vmul.f32 %v1081, %v1083
      %v1085 = vadd.f32 %v1081, %v1084
      %vm1086 = vweird.f32 %v1021
      %vm1087 = vweird.f32 %v1081
      %vm1088 = vmor %vm1086, %vm1087
      %v1089 = vsel %vm1088, %v1081, %v1085
      %v1090 = vand.u32 2147483647, %v1021
      %vm1091 = vcmp.eq.f32.partialorder %v1090, 8.507059e+37
      %v1092 = vand.u32 %v1021, 2147483648
      %v1093 = vor.u32 1.1754944e-38, %v1092
      %v1094 = vsel %vm1091, %v1093, %v1089
      %v1095 = vmul.f32 1.0, %v1094
      %v1096 = vrcp.pop %v1022
      %v1097 = vmul.f32 %v1022, %v1096
      %v1098 = vsub.f32 1.0, %v1097
      %v1099 = vmul.f32 %v1096, %v1098
      %v1100 = vadd.f32 %v1096, %v1099
      %vm1101 = vweird.f32 %v1022
      %vm1102 = vweird.f32 %v1096
      %vm1103 = vmor %vm1101, %vm1102
      %v1104 = vsel %vm1103, %v1096, %v1100
      %v1105 = vand.u32 2147483647, %v1022
      %vm1106 = vcmp.eq.f32.partialorder %v1105, 8.507059e+37
      %v1107 = vand.u32 %v1022, 2147483648
      %v1108 = vor.u32 1.1754944e-38, %v1107
      %v1109 = vsel %vm1106, %v1108, %v1104
      %v1110 = vmul.f32 1.0, %v1109
      %v1111 = vrcp.pop %v1023
      %v1112 = vmul.f32 %v1023, %v1111
      %v1113 = vsub.f32 1.0, %v1112
      %v1114 = vmul.f32 %v1111, %v1113
      %v1115 = vadd.f32 %v1111, %v1114
      %vm1116 = vweird.f32 %v1023
      %vm1117 = vweird.f32 %v1111
      %vm1118 = vmor %vm1116, %vm1117
      %v1119 = vsel %vm1118, %v1111, %v1115
      %v1120 = vand.u32 2147483647, %v1023
      %vm1121 = vcmp.eq.f32.partialorder %v1120, 8.507059e+37
      %v1122 = vand.u32 %v1023, 2147483648
      %v1123 = vor.u32 1.1754944e-38, %v1122
      %v1124 = vsel %vm1121, %v1123, %v1119
      %v1125 = vmul.f32 1.0, %v1124
      %v1126 = vrcp.pop %v1024
      %v1127 = vmul.f32 %v1024, %v1126
      %v1128 = vsub.f32 1.0, %v1127
      %v1129 = vmul.f32 %v1126, %v1128
      %v1130 = vadd.f32 %v1126, %v1129
      %vm1131 = vweird.f32 %v1024
      %vm1132 = vweird.f32 %v1126
      %vm1133 = vmor %vm1131, %vm1132
      %v1134 = vsel %vm1133, %v1126, %v1130
      %v1135 = vand.u32 2147483647, %v1024
      %vm1136 = vcmp.eq.f32.partialorder %v1135, 8.507059e+37
      %v1137 = vand.u32 %v1024, 2147483648
      %v1138 = vor.u32 1.1754944e-38, %v1137
      %v1139 = vsel %vm1136, %v1138, %v1134
      %v1140 = vmul.f32 1.0, %v1139
      %v1141 = vrcp.pop %v1025
      %v1142 = vmul.f32 %v1025, %v1141
      %v1143 = vsub.f32 1.0, %v1142
      %v1144 = vmul.f32 %v1141, %v1143
      %v1145 = vadd.f32 %v1141, %v1144
      %vm1146 = vweird.f32 %v1025
      %vm1147 = vweird.f32 %v1141
      %vm1148 = vmor %vm1146, %vm1147
      %v1149 = vsel %vm1148, %v1141, %v1145
      %v1150 = vand.u32 2147483647, %v1025
      %vm1151 = vcmp.eq.f32.partialorder %v1150, 8.507059e+37
      %v1152 = vand.u32 %v1025, 2147483648
      %v1153 = vor.u32 1.1754944e-38, %v1152
      %v1154 = vsel %vm1151, %v1153, %v1149
      %v1155 = vmul.f32 1.0, %v1154
      %v1156 = vrcp.pop %v1026
      %v1157 = vmul.f32 %v1026, %v1156
      %v1158 = vsub.f32 1.0, %v1157
      %v1159 = vmul.f32 %v1156, %v1158
      %v1160 = vadd.f32 %v1156, %v1159
      %vm1161 = vweird.f32 %v1026
      %vm1162 = vweird.f32 %v1156
      %vm1163 = vmor %vm1161, %vm1162
      %v1164 = vsel %vm1163, %v1156, %v1160
      %v1165 = vand.u32 2147483647, %v1026
      %vm1166 = vcmp.eq.f32.partialorder %v1165, 8.507059e+37
      %v1167 = vand.u32 %v1026, 2147483648
      %v1168 = vor.u32 1.1754944e-38, %v1167
      %v1169 = vsel %vm1166, %v1168, %v1164
      %v1170 = vmul.f32 1.0, %v1169
      %v1171 = vrcp.pop %v1027
      %v1172 = vmul.f32 %v1027, %v1171
      %v1173 = vsub.f32 1.0, %v1172
      %v1174 = vmul.f32 %v1171, %v1173
      %v1175 = vadd.f32 %v1171, %v1174
      %vm1176 = vweird.f32 %v1027
      %vm1177 = vweird.f32 %v1171
      %vm1178 = vmor %vm1176, %vm1177
      %v1179 = vsel %vm1178, %v1171, %v1175
      %v1180 = vand.u32 2147483647, %v1027
      %vm1181 = vcmp.eq.f32.partialorder %v1180, 8.507059e+37
      %v1182 = vand.u32 %v1027, 2147483648
      %v1183 = vor.u32 1.1754944e-38, %v1182
      %v1184 = vsel %vm1181, %v1183, %v1179
      %v1185 = vmul.f32 1.0, %v1184
      %v1186 = vrcp.pop %v1028
      %v1187 = vmul.f32 %v1028, %v1186
      %v1188 = vsub.f32 1.0, %v1187
      %v1189 = vmul.f32 %v1186, %v1188
      %v1190 = vadd.f32 %v1186, %v1189
      %vm1191 = vweird.f32 %v1028
      %vm1192 = vweird.f32 %v1186
      %vm1193 = vmor %vm1191, %vm1192
      %v1194 = vsel %vm1193, %v1186, %v1190
      %v1195 = vand.u32 2147483647, %v1028
      %vm1196 = vcmp.eq.f32.partialorder %v1195, 8.507059e+37
      %v1197 = vand.u32 %v1028, 2147483648
      %v1198 = vor.u32 1.1754944e-38, %v1197
      %v1199 = vsel %vm1196, %v1198, %v1194
      %v1200 = vmul.f32 1.0, %v1199
      %v1201 = vrcp.pop %v1029
      %v1202 = vmul.f32 %v1029, %v1201
      %v1203 = vsub.f32 1.0, %v1202
      %v1204 = vmul.f32 %v1201, %v1203
      %v1205 = vadd.f32 %v1201, %v1204
      %vm1206 = vweird.f32 %v1029
      %vm1207 = vweird.f32 %v1201
      %vm1208 = vmor %vm1206, %vm1207
      %v1209 = vsel %vm1208, %v1201, %v1205
      %v1210 = vand.u32 2147483647, %v1029
      %vm1211 = vcmp.eq.f32.partialorder %v1210, 8.507059e+37
      %v1212 = vand.u32 %v1029, 2147483648
      %v1213 = vor.u32 1.1754944e-38, %v1212
      %v1214 = vsel %vm1211, %v1213, %v1209
      %v1215 = vmul.f32 1.0, %v1214
      %v1216 = vrcp.pop %v1030
      %v1217 = vmul.f32 %v1030, %v1216
      %v1218 = vsub.f32 1.0, %v1217
      %v1219 = vmul.f32 %v1216, %v1218
      %v1220 = vadd.f32 %v1216, %v1219
      %vm1221 = vweird.f32 %v1030
      %vm1222 = vweird.f32 %v1216
      %vm1223 = vmor %vm1221, %vm1222
      %v1224 = vsel %vm1223, %v1216, %v1220
      %v1225 = vand.u32 2147483647, %v1030
      %vm1226 = vcmp.eq.f32.partialorder %v1225, 8.507059e+37
      %v1227 = vand.u32 %v1030, 2147483648
      %v1228 = vor.u32 1.1754944e-38, %v1227
      %v1229 = vsel %vm1226, %v1228, %v1224
      %v1230 = vmul.f32 1.0, %v1229
      %v1231 = vrcp.pop %v1031
      %v1232 = vmul.f32 %v1031, %v1231
      %v1233 = vsub.f32 1.0, %v1232
      %v1234 = vmul.f32 %v1231, %v1233
      %v1235 = vadd.f32 %v1231, %v1234
      %vm1236 = vweird.f32 %v1031
      %vm1237 = vweird.f32 %v1231
      %vm1238 = vmor %vm1236, %vm1237
      %v1239 = vsel %vm1238, %v1231, %v1235
      %v1240 = vand.u32 2147483647, %v1031
      %vm1241 = vcmp.eq.f32.partialorder %v1240, 8.507059e+37
      %v1242 = vand.u32 %v1031, 2147483648
      %v1243 = vor.u32 1.1754944e-38, %v1242
      %v1244 = vsel %vm1241, %v1243, %v1239
      %v1245 = vmul.f32 1.0, %v1244
      %v1246 = vrcp.pop %v1032
      %v1247 = vmul.f32 %v1032, %v1246
      %v1248 = vsub.f32 1.0, %v1247
      %v1249 = vmul.f32 %v1246, %v1248
      %v1250 = vadd.f32 %v1246, %v1249
      %vm1251 = vweird.f32 %v1032
      %vm1252 = vweird.f32 %v1246
      %vm1253 = vmor %vm1251, %vm1252
      %v1254 = vsel %vm1253, %v1246, %v1250
      %v1255 = vand.u32 2147483647, %v1032
      %vm1256 = vcmp.eq.f32.partialorder %v1255, 8.507059e+37
      %v1257 = vand.u32 %v1032, 2147483648
      %v1258 = vor.u32 1.1754944e-38, %v1257
      %v1259 = vsel %vm1256, %v1258, %v1254
      %v1260 = vmul.f32 1.0, %v1259
      %v1261 = vrcp.pop %v1033
      %v1262 = vmul.f32 %v1033, %v1261
      %v1263 = vsub.f32 1.0, %v1262
      %v1264 = vmul.f32 %v1261, %v1263
      %v1265 = vadd.f32 %v1261, %v1264
      %vm1266 = vweird.f32 %v1033
      %vm1267 = vweird.f32 %v1261
      %vm1268 = vmor %vm1266, %vm1267
      %v1269 = vsel %vm1268, %v1261, %v1265
      %v1270 = vand.u32 2147483647, %v1033
      %vm1271 = vcmp.eq.f32.partialorder %v1270, 8.507059e+37
      %v1272 = vand.u32 %v1033, 2147483648
      %v1273 = vor.u32 1.1754944e-38, %v1272
      %v1274 = vsel %vm1271, %v1273, %v1269
      %v1275 = vmul.f32 1.0, %v1274
      %v1276 = vrcp.pop %v1034
      %v1277 = vmul.f32 %v1034, %v1276
      %v1278 = vsub.f32 1.0, %v1277
      %v1279 = vmul.f32 %v1276, %v1278
      %v1280 = vadd.f32 %v1276, %v1279
      %vm1281 = vweird.f32 %v1034
      %vm1282 = vweird.f32 %v1276
      %vm1283 = vmor %vm1281, %vm1282
      %v1284 = vsel %vm1283, %v1276, %v1280
      %v1285 = vand.u32 2147483647, %v1034
      %vm1286 = vcmp.eq.f32.partialorder %v1285, 8.507059e+37
      %v1287 = vand.u32 %v1034, 2147483648
      %v1288 = vor.u32 1.1754944e-38, %v1287
      %v1289 = vsel %vm1286, %v1288, %v1284
      %v1290 = vmul.f32 1.0, %v1289
      %v1291 = vrcp.pop %v1035
      %v1292 = vmul.f32 %v1035, %v1291
      %v1293 = vsub.f32 1.0, %v1292
      %v1294 = vmul.f32 %v1291, %v1293
      %v1295 = vadd.f32 %v1291, %v1294
      %vm1296 = vweird.f32 %v1035
      %vm1297 = vweird.f32 %v1291
      %vm1298 = vmor %vm1296, %vm1297
      %v1299 = vsel %vm1298, %v1291, %v1295
      %v1300 = vand.u32 2147483647, %v1035
      %vm1301 = vcmp.eq.f32.partialorder %v1300, 8.507059e+37
      %v1302 = vand.u32 %v1035, 2147483648
      %v1303 = vor.u32 1.1754944e-38, %v1302
      %v1304 = vsel %vm1301, %v1303, %v1299
      %v1305 = vmul.f32 1.0, %v1304
      %v1306 = vrcp.pop %v1036
      %v1307 = vmul.f32 %v1036, %v1306
      %v1308 = vsub.f32 1.0, %v1307
      %v1309 = vmul.f32 %v1306, %v1308
      %v1310 = vadd.f32 %v1306, %v1309
      %vm1311 = vweird.f32 %v1036
      %vm1312 = vweird.f32 %v1306
      %vm1313 = vmor %vm1311, %vm1312
      %v1314 = vsel %vm1313, %v1306, %v1310
      %v1315 = vand.u32 2147483647, %v1036
      %vm1316 = vcmp.eq.f32.partialorder %v1315, 8.507059e+37
      %v1317 = vand.u32 %v1036, 2147483648
      %v1318 = vor.u32 1.1754944e-38, %v1317
      %v1319 = vsel %vm1316, %v1318, %v1314
      %v1320 = vmul.f32 1.0, %v1319
      %v1321 = vrcp.pop %v1037
      %v1322 = vmul.f32 %v1037, %v1321
      %v1323 = vsub.f32 1.0, %v1322
      %v1324 = vmul.f32 %v1321, %v1323
      %v1325 = vadd.f32 %v1321, %v1324
      %vm1326 = vweird.f32 %v1037
      %vm1327 = vweird.f32 %v1321
      %vm1328 = vmor %vm1326, %vm1327
      %v1329 = vsel %vm1328, %v1321, %v1325
      %v1330 = vand.u32 2147483647, %v1037
      %vm1331 = vcmp.eq.f32.partialorder %v1330, 8.507059e+37
      %v1332 = vand.u32 %v1037, 2147483648
      %v1333 = vor.u32 1.1754944e-38, %v1332
      %v1334 = vsel %vm1331, %v1333, %v1329
      %v1335 = vmul.f32 1.0, %v1334
      %v1336 = vrcp.pop %v1038
      %v1337 = vmul.f32 %v1038, %v1336
      %v1338 = vsub.f32 1.0, %v1337
      %v1339 = vmul.f32 %v1336, %v1338
      %v1340 = vadd.f32 %v1336, %v1339
      %vm1341 = vweird.f32 %v1038
      %vm1342 = vweird.f32 %v1336
      %vm1343 = vmor %vm1341, %vm1342
      %v1344 = vsel %vm1343, %v1336, %v1340
      %v1345 = vand.u32 2147483647, %v1038
      %vm1346 = vcmp.eq.f32.partialorder %v1345, 8.507059e+37
      %v1347 = vand.u32 %v1038, 2147483648
      %v1348 = vor.u32 1.1754944e-38, %v1347
      %v1349 = vsel %vm1346, %v1348, %v1344
      %v1350 = vmul.f32 1.0, %v1349
      %v1351 = vrcp.pop %v1039
      %v1352 = vmul.f32 %v1039, %v1351
      %v1353 = vsub.f32 1.0, %v1352
      %v1354 = vmul.f32 %v1351, %v1353
      %v1355 = vadd.f32 %v1351, %v1354
      %vm1356 = vweird.f32 %v1039
      %vm1357 = vweird.f32 %v1351
      %vm1358 = vmor %vm1356, %vm1357
      %v1359 = vsel %vm1358, %v1351, %v1355
      %v1360 = vand.u32 2147483647, %v1039
      %vm1361 = vcmp.eq.f32.partialorder %v1360, 8.507059e+37
      %v1362 = vand.u32 %v1039, 2147483648
      %v1363 = vor.u32 1.1754944e-38, %v1362
      %v1364 = vsel %vm1361, %v1363, %v1359
      %v1365 = vmul.f32 1.0, %v1364
      %v1366 = vrcp.pop %v1040
      %v1367 = vmul.f32 %v1040, %v1366
      %v1368 = vsub.f32 1.0, %v1367
      %v1369 = vmul.f32 %v1366, %v1368
      %v1370 = vadd.f32 %v1366, %v1369
      %vm1371 = vweird.f32 %v1040
      %vm1372 = vweird.f32 %v1366
      %vm1373 = vmor %vm1371, %vm1372
      %v1374 = vsel %vm1373, %v1366, %v1370
      %v1375 = vand.u32 2147483647, %v1040
      %vm1376 = vcmp.eq.f32.partialorder %v1375, 8.507059e+37
      %v1377 = vand.u32 %v1040, 2147483648
      %v1378 = vor.u32 1.1754944e-38, %v1377
      %v1379 = vsel %vm1376, %v1378, %v1374
      %v1380 = vmul.f32 1.0, %v1379
      %v1381 = vrcp.pop %v1041
      %v1382 = vmul.f32 %v1041, %v1381
      %v1383 = vsub.f32 1.0, %v1382
      %v1384 = vmul.f32 %v1381, %v1383
      %v1385 = vadd.f32 %v1381, %v1384
      %vm1386 = vweird.f32 %v1041
      %vm1387 = vweird.f32 %v1381
      %vm1388 = vmor %vm1386, %vm1387
      %v1389 = vsel %vm1388, %v1381, %v1385
      %v1390 = vand.u32 2147483647, %v1041
      %vm1391 = vcmp.eq.f32.partialorder %v1390, 8.507059e+37
      %v1392 = vand.u32 %v1041, 2147483648
      %v1393 = vor.u32 1.1754944e-38, %v1392
      %v1394 = vsel %vm1391, %v1393, %v1389
      %v1395 = vmul.f32 1.0, %v1394
      %v1396 = vrcp.pop %v1042
      %v1397 = vmul.f32 %v1042, %v1396
      %v1398 = vsub.f32 1.0, %v1397
      %v1399 = vmul.f32 %v1396, %v1398
      %v1400 = vadd.f32 %v1396, %v1399
      %vm1401 = vweird.f32 %v1042
      %vm1402 = vweird.f32 %v1396
      %vm1403 = vmor %vm1401, %vm1402
      %v1404 = vsel %vm1403, %v1396, %v1400
      %v1405 = vand.u32 2147483647, %v1042
      %vm1406 = vcmp.eq.f32.partialorder %v1405, 8.507059e+37
      %v1407 = vand.u32 %v1042, 2147483648
      %v1408 = vor.u32 1.1754944e-38, %v1407
      %v1409 = vsel %vm1406, %v1408, %v1404
      %v1410 = vmul.f32 1.0, %v1409
      %v1411 = vrcp.pop %v1043
      %v1412 = vmul.f32 %v1043, %v1411
      %v1413 = vsub.f32 1.0, %v1412
      %v1414 = vmul.f32 %v1411, %v1413
      %v1415 = vadd.f32 %v1411, %v1414
      %vm1416 = vweird.f32 %v1043
      %vm1417 = vweird.f32 %v1411
      %vm1418 = vmor %vm1416, %vm1417
      %v1419 = vsel %vm1418, %v1411, %v1415
      %v1420 = vand.u32 2147483647, %v1043
      %vm1421 = vcmp.eq.f32.partialorder %v1420, 8.507059e+37
      %v1422 = vand.u32 %v1043, 2147483648
      %v1423 = vor.u32 1.1754944e-38, %v1422
      %v1424 = vsel %vm1421, %v1423, %v1419
      %v1425 = vmul.f32 1.0, %v1424
      %v1426 = vrcp.pop %v1044
      %v1427 = vmul.f32 %v1044, %v1426
      %v1428 = vsub.f32 1.0, %v1427
      %v1429 = vmul.f32 %v1426, %v1428
      %v1430 = vadd.f32 %v1426, %v1429
      %vm1431 = vweird.f32 %v1044
      %vm1432 = vweird.f32 %v1426
      %vm1433 = vmor %vm1431, %vm1432
      %v1434 = vsel %vm1433, %v1426, %v1430
      %v1435 = vand.u32 2147483647, %v1044
      %vm1436 = vcmp.eq.f32.partialorder %v1435, 8.507059e+37
      %v1437 = vand.u32 %v1044, 2147483648
      %v1438 = vor.u32 1.1754944e-38, %v1437
      %v1439 = vsel %vm1436, %v1438, %v1434
      %v1440 = vmul.f32 1.0, %v1439
      %v1441 = vrcp.pop %v1045
      %v1442 = vmul.f32 %v1045, %v1441
      %v1443 = vsub.f32 1.0, %v1442
      %v1444 = vmul.f32 %v1441, %v1443
      %v1445 = vadd.f32 %v1441, %v1444
      %vm1446 = vweird.f32 %v1045
      %vm1447 = vweird.f32 %v1441
      %vm1448 = vmor %vm1446, %vm1447
      %v1449 = vsel %vm1448, %v1441, %v1445
      %v1450 = vand.u32 2147483647, %v1045
      %vm1451 = vcmp.eq.f32.partialorder %v1450, 8.507059e+37
      %v1452 = vand.u32 %v1045, 2147483648
      %v1453 = vor.u32 1.1754944e-38, %v1452
      %v1454 = vsel %vm1451, %v1453, %v1449
      %v1455 = vmul.f32 1.0, %v1454
      %v1456 = vrcp.pop %v1046
      %v1457 = vmul.f32 %v1046, %v1456
      %v1458 = vsub.f32 1.0, %v1457
      %v1459 = vmul.f32 %v1456, %v1458
      %v1460 = vadd.f32 %v1456, %v1459
      %vm1461 = vweird.f32 %v1046
      %vm1462 = vweird.f32 %v1456
      %vm1463 = vmor %vm1461, %vm1462
      %v1464 = vsel %vm1463, %v1456, %v1460
      %v1465 = vand.u32 2147483647, %v1046
      %vm1466 = vcmp.eq.f32.partialorder %v1465, 8.507059e+37
      %v1467 = vand.u32 %v1046, 2147483648
      %v1468 = vor.u32 1.1754944e-38, %v1467
      %v1469 = vsel %vm1466, %v1468, %v1464
      %v1470 = vmul.f32 1.0, %v1469
      %v1471 = vrcp.pop %v1047
      %v1472 = vmul.f32 %v1047, %v1471
      %v1473 = vsub.f32 1.0, %v1472
      %v1474 = vmul.f32 %v1471, %v1473
      %v1475 = vadd.f32 %v1471, %v1474
      %vm1476 = vweird.f32 %v1047
      %vm1477 = vweird.f32 %v1471
      %vm1478 = vmor %vm1476, %vm1477
      %v1479 = vsel %vm1478, %v1471, %v1475
      %v1480 = vand.u32 2147483647, %v1047
      %vm1481 = vcmp.eq.f32.partialorder %v1480, 8.507059e+37
      %v1482 = vand.u32 %v1047, 2147483648
      %v1483 = vor.u32 1.1754944e-38, %v1482
      %v1484 = vsel %vm1481, %v1483, %v1479
      %v1485 = vmul.f32 1.0, %v1484
      %v1486 = vrcp.pop %v1048
      %v1487 = vmul.f32 %v1048, %v1486
      %v1488 = vsub.f32 1.0, %v1487
      %v1489 = vmul.f32 %v1486, %v1488
      %v1490 = vadd.f32 %v1486, %v1489
      %vm1491 = vweird.f32 %v1048
      %vm1492 = vweird.f32 %v1486
      %vm1493 = vmor %vm1491, %vm1492
      %v1494 = vsel %vm1493, %v1486, %v1490
      %v1495 = vand.u32 2147483647, %v1048
      %vm1496 = vcmp.eq.f32.partialorder %v1495, 8.507059e+37
      %v1497 = vand.u32 %v1048, 2147483648
      %v1498 = vor.u32 1.1754944e-38, %v1497
      %v1499 = vsel %vm1496, %v1498, %v1494
      %v1500 = vmul.f32 1.0, %v1499
      %v1501 = vrcp.pop %v1049
      %v1502 = vmul.f32 %v1049, %v1501
      %v1503 = vsub.f32 1.0, %v1502
      %v1504 = vmul.f32 %v1501, %v1503
      %v1505 = vadd.f32 %v1501, %v1504
      %vm1506 = vweird.f32 %v1049
      %vm1507 = vweird.f32 %v1501
      %vm1508 = vmor %vm1506, %vm1507
      %v1509 = vsel %vm1508, %v1501, %v1505
      %v1510 = vand.u32 2147483647, %v1049
      %vm1511 = vcmp.eq.f32.partialorder %v1510, 8.507059e+37
      %v1512 = vand.u32 %v1049, 2147483648
      %v1513 = vor.u32 1.1754944e-38, %v1512
      %v1514 = vsel %vm1511, %v1513, %v1509
      %v1515 = vmul.f32 1.0, %v1514
      %v1516 = vrcp.pop %v1050
      %v1517 = vmul.f32 %v1050, %v1516
      %v1518 = vsub.f32 1.0, %v1517
      %v1519 = vmul.f32 %v1516, %v1518
      %v1520 = vadd.f32 %v1516, %v1519
      %vm1521 = vweird.f32 %v1050
      %vm1522 = vweird.f32 %v1516
      %vm1523 = vmor %vm1521, %vm1522
      %v1524 = vsel %vm1523, %v1516, %v1520
      %v1525 = vand.u32 2147483647, %v1050
      %vm1526 = vcmp.eq.f32.partialorder %v1525, 8.507059e+37
      %v1527 = vand.u32 %v1050, 2147483648
      %v1528 = vor.u32 1.1754944e-38, %v1527
      %v1529 = vsel %vm1526, %v1528, %v1524
      %v1530 = vmul.f32 1.0, %v1529
      %vm1531 = vcmp.ge.f32.partialorder %v666, 0.0
      %vm1532 = vcmp.ge.f32.partialorder %v668, 0.0
      %vm1533 = vcmp.ge.f32.partialorder %v671, 0.0
      %vm1534 = vcmp.ge.f32.partialorder %v673, 0.0
      %vm1535 = vcmp.ge.f32.partialorder %v676, 0.0
      %vm1536 = vcmp.ge.f32.partialorder %v678, 0.0
      %vm1537 = vcmp.ge.f32.partialorder %v681, 0.0
      %vm1538 = vcmp.ge.f32.partialorder %v683, 0.0
      %vm1539 = vcmp.ge.f32.partialorder %v686, 0.0
      %vm1540 = vcmp.ge.f32.partialorder %v688, 0.0
      %vm1541 = vcmp.ge.f32.partialorder %v691, 0.0
      %vm1542 = vcmp.ge.f32.partialorder %v693, 0.0
      %vm1543 = vcmp.ge.f32.partialorder %v696, 0.0
      %vm1544 = vcmp.ge.f32.partialorder %v698, 0.0
      %vm1545 = vcmp.ge.f32.partialorder %v701, 0.0
      %vm1546 = vcmp.ge.f32.partialorder %v703, 0.0
      %vm1547 = vcmp.ge.f32.partialorder %v706, 0.0
      %vm1548 = vcmp.ge.f32.partialorder %v708, 0.0
      %vm1549 = vcmp.ge.f32.partialorder %v711, 0.0
      %vm1550 = vcmp.ge.f32.partialorder %v713, 0.0
      %vm1551 = vcmp.ge.f32.partialorder %v716, 0.0
      %vm1552 = vcmp.ge.f32.partialorder %v718, 0.0
      %vm1553 = vcmp.ge.f32.partialorder %v721, 0.0
      %vm1554 = vcmp.ge.f32.partialorder %v723, 0.0
      %vm1555 = vcmp.ge.f32.partialorder %v726, 0.0
      %vm1556 = vcmp.ge.f32.partialorder %v728, 0.0
      %vm1557 = vcmp.ge.f32.partialorder %v731, 0.0
      %vm1558 = vcmp.ge.f32.partialorder %v733, 0.0
      %vm1559 = vcmp.ge.f32.partialorder %v736, 0.0
      %vm1560 = vcmp.ge.f32.partialorder %v738, 0.0
      %vm1561 = vcmp.ge.f32.partialorder %v741, 0.0
      %vm1562 = vcmp.ge.f32.partialorder %v743, 0.0
      %v1563 = vmul.f32 %v666, 0.2
      %v1564 = vmul.f32 %v668, 0.2
      %v1565 = vmul.f32 %v671, 0.2
      %v1566 = vmul.f32 %v673, 0.2
      %v1567 = vmul.f32 %v676, 0.2
      %v1568 = vmul.f32 %v678, 0.2
      %v1569 = vmul.f32 %v681, 0.2
      %v1570 = vmul.f32 %v683, 0.2
      %v1571 = vmul.f32 %v686, 0.2
      %v1572 = vmul.f32 %v688, 0.2
      %v1573 = vmul.f32 %v691, 0.2
      %v1574 = vmul.f32 %v693, 0.2
      %v1575 = vmul.f32 %v696, 0.2
      %v1576 = vmul.f32 %v698, 0.2
      %v1577 = vmul.f32 %v701, 0.2
      %v1578 = vmul.f32 %v703, 0.2
      %v1579 = vmul.f32 %v706, 0.2
      %v1580 = vmul.f32 %v708, 0.2
      %v1581 = vmul.f32 %v711, 0.2
      %v1582 = vmul.f32 %v713, 0.2
      %v1583 = vmul.f32 %v716, 0.2
      %v1584 = vmul.f32 %v718, 0.2
      %v1585 = vmul.f32 %v721, 0.2
      %v1586 = vmul.f32 %v723, 0.2
      %v1587 = vmul.f32 %v726, 0.2
      %v1588 = vmul.f32 %v728, 0.2
      %v1589 = vmul.f32 %v731, 0.2
      %v1590 = vmul.f32 %v733, 0.2
      %v1591 = vmul.f32 %v736, 0.2
      %v1592 = vmul.f32 %v738, 0.2
      %v1593 = vmul.f32 %v741, 0.2
      %v1594 = vmul.f32 %v743, 0.2
      %v1595 = vsel %vm1531, %v666, %v1563
      %v1596 = vsel %vm1532, %v668, %v1564
      %v1597 = vsel %vm1533, %v671, %v1565
      %v1598 = vsel %vm1534, %v673, %v1566
      %v1599 = vsel %vm1535, %v676, %v1567
      %v1600 = vsel %vm1536, %v678, %v1568
      %v1601 = vsel %vm1537, %v681, %v1569
      %v1602 = vsel %vm1538, %v683, %v1570
      %v1603 = vsel %vm1539, %v686, %v1571
      %v1604 = vsel %vm1540, %v688, %v1572
      %v1605 = vsel %vm1541, %v691, %v1573
      %v1606 = vsel %vm1542, %v693, %v1574
      %v1607 = vsel %vm1543, %v696, %v1575
      %v1608 = vsel %vm1544, %v698, %v1576
      %v1609 = vsel %vm1545, %v701, %v1577
      %v1610 = vsel %vm1546, %v703, %v1578
      %v1611 = vsel %vm1547, %v706, %v1579
      %v1612 = vsel %vm1548, %v708, %v1580
      %v1613 = vsel %vm1549, %v711, %v1581
      %v1614 = vsel %vm1550, %v713, %v1582
      %v1615 = vsel %vm1551, %v716, %v1583
      %v1616 = vsel %vm1552, %v718, %v1584
      %v1617 = vsel %vm1553, %v721, %v1585
      %v1618 = vsel %vm1554, %v723, %v1586
      %v1619 = vsel %vm1555, %v726, %v1587
      %v1620 = vsel %vm1556, %v728, %v1588
      %v1621 = vsel %vm1557, %v731, %v1589
      %v1622 = vsel %vm1558, %v733, %v1590
      %v1623 = vsel %vm1559, %v736, %v1591
      %v1624 = vsel %vm1560, %v738, %v1592
      %v1625 = vsel %vm1561, %v741, %v1593
      %v1626 = vsel %vm1562, %v743, %v1594
      %v1627 = vmul.f32 %v1595, %v1065
      %v1628 = vmul.f32 %v1596, %v1080
      %v1629 = vmul.f32 %v1597, %v1095
      %v1630 = vmul.f32 %v1598, %v1110
      %v1631 = vmul.f32 %v1599, %v1125
      %v1632 = vmul.f32 %v1600, %v1140
      %v1633 = vmul.f32 %v1601, %v1155
      %v1634 = vmul.f32 %v1602, %v1170
      %v1635 = vmul.f32 %v1603, %v1185
      %v1636 = vmul.f32 %v1604, %v1200
      %v1637 = vmul.f32 %v1605, %v1215
      %v1638 = vmul.f32 %v1606, %v1230
      %v1639 = vmul.f32 %v1607, %v1245
      %v1640 = vmul.f32 %v1608, %v1260
      %v1641 = vmul.f32 %v1609, %v1275
      %v1642 = vmul.f32 %v1610, %v1290
      %v1643 = vmul.f32 %v1611, %v1305
      %v1644 = vmul.f32 %v1612, %v1320
      %v1645 = vmul.f32 %v1613, %v1335
      %v1646 = vmul.f32 %v1614, %v1350
      %v1647 = vmul.f32 %v1615, %v1365
      %v1648 = vmul.f32 %v1616, %v1380
      %v1649 = vmul.f32 %v1617, %v1395
      %v1650 = vmul.f32 %v1618, %v1410
      %v1651 = vmul.f32 %v1619, %v1425
      %v1652 = vmul.f32 %v1620, %v1440
      %v1653 = vmul.f32 %v1621, %v1455
      %v1654 = vmul.f32 %v1622, %v1470
      %v1655 = vmul.f32 %v1623, %v1485
      %v1656 = vmul.f32 %v1624, %v1500
      %v1657 = vmul.f32 %v1625, %v1515
      %v1658 = vmul.f32 %v1626, %v1530
      %1659 = vst [vmem:[%s175] sm:$0xff] %v1627
      %1660 = vst [vmem:[%s175 + $0x8] sm:$0xff] %v1628
      %1661 = vst [vmem:[%s175 + $0x10] sm:$0xff] %v1629
      %1662 = vst [vmem:[%s175 + $0x18] sm:$0xff] %v1630
      %1663 = vst [vmem:[%s175 + $0x20] sm:$0xff] %v1631
      %1664 = vst [vmem:[%s175 + $0x28] sm:$0xff] %v1632
      %1665 = vst [vmem:[%s175 + $0x30] sm:$0xff] %v1633
      %1666 = vst [vmem:[%s175 + $0x38] sm:$0xff] %v1634
      %1667 = vst [vmem:[%s175 + $0x40] sm:$0xff] %v1635
      %1668 = vst [vmem:[%s175 + $0x48] sm:$0xff] %v1636
      %1669 = vst [vmem:[%s175 + $0x50] sm:$0xff] %v1637
      %1670 = vst [vmem:[%s175 + $0x58] sm:$0xff] %v1638
      %1671 = vst [vmem:[%s175 + $0x60] sm:$0xff] %v1639
      %1672 = vst [vmem:[%s175 + $0x68] sm:$0xff] %v1640
      %1673 = vst [vmem:[%s175 + $0x70] sm:$0xff] %v1641
      %1674 = vst [vmem:[%s175 + $0x78] sm:$0xff] %v1642
      %1675 = vst [vmem:[%s175 + $0x80] sm:$0xff] %v1643
      %1676 = vst [vmem:[%s175 + $0x88] sm:$0xff] %v1644
      %1677 = vst [vmem:[%s175 + $0x90] sm:$0xff] %v1645
      %1678 = vst [vmem:[%s175 + $0x98] sm:$0xff] %v1646
      %1679 = vst [vmem:[%s175 + $0xa0] sm:$0xff] %v1647
      %1680 = vst [vmem:[%s175 + $0xa8] sm:$0xff] %v1648
      %1681 = vst [vmem:[%s175 + $0xb0] sm:$0xff] %v1649
      %1682 = vst [vmem:[%s175 + $0xb8] sm:$0xff] %v1650
      %1683 = vst [vmem:[%s175 + $0xc0] sm:$0xff] %v1651
      %1684 = vst [vmem:[%s175 + $0xc8] sm:$0xff] %v1652
      %1685 = vst [vmem:[%s175 + $0xd0] sm:$0xff] %v1653
      %1686 = vst [vmem:[%s175 + $0xd8] sm:$0xff] %v1654
      %1687 = vst [vmem:[%s175 + $0xe0] sm:$0xff] %v1655
      %1688 = vst [vmem:[%s175 + $0xe8] sm:$0xff] %v1656
      %1689 = vst [vmem:[%s175 + $0xf0] sm:$0xff] %v1657
      %1690 = vst [vmem:[%s175 + $0xf8] sm:$0xff] %v1658
      %s1691 = smul.u32 32, %s14
      %p1692 = scmp.lt.s32.totalorder %s1691, 63
      %s1693 = scalar_select %p1692, %s1691, 63
      %s1694 = smul.addr %s1693, 8
      %s1695 = scalar_lea.vmem %s3, %s1694
      // Predicated region
      $region33: #{_lambda_.58} parent=31 // pred_check
        %p1696 = pneg %p100
      $region34: #{_lambda_.58} parent=31 // pred_check_branch
        %1698 = sbr.rel (%p1696) target = $region36
      $region35: #{_lambda_.58} parent=31 // pred_region
        %s1699 = smul.u32 32, %s14
      $region36: #{_lambda_.58} parent=31 // pred_fallthru
        _
    $region32: #{_lambda_.58} parent=5 // pred_fallthru
      _
    %p1700 = scmp.le.s32.totalorder 2, %s9
    // Predicated region
    $region37: #{_lambda_.58} parent=5 // pred_check
      %p1701 = pneg %p1700
    $region38: #{_lambda_.58} parent=5 // pred_check_branch
      %1703 = sbr.rel (%p1701) target = $region40
    $region39: #{_lambda_.58} parent=5 // pred_region
      %s1704 = ssub.s32 %s9, 2
      // Predicated region
      $region41: #{_lambda_.58} parent=39 // pred_check
        %p1705 = pneg %p106
      $region42: #{_lambda_.58} parent=39 // pred_check_branch
        %1707 = sbr.rel (%p1705) target = $region44
      $region43: #{_lambda_.58} parent=39 // pred_region
        %s1708 = smul.u32 32, %s15
        %p1709 = scmp.lt.s32.totalorder %s1708, 63
        %s1710 = scalar_select %p1709, %s1708, 63
        %s1711 = smul.addr %s1710, 8
        %s1712 = scalar_lea.vmem %s3, %s1711
      $region44: #{_lambda_.58} parent=39 // pred_fallthru
        _
    $region40: #{_lambda_.58} parent=5 // pred_fallthru
      _
  $region6: #{_lambda_.58} parent=0 // loop_footer
    %s13 = sadd.s32 1, %s9
  $region7: #{_lambda_.58} parent=0 // loop_footer_branch
    %8 = sbr.rel target = $region3
  $region8: #{_lambda_.58} parent=0 // loop_exit
    _

// kernel: _lambda_.60
$region0: #{_lambda_.60}
  #allocation0 [shape = 'u32[]', space=smem, size = 0x4, offset = 0x4, fixed_abs, tag = 'smem constant byte address 0x4 - core index']
  #allocation1 [shape = 'u32[72,128]{1,0:T(1,128)}', space=vmem, size = 0x9000, scoped, tag = 'internal scratch']
  %s0 = inlined_call_operand.vmem [shape: bf16[512,128], index: 0, kind: input, shape index: {}]
  %s1 = inlined_call_operand.vmem [shape: bf16[128,256], index: 1, kind: input, shape index: {}]
  %s2 = inlined_call_operand.vmem [shape: f32[1,256], index: 2, kind: input, shape index: {}]
  %s3 = inlined_call_operand.vmem [shape: f32[512,128], index: 3, kind: output, shape index: {}]
  %s4 = sld [smem:[#allocation0]]
  $region45: #{_lambda_.60} parent=0
    _
  %s6 = ssub.s32 1, %s4
  %s7 = scalar_select 0, %s6, %s4
  loop: start=0, step=1, limit=4
  $region2: #{_lambda_.60} parent=0 // loop_pre_header
    _
  $region3: #{_lambda_.60} parent=0 // loop_header
    %s9 = sphi 0, %s13
    %p10 = scmp.ge.s32.totalorder %s9, 4
    %s19 = sphi 0, %s21
    %s22 = sphi 0, %s19
    %s23 = sphi 0, %s22
    %s39 = sphi 0, %s23
    %s43 = sphi 0, %s43
    %s45 = sphi 0, %s43
    %s46 = sphi 0, %s45
    %s60 = sphi 0, %s46
    %s64 = sphi 0, %s64
    %s66 = sphi 0, %s64
    %s67 = sphi 0, %s66
    %s81 = sphi 0, %s67
    %s87 = sphi 0, %s89
    %s90 = sphi 0, %s87
    %s91 = sphi 0, %s90
    %s107 = sphi 0, %s91
  $region4: #{_lambda_.60} parent=0 // loop_header_branch
    %12 = sbr.rel (%p10) target = $region8
  $region5: #{_lambda_.60} parent=0 // loop_body
    %s14 = ssub.s32 %s9, 1
    %s15 = ssub.s32 %s9, 2
    %s16 = sadd.s32 %s9, 1
    %s17 = ssub.s32 %s9, %s16
    %p18 = scmp.eq.s32.totalorder %s17, 0
    %s20 = sadd.s32 %s19, 1
    %s21 = scalar_select %p18, %s19, %s20
    %p24 = pneg %p18
    %p25 = scmp.eq.s32.totalorder %s9, 1
    %p26 = por %p24, %p25
    %p27 = scmp.ne.s32.totalorder %s19, %s22
    %p28 = scmp.eq.s32.totalorder %s9, 0
    %p29 = por %p27, %p28
    %p30 = scmp.ne.s32.totalorder %s19, %s22
    %p31 = scmp.eq.s32.totalorder %s14, 1
    %p32 = por %p30, %p31
    %p33 = scmp.ne.s32.totalorder %s22, %s23
    %p34 = scmp.eq.s32.totalorder %s14, 0
    %p35 = por %p33, %p34
    %p36 = scmp.ne.s32.totalorder %s22, %s23
    %p37 = scmp.eq.s32.totalorder %s15, 1
    %p38 = por %p36, %p37
    %p40 = scmp.ne.s32.totalorder %s23, %s39
    %p41 = scmp.eq.s32.totalorder %s15, 0
    %p42 = por %p40, %p41
    %s44 = sadd.s32 %s43, 1
    %p47 = scmp.eq.s32.totalorder %s9, 1
    %p48 = scmp.ne.s32.totalorder %s43, %s45
    %p49 = scmp.eq.s32.totalorder %s9, 0
    %p50 = por %p48, %p49
    %p51 = scmp.ne.s32.totalorder %s43, %s45
    %p52 = scmp.eq.s32.totalorder %s14, 1
    %p53 = por %p51, %p52
    %p54 = scmp.ne.s32.totalorder %s45, %s46
    %p55 = scmp.eq.s32.totalorder %s14, 0
    %p56 = por %p54, %p55
    %p57 = scmp.ne.s32.totalorder %s45, %s46
    %p58 = scmp.eq.s32.totalorder %s15, 1
    %p59 = por %p57, %p58
    %p61 = scmp.ne.s32.totalorder %s46, %s60
    %p62 = scmp.eq.s32.totalorder %s15, 0
    %p63 = por %p61, %p62
    %s65 = sadd.s32 %s64, 1
    %p68 = scmp.eq.s32.totalorder %s9, 1
    %p69 = scmp.ne.s32.totalorder %s64, %s66
    %p70 = scmp.eq.s32.totalorder %s9, 0
    %p71 = por %p69, %p70
    %p72 = scmp.ne.s32.totalorder %s64, %s66
    %p73 = scmp.eq.s32.totalorder %s14, 1
    %p74 = por %p72, %p73
    %p75 = scmp.ne.s32.totalorder %s66, %s67
    %p76 = scmp.eq.s32.totalorder %s14, 0
    %p77 = por %p75, %p76
    %p78 = scmp.ne.s32.totalorder %s66, %s67
    %p79 = scmp.eq.s32.totalorder %s15, 1
    %p80 = por %p78, %p79
    %p82 = scmp.ne.s32.totalorder %s67, %s81
    %p83 = scmp.eq.s32.totalorder %s15, 0
    %p84 = por %p82, %p83
    %s85 = ssub.s32 %s9, %s16
    %p86 = scmp.eq.s32.totalorder %s85, 0
    %s88 = sadd.s32 %s87, 1
    %s89 = scalar_select %p86, %s87, %s88
    %p92 = pneg %p86
    %p93 = scmp.eq.s32.totalorder %s9, 1
    %p94 = por %p92, %p93
    %p95 = scmp.ne.s32.totalorder %s87, %s90
    %p96 = scmp.eq.s32.totalorder %s9, 0
    %p97 = por %p95, %p96
    %p98 = scmp.ne.s32.totalorder %s87, %s90
    %p99 = scmp.eq.s32.totalorder %s14, 1
    %p100 = por %p98, %p99
    %p101 = scmp.ne.s32.totalorder %s90, %s91
    %p102 = scmp.eq.s32.totalorder %s14, 0
    %p103 = por %p101, %p102
    %p104 = scmp.ne.s32.totalorder %s90, %s91
    %p105 = scmp.eq.s32.totalorder %s15, 1
    %p106 = por %p104, %p105
    %p108 = scmp.ne.s32.totalorder %s91, %s107
    %p109 = scmp.eq.s32.totalorder %s15, 0
    %p110 = por %p108, %p109
    %p111 = scmp.le.s32.totalorder 1, %s9
    %p112 = scmp.lt.s32.totalorder %s9, 3
    %p113 = pnand %p111, %p112
    %p114 = pneg %p113
    // Predicated region
    $region9: #{_lambda_.60} parent=5 // pred_check
      _
    $region10: #{_lambda_.60} parent=5 // pred_check_branch
      %116 = sbr.rel (%p113) target = $region12
    $region11: #{_lambda_.60} parent=5 // pred_region
      %s117 = ssub.s32 %s9, 1
      // Predicated region
      $region13: #{_lambda_.60} parent=11 // pred_check
        %p118 = pneg %p56
      $region14: #{_lambda_.60} parent=11 // pred_check_branch
        %120 = sbr.rel (%p118) target = $region16
      $region15: #{_lambda_.60} parent=11 // pred_region
        _
      $region16: #{_lambda_.60} parent=11 // pred_fallthru
        _
      // Predicated region
      $region17: #{_lambda_.60} parent=11 // pred_check
        %p121 = pneg %p77
      $region18: #{_lambda_.60} parent=11 // pred_check_branch
        %123 = sbr.rel (%p121) target = $region20
      $region19: #{_lambda_.60} parent=11 // pred_region
        _
      $region20: #{_lambda_.60} parent=11 // pred_fallthru
        _
    $region12: #{_lambda_.60} parent=5 // pred_fallthru
      _
    %p124 = scmp.lt.s32.totalorder %s9, 2
    // Predicated region
    $region21: #{_lambda_.60} parent=5 // pred_check
      %p125 = pneg %p124
    $region22: #{_lambda_.60} parent=5 // pred_check_branch
      %127 = sbr.rel (%p125) target = $region24
    $region23: #{_lambda_.60} parent=5 // pred_region
      // Predicated region
      $region25: #{_lambda_.60} parent=23 // pred_check
        %p128 = pneg %p29
      $region26: #{_lambda_.60} parent=23 // pred_check_branch
        %130 = sbr.rel (%p128) target = $region28
      $region27: #{_lambda_.60} parent=23 // pred_region
        %s131 = smul.u32 32, %s9
        %p132 = scmp.lt.s32.totalorder %s131, 63
        %s133 = scalar_select %p132, %s131, 63
        %s134 = smul.addr %s133, 4
        %s135 = scalar_lea.vmem %s0, %s134
        %s136 = smul.u32 32, %s9
      $region28: #{_lambda_.60} parent=23 // pred_fallthru
        _
    $region24: #{_lambda_.60} parent=5 // pred_fallthru
      _
    %p137 = scmp.le.s32.totalorder 1, %s9
    %p138 = scmp.lt.s32.totalorder %s9, 3
    %p139 = pnand %p137, %p138
    %p140 = pneg %p139
    // Predicated region
    $region29: #{_lambda_.60} parent=5 // pred_check
      _
    $region30: #{_lambda_.60} parent=5 // pred_check_branch
      %142 = sbr.rel (%p139) target = $region32
    $region31: #{_lambda_.60} parent=5 // pred_region
      %s143 = ssub.s32 %s9, 1
      %s144 = smul.u32 32, %s14
      %p145 = scmp.lt.s32.totalorder %s144, 63
      %s146 = scalar_select %p145, %s144, 63
      %s147 = smul.addr %s146, 4
      %s148 = scalar_lea.vmem %s0, %s147
      %p149 = pneg %p35
      %p150 = pneg %p32
      %p151 = pneg %p56
      %p152 = pneg %p53
      %p153 = pneg %p77
      %p154 = pneg %p74
      %p155 = pneg %p103
      %p156 = pneg %p100
      %s157 = smul.u32 32, %s14
      %p158 = scmp.lt.s32.totalorder %s157, 63
      %s159 = scalar_select %p158, %s157, 63
      %s160 = smul.addr %s159, 8
      %s161 = scalar_lea.vmem %s3, %s160
      %s162 = smul.u32 32, %s14
      %p163 = scmp.lt.s32.totalorder %s162, 63
      %s164 = scalar_select %p163, %s162, 63
      %s165 = smul.addr %s164, 4
      %s166 = scalar_lea.vmem %s0, %s165
      %s167 = smul.u32 32, %s14
      %s168 = smul.u32 32, %s14
      %p169 = scmp.lt.s32.totalorder %s168, 63
      %s170 = scalar_select %p169, %s168, 63
      %s171 = smul.addr %s170, 8
      %s172 = scalar_lea.vmem %s3, %s171
      %s173 = smul.u32 32, %s14
      %v174 = vld [vmem:[%s166] sm:$0xf]
      %v175 = vld [vmem:[%s166 + $0x4] sm:$0xf]
      %v176 = vld [vmem:[%s166 + $0x8] sm:$0xf]
      %v177 = vld [vmem:[%s166 + $0xc] sm:$0xf]
      %v178 = vld [vmem:[%s166 + $0x10] sm:$0xf]
      %v179 = vld [vmem:[%s166 + $0x14] sm:$0xf]
      %v180 = vld [vmem:[%s166 + $0x18] sm:$0xf]
      %v181 = vld [vmem:[%s166 + $0x1c] sm:$0xf]
      %v182 = vld [vmem:[%s166 + $0x20] sm:$0xf]
      %v183 = vld [vmem:[%s166 + $0x24] sm:$0xf]
      %v184 = vld [vmem:[%s166 + $0x28] sm:$0xf]
      %v185 = vld [vmem:[%s166 + $0x2c] sm:$0xf]
      %v186 = vld [vmem:[%s166 + $0x30] sm:$0xf]
      %v187 = vld [vmem:[%s166 + $0x34] sm:$0xf]
      %v188 = vld [vmem:[%s166 + $0x38] sm:$0xf]
      %v189 = vld [vmem:[%s166 + $0x3c] sm:$0xf]
      %v190 = vld [vmem:[%s166 + $0x40] sm:$0xf]
      %v191 = vld [vmem:[%s166 + $0x44] sm:$0xf]
      %v192 = vld [vmem:[%s166 + $0x48] sm:$0xf]
      %v193 = vld [vmem:[%s166 + $0x4c] sm:$0xf]
      %v194 = vld [vmem:[%s166 + $0x50] sm:$0xf]
      %v195 = vld [vmem:[%s166 + $0x54] sm:$0xf]
      %v196 = vld [vmem:[%s166 + $0x58] sm:$0xf]
      %v197 = vld [vmem:[%s166 + $0x5c] sm:$0xf]
      %v198 = vld [vmem:[%s166 + $0x60] sm:$0xf]
      %v199 = vld [vmem:[%s166 + $0x64] sm:$0xf]
      %v200 = vld [vmem:[%s166 + $0x68] sm:$0xf]
      %v201 = vld [vmem:[%s166 + $0x6c] sm:$0xf]
      %v202 = vld [vmem:[%s166 + $0x70] sm:$0xf]
      %v203 = vld [vmem:[%s166 + $0x74] sm:$0xf]
      %v204 = vld [vmem:[%s166 + $0x78] sm:$0xf]
      %v205 = vld [vmem:[%s166 + $0x7c] sm:$0xf]
      %v206 = vld [vmem:[%s1] sm:$0xff]
      %v207 = vld [vmem:[%s1 + $0x8] sm:$0xff]
      %v208 = vld [vmem:[%s1 + $0x10] sm:$0xff]
      %v209 = vld [vmem:[%s1 + $0x18] sm:$0xff]
      %v210 = vld [vmem:[%s1 + $0x20] sm:$0xff]
      %v211 = vld [vmem:[%s1 + $0x28] sm:$0xff]
      %v212 = vld [vmem:[%s1 + $0x30] sm:$0xff]
      %v213 = vld [vmem:[%s1 + $0x38] sm:$0xff]
      %v214 = vld [vmem:[%s1 + $0x40] sm:$0xff]
      %v215 = vld [vmem:[%s1 + $0x48] sm:$0xff]
      %v216 = vld [vmem:[%s1 + $0x50] sm:$0xff]
      %v217 = vld [vmem:[%s1 + $0x58] sm:$0xff]
      %v218 = vld [vmem:[%s1 + $0x60] sm:$0xff]
      %v219 = vld [vmem:[%s1 + $0x68] sm:$0xff]
      %v220 = vld [vmem:[%s1 + $0x70] sm:$0xff]
      %v221 = vld [vmem:[%s1 + $0x78] sm:$0xff]
      %v222 = vld [vmem:[%s2] sm:$0x3]
      %v224 = vperm.slane %v222, 0
      %v225 = vperm.slane %v222, 1
      %v260 = vunpack.c.l.b16 %v174
      %v261 = vunpack.c.l.b16 %v175
      %v262 = vunpack.c.l.b16 %v176
      %v263 = vunpack.c.l.b16 %v177
      %v264 = vunpack.c.l.b16 %v178
      %v265 = vunpack.c.l.b16 %v179
      %v266 = vunpack.c.l.b16 %v180
      %v267 = vunpack.c.l.b16 %v181
      %v268 = vunpack.c.l.b16 %v182
      %v269 = vunpack.c.l.b16 %v183
      %v270 = vunpack.c.l.b16 %v184
      %v271 = vunpack.c.l.b16 %v185
      %v272 = vunpack.c.l.b16 %v186
      %v273 = vunpack.c.l.b16 %v187
      %v274 = vunpack.c.l.b16 %v188
      %v275 = vunpack.c.l.b16 %v189
      %v276 = vunpack.c.l.b16 %v190
      %v277 = vunpack.c.l.b16 %v191
      %v278 = vunpack.c.l.b16 %v192
      %v279 = vunpack.c.l.b16 %v193
      %v280 = vunpack.c.l.b16 %v194
      %v281 = vunpack.c.l.b16 %v195
      %v282 = vunpack.c.l.b16 %v196
      %v283 = vunpack.c.l.b16 %v197
      %v284 = vunpack.c.l.b16 %v198
      %v285 = vunpack.c.l.b16 %v199
      %v286 = vunpack.c.l.b16 %v200
      %v287 = vunpack.c.l.b16 %v201
      %v288 = vunpack.c.l.b16 %v202
      %v289 = vunpack.c.l.b16 %v203
      %v290 = vunpack.c.l.b16 %v204
      %v291 = vunpack.c.l.b16 %v205
      %v292 = vpack.c.b16 %v261, %v260
      %v293 = vpack.c.b16 %v263, %v262
      %v294 = vpack.c.b16 %v265, %v264
      %v295 = vpack.c.b16 %v267, %v266
      %v296 = vpack.c.b16 %v269, %v268
      %v297 = vpack.c.b16 %v271, %v270
      %v298 = vpack.c.b16 %v273, %v272
      %v299 = vpack.c.b16 %v275, %v274
      %v300 = vpack.c.b16 %v277, %v276
      %v301 = vpack.c.b16 %v279, %v278
      %v302 = vpack.c.b16 %v281, %v280
      %v303 = vpack.c.b16 %v283, %v282
      %v304 = vpack.c.b16 %v285, %v284
      %v305 = vpack.c.b16 %v287, %v286
      %v306 = vpack.c.b16 %v289, %v288
      %v307 = vpack.c.b16 %v291, %v290
      %v340 = vunpack.c.l.b16 %v206
      %v341 = vunpack.c.h.b16 %v206
      %v342 = vunpack.c.l.b16 %v207
      %v343 = vunpack.c.h.b16 %v207
      %v344 = vunpack.c.l.b16 %v208
      %v345 = vunpack.c.h.b16 %v208
      %v346 = vunpack.c.l.b16 %v209
      %v347 = vunpack.c.h.b16 %v209
      %v348 = vunpack.c.l.b16 %v210
      %v349 = vunpack.c.h.b16 %v210
      %v350 = vunpack.c.l.b16 %v211
      %v351 = vunpack.c.h.b16 %v211
      %v352 = vunpack.c.l.b16 %v212
      %v353 = vunpack.c.h.b16 %v212
      %v354 = vunpack.c.l.b16 %v213
      %v355 = vunpack.c.h.b16 %v213
      %v356 = vunpack.c.l.b16 %v214
      %v357 = vunpack.c.h.b16 %v214
      %v358 = vunpack.c.l.b16 %v215
      %v359 = vunpack.c.h.b16 %v215
      %v360 = vunpack.c.l.b16 %v216
      %v361 = vunpack.c.h.b16 %v216
      %v362 = vunpack.c.l.b16 %v217
      %v363 = vunpack.c.h.b16 %v217
      %v364 = vunpack.c.l.b16 %v218
      %v365 = vunpack.c.h.b16 %v218
      %v366 = vunpack.c.l.b16 %v219
      %v367 = vunpack.c.h.b16 %v219
      %v368 = vunpack.c.l.b16 %v220
      %v369 = vunpack.c.h.b16 %v220
      %v370 = vunpack.c.l.b16 %v221
      %v371 = vunpack.c.h.b16 %v221
      %v372 = vpack.c.b16 %v342, %v340
      %v373 = vpack.c.b16 %v343, %v341
      %v374 = vpack.c.b16 %v346, %v344
      %v375 = vpack.c.b16 %v347, %v345
      %v376 = vpack.c.b16 %v350, %v348
      %v377 = vpack.c.b16 %v351, %v349
      %v378 = vpack.c.b16 %v354, %v352
      %v379 = vpack.c.b16 %v355, %v353
      %v380 = vpack.c.b16 %v358, %v356
      %v381 = vpack.c.b16 %v359, %v357
      %v382 = vpack.c.b16 %v362, %v360
      %v383 = vpack.c.b16 %v363, %v361
      %v384 = vpack.c.b16 %v366, %v364
      %v385 = vpack.c.b16 %v367, %v365
      %v386 = vpack.c.b16 %v370, %v368
      %v387 = vpack.c.b16 %v371, %v369
      %404 = vmatpush.bf16.msra.mxu0 %v386
      %405 = vmatpush.bf16.msra.mxu0 %v384
      %406 = vmatpush.bf16.msra.mxu0 %v382
      %407 = vmatpush.bf16.msra.mxu0 %v380
      %408 = vmatpush.bf16.msra.mxu0 %v378
      %409 = vmatpush.bf16.msra.mxu0 %v376
      %410 = vmatpush.bf16.msra.mxu0 %v374
      %411 = vmatpush.bf16.msra.mxu0 %v372
      %412 = vmatmul.bf16.gmra.mxu0 %v292
      %v413 = vpop.f32.mrf.mxu0
      %v414 = vadd.f32 %v224, %v413
      %v415 = vpop.f32.mrf.mxu0
      %v416 = vadd.f32 %v224, %v415
      %417 = vmatmul.bf16.gmra.mxu0 %v293
      %v418 = vpop.f32.mrf.mxu0
      %v419 = vadd.f32 %v224, %v418
      %v420 = vpop.f32.mrf.mxu0
      %v421 = vadd.f32 %v224, %v420
      %422 = vmatmul.bf16.gmra.mxu0 %v294
      %v423 = vpop.f32.mrf.mxu0
      %v424 = vadd.f32 %v224, %v423
      %v425 = vpop.f32.mrf.mxu0
      %v426 = vadd.f32 %v224, %v425
      %427 = vmatmul.bf16.gmra.mxu0 %v295
      %v428 = vpop.f32.mrf.mxu0
      %v429 = vadd.f32 %v224, %v428
      %v430 = vpop.f32.mrf.mxu0
      %v431 = vadd.f32 %v224, %v430
      %432 = vmatmul.bf16.gmra.mxu0 %v296
      %v433 = vpop.f32.mrf.mxu0
      %v434 = vadd.f32 %v224, %v433
      %v435 = vpop.f32.mrf.mxu0
      %v436 = vadd.f32 %v224, %v435
      %437 = vmatmul.bf16.gmra.mxu0 %v297
      %v438 = vpop.f32.mrf.mxu0
      %v439 = vadd.f32 %v224, %v438
      %v440 = vpop.f32.mrf.mxu0
      %v441 = vadd.f32 %v224, %v440
      %442 = vmatmul.bf16.gmra.mxu0 %v298
      %v443 = vpop.f32.mrf.mxu0
      %v444 = vadd.f32 %v224, %v443
      %v445 = vpop.f32.mrf.mxu0
      %v446 = vadd.f32 %v224, %v445
      %447 = vmatmul.bf16.gmra.mxu0 %v299
      %v448 = vpop.f32.mrf.mxu0
      %v449 = vadd.f32 %v224, %v448
      %v450 = vpop.f32.mrf.mxu0
      %v451 = vadd.f32 %v224, %v450
      %452 = vmatmul.bf16.gmra.mxu0 %v300
      %v453 = vpop.f32.mrf.mxu0
      %v454 = vadd.f32 %v224, %v453
      %v455 = vpop.f32.mrf.mxu0
      %v456 = vadd.f32 %v224, %v455
      %457 = vmatmul.bf16.gmra.mxu0 %v301
      %v458 = vpop.f32.mrf.mxu0
      %v459 = vadd.f32 %v224, %v458
      %v460 = vpop.f32.mrf.mxu0
      %v461 = vadd.f32 %v224, %v460
      %462 = vmatmul.bf16.gmra.mxu0 %v302
      %v463 = vpop.f32.mrf.mxu0
      %v464 = vadd.f32 %v224, %v463
      %v465 = vpop.f32.mrf.mxu0
      %v466 = vadd.f32 %v224, %v465
      %467 = vmatmul.bf16.gmra.mxu0 %v303
      %v468 = vpop.f32.mrf.mxu0
      %v469 = vadd.f32 %v224, %v468
      %v470 = vpop.f32.mrf.mxu0
      %v471 = vadd.f32 %v224, %v470
      %472 = vmatmul.bf16.gmra.mxu0 %v304
      %v473 = vpop.f32.mrf.mxu0
      %v474 = vadd.f32 %v224, %v473
      %v475 = vpop.f32.mrf.mxu0
      %v476 = vadd.f32 %v224, %v475
      %477 = vmatmul.bf16.gmra.mxu0 %v305
      %v478 = vpop.f32.mrf.mxu0
      %v479 = vadd.f32 %v224, %v478
      %v480 = vpop.f32.mrf.mxu0
      %v481 = vadd.f32 %v224, %v480
      %482 = vmatmul.bf16.gmra.mxu0 %v306
      %v483 = vpop.f32.mrf.mxu0
      %v484 = vadd.f32 %v224, %v483
      %v485 = vpop.f32.mrf.mxu0
      %v486 = vadd.f32 %v224, %v485
      %487 = vmatmul.bf16.gmra.mxu0 %v307
      %v488 = vpop.f32.mrf.mxu0
      %v489 = vadd.f32 %v224, %v488
      %v490 = vpop.f32.mrf.mxu0
      %v491 = vadd.f32 %v224, %v490
      %492 = vdwg.mxu0
      %493 = vmatpush.bf16.msra.mxu0 %v387
      %494 = vmatpush.bf16.msra.mxu0 %v385
      %495 = vmatpush.bf16.msra.mxu0 %v383
      %496 = vmatpush.bf16.msra.mxu0 %v381
      %497 = vmatpush.bf16.msra.mxu0 %v379
      %498 = vmatpush.bf16.msra.mxu0 %v377
      %499 = vmatpush.bf16.msra.mxu0 %v375
      %500 = vmatpush.bf16.msra.mxu0 %v373
      %501 = vmatmul.bf16.gmra.mxu0 %v292
      %v502 = vpop.f32.mrf.mxu0
      %v503 = vadd.f32 %v225, %v502
      %v504 = vpop.f32.mrf.mxu0
      %v505 = vadd.f32 %v225, %v504
      %506 = vmatmul.bf16.gmra.mxu0 %v293
      %v507 = vpop.f32.mrf.mxu0
      %v508 = vadd.f32 %v225, %v507
      %v509 = vpop.f32.mrf.mxu0
      %v510 = vadd.f32 %v225, %v509
      %511 = vmatmul.bf16.gmra.mxu0 %v294
      %v512 = vpop.f32.mrf.mxu0
      %v513 = vadd.f32 %v225, %v512
      %v514 = vpop.f32.mrf.mxu0
      %v515 = vadd.f32 %v225, %v514
      %516 = vmatmul.bf16.gmra.mxu0 %v295
      %v517 = vpop.f32.mrf.mxu0
      %v518 = vadd.f32 %v225, %v517
      %v519 = vpop.f32.mrf.mxu0
      %v520 = vadd.f32 %v225, %v519
      %521 = vmatmul.bf16.gmra.mxu0 %v296
      %v522 = vpop.f32.mrf.mxu0
      %v523 = vadd.f32 %v225, %v522
      %v524 = vpop.f32.mrf.mxu0
      %v525 = vadd.f32 %v225, %v524
      %526 = vmatmul.bf16.gmra.mxu0 %v297
      %v527 = vpop.f32.mrf.mxu0
      %v528 = vadd.f32 %v225, %v527
      %v529 = vpop.f32.mrf.mxu0
      %v530 = vadd.f32 %v225, %v529
      %531 = vmatmul.bf16.gmra.mxu0 %v298
      %v532 = vpop.f32.mrf.mxu0
      %v533 = vadd.f32 %v225, %v532
      %v534 = vpop.f32.mrf.mxu0
      %v535 = vadd.f32 %v225, %v534
      %536 = vmatmul.bf16.gmra.mxu0 %v299
      %v537 = vpop.f32.mrf.mxu0
      %v538 = vadd.f32 %v225, %v537
      %v539 = vpop.f32.mrf.mxu0
      %v540 = vadd.f32 %v225, %v539
      %541 = vmatmul.bf16.gmra.mxu0 %v300
      %v542 = vpop.f32.mrf.mxu0
      %v543 = vadd.f32 %v225, %v542
      %v544 = vpop.f32.mrf.mxu0
      %v545 = vadd.f32 %v225, %v544
      %546 = vmatmul.bf16.gmra.mxu0 %v301
      %v547 = vpop.f32.mrf.mxu0
      %v548 = vadd.f32 %v225, %v547
      %v549 = vpop.f32.mrf.mxu0
      %v550 = vadd.f32 %v225, %v549
      %551 = vmatmul.bf16.gmra.mxu0 %v302
      %v552 = vpop.f32.mrf.mxu0
      %v553 = vadd.f32 %v225, %v552
      %v554 = vpop.f32.mrf.mxu0
      %v555 = vadd.f32 %v225, %v554
      %556 = vmatmul.bf16.gmra.mxu0 %v303
      %v557 = vpop.f32.mrf.mxu0
      %v558 = vadd.f32 %v225, %v557
      %v559 = vpop.f32.mrf.mxu0
      %v560 = vadd.f32 %v225, %v559
      %561 = vmatmul.bf16.gmra.mxu0 %v304
      %v562 = vpop.f32.mrf.mxu0
      %v563 = vadd.f32 %v225, %v562
      %v564 = vpop.f32.mrf.mxu0
      %v565 = vadd.f32 %v225, %v564
      %566 = vmatmul.bf16.gmra.mxu0 %v305
      %v567 = vpop.f32.mrf.mxu0
      %v568 = vadd.f32 %v225, %v567
      %v569 = vpop.f32.mrf.mxu0
      %v570 = vadd.f32 %v225, %v569
      %571 = vmatmul.bf16.gmra.mxu0 %v306
      %v572 = vpop.f32.mrf.mxu0
      %v573 = vadd.f32 %v225, %v572
      %v574 = vpop.f32.mrf.mxu0
      %v575 = vadd.f32 %v225, %v574
      %576 = vmatmul.bf16.gmra.mxu0 %v307
      %v577 = vpop.f32.mrf.mxu0
      %v578 = vadd.f32 %v225, %v577
      %v579 = vpop.f32.mrf.mxu0
      %v580 = vadd.f32 %v225, %v579
      %581 = vdwg.mxu0
      %v582 = vxor.u32 %v503, 2147483648
      %v583 = vxor.u32 %v505, 2147483648
      %v584 = vxor.u32 %v508, 2147483648
      %v585 = vxor.u32 %v510, 2147483648
      %v586 = vxor.u32 %v513, 2147483648
      %v587 = vxor.u32 %v515, 2147483648
      %v588 = vxor.u32 %v518, 2147483648
      %v589 = vxor.u32 %v520, 2147483648
      %v590 = vxor.u32 %v523, 2147483648
      %v591 = vxor.u32 %v525, 2147483648
      %v592 = vxor.u32 %v528, 2147483648
      %v593 = vxor.u32 %v530, 2147483648
      %v594 = vxor.u32 %v533, 2147483648
      %v595 = vxor.u32 %v535, 2147483648
      %v596 = vxor.u32 %v538, 2147483648
      %v597 = vxor.u32 %v540, 2147483648
      %v598 = vxor.u32 %v543, 2147483648
      %v599 = vxor.u32 %v545, 2147483648
      %v600 = vxor.u32 %v548, 2147483648
      %v601 = vxor.u32 %v550, 2147483648
      %v602 = vxor.u32 %v553, 2147483648
      %v603 = vxor.u32 %v555, 2147483648
      %v604 = vxor.u32 %v558, 2147483648
      %v605 = vxor.u32 %v560, 2147483648
      %v606 = vxor.u32 %v563, 2147483648
      %v607 = vxor.u32 %v565, 2147483648
      %v608 = vxor.u32 %v568, 2147483648
      %v609 = vxor.u32 %v570, 2147483648
      %v610 = vxor.u32 %v573, 2147483648
      %v611 = vxor.u32 %v575, 2147483648
      %v612 = vxor.u32 %v578, 2147483648
      %v613 = vxor.u32 %v580, 2147483648
      %v614 = vmul.f32 %v582, 1.442695
      %v615 = vpow.pop %v614
      %v616 = vmul.f32 %v583, 1.442695
      %v617 = vpow.pop %v616
      %v618 = vmul.f32 %v584, 1.442695
      %v619 = vpow.pop %v618
      %v620 = vmul.f32 %v585, 1.442695
      %v621 = vpow.pop %v620
      %v622 = vmul.f32 %v586, 1.442695
      %v623 = vpow.pop %v622
      %v624 = vmul.f32 %v587, 1.442695
      %v625 = vpow.pop %v624
      %v626 = vmul.f32 %v588, 1.442695
      %v627 = vpow.pop %v626
      %v628 = vmul.f32 %v589, 1.442695
      %v629 = vpow.pop %v628
      %v630 = vmul.f32 %v590, 1.442695
      %v631 = vpow.pop %v630
      %v632 = vmul.f32 %v591, 1.442695
      %v633 = vpow.pop %v632
      %v634 = vmul.f32 %v592, 1.442695
      %v635 = vpow.pop %v634
      %v636 = vmul.f32 %v593, 1.442695
      %v637 = vpow.pop %v636
      %v638 = vmul.f32 %v594, 1.442695
      %v639 = vpow.pop %v638
      %v640 = vmul.f32 %v595, 1.442695
      %v641 = vpow.pop %v640
      %v642 = vmul.f32 %v596, 1.442695
      %v643 = vpow.pop %v642
      %v644 = vmul.f32 %v597, 1.442695
      %v645 = vpow.pop %v644
      %v646 = vmul.f32 %v598, 1.442695
      %v647 = vpow.pop %v646
      %v648 = vmul.f32 %v599, 1.442695
      %v649 = vpow.pop %v648
      %v650 = vmul.f32 %v600, 1.442695
      %v651 = vpow.pop %v650
      %v652 = vmul.f32 %v601, 1.442695
      %v653 = vpow.pop %v652
      %v654 = vmul.f32 %v602, 1.442695
      %v655 = vpow.pop %v654
      %v656 = vmul.f32 %v603, 1.442695
      %v657 = vpow.pop %v656
      %v658 = vmul.f32 %v604, 1.442695
      %v659 = vpow.pop %v658
      %v660 = vmul.f32 %v605, 1.442695
      %v661 = vpow.pop %v660
      %v662 = vmul.f32 %v606, 1.442695
      %v663 = vpow.pop %v662
      %v664 = vmul.f32 %v607, 1.442695
      %v665 = vpow.pop %v664
      %v666 = vmul.f32 %v608, 1.442695
      %v667 = vpow.pop %v666
      %v668 = vmul.f32 %v609, 1.442695
      %v669 = vpow.pop %v668
      %v670 = vmul.f32 %v610, 1.442695
      %v671 = vpow.pop %v670
      %v672 = vmul.f32 %v611, 1.442695
      %v673 = vpow.pop %v672
      %v674 = vmul.f32 %v612, 1.442695
      %v675 = vpow.pop %v674
      %v676 = vmul.f32 %v613, 1.442695
      %v677 = vpow.pop %v676
      %v678 = vadd.f32 %v615, 1.0
      %v679 = vadd.f32 %v617, 1.0
      %v680 = vadd.f32 %v619, 1.0
      %v681 = vadd.f32 %v621, 1.0
      %v682 = vadd.f32 %v623, 1.0
      %v683 = vadd.f32 %v625, 1.0
      %v684 = vadd.f32 %v627, 1.0
      %v685 = vadd.f32 %v629, 1.0
      %v686 = vadd.f32 %v631, 1.0
      %v687 = vadd.f32 %v633, 1.0
      %v688 = vadd.f32 %v635, 1.0
      %v689 = vadd.f32 %v637, 1.0
      %v690 = vadd.f32 %v639, 1.0
      %v691 = vadd.f32 %v641, 1.0
      %v692 = vadd.f32 %v643, 1.0
      %v693 = vadd.f32 %v645, 1.0
      %v694 = vadd.f32 %v647, 1.0
      %v695 = vadd.f32 %v649, 1.0
      %v696 = vadd.f32 %v651, 1.0
      %v697 = vadd.f32 %v653, 1.0
      %v698 = vadd.f32 %v655, 1.0
      %v699 = vadd.f32 %v657, 1.0
      %v700 = vadd.f32 %v659, 1.0
      %v701 = vadd.f32 %v661, 1.0
      %v702 = vadd.f32 %v663, 1.0
      %v703 = vadd.f32 %v665, 1.0
      %v704 = vadd.f32 %v667, 1.0
      %v705 = vadd.f32 %v669, 1.0
      %v706 = vadd.f32 %v671, 1.0
      %v707 = vadd.f32 %v673, 1.0
      %v708 = vadd.f32 %v675, 1.0
      %v709 = vadd.f32 %v677, 1.0
      %v710 = vrcp.pop %v678
      %v711 = vmul.f32 %v678, %v710
      %v712 = vsub.f32 1.0, %v711
      %v713 = vmul.f32 %v710, %v712
      %v714 = vadd.f32 %v710, %v713
      %vm715 = vweird.f32 %v678
      %vm716 = vweird.f32 %v710
      %vm717 = vmor %vm715, %vm716
      %v718 = vsel %vm717, %v710, %v714
      %v719 = vand.u32 2147483647, %v678
      %vm720 = vcmp.eq.f32.partialorder %v719, 8.507059e+37
      %v721 = vand.u32 %v678, 2147483648
      %v722 = vor.u32 1.1754944e-38, %v721
      %v723 = vsel %vm720, %v722, %v718
      %v724 = vmul.f32 1.0, %v723
      %v725 = vrcp.pop %v679
      %v726 = vmul.f32 %v679, %v725
      %v727 = vsub.f32 1.0, %v726
      %v728 = vmul.f32 %v725, %v727
      %v729 = vadd.f32 %v725, %v728
      %vm730 = vweird.f32 %v679
      %vm731 = vweird.f32 %v725
      %vm732 = vmor %vm730, %vm731
      %v733 = vsel %vm732, %v725, %v729
      %v734 = vand.u32 2147483647, %v679
      %vm735 = vcmp.eq.f32.partialorder %v734, 8.507059e+37
      %v736 = vand.u32 %v679, 2147483648
      %v737 = vor.u32 1.1754944e-38, %v736
      %v738 = vsel %vm735, %v737, %v733
      %v739 = vmul.f32 1.0, %v738
      %v740 = vrcp.pop %v680
      %v741 = vmul.f32 %v680, %v740
      %v742 = vsub.f32 1.0, %v741
      %v743 = vmul.f32 %v740, %v742
      %v744 = vadd.f32 %v740, %v743
      %vm745 = vweird.f32 %v680
      %vm746 = vweird.f32 %v740
      %vm747 = vmor %vm745, %vm746
      %v748 = vsel %vm747, %v740, %v744
      %v749 = vand.u32 2147483647, %v680
      %vm750 = vcmp.eq.f32.partialorder %v749, 8.507059e+37
      %v751 = vand.u32 %v680, 2147483648
      %v752 = vor.u32 1.1754944e-38, %v751
      %v753 = vsel %vm750, %v752, %v748
      %v754 = vmul.f32 1.0, %v753
      %v755 = vrcp.pop %v681
      %v756 = vmul.f32 %v681, %v755
      %v757 = vsub.f32 1.0, %v756
      %v758 = vmul.f32 %v755, %v757
      %v759 = vadd.f32 %v755, %v758
      %vm760 = vweird.f32 %v681
      %vm761 = vweird.f32 %v755
      %vm762 = vmor %vm760, %vm761
      %v763 = vsel %vm762, %v755, %v759
      %v764 = vand.u32 2147483647, %v681
      %vm765 = vcmp.eq.f32.partialorder %v764, 8.507059e+37
      %v766 = vand.u32 %v681, 2147483648
      %v767 = vor.u32 1.1754944e-38, %v766
      %v768 = vsel %vm765, %v767, %v763
      %v769 = vmul.f32 1.0, %v768
      %v770 = vrcp.pop %v682
      %v771 = vmul.f32 %v682, %v770
      %v772 = vsub.f32 1.0, %v771
      %v773 = vmul.f32 %v770, %v772
      %v774 = vadd.f32 %v770, %v773
      %vm775 = vweird.f32 %v682
      %vm776 = vweird.f32 %v770
      %vm777 = vmor %vm775, %vm776
      %v778 = vsel %vm777, %v770, %v774
      %v779 = vand.u32 2147483647, %v682
      %vm780 = vcmp.eq.f32.partialorder %v779, 8.507059e+37
      %v781 = vand.u32 %v682, 2147483648
      %v782 = vor.u32 1.1754944e-38, %v781
      %v783 = vsel %vm780, %v782, %v778
      %v784 = vmul.f32 1.0, %v783
      %v785 = vrcp.pop %v683
      %v786 = vmul.f32 %v683, %v785
      %v787 = vsub.f32 1.0, %v786
      %v788 = vmul.f32 %v785, %v787
      %v789 = vadd.f32 %v785, %v788
      %vm790 = vweird.f32 %v683
      %vm791 = vweird.f32 %v785
      %vm792 = vmor %vm790, %vm791
      %v793 = vsel %vm792, %v785, %v789
      %v794 = vand.u32 2147483647, %v683
      %vm795 = vcmp.eq.f32.partialorder %v794, 8.507059e+37
      %v796 = vand.u32 %v683, 2147483648
      %v797 = vor.u32 1.1754944e-38, %v796
      %v798 = vsel %vm795, %v797, %v793
      %v799 = vmul.f32 1.0, %v798
      %v800 = vrcp.pop %v684
      %v801 = vmul.f32 %v684, %v800
      %v802 = vsub.f32 1.0, %v801
      %v803 = vmul.f32 %v800, %v802
      %v804 = vadd.f32 %v800, %v803
      %vm805 = vweird.f32 %v684
      %vm806 = vweird.f32 %v800
      %vm807 = vmor %vm805, %vm806
      %v808 = vsel %vm807, %v800, %v804
      %v809 = vand.u32 2147483647, %v684
      %vm810 = vcmp.eq.f32.partialorder %v809, 8.507059e+37
      %v811 = vand.u32 %v684, 2147483648
      %v812 = vor.u32 1.1754944e-38, %v811
      %v813 = vsel %vm810, %v812, %v808
      %v814 = vmul.f32 1.0, %v813
      %v815 = vrcp.pop %v685
      %v816 = vmul.f32 %v685, %v815
      %v817 = vsub.f32 1.0, %v816
      %v818 = vmul.f32 %v815, %v817
      %v819 = vadd.f32 %v815, %v818
      %vm820 = vweird.f32 %v685
      %vm821 = vweird.f32 %v815
      %vm822 = vmor %vm820, %vm821
      %v823 = vsel %vm822, %v815, %v819
      %v824 = vand.u32 2147483647, %v685
      %vm825 = vcmp.eq.f32.partialorder %v824, 8.507059e+37
      %v826 = vand.u32 %v685, 2147483648
      %v827 = vor.u32 1.1754944e-38, %v826
      %v828 = vsel %vm825, %v827, %v823
      %v829 = vmul.f32 1.0, %v828
      %v830 = vrcp.pop %v686
      %v831 = vmul.f32 %v686, %v830
      %v832 = vsub.f32 1.0, %v831
      %v833 = vmul.f32 %v830, %v832
      %v834 = vadd.f32 %v830, %v833
      %vm835 = vweird.f32 %v686
      %vm836 = vweird.f32 %v830
      %vm837 = vmor %vm835, %vm836
      %v838 = vsel %vm837, %v830, %v834
      %v839 = vand.u32 2147483647, %v686
      %vm840 = vcmp.eq.f32.partialorder %v839, 8.507059e+37
      %v841 = vand.u32 %v686, 2147483648
      %v842 = vor.u32 1.1754944e-38, %v841
      %v843 = vsel %vm840, %v842, %v838
      %v844 = vmul.f32 1.0, %v843
      %v845 = vrcp.pop %v687
      %v846 = vmul.f32 %v687, %v845
      %v847 = vsub.f32 1.0, %v846
      %v848 = vmul.f32 %v845, %v847
      %v849 = vadd.f32 %v845, %v848
      %vm850 = vweird.f32 %v687
      %vm851 = vweird.f32 %v845
      %vm852 = vmor %vm850, %vm851
      %v853 = vsel %vm852, %v845, %v849
      %v854 = vand.u32 2147483647, %v687
      %vm855 = vcmp.eq.f32.partialorder %v854, 8.507059e+37
      %v856 = vand.u32 %v687, 2147483648
      %v857 = vor.u32 1.1754944e-38, %v856
      %v858 = vsel %vm855, %v857, %v853
      %v859 = vmul.f32 1.0, %v858
      %v860 = vrcp.pop %v688
      %v861 = vmul.f32 %v688, %v860
      %v862 = vsub.f32 1.0, %v861
      %v863 = vmul.f32 %v860, %v862
      %v864 = vadd.f32 %v860, %v863
      %vm865 = vweird.f32 %v688
      %vm866 = vweird.f32 %v860
      %vm867 = vmor %vm865, %vm866
      %v868 = vsel %vm867, %v860, %v864
      %v869 = vand.u32 2147483647, %v688
      %vm870 = vcmp.eq.f32.partialorder %v869, 8.507059e+37
      %v871 = vand.u32 %v688, 2147483648
      %v872 = vor.u32 1.1754944e-38, %v871
      %v873 = vsel %vm870, %v872, %v868
      %v874 = vmul.f32 1.0, %v873
      %v875 = vrcp.pop %v689
      %v876 = vmul.f32 %v689, %v875
      %v877 = vsub.f32 1.0, %v876
      %v878 = vmul.f32 %v875, %v877
      %v879 = vadd.f32 %v875, %v878
      %vm880 = vweird.f32 %v689
      %vm881 = vweird.f32 %v875
      %vm882 = vmor %vm880, %vm881
      %v883 = vsel %vm882, %v875, %v879
      %v884 = vand.u32 2147483647, %v689
      %vm885 = vcmp.eq.f32.partialorder %v884, 8.507059e+37
      %v886 = vand.u32 %v689, 2147483648
      %v887 = vor.u32 1.1754944e-38, %v886
      %v888 = vsel %vm885, %v887, %v883
      %v889 = vmul.f32 1.0, %v888
      %v890 = vrcp.pop %v690
      %v891 = vmul.f32 %v690, %v890
      %v892 = vsub.f32 1.0, %v891
      %v893 = vmul.f32 %v890, %v892
      %v894 = vadd.f32 %v890, %v893
      %vm895 = vweird.f32 %v690
      %vm896 = vweird.f32 %v890
      %vm897 = vmor %vm895, %vm896
      %v898 = vsel %vm897, %v890, %v894
      %v899 = vand.u32 2147483647, %v690
      %vm900 = vcmp.eq.f32.partialorder %v899, 8.507059e+37
      %v901 = vand.u32 %v690, 2147483648
      %v902 = vor.u32 1.1754944e-38, %v901
      %v903 = vsel %vm900, %v902, %v898
      %v904 = vmul.f32 1.0, %v903
      %v905 = vrcp.pop %v691
      %v906 = vmul.f32 %v691, %v905
      %v907 = vsub.f32 1.0, %v906
      %v908 = vmul.f32 %v905, %v907
      %v909 = vadd.f32 %v905, %v908
      %vm910 = vweird.f32 %v691
      %vm911 = vweird.f32 %v905
      %vm912 = vmor %vm910, %vm911
      %v913 = vsel %vm912, %v905, %v909
      %v914 = vand.u32 2147483647, %v691
      %vm915 = vcmp.eq.f32.partialorder %v914, 8.507059e+37
      %v916 = vand.u32 %v691, 2147483648
      %v917 = vor.u32 1.1754944e-38, %v916
      %v918 = vsel %vm915, %v917, %v913
      %v919 = vmul.f32 1.0, %v918
      %v920 = vrcp.pop %v692
      %v921 = vmul.f32 %v692, %v920
      %v922 = vsub.f32 1.0, %v921
      %v923 = vmul.f32 %v920, %v922
      %v924 = vadd.f32 %v920, %v923
      %vm925 = vweird.f32 %v692
      %vm926 = vweird.f32 %v920
      %vm927 = vmor %vm925, %vm926
      %v928 = vsel %vm927, %v920, %v924
      %v929 = vand.u32 2147483647, %v692
      %vm930 = vcmp.eq.f32.partialorder %v929, 8.507059e+37
      %v931 = vand.u32 %v692, 2147483648
      %v932 = vor.u32 1.1754944e-38, %v931
      %v933 = vsel %vm930, %v932, %v928
      %v934 = vmul.f32 1.0, %v933
      %v935 = vrcp.pop %v693
      %v936 = vmul.f32 %v693, %v935
      %v937 = vsub.f32 1.0, %v936
      %v938 = vmul.f32 %v935, %v937
      %v939 = vadd.f32 %v935, %v938
      %vm940 = vweird.f32 %v693
      %vm941 = vweird.f32 %v935
      %vm942 = vmor %vm940, %vm941
      %v943 = vsel %vm942, %v935, %v939
      %v944 = vand.u32 2147483647, %v693
      %vm945 = vcmp.eq.f32.partialorder %v944, 8.507059e+37
      %v946 = vand.u32 %v693, 2147483648
      %v947 = vor.u32 1.1754944e-38, %v946
      %v948 = vsel %vm945, %v947, %v943
      %v949 = vmul.f32 1.0, %v948
      %v950 = vrcp.pop %v694
      %v951 = vmul.f32 %v694, %v950
      %v952 = vsub.f32 1.0, %v951
      %v953 = vmul.f32 %v950, %v952
      %v954 = vadd.f32 %v950, %v953
      %vm955 = vweird.f32 %v694
      %vm956 = vweird.f32 %v950
      %vm957 = vmor %vm955, %vm956
      %v958 = vsel %vm957, %v950, %v954
      %v959 = vand.u32 2147483647, %v694
      %vm960 = vcmp.eq.f32.partialorder %v959, 8.507059e+37
      %v961 = vand.u32 %v694, 2147483648
      %v962 = vor.u32 1.1754944e-38, %v961
      %v963 = vsel %vm960, %v962, %v958
      %v964 = vmul.f32 1.0, %v963
      %v965 = vrcp.pop %v695
      %v966 = vmul.f32 %v695, %v965
      %v967 = vsub.f32 1.0, %v966
      %v968 = vmul.f32 %v965, %v967
      %v969 = vadd.f32 %v965, %v968
      %vm970 = vweird.f32 %v695
      %vm971 = vweird.f32 %v965
      %vm972 = vmor %vm970, %vm971
      %v973 = vsel %vm972, %v965, %v969
      %v974 = vand.u32 2147483647, %v695
      %vm975 = vcmp.eq.f32.partialorder %v974, 8.507059e+37
      %v976 = vand.u32 %v695, 2147483648
      %v977 = vor.u32 1.1754944e-38, %v976
      %v978 = vsel %vm975, %v977, %v973
      %v979 = vmul.f32 1.0, %v978
      %v980 = vrcp.pop %v696
      %v981 = vmul.f32 %v696, %v980
      %v982 = vsub.f32 1.0, %v981
      %v983 = vmul.f32 %v980, %v982
      %v984 = vadd.f32 %v980, %v983
      %vm985 = vweird.f32 %v696
      %vm986 = vweird.f32 %v980
      %vm987 = vmor %vm985, %vm986
      %v988 = vsel %vm987, %v980, %v984
      %v989 = vand.u32 2147483647, %v696
      %vm990 = vcmp.eq.f32.partialorder %v989, 8.507059e+37
      %v991 = vand.u32 %v696, 2147483648
      %v992 = vor.u32 1.1754944e-38, %v991
      %v993 = vsel %vm990, %v992, %v988
      %v994 = vmul.f32 1.0, %v993
      %v995 = vrcp.pop %v697
      %v996 = vmul.f32 %v697, %v995
      %v997 = vsub.f32 1.0, %v996
      %v998 = vmul.f32 %v995, %v997
      %v999 = vadd.f32 %v995, %v998
      %vm1000 = vweird.f32 %v697
      %vm1001 = vweird.f32 %v995
      %vm1002 = vmor %vm1000, %vm1001
      %v1003 = vsel %vm1002, %v995, %v999
      %v1004 = vand.u32 2147483647, %v697
      %vm1005 = vcmp.eq.f32.partialorder %v1004, 8.507059e+37
      %v1006 = vand.u32 %v697, 2147483648
      %v1007 = vor.u32 1.1754944e-38, %v1006
      %v1008 = vsel %vm1005, %v1007, %v1003
      %v1009 = vmul.f32 1.0, %v1008
      %v1010 = vrcp.pop %v698
      %v1011 = vmul.f32 %v698, %v1010
      %v1012 = vsub.f32 1.0, %v1011
      %v1013 = vmul.f32 %v1010, %v1012
      %v1014 = vadd.f32 %v1010, %v1013
      %vm1015 = vweird.f32 %v698
      %vm1016 = vweird.f32 %v1010
      %vm1017 = vmor %vm1015, %vm1016
      %v1018 = vsel %vm1017, %v1010, %v1014
      %v1019 = vand.u32 2147483647, %v698
      %vm1020 = vcmp.eq.f32.partialorder %v1019, 8.507059e+37
      %v1021 = vand.u32 %v698, 2147483648
      %v1022 = vor.u32 1.1754944e-38, %v1021
      %v1023 = vsel %vm1020, %v1022, %v1018
      %v1024 = vmul.f32 1.0, %v1023
      %v1025 = vrcp.pop %v699
      %v1026 = vmul.f32 %v699, %v1025
      %v1027 = vsub.f32 1.0, %v1026
      %v1028 = vmul.f32 %v1025, %v1027
      %v1029 = vadd.f32 %v1025, %v1028
      %vm1030 = vweird.f32 %v699
      %vm1031 = vweird.f32 %v1025
      %vm1032 = vmor %vm1030, %vm1031
      %v1033 = vsel %vm1032, %v1025, %v1029
      %v1034 = vand.u32 2147483647, %v699
      %vm1035 = vcmp.eq.f32.partialorder %v1034, 8.507059e+37
      %v1036 = vand.u32 %v699, 2147483648
      %v1037 = vor.u32 1.1754944e-38, %v1036
      %v1038 = vsel %vm1035, %v1037, %v1033
      %v1039 = vmul.f32 1.0, %v1038
      %v1040 = vrcp.pop %v700
      %v1041 = vmul.f32 %v700, %v1040
      %v1042 = vsub.f32 1.0, %v1041
      %v1043 = vmul.f32 %v1040, %v1042
      %v1044 = vadd.f32 %v1040, %v1043
      %vm1045 = vweird.f32 %v700
      %vm1046 = vweird.f32 %v1040
      %vm1047 = vmor %vm1045, %vm1046
      %v1048 = vsel %vm1047, %v1040, %v1044
      %v1049 = vand.u32 2147483647, %v700
      %vm1050 = vcmp.eq.f32.partialorder %v1049, 8.507059e+37
      %v1051 = vand.u32 %v700, 2147483648
      %v1052 = vor.u32 1.1754944e-38, %v1051
      %v1053 = vsel %vm1050, %v1052, %v1048
      %v1054 = vmul.f32 1.0, %v1053
      %v1055 = vrcp.pop %v701
      %v1056 = vmul.f32 %v701, %v1055
      %v1057 = vsub.f32 1.0, %v1056
      %v1058 = vmul.f32 %v1055, %v1057
      %v1059 = vadd.f32 %v1055, %v1058
      %vm1060 = vweird.f32 %v701
      %vm1061 = vweird.f32 %v1055
      %vm1062 = vmor %vm1060, %vm1061
      %v1063 = vsel %vm1062, %v1055, %v1059
      %v1064 = vand.u32 2147483647, %v701
      %vm1065 = vcmp.eq.f32.partialorder %v1064, 8.507059e+37
      %v1066 = vand.u32 %v701, 2147483648
      %v1067 = vor.u32 1.1754944e-38, %v1066
      %v1068 = vsel %vm1065, %v1067, %v1063
      %v1069 = vmul.f32 1.0, %v1068
      %v1070 = vrcp.pop %v702
      %v1071 = vmul.f32 %v702, %v1070
      %v1072 = vsub.f32 1.0, %v1071
      %v1073 = vmul.f32 %v1070, %v1072
      %v1074 = vadd.f32 %v1070, %v1073
      %vm1075 = vweird.f32 %v702
      %vm1076 = vweird.f32 %v1070
      %vm1077 = vmor %vm1075, %vm1076
      %v1078 = vsel %vm1077, %v1070, %v1074
      %v1079 = vand.u32 2147483647, %v702
      %vm1080 = vcmp.eq.f32.partialorder %v1079, 8.507059e+37
      %v1081 = vand.u32 %v702, 2147483648
      %v1082 = vor.u32 1.1754944e-38, %v1081
      %v1083 = vsel %vm1080, %v1082, %v1078
      %v1084 = vmul.f32 1.0, %v1083
      %v1085 = vrcp.pop %v703
      %v1086 = vmul.f32 %v703, %v1085
      %v1087 = vsub.f32 1.0, %v1086
      %v1088 = vmul.f32 %v1085, %v1087
      %v1089 = vadd.f32 %v1085, %v1088
      %vm1090 = vweird.f32 %v703
      %vm1091 = vweird.f32 %v1085
      %vm1092 = vmor %vm1090, %vm1091
      %v1093 = vsel %vm1092, %v1085, %v1089
      %v1094 = vand.u32 2147483647, %v703
      %vm1095 = vcmp.eq.f32.partialorder %v1094, 8.507059e+37
      %v1096 = vand.u32 %v703, 2147483648
      %v1097 = vor.u32 1.1754944e-38, %v1096
      %v1098 = vsel %vm1095, %v1097, %v1093
      %v1099 = vmul.f32 1.0, %v1098
      %v1100 = vrcp.pop %v704
      %v1101 = vmul.f32 %v704, %v1100
      %v1102 = vsub.f32 1.0, %v1101
      %v1103 = vmul.f32 %v1100, %v1102
      %v1104 = vadd.f32 %v1100, %v1103
      %vm1105 = vweird.f32 %v704
      %vm1106 = vweird.f32 %v1100
      %vm1107 = vmor %vm1105, %vm1106
      %v1108 = vsel %vm1107, %v1100, %v1104
      %v1109 = vand.u32 2147483647, %v704
      %vm1110 = vcmp.eq.f32.partialorder %v1109, 8.507059e+37
      %v1111 = vand.u32 %v704, 2147483648
      %v1112 = vor.u32 1.1754944e-38, %v1111
      %v1113 = vsel %vm1110, %v1112, %v1108
      %v1114 = vmul.f32 1.0, %v1113
      %v1115 = vrcp.pop %v705
      %v1116 = vmul.f32 %v705, %v1115
      %v1117 = vsub.f32 1.0, %v1116
      %v1118 = vmul.f32 %v1115, %v1117
      %v1119 = vadd.f32 %v1115, %v1118
      %vm1120 = vweird.f32 %v705
      %vm1121 = vweird.f32 %v1115
      %vm1122 = vmor %vm1120, %vm1121
      %v1123 = vsel %vm1122, %v1115, %v1119
      %v1124 = vand.u32 2147483647, %v705
      %vm1125 = vcmp.eq.f32.partialorder %v1124, 8.507059e+37
      %v1126 = vand.u32 %v705, 2147483648
      %v1127 = vor.u32 1.1754944e-38, %v1126
      %v1128 = vsel %vm1125, %v1127, %v1123
      %v1129 = vmul.f32 1.0, %v1128
      %v1130 = vrcp.pop %v706
      %v1131 = vmul.f32 %v706, %v1130
      %v1132 = vsub.f32 1.0, %v1131
      %v1133 = vmul.f32 %v1130, %v1132
      %v1134 = vadd.f32 %v1130, %v1133
      %vm1135 = vweird.f32 %v706
      %vm1136 = vweird.f32 %v1130
      %vm1137 = vmor %vm1135, %vm1136
      %v1138 = vsel %vm1137, %v1130, %v1134
      %v1139 = vand.u32 2147483647, %v706
      %vm1140 = vcmp.eq.f32.partialorder %v1139, 8.507059e+37
      %v1141 = vand.u32 %v706, 2147483648
      %v1142 = vor.u32 1.1754944e-38, %v1141
      %v1143 = vsel %vm1140, %v1142, %v1138
      %v1144 = vmul.f32 1.0, %v1143
      %v1145 = vrcp.pop %v707
      %v1146 = vmul.f32 %v707, %v1145
      %v1147 = vsub.f32 1.0, %v1146
      %v1148 = vmul.f32 %v1145, %v1147
      %v1149 = vadd.f32 %v1145, %v1148
      %vm1150 = vweird.f32 %v707
      %vm1151 = vweird.f32 %v1145
      %vm1152 = vmor %vm1150, %vm1151
      %v1153 = vsel %vm1152, %v1145, %v1149
      %v1154 = vand.u32 2147483647, %v707
      %vm1155 = vcmp.eq.f32.partialorder %v1154, 8.507059e+37
      %v1156 = vand.u32 %v707, 2147483648
      %v1157 = vor.u32 1.1754944e-38, %v1156
      %v1158 = vsel %vm1155, %v1157, %v1153
      %v1159 = vmul.f32 1.0, %v1158
      %v1160 = vrcp.pop %v708
      %v1161 = vmul.f32 %v708, %v1160
      %v1162 = vsub.f32 1.0, %v1161
      %v1163 = vmul.f32 %v1160, %v1162
      %v1164 = vadd.f32 %v1160, %v1163
      %vm1165 = vweird.f32 %v708
      %vm1166 = vweird.f32 %v1160
      %vm1167 = vmor %vm1165, %vm1166
      %v1168 = vsel %vm1167, %v1160, %v1164
      %v1169 = vand.u32 2147483647, %v708
      %vm1170 = vcmp.eq.f32.partialorder %v1169, 8.507059e+37
      %v1171 = vand.u32 %v708, 2147483648
      %v1172 = vor.u32 1.1754944e-38, %v1171
      %v1173 = vsel %vm1170, %v1172, %v1168
      %v1174 = vmul.f32 1.0, %v1173
      %v1175 = vrcp.pop %v709
      %v1176 = vmul.f32 %v709, %v1175
      %v1177 = vsub.f32 1.0, %v1176
      %v1178 = vmul.f32 %v1175, %v1177
      %v1179 = vadd.f32 %v1175, %v1178
      %vm1180 = vweird.f32 %v709
      %vm1181 = vweird.f32 %v1175
      %vm1182 = vmor %vm1180, %vm1181
      %v1183 = vsel %vm1182, %v1175, %v1179
      %v1184 = vand.u32 2147483647, %v709
      %vm1185 = vcmp.eq.f32.partialorder %v1184, 8.507059e+37
      %v1186 = vand.u32 %v709, 2147483648
      %v1187 = vor.u32 1.1754944e-38, %v1186
      %v1188 = vsel %vm1185, %v1187, %v1183
      %v1189 = vmul.f32 1.0, %v1188
      %v1190 = vmul.f32 %v414, %v724
      %v1191 = vmul.f32 %v416, %v739
      %v1192 = vmul.f32 %v419, %v754
      %v1193 = vmul.f32 %v421, %v769
      %v1194 = vmul.f32 %v424, %v784
      %v1195 = vmul.f32 %v426, %v799
      %v1196 = vmul.f32 %v429, %v814
      %v1197 = vmul.f32 %v431, %v829
      %v1198 = vmul.f32 %v434, %v844
      %v1199 = vmul.f32 %v436, %v859
      %v1200 = vmul.f32 %v439, %v874
      %v1201 = vmul.f32 %v441, %v889
      %v1202 = vmul.f32 %v444, %v904
      %v1203 = vmul.f32 %v446, %v919
      %v1204 = vmul.f32 %v449, %v934
      %v1205 = vmul.f32 %v451, %v949
      %v1206 = vmul.f32 %v454, %v964
      %v1207 = vmul.f32 %v456, %v979
      %v1208 = vmul.f32 %v459, %v994
      %v1209 = vmul.f32 %v461, %v1009
      %v1210 = vmul.f32 %v464, %v1024
      %v1211 = vmul.f32 %v466, %v1039
      %v1212 = vmul.f32 %v469, %v1054
      %v1213 = vmul.f32 %v471, %v1069
      %v1214 = vmul.f32 %v474, %v1084
      %v1215 = vmul.f32 %v476, %v1099
      %v1216 = vmul.f32 %v479, %v1114
      %v1217 = vmul.f32 %v481, %v1129
      %v1218 = vmul.f32 %v484, %v1144
      %v1219 = vmul.f32 %v486, %v1159
      %v1220 = vmul.f32 %v489, %v1174
      %v1221 = vmul.f32 %v491, %v1189
      %v1222 = vtanh.pop %v1190
      %v1223 = vtanh.pop %v1191
      %v1224 = vtanh.pop %v1192
      %v1225 = vtanh.pop %v1193
      %v1226 = vtanh.pop %v1194
      %v1227 = vtanh.pop %v1195
      %v1228 = vtanh.pop %v1196
      %v1229 = vtanh.pop %v1197
      %v1230 = vtanh.pop %v1198
      %v1231 = vtanh.pop %v1199
      %v1232 = vtanh.pop %v1200
      %v1233 = vtanh.pop %v1201
      %v1234 = vtanh.pop %v1202
      %v1235 = vtanh.pop %v1203
      %v1236 = vtanh.pop %v1204
      %v1237 = vtanh.pop %v1205
      %v1238 = vtanh.pop %v1206
      %v1239 = vtanh.pop %v1207
      %v1240 = vtanh.pop %v1208
      %v1241 = vtanh.pop %v1209
      %v1242 = vtanh.pop %v1210
      %v1243 = vtanh.pop %v1211
      %v1244 = vtanh.pop %v1212
      %v1245 = vtanh.pop %v1213
      %v1246 = vtanh.pop %v1214
      %v1247 = vtanh.pop %v1215
      %v1248 = vtanh.pop %v1216
      %v1249 = vtanh.pop %v1217
      %v1250 = vtanh.pop %v1218
      %v1251 = vtanh.pop %v1219
      %v1252 = vtanh.pop %v1220
      %v1253 = vtanh.pop %v1221
      %1254 = vst [vmem:[%s172] sm:$0xff] %v1222
      %1255 = vst [vmem:[%s172 + $0x8] sm:$0xff] %v1223
      %1256 = vst [vmem:[%s172 + $0x10] sm:$0xff] %v1224
      %1257 = vst [vmem:[%s172 + $0x18] sm:$0xff] %v1225
      %1258 = vst [vmem:[%s172 + $0x20] sm:$0xff] %v1226
      %1259 = vst [vmem:[%s172 + $0x28] sm:$0xff] %v1227
      %1260 = vst [vmem:[%s172 + $0x30] sm:$0xff] %v1228
      %1261 = vst [vmem:[%s172 + $0x38] sm:$0xff] %v1229
      %1262 = vst [vmem:[%s172 + $0x40] sm:$0xff] %v1230
      %1263 = vst [vmem:[%s172 + $0x48] sm:$0xff] %v1231
      %1264 = vst [vmem:[%s172 + $0x50] sm:$0xff] %v1232
      %1265 = vst [vmem:[%s172 + $0x58] sm:$0xff] %v1233
      %1266 = vst [vmem:[%s172 + $0x60] sm:$0xff] %v1234
      %1267 = vst [vmem:[%s172 + $0x68] sm:$0xff] %v1235
      %1268 = vst [vmem:[%s172 + $0x70] sm:$0xff] %v1236
      %1269 = vst [vmem:[%s172 + $0x78] sm:$0xff] %v1237
      %1270 = vst [vmem:[%s172 + $0x80] sm:$0xff] %v1238
      %1271 = vst [vmem:[%s172 + $0x88] sm:$0xff] %v1239
      %1272 = vst [vmem:[%s172 + $0x90] sm:$0xff] %v1240
      %1273 = vst [vmem:[%s172 + $0x98] sm:$0xff] %v1241
      %1274 = vst [vmem:[%s172 + $0xa0] sm:$0xff] %v1242
      %1275 = vst [vmem:[%s172 + $0xa8] sm:$0xff] %v1243
      %1276 = vst [vmem:[%s172 + $0xb0] sm:$0xff] %v1244
      %1277 = vst [vmem:[%s172 + $0xb8] sm:$0xff] %v1245
      %1278 = vst [vmem:[%s172 + $0xc0] sm:$0xff] %v1246
      %1279 = vst [vmem:[%s172 + $0xc8] sm:$0xff] %v1247
      %1280 = vst [vmem:[%s172 + $0xd0] sm:$0xff] %v1248
      %1281 = vst [vmem:[%s172 + $0xd8] sm:$0xff] %v1249
      %1282 = vst [vmem:[%s172 + $0xe0] sm:$0xff] %v1250
      %1283 = vst [vmem:[%s172 + $0xe8] sm:$0xff] %v1251
      %1284 = vst [vmem:[%s172 + $0xf0] sm:$0xff] %v1252
      %1285 = vst [vmem:[%s172 + $0xf8] sm:$0xff] %v1253
      %s1286 = smul.u32 32, %s14
      %p1287 = scmp.lt.s32.totalorder %s1286, 63
      %s1288 = scalar_select %p1287, %s1286, 63
      %s1289 = smul.addr %s1288, 8
      %s1290 = scalar_lea.vmem %s3, %s1289
      // Predicated region
      $region33: #{_lambda_.60} parent=31 // pred_check
        %p1291 = pneg %p100
      $region34: #{_lambda_.60} parent=31 // pred_check_branch
        %1293 = sbr.rel (%p1291) target = $region36
      $region35: #{_lambda_.60} parent=31 // pred_region
        %s1294 = smul.u32 32, %s14
      $region36: #{_lambda_.60} parent=31 // pred_fallthru
        _
    $region32: #{_lambda_.60} parent=5 // pred_fallthru
      _
    %p1295 = scmp.le.s32.totalorder 2, %s9
    // Predicated region
    $region37: #{_lambda_.60} parent=5 // pred_check
      %p1296 = pneg %p1295
    $region38: #{_lambda_.60} parent=5 // pred_check_branch
      %1298 = sbr.rel (%p1296) target = $region40
    $region39: #{_lambda_.60} parent=5 // pred_region
      %s1299 = ssub.s32 %s9, 2
      // Predicated region
      $region41: #{_lambda_.60} parent=39 // pred_check
        %p1300 = pneg %p106
      $region42: #{_lambda_.60} parent=39 // pred_check_branch
        %1302 = sbr.rel (%p1300) target = $region44
      $region43: #{_lambda_.60} parent=39 // pred_region
        %s1303 = smul.u32 32, %s15
        %p1304 = scmp.lt.s32.totalorder %s1303, 63
        %s1305 = scalar_select %p1304, %s1303, 63
        %s1306 = smul.addr %s1305, 8
        %s1307 = scalar_lea.vmem %s3, %s1306
      $region44: #{_lambda_.60} parent=39 // pred_fallthru
        _
    $region40: #{_lambda_.60} parent=5 // pred_fallthru
      _
  $region6: #{_lambda_.60} parent=0 // loop_footer
    %s13 = sadd.s32 1, %s9
  $region7: #{_lambda_.60} parent=0 // loop_footer_branch
    %8 = sbr.rel target = $region3
  $region8: #{_lambda_.60} parent=0 // loop_exit
    _

// kernel: _lambda_.76
$region0: #{_lambda_.76}
  #allocation0 [shape = 'u32[]', space=smem, size = 0x4, offset = 0x4, fixed_abs, tag = 'smem constant byte address 0x4 - core index']
  #allocation1 [shape = 'u32[72,128]{1,0:T(1,128)}', space=vmem, size = 0x9000, scoped, tag = 'internal scratch']
  %s0 = inlined_call_operand.vmem [shape: bf16[32,384], index: 0, kind: input, shape index: {}]
  %s1 = inlined_call_operand.vmem [shape: bf16[384,256], index: 1, kind: input, shape index: {}]
  %s2 = inlined_call_operand.vmem [shape: f32[1,256], index: 2, kind: input, shape index: {}]
  %s3 = inlined_call_operand.vmem [shape: f32[32,128], index: 3, kind: output, shape index: {}]
  %s4 = sld [smem:[#allocation0]]
  $region22: #{_lambda_.76} parent=0
    _
  %s6 = ssub.s32 1, %s4
  %s7 = scalar_select 0, %s6, %s4
  // Predicated region
  $region2: #{_lambda_.76} parent=0 // pred_check
    _
  $region3: #{_lambda_.76} parent=0 // pred_check_branch
    %9 = sbr.rel (0) target = $region5
  $region4: #{_lambda_.76} parent=0 // pred_region
    _
  $region5: #{_lambda_.76} parent=0 // pred_fallthru
    _
  // Predicated region
  $region6: #{_lambda_.76} parent=0 // pred_check
    _
  $region7: #{_lambda_.76} parent=0 // pred_check_branch
    %11 = sbr.rel (0) target = $region9
  $region8: #{_lambda_.76} parent=0 // pred_region
    _
  $region9: #{_lambda_.76} parent=0 // pred_fallthru
    _
  // Predicated region
  $region10: #{_lambda_.76} parent=0 // pred_check
    _
  $region11: #{_lambda_.76} parent=0 // pred_check_branch
    %13 = sbr.rel (0) target = $region13
  $region12: #{_lambda_.76} parent=0 // pred_region
    _
  $region13: #{_lambda_.76} parent=0 // pred_fallthru
    _
  %v14 = vld [vmem:[%s0] sm:$0xff]
  %v15 = vld [vmem:[%s0 + $0x8] sm:$0xf]
  %v16 = vld [vmem:[%s0 + $0xc] sm:$0xff]
  %v17 = vld [vmem:[%s0 + $0x14] sm:$0xf]
  %v18 = vld [vmem:[%s0 + $0x18] sm:$0xff]
  %v19 = vld [vmem:[%s0 + $0x20] sm:$0xf]
  %v20 = vld [vmem:[%s0 + $0x24] sm:$0xff]
  %v21 = vld [vmem:[%s0 + $0x2c] sm:$0xf]
  %v22 = vld [vmem:[%s1] sm:$0xff]
  %v23 = vld [vmem:[%s1 + $0x8] sm:$0xff]
  %v24 = vld [vmem:[%s1 + $0x10] sm:$0xff]
  %v25 = vld [vmem:[%s1 + $0x18] sm:$0xff]
  %v26 = vld [vmem:[%s1 + $0x20] sm:$0xff]
  %v27 = vld [vmem:[%s1 + $0x28] sm:$0xff]
  %v28 = vld [vmem:[%s1 + $0x30] sm:$0xff]
  %v29 = vld [vmem:[%s1 + $0x38] sm:$0xff]
  %v30 = vld [vmem:[%s1 + $0x40] sm:$0xff]
  %v31 = vld [vmem:[%s1 + $0x48] sm:$0xff]
  %v32 = vld [vmem:[%s1 + $0x50] sm:$0xff]
  %v33 = vld [vmem:[%s1 + $0x58] sm:$0xff]
  %v34 = vld [vmem:[%s1 + $0x60] sm:$0xff]
  %v35 = vld [vmem:[%s1 + $0x68] sm:$0xff]
  %v36 = vld [vmem:[%s1 + $0x70] sm:$0xff]
  %v37 = vld [vmem:[%s1 + $0x78] sm:$0xff]
  %v38 = vld [vmem:[%s1 + $0x80] sm:$0xff]
  %v39 = vld [vmem:[%s1 + $0x88] sm:$0xff]
  %v40 = vld [vmem:[%s1 + $0x90] sm:$0xff]
  %v41 = vld [vmem:[%s1 + $0x98] sm:$0xff]
  %v42 = vld [vmem:[%s1 + $0xa0] sm:$0xff]
  %v43 = vld [vmem:[%s1 + $0xa8] sm:$0xff]
  %v44 = vld [vmem:[%s1 + $0xb0] sm:$0xff]
  %v45 = vld [vmem:[%s1 + $0xb8] sm:$0xff]
  %v46 = vld [vmem:[%s1 + $0xc0] sm:$0xff]
  %v47 = vld [vmem:[%s1 + $0xc8] sm:$0xff]
  %v48 = vld [vmem:[%s1 + $0xd0] sm:$0xff]
  %v49 = vld [vmem:[%s1 + $0xd8] sm:$0xff]
  %v50 = vld [vmem:[%s1 + $0xe0] sm:$0xff]
  %v51 = vld [vmem:[%s1 + $0xe8] sm:$0xff]
  %v52 = vld [vmem:[%s1 + $0xf0] sm:$0xff]
  %v53 = vld [vmem:[%s1 + $0xf8] sm:$0xff]
  %v54 = vld [vmem:[%s1 + $0x100] sm:$0xff]
  %v55 = vld [vmem:[%s1 + $0x108] sm:$0xff]
  %v56 = vld [vmem:[%s1 + $0x110] sm:$0xff]
  %v57 = vld [vmem:[%s1 + $0x118] sm:$0xff]
  %v58 = vld [vmem:[%s1 + $0x120] sm:$0xff]
  %v59 = vld [vmem:[%s1 + $0x128] sm:$0xff]
  %v60 = vld [vmem:[%s1 + $0x130] sm:$0xff]
  %v61 = vld [vmem:[%s1 + $0x138] sm:$0xff]
  %v62 = vld [vmem:[%s1 + $0x140] sm:$0xff]
  %v63 = vld [vmem:[%s1 + $0x148] sm:$0xff]
  %v64 = vld [vmem:[%s1 + $0x150] sm:$0xff]
  %v65 = vld [vmem:[%s1 + $0x158] sm:$0xff]
  %v66 = vld [vmem:[%s1 + $0x160] sm:$0xff]
  %v67 = vld [vmem:[%s1 + $0x168] sm:$0xff]
  %v68 = vld [vmem:[%s1 + $0x170] sm:$0xff]
  %v69 = vld [vmem:[%s1 + $0x178] sm:$0xff]
  %v70 = vld [vmem:[%s2] sm:$0x3]
  %v72 = vperm.slane %v70, 0
  %v73 = vperm.slane %v70, 1
  %v84 = vunpack.c.l.b16 %v14
  %v85 = vunpack.c.h.b16 %v14
  %v86 = vunpack.c.l.b16 %v15
  %v87 = vunpack.c.l.b16 %v16
  %v88 = vunpack.c.h.b16 %v16
  %v89 = vunpack.c.l.b16 %v17
  %v90 = vunpack.c.l.b16 %v18
  %v91 = vunpack.c.h.b16 %v18
  %v92 = vunpack.c.l.b16 %v19
  %v93 = vunpack.c.l.b16 %v20
  %v94 = vunpack.c.h.b16 %v20
  %v95 = vunpack.c.l.b16 %v21
  %v96 = vpack.c.b16 %v87, %v84
  %v97 = vpack.c.b16 %v88, %v85
  %v98 = vpack.c.b16 %v89, %v86
  %v99 = vpack.c.b16 %v93, %v90
  %v100 = vpack.c.b16 %v94, %v91
  %v101 = vpack.c.b16 %v95, %v92
  %v156 = vunpack.c.l.b16 %v22
  %v157 = vunpack.c.h.b16 %v22
  %v158 = vunpack.c.l.b16 %v23
  %v159 = vunpack.c.h.b16 %v23
  %v160 = vunpack.c.l.b16 %v24
  %v161 = vunpack.c.h.b16 %v24
  %v162 = vunpack.c.l.b16 %v25
  %v163 = vunpack.c.h.b16 %v25
  %v164 = vunpack.c.l.b16 %v26
  %v165 = vunpack.c.h.b16 %v26
  %v166 = vunpack.c.l.b16 %v27
  %v167 = vunpack.c.h.b16 %v27
  %v168 = vunpack.c.l.b16 %v28
  %v169 = vunpack.c.h.b16 %v28
  %v170 = vunpack.c.l.b16 %v29
  %v171 = vunpack.c.h.b16 %v29
  %v172 = vunpack.c.l.b16 %v30
  %v173 = vunpack.c.h.b16 %v30
  %v174 = vunpack.c.l.b16 %v31
  %v175 = vunpack.c.h.b16 %v31
  %v176 = vunpack.c.l.b16 %v32
  %v177 = vunpack.c.h.b16 %v32
  %v178 = vunpack.c.l.b16 %v33
  %v179 = vunpack.c.h.b16 %v33
  %v180 = vunpack.c.l.b16 %v34
  %v181 = vunpack.c.h.b16 %v34
  %v182 = vunpack.c.l.b16 %v35
  %v183 = vunpack.c.h.b16 %v35
  %v184 = vunpack.c.l.b16 %v36
  %v185 = vunpack.c.h.b16 %v36
  %v186 = vunpack.c.l.b16 %v37
  %v187 = vunpack.c.h.b16 %v37
  %v188 = vunpack.c.l.b16 %v38
  %v189 = vunpack.c.h.b16 %v38
  %v190 = vunpack.c.l.b16 %v39
  %v191 = vunpack.c.h.b16 %v39
  %v192 = vunpack.c.l.b16 %v40
  %v193 = vunpack.c.h.b16 %v40
  %v194 = vunpack.c.l.b16 %v41
  %v195 = vunpack.c.h.b16 %v41
  %v196 = vunpack.c.l.b16 %v42
  %v197 = vunpack.c.h.b16 %v42
  %v198 = vunpack.c.l.b16 %v43
  %v199 = vunpack.c.h.b16 %v43
  %v200 = vunpack.c.l.b16 %v44
  %v201 = vunpack.c.h.b16 %v44
  %v202 = vunpack.c.l.b16 %v45
  %v203 = vunpack.c.h.b16 %v45
  %v204 = vunpack.c.l.b16 %v46
  %v205 = vunpack.c.h.b16 %v46
  %v206 = vunpack.c.l.b16 %v47
  %v207 = vunpack.c.h.b16 %v47
  %v208 = vunpack.c.l.b16 %v48
  %v209 = vunpack.c.h.b16 %v48
  %v210 = vunpack.c.l.b16 %v49
  %v211 = vunpack.c.h.b16 %v49
  %v212 = vunpack.c.l.b16 %v50
  %v213 = vunpack.c.h.b16 %v50
  %v214 = vunpack.c.l.b16 %v51
  %v215 = vunpack.c.h.b16 %v51
  %v216 = vunpack.c.l.b16 %v52
  %v217 = vunpack.c.h.b16 %v52
  %v218 = vunpack.c.l.b16 %v53
  %v219 = vunpack.c.h.b16 %v53
  %v220 = vunpack.c.l.b16 %v54
  %v221 = vunpack.c.h.b16 %v54
  %v222 = vunpack.c.l.b16 %v55
  %v223 = vunpack.c.h.b16 %v55
  %v224 = vunpack.c.l.b16 %v56
  %v225 = vunpack.c.h.b16 %v56
  %v226 = vunpack.c.l.b16 %v57
  %v227 = vunpack.c.h.b16 %v57
  %v228 = vunpack.c.l.b16 %v58
  %v229 = vunpack.c.h.b16 %v58
  %v230 = vunpack.c.l.b16 %v59
  %v231 = vunpack.c.h.b16 %v59
  %v232 = vunpack.c.l.b16 %v60
  %v233 = vunpack.c.h.b16 %v60
  %v234 = vunpack.c.l.b16 %v61
  %v235 = vunpack.c.h.b16 %v61
  %v236 = vunpack.c.l.b16 %v62
  %v237 = vunpack.c.h.b16 %v62
  %v238 = vunpack.c.l.b16 %v63
  %v239 = vunpack.c.h.b16 %v63
  %v240 = vunpack.c.l.b16 %v64
  %v241 = vunpack.c.h.b16 %v64
  %v242 = vunpack.c.l.b16 %v65
  %v243 = vunpack.c.h.b16 %v65
  %v244 = vunpack.c.l.b16 %v66
  %v245 = vunpack.c.h.b16 %v66
  %v246 = vunpack.c.l.b16 %v67
  %v247 = vunpack.c.h.b16 %v67
  %v248 = vunpack.c.l.b16 %v68
  %v249 = vunpack.c.h.b16 %v68
  %v250 = vunpack.c.l.b16 %v69
  %v251 = vunpack.c.h.b16 %v69
  %v252 = vpack.c.b16 %v158, %v156
  %v253 = vpack.c.b16 %v159, %v157
  %v254 = vpack.c.b16 %v162, %v160
  %v255 = vpack.c.b16 %v163, %v161
  %v256 = vpack.c.b16 %v166, %v164
  %v257 = vpack.c.b16 %v167, %v165
  %v258 = vpack.c.b16 %v170, %v168
  %v259 = vpack.c.b16 %v171, %v169
  %v260 = vpack.c.b16 %v174, %v172
  %v261 = vpack.c.b16 %v175, %v173
  %v262 = vpack.c.b16 %v178, %v176
  %v263 = vpack.c.b16 %v179, %v177
  %v264 = vpack.c.b16 %v182, %v180
  %v265 = vpack.c.b16 %v183, %v181
  %v266 = vpack.c.b16 %v186, %v184
  %v267 = vpack.c.b16 %v187, %v185
  %v268 = vpack.c.b16 %v190, %v188
  %v269 = vpack.c.b16 %v191, %v189
  %v270 = vpack.c.b16 %v194, %v192
  %v271 = vpack.c.b16 %v195, %v193
  %v272 = vpack.c.b16 %v198, %v196
  %v273 = vpack.c.b16 %v199, %v197
  %v274 = vpack.c.b16 %v202, %v200
  %v275 = vpack.c.b16 %v203, %v201
  %v276 = vpack.c.b16 %v206, %v204
  %v277 = vpack.c.b16 %v207, %v205
  %v278 = vpack.c.b16 %v210, %v208
  %v279 = vpack.c.b16 %v211, %v209
  %v280 = vpack.c.b16 %v214, %v212
  %v281 = vpack.c.b16 %v215, %v213
  %v282 = vpack.c.b16 %v218, %v216
  %v283 = vpack.c.b16 %v219, %v217
  %v284 = vpack.c.b16 %v222, %v220
  %v285 = vpack.c.b16 %v223, %v221
  %v286 = vpack.c.b16 %v226, %v224
  %v287 = vpack.c.b16 %v227, %v225
  %v288 = vpack.c.b16 %v230, %v228
  %v289 = vpack.c.b16 %v231, %v229
  %v290 = vpack.c.b16 %v234, %v232
  %v291 = vpack.c.b16 %v235, %v233
  %v292 = vpack.c.b16 %v238, %v236
  %v293 = vpack.c.b16 %v239, %v237
  %v294 = vpack.c.b16 %v242, %v240
  %v295 = vpack.c.b16 %v243, %v241
  %v296 = vpack.c.b16 %v246, %v244
  %v297 = vpack.c.b16 %v247, %v245
  %v298 = vpack.c.b16 %v250, %v248
  %v299 = vpack.c.b16 %v251, %v249
  %348 = vmatpush.bf16.msra.mxu0 %v266
  %349 = vmatpush.bf16.msra.mxu0 %v264
  %350 = vmatpush.bf16.msra.mxu0 %v262
  %351 = vmatpush.bf16.msra.mxu0 %v260
  %352 = vmatpush.bf16.msra.mxu0 %v258
  %353 = vmatpush.bf16.msra.mxu0 %v256
  %354 = vmatpush.bf16.msra.mxu0 %v254
  %355 = vmatpush.bf16.msra.mxu0 %v252
  %356 = vmatmul.bf16.gmra.mxu0 %v96
  %v357 = vpop.f32.mrf.mxu0
  %v358 = vadd.f32 %v72, %v357
  %v359 = vpop.f32.mrf.mxu0
  %v360 = vadd.f32 %v72, %v359
  %361 = vmatmul.bf16.gmra.mxu0 %v99
  %v362 = vpop.f32.mrf.mxu0
  %v363 = vadd.f32 %v72, %v362
  %v364 = vpop.f32.mrf.mxu0
  %v365 = vadd.f32 %v72, %v364
  %366 = vdwg.mxu0
  %367 = vmatpush.bf16.msra.mxu0 %v282
  %368 = vmatpush.bf16.msra.mxu0 %v280
  %369 = vmatpush.bf16.msra.mxu0 %v278
  %370 = vmatpush.bf16.msra.mxu0 %v276
  %371 = vmatpush.bf16.msra.mxu0 %v274
  %372 = vmatpush.bf16.msra.mxu0 %v272
  %373 = vmatpush.bf16.msra.mxu0 %v270
  %374 = vmatpush.bf16.msra.mxu0 %v268
  %375 = vmatmul.bf16.gmra.mxu0 %v97
  %v376 = vpop.f32.mrf.mxu0
  %v377 = vadd.f32 %v358, %v376
  %v378 = vpop.f32.mrf.mxu0
  %v379 = vadd.f32 %v360, %v378
  %380 = vmatmul.bf16.gmra.mxu0 %v100
  %v381 = vpop.f32.mrf.mxu0
  %v382 = vadd.f32 %v363, %v381
  %v383 = vpop.f32.mrf.mxu0
  %v384 = vadd.f32 %v365, %v383
  %385 = vdwg.mxu0
  %386 = vmatpush.bf16.msra.mxu0 %v298
  %387 = vmatpush.bf16.msra.mxu0 %v296
  %388 = vmatpush.bf16.msra.mxu0 %v294
  %389 = vmatpush.bf16.msra.mxu0 %v292
  %390 = vmatpush.bf16.msra.mxu0 %v290
  %391 = vmatpush.bf16.msra.mxu0 %v288
  %392 = vmatpush.bf16.msra.mxu0 %v286
  %393 = vmatpush.bf16.msra.mxu0 %v284
  %394 = vmatmul.bf16.gmra.mxu0 %v98
  %v395 = vpop.f32.mrf.mxu0
  %v396 = vadd.f32 %v377, %v395
  %v397 = vpop.f32.mrf.mxu0
  %v398 = vadd.f32 %v379, %v397
  %399 = vmatmul.bf16.gmra.mxu0 %v101
  %v400 = vpop.f32.mrf.mxu0
  %v401 = vadd.f32 %v382, %v400
  %v402 = vpop.f32.mrf.mxu0
  %v403 = vadd.f32 %v384, %v402
  %404 = vdwg.mxu0
  %405 = vmatpush.bf16.msra.mxu0 %v267
  %406 = vmatpush.bf16.msra.mxu0 %v265
  %407 = vmatpush.bf16.msra.mxu0 %v263
  %408 = vmatpush.bf16.msra.mxu0 %v261
  %409 = vmatpush.bf16.msra.mxu0 %v259
  %410 = vmatpush.bf16.msra.mxu0 %v257
  %411 = vmatpush.bf16.msra.mxu0 %v255
  %412 = vmatpush.bf16.msra.mxu0 %v253
  %413 = vmatmul.bf16.gmra.mxu0 %v96
  %v414 = vpop.f32.mrf.mxu0
  %v415 = vadd.f32 %v73, %v414
  %v416 = vpop.f32.mrf.mxu0
  %v417 = vadd.f32 %v73, %v416
  %418 = vmatmul.bf16.gmra.mxu0 %v99
  %v419 = vpop.f32.mrf.mxu0
  %v420 = vadd.f32 %v73, %v419
  %v421 = vpop.f32.mrf.mxu0
  %v422 = vadd.f32 %v73, %v421
  %423 = vdwg.mxu0
  %424 = vmatpush.bf16.msra.mxu0 %v283
  %425 = vmatpush.bf16.msra.mxu0 %v281
  %426 = vmatpush.bf16.msra.mxu0 %v279
  %427 = vmatpush.bf16.msra.mxu0 %v277
  %428 = vmatpush.bf16.msra.mxu0 %v275
  %429 = vmatpush.bf16.msra.mxu0 %v273
  %430 = vmatpush.bf16.msra.mxu0 %v271
  %431 = vmatpush.bf16.msra.mxu0 %v269
  %432 = vmatmul.bf16.gmra.mxu0 %v97
  %v433 = vpop.f32.mrf.mxu0
  %v434 = vadd.f32 %v415, %v433
  %v435 = vpop.f32.mrf.mxu0
  %v436 = vadd.f32 %v417, %v435
  %437 = vmatmul.bf16.gmra.mxu0 %v100
  %v438 = vpop.f32.mrf.mxu0
  %v439 = vadd.f32 %v420, %v438
  %v440 = vpop.f32.mrf.mxu0
  %v441 = vadd.f32 %v422, %v440
  %442 = vdwg.mxu0
  %443 = vmatpush.bf16.msra.mxu0 %v299
  %444 = vmatpush.bf16.msra.mxu0 %v297
  %445 = vmatpush.bf16.msra.mxu0 %v295
  %446 = vmatpush.bf16.msra.mxu0 %v293
  %447 = vmatpush.bf16.msra.mxu0 %v291
  %448 = vmatpush.bf16.msra.mxu0 %v289
  %449 = vmatpush.bf16.msra.mxu0 %v287
  %450 = vmatpush.bf16.msra.mxu0 %v285
  %451 = vmatmul.bf16.gmra.mxu0 %v98
  %v452 = vpop.f32.mrf.mxu0
  %v453 = vadd.f32 %v434, %v452
  %v454 = vpop.f32.mrf.mxu0
  %v455 = vadd.f32 %v436, %v454
  %456 = vmatmul.bf16.gmra.mxu0 %v101
  %v457 = vpop.f32.mrf.mxu0
  %v458 = vadd.f32 %v439, %v457
  %v459 = vpop.f32.mrf.mxu0
  %v460 = vadd.f32 %v441, %v459
  %461 = vdwg.mxu0
  %v462 = vxor.u32 %v453, 2147483648
  %v463 = vxor.u32 %v455, 2147483648
  %v464 = vxor.u32 %v458, 2147483648
  %v465 = vxor.u32 %v460, 2147483648
  %v466 = vmul.f32 %v462, 1.442695
  %v467 = vpow.pop %v466
  %v468 = vmul.f32 %v463, 1.442695
  %v469 = vpow.pop %v468
  %v470 = vmul.f32 %v464, 1.442695
  %v471 = vpow.pop %v470
  %v472 = vmul.f32 %v465, 1.442695
  %v473 = vpow.pop %v472
  %v474 = vadd.f32 %v467, 1.0
  %v475 = vadd.f32 %v469, 1.0
  %v476 = vadd.f32 %v471, 1.0
  %v477 = vadd.f32 %v473, 1.0
  %v478 = vrcp.pop %v474
  %v479 = vmul.f32 %v474, %v478
  %v480 = vsub.f32 1.0, %v479
  %v481 = vmul.f32 %v478, %v480
  %v482 = vadd.f32 %v478, %v481
  %vm483 = vweird.f32 %v474
  %vm484 = vweird.f32 %v478
  %vm485 = vmor %vm483, %vm484
  %v486 = vsel %vm485, %v478, %v482
  %v487 = vand.u32 2147483647, %v474
  %vm488 = vcmp.eq.f32.partialorder %v487, 8.507059e+37
  %v489 = vand.u32 %v474, 2147483648
  %v490 = vor.u32 1.1754944e-38, %v489
  %v491 = vsel %vm488, %v490, %v486
  %v492 = vmul.f32 1.0, %v491
  %v493 = vrcp.pop %v475
  %v494 = vmul.f32 %v475, %v493
  %v495 = vsub.f32 1.0, %v494
  %v496 = vmul.f32 %v493, %v495
  %v497 = vadd.f32 %v493, %v496
  %vm498 = vweird.f32 %v475
  %vm499 = vweird.f32 %v493
  %vm500 = vmor %vm498, %vm499
  %v501 = vsel %vm500, %v493, %v497
  %v502 = vand.u32 2147483647, %v475
  %vm503 = vcmp.eq.f32.partialorder %v502, 8.507059e+37
  %v504 = vand.u32 %v475, 2147483648
  %v505 = vor.u32 1.1754944e-38, %v504
  %v506 = vsel %vm503, %v505, %v501
  %v507 = vmul.f32 1.0, %v506
  %v508 = vrcp.pop %v476
  %v509 = vmul.f32 %v476, %v508
  %v510 = vsub.f32 1.0, %v509
  %v511 = vmul.f32 %v508, %v510
  %v512 = vadd.f32 %v508, %v511
  %vm513 = vweird.f32 %v476
  %vm514 = vweird.f32 %v508
  %vm515 = vmor %vm513, %vm514
  %v516 = vsel %vm515, %v508, %v512
  %v517 = vand.u32 2147483647, %v476
  %vm518 = vcmp.eq.f32.partialorder %v517, 8.507059e+37
  %v519 = vand.u32 %v476, 2147483648
  %v520 = vor.u32 1.1754944e-38, %v519
  %v521 = vsel %vm518, %v520, %v516
  %v522 = vmul.f32 1.0, %v521
  %v523 = vrcp.pop %v477
  %v524 = vmul.f32 %v477, %v523
  %v525 = vsub.f32 1.0, %v524
  %v526 = vmul.f32 %v523, %v525
  %v527 = vadd.f32 %v523, %v526
  %vm528 = vweird.f32 %v477
  %vm529 = vweird.f32 %v523
  %vm530 = vmor %vm528, %vm529
  %v531 = vsel %vm530, %v523, %v527
  %v532 = vand.u32 2147483647, %v477
  %vm533 = vcmp.eq.f32.partialorder %v532, 8.507059e+37
  %v534 = vand.u32 %v477, 2147483648
  %v535 = vor.u32 1.1754944e-38, %v534
  %v536 = vsel %vm533, %v535, %v531
  %v537 = vmul.f32 1.0, %v536
  %v538 = vmax.f32 %v396, 0.0
  %v539 = vmax.f32 %v398, 0.0
  %v540 = vmax.f32 %v401, 0.0
  %v541 = vmax.f32 %v403, 0.0
  %v542 = vmul.f32 %v538, %v492
  %v543 = vmul.f32 %v539, %v507
  %v544 = vmul.f32 %v540, %v522
  %v545 = vmul.f32 %v541, %v537
  %546 = vst [vmem:[%s3] sm:$0xff] %v542
  %547 = vst [vmem:[%s3 + $0x8] sm:$0xff] %v543
  %548 = vst [vmem:[%s3 + $0x10] sm:$0xff] %v544
  %549 = vst [vmem:[%s3 + $0x18] sm:$0xff] %v545
  // Predicated region
  $region14: #{_lambda_.76} parent=0 // pred_check
    _
  $region15: #{_lambda_.76} parent=0 // pred_check_branch
    %551 = sbr.rel (0) target = $region17
  $region16: #{_lambda_.76} parent=0 // pred_region
    _
  $region17: #{_lambda_.76} parent=0 // pred_fallthru
    _
  // Predicated region
  $region18: #{_lambda_.76} parent=0 // pred_check
    _
  $region19: #{_lambda_.76} parent=0 // pred_check_branch
    %553 = sbr.rel (0) target = $region21
  $region20: #{_lambda_.76} parent=0 // pred_region
    _
  $region21: #{_lambda_.76} parent=0 // pred_fallthru
    _

// kernel: _lambda_.77
$region0: #{_lambda_.77}
  #allocation0 [shape = 'u32[]', space=smem, size = 0x4, offset = 0x4, fixed_abs, tag = 'smem constant byte address 0x4 - core index']
  #allocation1 [shape = 'u32[72,128]{1,0:T(1,128)}', space=vmem, size = 0x9000, scoped, tag = 'internal scratch']
  %s0 = inlined_call_operand.vmem [shape: bf16[2,4,288], index: 0, kind: input, shape index: {}]
  %s1 = inlined_call_operand.vmem [shape: bf16[2,288,4], index: 1, kind: input, shape index: {}]
  %s2 = inlined_call_operand.vmem [shape: f32[2,4,4], index: 2, kind: output, shape index: {}]
  %s3 = sld [smem:[#allocation0]]
  $region41: #{_lambda_.77} parent=0
    _
  %s5 = ssub.s32 1, %s3
  %s6 = scalar_select 0, %s5, %s3
  loop: start=0, step=1, limit=4
  $region2: #{_lambda_.77} parent=0 // loop_pre_header
    _
  $region3: #{_lambda_.77} parent=0 // loop_header
    %s8 = sphi 0, %s12
    %p9 = scmp.ge.s32.totalorder %s8, 4
    %s15 = sphi 0, %s27
    %s16 = sphi 0, %s23
    %s17 = sphi 0, %s15
    %s18 = sphi 0, %s16
    %s19 = sphi 0, %s17
    %s20 = sphi 0, %s18
    %s32 = sphi 0, %s34
    %s35 = sphi 0, %s32
    %s36 = sphi 0, %s35
    %s52 = sphi 0, %s36
    %s58 = sphi 0, %s60
    %s61 = sphi 0, %s58
    %s62 = sphi 0, %s61
    %s78 = sphi 0, %s62
    %s86 = sphi 0, %s88
    %s89 = sphi 0, %s86
    %s90 = sphi 0, %s89
    %s106 = sphi 0, %s90
  $region4: #{_lambda_.77} parent=0 // loop_header_branch
    %11 = sbr.rel (%p9) target = $region8
  $region5: #{_lambda_.77} parent=0 // loop_body
    %s13 = ssub.s32 %s8, 1
    %s14 = ssub.s32 %s8, 2
    %s21 = sadd.s32 1, %s16
    %p22 = scmp.ge.s32.totalorder %s21, 1
    %s23 = scalar_select %p22, 0, %s21
    %s24 = sadd.s32 1, %s15
    %s25 = scalar_select %p22, %s24, %s15
    %p26 = scmp.ge.s32.totalorder %s25, 2
    %s27 = scalar_select %p26, 0, %s25
    %s28 = ssub.s32 %s15, %s27
    %s29 = ssub.s32 %s16, %s23
    %s30 = sor.u32 %s28, %s29
    %p31 = scmp.eq.s32.totalorder %s30, 0
    %s33 = sadd.s32 %s32, 1
    %s34 = scalar_select %p31, %s32, %s33
    %p37 = pneg %p31
    %p38 = scmp.eq.s32.totalorder %s8, 1
    %p39 = por %p37, %p38
    %p40 = scmp.ne.s32.totalorder %s32, %s35
    %p41 = scmp.eq.s32.totalorder %s8, 0
    %p42 = por %p40, %p41
    %p43 = scmp.ne.s32.totalorder %s32, %s35
    %p44 = scmp.eq.s32.totalorder %s13, 1
    %p45 = por %p43, %p44
    %p46 = scmp.ne.s32.totalorder %s35, %s36
    %p47 = scmp.eq.s32.totalorder %s13, 0
    %p48 = por %p46, %p47
    %p49 = scmp.ne.s32.totalorder %s35, %s36
    %p50 = scmp.eq.s32.totalorder %s14, 1
    %p51 = por %p49, %p50
    %p53 = scmp.ne.s32.totalorder %s36, %s52
    %p54 = scmp.eq.s32.totalorder %s14, 0
    %p55 = por %p53, %p54
    %s56 = ssub.s32 %s15, %s27
    %p57 = scmp.eq.s32.totalorder %s56, 0
    %s59 = sadd.s32 %s58, 1
    %s60 = scalar_select %p57, %s58, %s59
    %p63 = pneg %p57
    %p64 = scmp.eq.s32.totalorder %s8, 1
    %p65 = por %p63, %p64
    %p66 = scmp.ne.s32.totalorder %s58, %s61
    %p67 = scmp.eq.s32.totalorder %s8, 0
    %p68 = por %p66, %p67
    %p69 = scmp.ne.s32.totalorder %s58, %s61
    %p70 = scmp.eq.s32.totalorder %s13, 1
    %p71 = por %p69, %p70
    %p72 = scmp.ne.s32.totalorder %s61, %s62
    %p73 = scmp.eq.s32.totalorder %s13, 0
    %p74 = por %p72, %p73
    %p75 = scmp.ne.s32.totalorder %s61, %s62
    %p76 = scmp.eq.s32.totalorder %s14, 1
    %p77 = por %p75, %p76
    %p79 = scmp.ne.s32.totalorder %s62, %s78
    %p80 = scmp.eq.s32.totalorder %s14, 0
    %p81 = por %p79, %p80
    %s82 = ssub.s32 %s15, %s27
    %s83 = ssub.s32 %s16, %s23
    %s84 = sor.u32 %s82, %s83
    %p85 = scmp.eq.s32.totalorder %s84, 0
    %s87 = sadd.s32 %s86, 1
    %s88 = scalar_select %p85, %s86, %s87
    %p91 = pneg %p85
    %p92 = scmp.eq.s32.totalorder %s8, 1
    %p93 = por %p91, %p92
    %p94 = scmp.ne.s32.totalorder %s86, %s89
    %p95 = scmp.eq.s32.totalorder %s8, 0
    %p96 = por %p94, %p95
    %p97 = scmp.ne.s32.totalorder %s86, %s89
    %p98 = scmp.eq.s32.totalorder %s13, 1
    %p99 = por %p97, %p98
    %p100 = scmp.ne.s32.totalorder %s89, %s90
    %p101 = scmp.eq.s32.totalorder %s13, 0
    %p102 = por %p100, %p101
    %p103 = scmp.ne.s32.totalorder %s89, %s90
    %p104 = scmp.eq.s32.totalorder %s14, 1
    %p105 = por %p103, %p104
    %p107 = scmp.ne.s32.totalorder %s90, %s106
    %p108 = scmp.eq.s32.totalorder %s14, 0
    %p109 = por %p107, %p108
    %p110 = scmp.le.s32.totalorder 1, %s8
    %p111 = scmp.lt.s32.totalorder %s8, 3
    %p112 = pnand %p110, %p111
    %p113 = pneg %p112
    // Predicated region
    $region9: #{_lambda_.77} parent=5 // pred_check
      _
    $region10: #{_lambda_.77} parent=5 // pred_check_branch
      %115 = sbr.rel (%p112) target = $region12
    $region11: #{_lambda_.77} parent=5 // pred_region
      %s116 = ssub.s32 %s8, 1
    $region12: #{_lambda_.77} parent=5 // pred_fallthru
      _
    %p117 = scmp.lt.s32.totalorder %s8, 2
    // Predicated region
    $region13: #{_lambda_.77} parent=5 // pred_check
      %p118 = pneg %p117
    $region14: #{_lambda_.77} parent=5 // pred_check_branch
      %120 = sbr.rel (%p118) target = $region16
    $region15: #{_lambda_.77} parent=5 // pred_region
      // Predicated region
      $region17: #{_lambda_.77} parent=15 // pred_check
        %p121 = pneg %p42
      $region18: #{_lambda_.77} parent=15 // pred_check_branch
        %123 = sbr.rel (%p121) target = $region20
      $region19: #{_lambda_.77} parent=15 // pred_region
        %p124 = scmp.lt.s32.totalorder %s15, 1
        %s125 = scalar_select %p124, %s15, 1
        %p126 = scmp.lt.s32.totalorder %s16, 0
        %s127 = scalar_select %p126, %s16, 0
        %s128 = smul.addr %s127, 3
        %s129 = smul.addr %s125, 3
        %s130 = sadd.s32 %s128, %s129
        %s131 = smul.addr %s130, 2
        %s132 = scalar_lea.vmem %s0, %s131
      $region20: #{_lambda_.77} parent=15 // pred_fallthru
        _
      // Predicated region
      $region21: #{_lambda_.77} parent=15 // pred_check
        %p133 = pneg %p68
      $region22: #{_lambda_.77} parent=15 // pred_check_branch
        %135 = sbr.rel (%p133) target = $region24
      $region23: #{_lambda_.77} parent=15 // pred_region
        %p136 = scmp.lt.s32.totalorder %s15, 1
        %s137 = scalar_select %p136, %s15, 1
        %s138 = smul.addr %s137, 36
        %s139 = smul.addr %s138, 4
        %s140 = scalar_lea.vmem %s1, %s139
      $region24: #{_lambda_.77} parent=15 // pred_fallthru
        _
    $region16: #{_lambda_.77} parent=5 // pred_fallthru
      _
    %p141 = scmp.le.s32.totalorder 1, %s8
    %p142 = scmp.lt.s32.totalorder %s8, 3
    %p143 = pnand %p141, %p142
    %p144 = pneg %p143
    // Predicated region
    $region25: #{_lambda_.77} parent=5 // pred_check
      _
    $region26: #{_lambda_.77} parent=5 // pred_check_branch
      %146 = sbr.rel (%p143) target = $region28
    $region27: #{_lambda_.77} parent=5 // pred_region
      %s147 = ssub.s32 %s8, 1
      %p148 = scmp.lt.s32.totalorder %s17, 1
      %s149 = scalar_select %p148, %s17, 1
      %p150 = scmp.lt.s32.totalorder %s18, 0
      %s151 = scalar_select %p150, %s18, 0
      %s152 = smul.addr %s151, 3
      %s153 = smul.addr %s149, 3
      %s154 = sadd.s32 %s152, %s153
      %s155 = smul.addr %s154, 2
      %s156 = scalar_lea.vmem %s0, %s155
      %p157 = pneg %p48
      %p158 = pneg %p45
      %p159 = scmp.lt.s32.totalorder %s17, 1
      %s160 = scalar_select %p159, %s17, 1
      %s161 = smul.addr %s160, 36
      %s162 = smul.addr %s161, 4
      %s163 = scalar_lea.vmem %s1, %s162
      %p164 = pneg %p74
      %p165 = pneg %p71
      %p166 = pneg %p102
      %p167 = pneg %p99
      %p168 = scmp.lt.s32.totalorder %s17, 1
      %s169 = scalar_select %p168, %s17, 1
      %p170 = scmp.lt.s32.totalorder %s18, 0
      %s171 = scalar_select %p170, %s18, 0
      %s172 = sadd.s32 %s171, %s169
      %s173 = smul.addr %s172, 4
      %s174 = scalar_lea.vmem %s2, %s173
      %p175 = scmp.lt.s32.totalorder %s17, 1
      %s176 = scalar_select %p175, %s17, 1
      %p177 = scmp.lt.s32.totalorder %s18, 0
      %s178 = scalar_select %p177, %s18, 0
      %s179 = smul.addr %s178, 3
      %s180 = smul.addr %s176, 3
      %s181 = sadd.s32 %s179, %s180
      %s182 = smul.addr %s181, 2
      %s183 = scalar_lea.vmem %s0, %s182
      %p184 = scmp.lt.s32.totalorder %s17, 1
      %s185 = scalar_select %p184, %s17, 1
      %s186 = smul.addr %s185, 36
      %s187 = smul.addr %s186, 4
      %s188 = scalar_lea.vmem %s1, %s187
      %p189 = scmp.lt.s32.totalorder %s17, 1
      %s190 = scalar_select %p189, %s17, 1
      %p191 = scmp.lt.s32.totalorder %s18, 0
      %s192 = scalar_select %p191, %s18, 0
      %s193 = sadd.s32 %s192, %s190
      %s194 = smul.addr %s193, 4
      %s195 = scalar_lea.vmem %s2, %s194
      %v197 = vld [vmem:[%s183] sm:$0x3f]
      %v198 = vld [vmem:[%s188] sm:$0xf]
      %v199 = vld [vmem:[%s188 + $0x4] sm:$0xf]
      %v200 = vld [vmem:[%s188 + $0x8] sm:$0xf]
      %v201 = vld [vmem:[%s188 + $0xc] sm:$0xf]
      %v202 = vld [vmem:[%s188 + $0x10] sm:$0xf]
      %v203 = vld [vmem:[%s188 + $0x14] sm:$0xf]
      %v204 = vld [vmem:[%s188 + $0x18] sm:$0xf]
      %v205 = vld [vmem:[%s188 + $0x1c] sm:$0xf]
      %v206 = vld [vmem:[%s188 + $0x20] sm:$0xf]
      %v207 = vld [vmem:[%s188 + $0x24] sm:$0xf]
      %v208 = vld [vmem:[%s188 + $0x28] sm:$0xf]
      %v209 = vld [vmem:[%s188 + $0x2c] sm:$0xf]
      %v210 = vld [vmem:[%s188 + $0x30] sm:$0xf]
      %v211 = vld [vmem:[%s188 + $0x34] sm:$0xf]
      %v212 = vld [vmem:[%s188 + $0x38] sm:$0xf]
      %v213 = vld [vmem:[%s188 + $0x3c] sm:$0xf]
      %v214 = vld [vmem:[%s188 + $0x40] sm:$0xf]
      %v215 = vld [vmem:[%s188 + $0x44] sm:$0xf]
      %v216 = vld [vmem:[%s188 + $0x48] sm:$0xf]
      %v217 = vld [vmem:[%s188 + $0x4c] sm:$0xf]
      %v218 = vld [vmem:[%s188 + $0x50] sm:$0xf]
      %v219 = vld [vmem:[%s188 + $0x54] sm:$0xf]
      %v220 = vld [vmem:[%s188 + $0x58] sm:$0xf]
      %v221 = vld [vmem:[%s188 + $0x5c] sm:$0xf]
      %v222 = vld [vmem:[%s188 + $0x60] sm:$0xf]
      %v223 = vld [vmem:[%s188 + $0x64] sm:$0xf]
      %v224 = vld [vmem:[%s188 + $0x68] sm:$0xf]
      %v225 = vld [vmem:[%s188 + $0x6c] sm:$0xf]
      %v226 = vld [vmem:[%s188 + $0x70] sm:$0xf]
      %v227 = vld [vmem:[%s188 + $0x74] sm:$0xf]
      %v228 = vld [vmem:[%s188 + $0x78] sm:$0xf]
      %v229 = vld [vmem:[%s188 + $0x7c] sm:$0xf]
      %v230 = vld [vmem:[%s188 + $0x80] sm:$0xf]
      %v231 = vld [vmem:[%s188 + $0x84] sm:$0xf]
      %v232 = vld [vmem:[%s188 + $0x88] sm:$0xf]
      %v233 = vld [vmem:[%s188 + $0x8c] sm:$0xf]
      %235 = vst [vmem:[#allocation1] ss:$4 sm:$0xff] %v197
      %v236 = vld.sshfl [vmem:[#allocation1] sm:$0xff pattern:$0x73625140]
      %v237 = vld.sshfl [vmem:[#allocation1 + $0x8] sm:$0xff pattern:$0x73625140]
      %v238 = vld.sshfl [vmem:[#allocation1 + $0x10] sm:$0xff pattern:$0x73625140]
      %v277 = vunpack.c.l.b16 %v198
      %v278 = vunpack.c.l.b16 %v199
      %v279 = vunpack.c.l.b16 %v200
      %v280 = vunpack.c.l.b16 %v201
      %v281 = vunpack.c.l.b16 %v202
      %v282 = vunpack.c.l.b16 %v203
      %v283 = vunpack.c.l.b16 %v204
      %v284 = vunpack.c.l.b16 %v205
      %v285 = vunpack.c.l.b16 %v206
      %v286 = vunpack.c.l.b16 %v207
      %v287 = vunpack.c.l.b16 %v208
      %v288 = vunpack.c.l.b16 %v209
      %v289 = vunpack.c.l.b16 %v210
      %v290 = vunpack.c.l.b16 %v211
      %v291 = vunpack.c.l.b16 %v212
      %v292 = vunpack.c.l.b16 %v213
      %v293 = vunpack.c.l.b16 %v214
      %v294 = vunpack.c.l.b16 %v215
      %v295 = vunpack.c.l.b16 %v216
      %v296 = vunpack.c.l.b16 %v217
      %v297 = vunpack.c.l.b16 %v218
      %v298 = vunpack.c.l.b16 %v219
      %v299 = vunpack.c.l.b16 %v220
      %v300 = vunpack.c.l.b16 %v221
      %v301 = vunpack.c.l.b16 %v222
      %v302 = vunpack.c.l.b16 %v223
      %v303 = vunpack.c.l.b16 %v224
      %v304 = vunpack.c.l.b16 %v225
      %v305 = vunpack.c.l.b16 %v226
      %v306 = vunpack.c.l.b16 %v227
      %v307 = vunpack.c.l.b16 %v228
      %v308 = vunpack.c.l.b16 %v229
      %v309 = vunpack.c.l.b16 %v230
      %v310 = vunpack.c.l.b16 %v231
      %v311 = vunpack.c.l.b16 %v232
      %v312 = vunpack.c.l.b16 %v233
      %v313 = vpack.c.b16 %v278, %v277
      %v314 = vpack.c.b16 %v280, %v279
      %v315 = vpack.c.b16 %v282, %v281
      %v316 = vpack.c.b16 %v284, %v283
      %v317 = vpack.c.b16 %v286, %v285
      %v318 = vpack.c.b16 %v288, %v287
      %v319 = vpack.c.b16 %v290, %v289
      %v320 = vpack.c.b16 %v292, %v291
      %v321 = vpack.c.b16 %v294, %v293
      %v322 = vpack.c.b16 %v296, %v295
      %v323 = vpack.c.b16 %v298, %v297
      %v324 = vpack.c.b16 %v300, %v299
      %v325 = vpack.c.b16 %v302, %v301
      %v326 = vpack.c.b16 %v304, %v303
      %v327 = vpack.c.b16 %v306, %v305
      %v328 = vpack.c.b16 %v308, %v307
      %v329 = vpack.c.b16 %v310, %v309
      %v330 = vpack.c.b16 %v312, %v311
      %vm349 = vcmask 261120
      %v350 = vsel %vm349, %v238, 0
      %352 = vmatpush.bf16.msra.mxu0 %v320
      %353 = vmatpush.bf16.msra.mxu0 %v319
      %354 = vmatpush.bf16.msra.mxu0 %v318
      %355 = vmatpush.bf16.msra.mxu0 %v317
      %356 = vmatpush.bf16.msra.mxu0 %v316
      %357 = vmatpush.bf16.msra.mxu0 %v315
      %358 = vmatpush.bf16.msra.mxu0 %v314
      %359 = vmatpush.bf16.msra.mxu0 %v313
      %360 = vmatmul.bf16.gmra.mxu0 %v236
      %v361 = vpop.f32.mrf.mxu0
      %v362 = vadd.f32 0.0, %v361
      %v363 = vpop.f32.mrf.mxu0
      %364 = vdwg.mxu0
      %365 = vmatpush.bf16.msra.mxu0 %v328
      %366 = vmatpush.bf16.msra.mxu0 %v327
      %367 = vmatpush.bf16.msra.mxu0 %v326
      %368 = vmatpush.bf16.msra.mxu0 %v325
      %369 = vmatpush.bf16.msra.mxu0 %v324
      %370 = vmatpush.bf16.msra.mxu0 %v323
      %371 = vmatpush.bf16.msra.mxu0 %v322
      %372 = vmatpush.bf16.msra.mxu0 %v321
      %373 = vmatmul.bf16.gmra.mxu0 %v237
      %v374 = vpop.f32.mrf.mxu0
      %v375 = vadd.f32 %v362, %v374
      %v376 = vpop.f32.mrf.mxu0
      %377 = vdwg.mxu0
      %378 = vmatpush.bf16.msra.mxu0 0
      %379 = vmatpush.bf16.msra.mxu0 0
      %380 = vmatpush.bf16.msra.mxu0 0
      %381 = vmatpush.bf16.msra.mxu0 0
      %382 = vmatpush.bf16.msra.mxu0 0
      %383 = vmatpush.bf16.msra.mxu0 0
      %384 = vmatpush.bf16.msra.mxu0 %v330
      %385 = vmatpush.bf16.msra.mxu0 %v329
      %386 = vmatmul.bf16.gmra.mxu0 %v350
      %v387 = vpop.f32.mrf.mxu0
      %v388 = vadd.f32 %v375, %v387
      %v389 = vpop.f32.mrf.mxu0
      %390 = vdwg.mxu0
      %vm391 = vcmask 27648
      %392 = vst.msk [vmem:[%s195] sm:$0xf] %vm391, %v388
      %p393 = scmp.lt.s32.totalorder %s17, 1
      %s394 = scalar_select %p393, %s17, 1
      %p395 = scmp.lt.s32.totalorder %s18, 0
      %s396 = scalar_select %p395, %s18, 0
      %s397 = sadd.s32 %s396, %s394
      %s398 = smul.addr %s397, 4
      %s399 = scalar_lea.vmem %s2, %s398
      // Predicated region
      $region29: #{_lambda_.77} parent=27 // pred_check
        %p400 = pneg %p99
      $region30: #{_lambda_.77} parent=27 // pred_check_branch
        %402 = sbr.rel (%p400) target = $region32
      $region31: #{_lambda_.77} parent=27 // pred_region
        _
      $region32: #{_lambda_.77} parent=27 // pred_fallthru
        _
    $region28: #{_lambda_.77} parent=5 // pred_fallthru
      _
    %p403 = scmp.le.s32.totalorder 2, %s8
    // Predicated region
    $region33: #{_lambda_.77} parent=5 // pred_check
      %p404 = pneg %p403
    $region34: #{_lambda_.77} parent=5 // pred_check_branch
      %406 = sbr.rel (%p404) target = $region36
    $region35: #{_lambda_.77} parent=5 // pred_region
      %s407 = ssub.s32 %s8, 2
      // Predicated region
      $region37: #{_lambda_.77} parent=35 // pred_check
        %p408 = pneg %p105
      $region38: #{_lambda_.77} parent=35 // pred_check_branch
        %410 = sbr.rel (%p408) target = $region40
      $region39: #{_lambda_.77} parent=35 // pred_region
        %p411 = scmp.lt.s32.totalorder %s19, 1
        %s412 = scalar_select %p411, %s19, 1
        %p413 = scmp.lt.s32.totalorder %s20, 0
        %s414 = scalar_select %p413, %s20, 0
        %s415 = sadd.s32 %s414, %s412
        %s416 = smul.addr %s415, 4
        %s417 = scalar_lea.vmem %s2, %s416
      $region40: #{_lambda_.77} parent=35 // pred_fallthru
        _
    $region36: #{_lambda_.77} parent=5 // pred_fallthru
      _
  $region6: #{_lambda_.77} parent=0 // loop_footer
    %s12 = sadd.s32 1, %s8
  $region7: #{_lambda_.77} parent=0 // loop_footer_branch
    %7 = sbr.rel target = $region3
  $region8: #{_lambda_.77} parent=0 // loop_exit
    _

// kernel: _lambda_.78
$region0: #{_lambda_.78}
  #allocation0 [shape = 'u32[]', space=smem, size = 0x4, offset = 0x4, fixed_abs, tag = 'smem constant byte address 0x4 - core index']
  #allocation1 [shape = 'u32[72,128]{1,0:T(1,128)}', space=vmem, size = 0x9000, scoped, tag = 'internal scratch']
  %s0 = inlined_call_operand.vmem [shape: f32[2,4,4], index: 0, kind: input, shape index: {}]
  %s1 = inlined_call_operand.vmem [shape: f32[1,4], index: 1, kind: input, shape index: {}]
  %s2 = inlined_call_operand.vmem [shape: bf16[2,4,512], index: 2, kind: input, shape index: {}]
  %s3 = inlined_call_operand.vmem [shape: f32[2,4,512], index: 3, kind: output, shape index: {}]
  %s4 = sld [smem:[#allocation0]]
  $region45: #{_lambda_.78} parent=0
    _
  %s6 = ssub.s32 1, %s4
  %s7 = scalar_select 0, %s6, %s4
  loop: start=0, step=1, limit=4
  $region2: #{_lambda_.78} parent=0 // loop_pre_header
    _
  $region3: #{_lambda_.78} parent=0 // loop_header
    %s9 = sphi 0, %s13
    %p10 = scmp.ge.s32.totalorder %s9, 4
    %s16 = sphi 0, %s28
    %s17 = sphi 0, %s24
    %s18 = sphi 0, %s16
    %s19 = sphi 0, %s17
    %s20 = sphi 0, %s18
    %s21 = sphi 0, %s19
    %s33 = sphi 0, %s35
    %s36 = sphi 0, %s33
    %s37 = sphi 0, %s36
    %s53 = sphi 0, %s37
    %s57 = sphi 0, %s57
    %s59 = sphi 0, %s57
    %s60 = sphi 0, %s59
    %s74 = sphi 0, %s60
    %s80 = sphi 0, %s82
    %s83 = sphi 0, %s80
    %s84 = sphi 0, %s83
    %s100 = sphi 0, %s84
    %s108 = sphi 0, %s110
    %s111 = sphi 0, %s108
    %s112 = sphi 0, %s111
    %s128 = sphi 0, %s112
  $region4: #{_lambda_.78} parent=0 // loop_header_branch
    %12 = sbr.rel (%p10) target = $region8
  $region5: #{_lambda_.78} parent=0 // loop_body
    %s14 = ssub.s32 %s9, 1
    %s15 = ssub.s32 %s9, 2
    %s22 = sadd.s32 1, %s17
    %p23 = scmp.ge.s32.totalorder %s22, 1
    %s24 = scalar_select %p23, 0, %s22
    %s25 = sadd.s32 1, %s16
    %s26 = scalar_select %p23, %s25, %s16
    %p27 = scmp.ge.s32.totalorder %s26, 2
    %s28 = scalar_select %p27, 0, %s26
    %s29 = ssub.s32 %s16, %s28
    %s30 = ssub.s32 %s17, %s24
    %s31 = sor.u32 %s29, %s30
    %p32 = scmp.eq.s32.totalorder %s31, 0
    %s34 = sadd.s32 %s33, 1
    %s35 = scalar_select %p32, %s33, %s34
    %p38 = pneg %p32
    %p39 = scmp.eq.s32.totalorder %s9, 1
    %p40 = por %p38, %p39
    %p41 = scmp.ne.s32.totalorder %s33, %s36
    %p42 = scmp.eq.s32.totalorder %s9, 0
    %p43 = por %p41, %p42
    %p44 = scmp.ne.s32.totalorder %s33, %s36
    %p45 = scmp.eq.s32.totalorder %s14, 1
    %p46 = por %p44, %p45
    %p47 = scmp.ne.s32.totalorder %s36, %s37
    %p48 = scmp.eq.s32.totalorder %s14, 0
    %p49 = por %p47, %p48
    %p50 = scmp.ne.s32.totalorder %s36, %s37
    %p51 = scmp.eq.s32.totalorder %s15, 1
    %p52 = por %p50, %p51
    %p54 = scmp.ne.s32.totalorder %s37, %s53
    %p55 = scmp.eq.s32.totalorder %s15, 0
    %p56 = por %p54, %p55
    %s58 = sadd.s32 %s57, 1
    %p61 = scmp.eq.s32.totalorder %s9, 1
    %p62 = scmp.ne.s32.totalorder %s57, %s59
    %p63 = scmp.eq.s32.totalorder %s9, 0
    %p64 = por %p62, %p63
    %p65 = scmp.ne.s32.totalorder %s57, %s59
    %p66 = scmp.eq.s32.totalorder %s14, 1
    %p67 = por %p65, %p66
    %p68 = scmp.ne.s32.totalorder %s59, %s60
    %p69 = scmp.eq.s32.totalorder %s14, 0
    %p70 = por %p68, %p69
    %p71 = scmp.ne.s32.totalorder %s59, %s60
    %p72 = scmp.eq.s32.totalorder %s15, 1
    %p73 = por %p71, %p72
    %p75 = scmp.ne.s32.totalorder %s60, %s74
    %p76 = scmp.eq.s32.totalorder %s15, 0
    %p77 = por %p75, %p76
    %s78 = ssub.s32 %s16, %s28
    %p79 = scmp.eq.s32.totalorder %s78, 0
    %s81 = sadd.s32 %s80, 1
    %s82 = scalar_select %p79, %s80, %s81
    %p85 = pneg %p79
    %p86 = scmp.eq.s32.totalorder %s9, 1
    %p87 = por %p85, %p86
    %p88 = scmp.ne.s32.totalorder %s80, %s83
    %p89 = scmp.eq.s32.totalorder %s9, 0
    %p90 = por %p88, %p89
    %p91 = scmp.ne.s32.totalorder %s80, %s83
    %p92 = scmp.eq.s32.totalorder %s14, 1
    %p93 = por %p91, %p92
    %p94 = scmp.ne.s32.totalorder %s83, %s84
    %p95 = scmp.eq.s32.totalorder %s14, 0
    %p96 = por %p94, %p95
    %p97 = scmp.ne.s32.totalorder %s83, %s84
    %p98 = scmp.eq.s32.totalorder %s15, 1
    %p99 = por %p97, %p98
    %p101 = scmp.ne.s32.totalorder %s84, %s100
    %p102 = scmp.eq.s32.totalorder %s15, 0
    %p103 = por %p101, %p102
    %s104 = ssub.s32 %s16, %s28
    %s105 = ssub.s32 %s17, %s24
    %s106 = sor.u32 %s104, %s105
    %p107 = scmp.eq.s32.totalorder %s106, 0
    %s109 = sadd.s32 %s108, 1
    %s110 = scalar_select %p107, %s108, %s109
    %p113 = pneg %p107
    %p114 = scmp.eq.s32.totalorder %s9, 1
    %p115 = por %p113, %p114
    %p116 = scmp.ne.s32.totalorder %s108, %s111
    %p117 = scmp.eq.s32.totalorder %s9, 0
    %p118 = por %p116, %p117
    %p119 = scmp.ne.s32.totalorder %s108, %s111
    %p120 = scmp.eq.s32.totalorder %s14, 1
    %p121 = por %p119, %p120
    %p122 = scmp.ne.s32.totalorder %s111, %s112
    %p123 = scmp.eq.s32.totalorder %s14, 0
    %p124 = por %p122, %p123
    %p125 = scmp.ne.s32.totalorder %s111, %s112
    %p126 = scmp.eq.s32.totalorder %s15, 1
    %p127 = por %p125, %p126
    %p129 = scmp.ne.s32.totalorder %s112, %s128
    %p130 = scmp.eq.s32.totalorder %s15, 0
    %p131 = por %p129, %p130
    %p132 = scmp.le.s32.totalorder 1, %s9
    %p133 = scmp.lt.s32.totalorder %s9, 3
    %p134 = pnand %p132, %p133
    %p135 = pneg %p134
    // Predicated region
    $region9: #{_lambda_.78} parent=5 // pred_check
      _
    $region10: #{_lambda_.78} parent=5 // pred_check_branch
      %137 = sbr.rel (%p134) target = $region12
    $region11: #{_lambda_.78} parent=5 // pred_region
      %s138 = ssub.s32 %s9, 1
      // Predicated region
      $region13: #{_lambda_.78} parent=11 // pred_check
        %p139 = pneg %p70
      $region14: #{_lambda_.78} parent=11 // pred_check_branch
        %141 = sbr.rel (%p139) target = $region16
      $region15: #{_lambda_.78} parent=11 // pred_region
        _
      $region16: #{_lambda_.78} parent=11 // pred_fallthru
        _
    $region12: #{_lambda_.78} parent=5 // pred_fallthru
      _
    %p142 = scmp.lt.s32.totalorder %s9, 2
    // Predicated region
    $region17: #{_lambda_.78} parent=5 // pred_check
      %p143 = pneg %p142
    $region18: #{_lambda_.78} parent=5 // pred_check_branch
      %145 = sbr.rel (%p143) target = $region20
    $region19: #{_lambda_.78} parent=5 // pred_region
      // Predicated region
      $region21: #{_lambda_.78} parent=19 // pred_check
        %p146 = pneg %p43
      $region22: #{_lambda_.78} parent=19 // pred_check_branch
        %148 = sbr.rel (%p146) target = $region24
      $region23: #{_lambda_.78} parent=19 // pred_region
        %p149 = scmp.lt.s32.totalorder %s16, 1
        %s150 = scalar_select %p149, %s16, 1
        %p151 = scmp.lt.s32.totalorder %s17, 0
        %s152 = scalar_select %p151, %s17, 0
        %s153 = sadd.s32 %s152, %s150
        %s154 = smul.addr %s153, 4
        %s155 = scalar_lea.vmem %s0, %s154
      $region24: #{_lambda_.78} parent=19 // pred_fallthru
        _
      // Predicated region
      $region25: #{_lambda_.78} parent=19 // pred_check
        %p156 = pneg %p90
      $region26: #{_lambda_.78} parent=19 // pred_check_branch
        %158 = sbr.rel (%p156) target = $region28
      $region27: #{_lambda_.78} parent=19 // pred_region
        %p159 = scmp.lt.s32.totalorder %s16, 1
        %s160 = scalar_select %p159, %s16, 1
        %s161 = smul.addr %s160, 4
        %s162 = smul.addr %s161, 2
        %s163 = scalar_lea.vmem %s2, %s162
      $region28: #{_lambda_.78} parent=19 // pred_fallthru
        _
    $region20: #{_lambda_.78} parent=5 // pred_fallthru
      _
    %p164 = scmp.le.s32.totalorder 1, %s9
    %p165 = scmp.lt.s32.totalorder %s9, 3
    %p166 = pnand %p164, %p165
    %p167 = pneg %p166
    // Predicated region
    $region29: #{_lambda_.78} parent=5 // pred_check
      _
    $region30: #{_lambda_.78} parent=5 // pred_check_branch
      %169 = sbr.rel (%p166) target = $region32
    $region31: #{_lambda_.78} parent=5 // pred_region
      %s170 = ssub.s32 %s9, 1
      %p171 = scmp.lt.s32.totalorder %s18, 1
      %s172 = scalar_select %p171, %s18, 1
      %p173 = scmp.lt.s32.totalorder %s19, 0
      %s174 = scalar_select %p173, %s19, 0
      %s175 = sadd.s32 %s174, %s172
      %s176 = smul.addr %s175, 4
      %s177 = scalar_lea.vmem %s0, %s176
      %p178 = pneg %p49
      %p179 = pneg %p46
      %p180 = pneg %p70
      %p181 = pneg %p67
      %p182 = scmp.lt.s32.totalorder %s18, 1
      %s183 = scalar_select %p182, %s18, 1
      %s184 = smul.addr %s183, 4
      %s185 = smul.addr %s184, 2
      %s186 = scalar_lea.vmem %s2, %s185
      %p187 = pneg %p96
      %p188 = pneg %p93
      %p189 = pneg %p124
      %p190 = pneg %p121
      %p191 = scmp.lt.s32.totalorder %s18, 1
      %s192 = scalar_select %p191, %s18, 1
      %p193 = scmp.lt.s32.totalorder %s19, 0
      %s194 = scalar_select %p193, %s19, 0
      %s195 = smul.addr %s194, 4
      %s196 = smul.addr %s192, 4
      %s197 = sadd.s32 %s195, %s196
      %s198 = smul.addr %s197, 4
      %s199 = scalar_lea.vmem %s3, %s198
      %p200 = scmp.lt.s32.totalorder %s18, 1
      %s201 = scalar_select %p200, %s18, 1
      %p202 = scmp.lt.s32.totalorder %s19, 0
      %s203 = scalar_select %p202, %s19, 0
      %s204 = sadd.s32 %s203, %s201
      %s205 = smul.addr %s204, 4
      %s206 = scalar_lea.vmem %s0, %s205
      %p207 = scmp.lt.s32.totalorder %s18, 1
      %s208 = scalar_select %p207, %s18, 1
      %s209 = smul.addr %s208, 4
      %s210 = smul.addr %s209, 2
      %s211 = scalar_lea.vmem %s2, %s210
      %p212 = scmp.lt.s32.totalorder %s18, 1
      %s213 = scalar_select %p212, %s18, 1
      %p214 = scmp.lt.s32.totalorder %s19, 0
      %s215 = scalar_select %p214, %s19, 0
      %s216 = smul.addr %s215, 4
      %s217 = smul.addr %s213, 4
      %s218 = sadd.s32 %s216, %s217
      %s219 = smul.addr %s218, 4
      %s220 = scalar_lea.vmem %s3, %s219
      %v222 = vld [vmem:[%s1] sm:$0x1]
      %v223 = vld [vmem:[%s206] sm:$0xf]
      %v225 = vperm.slane %v222, 0
      %v227 = vmul.f32 %v223, %v225
      %v228 = vmul.f32 %v227, 10.0
      %vm229 = vcmask 27648
      %v230 = vsel %vm229, %v228, -inf
      %231 = vmax.xlane.f32.xlu0 %v230
      %v232 = vpop.xlane.xlu0 %231
      %v233 = vsub.f32 %v228, %v232
      %v234 = vmul.f32 %v233, 1.442695
      %v235 = vpow.pop %v234
      %v236 = vsel %vm229, %v235, 0.0
      %237 = vadd.xlane.f32.xlu0 %v236
      %v238 = vpop.xlane.xlu0 %237
      %v239 = vrcp.pop %v238
      %v240 = vmul.f32 %v235, %v239
      %v241 = vmul.f32 %v240, %v225
      %v242 = vpack.c.bf16 %v241, %v241
      %v243 = vld [vmem:[%s211] sm:$0xff]
      %245 = vst [vmem:[#allocation1] ss:$4 sm:$0xff] %v243
      %v246 = vld.sshfl [vmem:[#allocation1] sm:$0xff pattern:$0x73625140]
      %v247 = vld.sshfl [vmem:[#allocation1 + $0x8] sm:$0xff pattern:$0x73625140]
      %v248 = vld.sshfl [vmem:[#allocation1 + $0x10] sm:$0xff pattern:$0x73625140]
      %v249 = vld.sshfl [vmem:[#allocation1 + $0x18] sm:$0xff pattern:$0x73625140]
      %vm250 = vcmask 31744
      %v252 = vsel %vm250, %v242, 0
      %vm254 = vcmask 1041408
      %v255 = vsel %vm254, %v246, 0
      %v257 = vsel %vm254, %v247, 0
      %v259 = vsel %vm254, %v248, 0
      %v261 = vsel %vm254, %v249, 0
      %263 = vmatpush.bf16.msra.mxu0 0
      %264 = vmatpush.bf16.msra.mxu0 0
      %265 = vmatpush.bf16.msra.mxu0 0
      %266 = vmatpush.bf16.msra.mxu0 0
      %267 = vmatpush.bf16.msra.mxu0 0
      %268 = vmatpush.bf16.msra.mxu0 0
      %269 = vmatpush.bf16.msra.mxu0 0
      %270 = vmatpush.bf16.msra.mxu0 %v255
      %271 = vmatmul.bf16.gmra.mxu0 %v252
      %v272 = vpop.f32.mrf.mxu0
      %v273 = vadd.f32 0.0, %v272
      %v274 = vpop.f32.mrf.mxu0
      %275 = vdwg.mxu0
      %276 = vmatpush.bf16.msra.mxu0 0
      %277 = vmatpush.bf16.msra.mxu0 0
      %278 = vmatpush.bf16.msra.mxu0 0
      %279 = vmatpush.bf16.msra.mxu0 0
      %280 = vmatpush.bf16.msra.mxu0 0
      %281 = vmatpush.bf16.msra.mxu0 0
      %282 = vmatpush.bf16.msra.mxu0 0
      %283 = vmatpush.bf16.msra.mxu0 %v257
      %284 = vmatmul.bf16.gmra.mxu0 %v252
      %v285 = vpop.f32.mrf.mxu0
      %v286 = vadd.f32 0.0, %v285
      %v287 = vpop.f32.mrf.mxu0
      %288 = vdwg.mxu0
      %289 = vmatpush.bf16.msra.mxu0 0
      %290 = vmatpush.bf16.msra.mxu0 0
      %291 = vmatpush.bf16.msra.mxu0 0
      %292 = vmatpush.bf16.msra.mxu0 0
      %293 = vmatpush.bf16.msra.mxu0 0
      %294 = vmatpush.bf16.msra.mxu0 0
      %295 = vmatpush.bf16.msra.mxu0 0
      %296 = vmatpush.bf16.msra.mxu0 %v259
      %297 = vmatmul.bf16.gmra.mxu0 %v252
      %v298 = vpop.f32.mrf.mxu0
      %v299 = vadd.f32 0.0, %v298
      %v300 = vpop.f32.mrf.mxu0
      %301 = vdwg.mxu0
      %302 = vmatpush.bf16.msra.mxu0 0
      %303 = vmatpush.bf16.msra.mxu0 0
      %304 = vmatpush.bf16.msra.mxu0 0
      %305 = vmatpush.bf16.msra.mxu0 0
      %306 = vmatpush.bf16.msra.mxu0 0
      %307 = vmatpush.bf16.msra.mxu0 0
      %308 = vmatpush.bf16.msra.mxu0 0
      %309 = vmatpush.bf16.msra.mxu0 %v261
      %310 = vmatmul.bf16.gmra.mxu0 %v252
      %v311 = vpop.f32.mrf.mxu0
      %v312 = vadd.f32 0.0, %v311
      %v313 = vpop.f32.mrf.mxu0
      %314 = vdwg.mxu0
      %v319 = vrot.slane %v286, 4
      %v320 = vrot.slane %v312, 4
      %vm321 = vcmask 1043456
      %v322 = vsel %vm321, %v273, %v319
      %v323 = vsel %vm321, %v299, %v320
      %326 = vst [vmem:[%s220] sm:$0xff] %v322
      %327 = vst [vmem:[%s220 + $0x8] sm:$0xff] %v323
      %p328 = scmp.lt.s32.totalorder %s18, 1
      %s329 = scalar_select %p328, %s18, 1
      %p330 = scmp.lt.s32.totalorder %s19, 0
      %s331 = scalar_select %p330, %s19, 0
      %s332 = smul.addr %s331, 4
      %s333 = smul.addr %s329, 4
      %s334 = sadd.s32 %s332, %s333
      %s335 = smul.addr %s334, 4
      %s336 = scalar_lea.vmem %s3, %s335
      // Predicated region
      $region33: #{_lambda_.78} parent=31 // pred_check
        %p337 = pneg %p121
      $region34: #{_lambda_.78} parent=31 // pred_check_branch
        %339 = sbr.rel (%p337) target = $region36
      $region35: #{_lambda_.78} parent=31 // pred_region
        _
      $region36: #{_lambda_.78} parent=31 // pred_fallthru
        _
    $region32: #{_lambda_.78} parent=5 // pred_fallthru
      _
    %p340 = scmp.le.s32.totalorder 2, %s9
    // Predicated region
    $region37: #{_lambda_.78} parent=5 // pred_check
      %p341 = pneg %p340
    $region38: #{_lambda_.78} parent=5 // pred_check_branch
      %343 = sbr.rel (%p341) target = $region40
    $region39: #{_lambda_.78} parent=5 // pred_region
      %s344 = ssub.s32 %s9, 2
      // Predicated region
      $region41: #{_lambda_.78} parent=39 // pred_check
        %p345 = pneg %p127
      $region42: #{_lambda_.78} parent=39 // pred_check_branch
        %347 = sbr.rel (%p345) target = $region44
      $region43: #{_lambda_.78} parent=39 // pred_region
        %p348 = scmp.lt.s32.totalorder %s20, 1
        %s349 = scalar_select %p348, %s20, 1
        %p350 = scmp.lt.s32.totalorder %s21, 0
        %s351 = scalar_select %p350, %s21, 0
        %s352 = smul.addr %s351, 4
        %s353 = smul.addr %s349, 4
        %s354 = sadd.s32 %s352, %s353
        %s355 = smul.addr %s354, 4
        %s356 = scalar_lea.vmem %s3, %s355
      $region44: #{_lambda_.78} parent=39 // pred_fallthru
        _
    $region40: #{_lambda_.78} parent=5 // pred_fallthru
      _
  $region6: #{_lambda_.78} parent=0 // loop_footer
    %s13 = sadd.s32 1, %s9
  $region7: #{_lambda_.78} parent=0 // loop_footer_branch
    %8 = sbr.rel target = $region3
  $region8: #{_lambda_.78} parent=0 // loop_exit
    _

// kernel: _lambda_.81
$region0: #{_lambda_.81}
  #allocation0 [shape = 'u32[]', space=smem, size = 0x4, offset = 0x4, fixed_abs, tag = 'smem constant byte address 0x4 - core index']
  #allocation1 [shape = 'u32[72,128]{1,0:T(1,128)}', space=vmem, size = 0x9000, scoped, tag = 'internal scratch']
  %s0 = inlined_call_operand.vmem [shape: bf16[32,640], index: 0, kind: input, shape index: {}]
  %s1 = inlined_call_operand.vmem [shape: bf16[640,256], index: 1, kind: input, shape index: {}]
  %s2 = inlined_call_operand.vmem [shape: f32[1,256], index: 2, kind: input, shape index: {}]
  %s3 = inlined_call_operand.vmem [shape: f32[32,128], index: 3, kind: output, shape index: {}]
  %s4 = sld [smem:[#allocation0]]
  $region22: #{_lambda_.81} parent=0
    _
  %s6 = ssub.s32 1, %s4
  %s7 = scalar_select 0, %s6, %s4
  // Predicated region
  $region2: #{_lambda_.81} parent=0 // pred_check
    _
  $region3: #{_lambda_.81} parent=0 // pred_check_branch
    %9 = sbr.rel (0) target = $region5
  $region4: #{_lambda_.81} parent=0 // pred_region
    _
  $region5: #{_lambda_.81} parent=0 // pred_fallthru
    _
  // Predicated region
  $region6: #{_lambda_.81} parent=0 // pred_check
    _
  $region7: #{_lambda_.81} parent=0 // pred_check_branch
    %11 = sbr.rel (0) target = $region9
  $region8: #{_lambda_.81} parent=0 // pred_region
    _
  $region9: #{_lambda_.81} parent=0 // pred_fallthru
    _
  // Predicated region
  $region10: #{_lambda_.81} parent=0 // pred_check
    _
  $region11: #{_lambda_.81} parent=0 // pred_check_branch
    %13 = sbr.rel (0) target = $region13
  $region12: #{_lambda_.81} parent=0 // pred_region
    _
  $region13: #{_lambda_.81} parent=0 // pred_fallthru
    _
  %v14 = vld [vmem:[%s0] sm:$0xff]
  %v15 = vld [vmem:[%s0 + $0x8] sm:$0xff]
  %v16 = vld [vmem:[%s0 + $0x10] sm:$0xf]
  %v17 = vld [vmem:[%s0 + $0x14] sm:$0xff]
  %v18 = vld [vmem:[%s0 + $0x1c] sm:$0xff]
  %v19 = vld [vmem:[%s0 + $0x24] sm:$0xf]
  %v20 = vld [vmem:[%s0 + $0x28] sm:$0xff]
  %v21 = vld [vmem:[%s0 + $0x30] sm:$0xff]
  %v22 = vld [vmem:[%s0 + $0x38] sm:$0xf]
  %v23 = vld [vmem:[%s0 + $0x3c] sm:$0xff]
  %v24 = vld [vmem:[%s0 + $0x44] sm:$0xff]
  %v25 = vld [vmem:[%s0 + $0x4c] sm:$0xf]
  %v26 = vld [vmem:[%s1] sm:$0xff]
  %v27 = vld [vmem:[%s1 + $0x8] sm:$0xff]
  %v28 = vld [vmem:[%s1 + $0x10] sm:$0xff]
  %v29 = vld [vmem:[%s1 + $0x18] sm:$0xff]
  %v30 = vld [vmem:[%s1 + $0x20] sm:$0xff]
  %v31 = vld [vmem:[%s1 + $0x28] sm:$0xff]
  %v32 = vld [vmem:[%s1 + $0x30] sm:$0xff]
  %v33 = vld [vmem:[%s1 + $0x38] sm:$0xff]
  %v34 = vld [vmem:[%s1 + $0x40] sm:$0xff]
  %v35 = vld [vmem:[%s1 + $0x48] sm:$0xff]
  %v36 = vld [vmem:[%s1 + $0x50] sm:$0xff]
  %v37 = vld [vmem:[%s1 + $0x58] sm:$0xff]
  %v38 = vld [vmem:[%s1 + $0x60] sm:$0xff]
  %v39 = vld [vmem:[%s1 + $0x68] sm:$0xff]
  %v40 = vld [vmem:[%s1 + $0x70] sm:$0xff]
  %v41 = vld [vmem:[%s1 + $0x78] sm:$0xff]
  %v42 = vld [vmem:[%s1 + $0x80] sm:$0xff]
  %v43 = vld [vmem:[%s1 + $0x88] sm:$0xff]
  %v44 = vld [vmem:[%s1 + $0x90] sm:$0xff]
  %v45 = vld [vmem:[%s1 + $0x98] sm:$0xff]
  %v46 = vld [vmem:[%s1 + $0xa0] sm:$0xff]
  %v47 = vld [vmem:[%s1 + $0xa8] sm:$0xff]
  %v48 = vld [vmem:[%s1 + $0xb0] sm:$0xff]
  %v49 = vld [vmem:[%s1 + $0xb8] sm:$0xff]
  %v50 = vld [vmem:[%s1 + $0xc0] sm:$0xff]
  %v51 = vld [vmem:[%s1 + $0xc8] sm:$0xff]
  %v52 = vld [vmem:[%s1 + $0xd0] sm:$0xff]
  %v53 = vld [vmem:[%s1 + $0xd8] sm:$0xff]
  %v54 = vld [vmem:[%s1 + $0xe0] sm:$0xff]
  %v55 = vld [vmem:[%s1 + $0xe8] sm:$0xff]
  %v56 = vld [vmem:[%s1 + $0xf0] sm:$0xff]
  %v57 = vld [vmem:[%s1 + $0xf8] sm:$0xff]
  %v58 = vld [vmem:[%s1 + $0x100] sm:$0xff]
  %v59 = vld [vmem:[%s1 + $0x108] sm:$0xff]
  %v60 = vld [vmem:[%s1 + $0x110] sm:$0xff]
  %v61 = vld [vmem:[%s1 + $0x118] sm:$0xff]
  %v62 = vld [vmem:[%s1 + $0x120] sm:$0xff]
  %v63 = vld [vmem:[%s1 + $0x128] sm:$0xff]
  %v64 = vld [vmem:[%s1 + $0x130] sm:$0xff]
  %v65 = vld [vmem:[%s1 + $0x138] sm:$0xff]
  %v66 = vld [vmem:[%s1 + $0x140] sm:$0xff]
  %v67 = vld [vmem:[%s1 + $0x148] sm:$0xff]
  %v68 = vld [vmem:[%s1 + $0x150] sm:$0xff]
  %v69 = vld [vmem:[%s1 + $0x158] sm:$0xff]
  %v70 = vld [vmem:[%s1 + $0x160] sm:$0xff]
  %v71 = vld [vmem:[%s1 + $0x168] sm:$0xff]
  %v72 = vld [vmem:[%s1 + $0x170] sm:$0xff]
  %v73 = vld [vmem:[%s1 + $0x178] sm:$0xff]
  %v74 = vld [vmem:[%s1 + $0x180] sm:$0xff]
  %v75 = vld [vmem:[%s1 + $0x188] sm:$0xff]
  %v76 = vld [vmem:[%s1 + $0x190] sm:$0xff]
  %v77 = vld [vmem:[%s1 + $0x198] sm:$0xff]
  %v78 = vld [vmem:[%s1 + $0x1a0] sm:$0xff]
  %v79 = vld [vmem:[%s1 + $0x1a8] sm:$0xff]
  %v80 = vld [vmem:[%s1 + $0x1b0] sm:$0xff]
  %v81 = vld [vmem:[%s1 + $0x1b8] sm:$0xff]
  %v82 = vld [vmem:[%s1 + $0x1c0] sm:$0xff]
  %v83 = vld [vmem:[%s1 + $0x1c8] sm:$0xff]
  %v84 = vld [vmem:[%s1 + $0x1d0] sm:$0xff]
  %v85 = vld [vmem:[%s1 + $0x1d8] sm:$0xff]
  %v86 = vld [vmem:[%s1 + $0x1e0] sm:$0xff]
  %v87 = vld [vmem:[%s1 + $0x1e8] sm:$0xff]
  %v88 = vld [vmem:[%s1 + $0x1f0] sm:$0xff]
  %v89 = vld [vmem:[%s1 + $0x1f8] sm:$0xff]
  %v90 = vld [vmem:[%s1 + $0x200] sm:$0xff]
  %v91 = vld [vmem:[%s1 + $0x208] sm:$0xff]
  %v92 = vld [vmem:[%s1 + $0x210] sm:$0xff]
  %v93 = vld [vmem:[%s1 + $0x218] sm:$0xff]
  %v94 = vld [vmem:[%s1 + $0x220] sm:$0xff]
  %v95 = vld [vmem:[%s1 + $0x228] sm:$0xff]
  %v96 = vld [vmem:[%s1 + $0x230] sm:$0xff]
  %v97 = vld [vmem:[%s1 + $0x238] sm:$0xff]
  %v98 = vld [vmem:[%s1 + $0x240] sm:$0xff]
  %v99 = vld [vmem:[%s1 + $0x248] sm:$0xff]
  %v100 = vld [vmem:[%s1 + $0x250] sm:$0xff]
  %v101 = vld [vmem:[%s1 + $0x258] sm:$0xff]
  %v102 = vld [vmem:[%s1 + $0x260] sm:$0xff]
  %v103 = vld [vmem:[%s1 + $0x268] sm:$0xff]
  %v104 = vld [vmem:[%s1 + $0x270] sm:$0xff]
  %v105 = vld [vmem:[%s1 + $0x278] sm:$0xff]
  %v106 = vld [vmem:[%s2] sm:$0x3]
  %v108 = vperm.slane %v106, 0
  %v109 = vperm.slane %v106, 1
  %v124 = vunpack.c.l.b16 %v14
  %v125 = vunpack.c.h.b16 %v14
  %v126 = vunpack.c.l.b16 %v15
  %v127 = vunpack.c.h.b16 %v15
  %v128 = vunpack.c.l.b16 %v16
  %v129 = vunpack.c.l.b16 %v17
  %v130 = vunpack.c.h.b16 %v17
  %v131 = vunpack.c.l.b16 %v18
  %v132 = vunpack.c.h.b16 %v18
  %v133 = vunpack.c.l.b16 %v19
  %v134 = vunpack.c.l.b16 %v20
  %v135 = vunpack.c.h.b16 %v20
  %v136 = vunpack.c.l.b16 %v21
  %v137 = vunpack.c.h.b16 %v21
  %v138 = vunpack.c.l.b16 %v22
  %v139 = vunpack.c.l.b16 %v23
  %v140 = vunpack.c.h.b16 %v23
  %v141 = vunpack.c.l.b16 %v24
  %v142 = vunpack.c.h.b16 %v24
  %v143 = vunpack.c.l.b16 %v25
  %v144 = vpack.c.b16 %v129, %v124
  %v145 = vpack.c.b16 %v130, %v125
  %v146 = vpack.c.b16 %v131, %v126
  %v147 = vpack.c.b16 %v132, %v127
  %v148 = vpack.c.b16 %v133, %v128
  %v149 = vpack.c.b16 %v139, %v134
  %v150 = vpack.c.b16 %v140, %v135
  %v151 = vpack.c.b16 %v141, %v136
  %v152 = vpack.c.b16 %v142, %v137
  %v153 = vpack.c.b16 %v143, %v138
  %v244 = vunpack.c.l.b16 %v26
  %v245 = vunpack.c.h.b16 %v26
  %v246 = vunpack.c.l.b16 %v27
  %v247 = vunpack.c.h.b16 %v27
  %v248 = vunpack.c.l.b16 %v28
  %v249 = vunpack.c.h.b16 %v28
  %v250 = vunpack.c.l.b16 %v29
  %v251 = vunpack.c.h.b16 %v29
  %v252 = vunpack.c.l.b16 %v30
  %v253 = vunpack.c.h.b16 %v30
  %v254 = vunpack.c.l.b16 %v31
  %v255 = vunpack.c.h.b16 %v31
  %v256 = vunpack.c.l.b16 %v32
  %v257 = vunpack.c.h.b16 %v32
  %v258 = vunpack.c.l.b16 %v33
  %v259 = vunpack.c.h.b16 %v33
  %v260 = vunpack.c.l.b16 %v34
  %v261 = vunpack.c.h.b16 %v34
  %v262 = vunpack.c.l.b16 %v35
  %v263 = vunpack.c.h.b16 %v35
  %v264 = vunpack.c.l.b16 %v36
  %v265 = vunpack.c.h.b16 %v36
  %v266 = vunpack.c.l.b16 %v37
  %v267 = vunpack.c.h.b16 %v37
  %v268 = vunpack.c.l.b16 %v38
  %v269 = vunpack.c.h.b16 %v38
  %v270 = vunpack.c.l.b16 %v39
  %v271 = vunpack.c.h.b16 %v39
  %v272 = vunpack.c.l.b16 %v40
  %v273 = vunpack.c.h.b16 %v40
  %v274 = vunpack.c.l.b16 %v41
  %v275 = vunpack.c.h.b16 %v41
  %v276 = vunpack.c.l.b16 %v42
  %v277 = vunpack.c.h.b16 %v42
  %v278 = vunpack.c.l.b16 %v43
  %v279 = vunpack.c.h.b16 %v43
  %v280 = vunpack.c.l.b16 %v44
  %v281 = vunpack.c.h.b16 %v44
  %v282 = vunpack.c.l.b16 %v45
  %v283 = vunpack.c.h.b16 %v45
  %v284 = vunpack.c.l.b16 %v46
  %v285 = vunpack.c.h.b16 %v46
  %v286 = vunpack.c.l.b16 %v47
  %v287 = vunpack.c.h.b16 %v47
  %v288 = vunpack.c.l.b16 %v48
  %v289 = vunpack.c.h.b16 %v48
  %v290 = vunpack.c.l.b16 %v49
  %v291 = vunpack.c.h.b16 %v49
  %v292 = vunpack.c.l.b16 %v50
  %v293 = vunpack.c.h.b16 %v50
  %v294 = vunpack.c.l.b16 %v51
  %v295 = vunpack.c.h.b16 %v51
  %v296 = vunpack.c.l.b16 %v52
  %v297 = vunpack.c.h.b16 %v52
  %v298 = vunpack.c.l.b16 %v53
  %v299 = vunpack.c.h.b16 %v53
  %v300 = vunpack.c.l.b16 %v54
  %v301 = vunpack.c.h.b16 %v54
  %v302 = vunpack.c.l.b16 %v55
  %v303 = vunpack.c.h.b16 %v55
  %v304 = vunpack.c.l.b16 %v56
  %v305 = vunpack.c.h.b16 %v56
  %v306 = vunpack.c.l.b16 %v57
  %v307 = vunpack.c.h.b16 %v57
  %v308 = vunpack.c.l.b16 %v58
  %v309 = vunpack.c.h.b16 %v58
  %v310 = vunpack.c.l.b16 %v59
  %v311 = vunpack.c.h.b16 %v59
  %v312 = vunpack.c.l.b16 %v60
  %v313 = vunpack.c.h.b16 %v60
  %v314 = vunpack.c.l.b16 %v61
  %v315 = vunpack.c.h.b16 %v61
  %v316 = vunpack.c.l.b16 %v62
  %v317 = vunpack.c.h.b16 %v62
  %v318 = vunpack.c.l.b16 %v63
  %v319 = vunpack.c.h.b16 %v63
  %v320 = vunpack.c.l.b16 %v64
  %v321 = vunpack.c.h.b16 %v64
  %v322 = vunpack.c.l.b16 %v65
  %v323 = vunpack.c.h.b16 %v65
  %v324 = vunpack.c.l.b16 %v66
  %v325 = vunpack.c.h.b16 %v66
  %v326 = vunpack.c.l.b16 %v67
  %v327 = vunpack.c.h.b16 %v67
  %v328 = vunpack.c.l.b16 %v68
  %v329 = vunpack.c.h.b16 %v68
  %v330 = vunpack.c.l.b16 %v69
  %v331 = vunpack.c.h.b16 %v69
  %v332 = vunpack.c.l.b16 %v70
  %v333 = vunpack.c.h.b16 %v70
  %v334 = vunpack.c.l.b16 %v71
  %v335 = vunpack.c.h.b16 %v71
  %v336 = vunpack.c.l.b16 %v72
  %v337 = vunpack.c.h.b16 %v72
  %v338 = vunpack.c.l.b16 %v73
  %v339 = vunpack.c.h.b16 %v73
  %v340 = vunpack.c.l.b16 %v74
  %v341 = vunpack.c.h.b16 %v74
  %v342 = vunpack.c.l.b16 %v75
  %v343 = vunpack.c.h.b16 %v75
  %v344 = vunpack.c.l.b16 %v76
  %v345 = vunpack.c.h.b16 %v76
  %v346 = vunpack.c.l.b16 %v77
  %v347 = vunpack.c.h.b16 %v77
  %v348 = vunpack.c.l.b16 %v78
  %v349 = vunpack.c.h.b16 %v78
  %v350 = vunpack.c.l.b16 %v79
  %v351 = vunpack.c.h.b16 %v79
  %v352 = vunpack.c.l.b16 %v80
  %v353 = vunpack.c.h.b16 %v80
  %v354 = vunpack.c.l.b16 %v81
  %v355 = vunpack.c.h.b16 %v81
  %v356 = vunpack.c.l.b16 %v82
  %v357 = vunpack.c.h.b16 %v82
  %v358 = vunpack.c.l.b16 %v83
  %v359 = vunpack.c.h.b16 %v83
  %v360 = vunpack.c.l.b16 %v84
  %v361 = vunpack.c.h.b16 %v84
  %v362 = vunpack.c.l.b16 %v85
  %v363 = vunpack.c.h.b16 %v85
  %v364 = vunpack.c.l.b16 %v86
  %v365 = vunpack.c.h.b16 %v86
  %v366 = vunpack.c.l.b16 %v87
  %v367 = vunpack.c.h.b16 %v87
  %v368 = vunpack.c.l.b16 %v88
  %v369 = vunpack.c.h.b16 %v88
  %v370 = vunpack.c.l.b16 %v89
  %v371 = vunpack.c.h.b16 %v89
  %v372 = vunpack.c.l.b16 %v90
  %v373 = vunpack.c.h.b16 %v90
  %v374 = vunpack.c.l.b16 %v91
  %v375 = vunpack.c.h.b16 %v91
  %v376 = vunpack.c.l.b16 %v92
  %v377 = vunpack.c.h.b16 %v92
  %v378 = vunpack.c.l.b16 %v93
  %v379 = vunpack.c.h.b16 %v93
  %v380 = vunpack.c.l.b16 %v94
  %v381 = vunpack.c.h.b16 %v94
  %v382 = vunpack.c.l.b16 %v95
  %v383 = vunpack.c.h.b16 %v95
  %v384 = vunpack.c.l.b16 %v96
  %v385 = vunpack.c.h.b16 %v96
  %v386 = vunpack.c.l.b16 %v97
  %v387 = vunpack.c.h.b16 %v97
  %v388 = vunpack.c.l.b16 %v98
  %v389 = vunpack.c.h.b16 %v98
  %v390 = vunpack.c.l.b16 %v99
  %v391 = vunpack.c.h.b16 %v99
  %v392 = vunpack.c.l.b16 %v100
  %v393 = vunpack.c.h.b16 %v100
  %v394 = vunpack.c.l.b16 %v101
  %v395 = vunpack.c.h.b16 %v101
  %v396 = vunpack.c.l.b16 %v102
  %v397 = vunpack.c.h.b16 %v102
  %v398 = vunpack.c.l.b16 %v103
  %v399 = vunpack.c.h.b16 %v103
  %v400 = vunpack.c.l.b16 %v104
  %v401 = vunpack.c.h.b16 %v104
  %v402 = vunpack.c.l.b16 %v105
  %v403 = vunpack.c.h.b16 %v105
  %v404 = vpack.c.b16 %v246, %v244
  %v405 = vpack.c.b16 %v247, %v245
  %v406 = vpack.c.b16 %v250, %v248
  %v407 = vpack.c.b16 %v251, %v249
  %v408 = vpack.c.b16 %v254, %v252
  %v409 = vpack.c.b16 %v255, %v253
  %v410 = vpack.c.b16 %v258, %v256
  %v411 = vpack.c.b16 %v259, %v257
  %v412 = vpack.c.b16 %v262, %v260
  %v413 = vpack.c.b16 %v263, %v261
  %v414 = vpack.c.b16 %v266, %v264
  %v415 = vpack.c.b16 %v267, %v265
  %v416 = vpack.c.b16 %v270, %v268
  %v417 = vpack.c.b16 %v271, %v269
  %v418 = vpack.c.b16 %v274, %v272
  %v419 = vpack.c.b16 %v275, %v273
  %v420 = vpack.c.b16 %v278, %v276
  %v421 = vpack.c.b16 %v279, %v277
  %v422 = vpack.c.b16 %v282, %v280
  %v423 = vpack.c.b16 %v283, %v281
  %v424 = vpack.c.b16 %v286, %v284
  %v425 = vpack.c.b16 %v287, %v285
  %v426 = vpack.c.b16 %v290, %v288
  %v427 = vpack.c.b16 %v291, %v289
  %v428 = vpack.c.b16 %v294, %v292
  %v429 = vpack.c.b16 %v295, %v293
  %v430 = vpack.c.b16 %v298, %v296
  %v431 = vpack.c.b16 %v299, %v297
  %v432 = vpack.c.b16 %v302, %v300
  %v433 = vpack.c.b16 %v303, %v301
  %v434 = vpack.c.b16 %v306, %v304
  %v435 = vpack.c.b16 %v307, %v305
  %v436 = vpack.c.b16 %v310, %v308
  %v437 = vpack.c.b16 %v311, %v309
  %v438 = vpack.c.b16 %v314, %v312
  %v439 = vpack.c.b16 %v315, %v313
  %v440 = vpack.c.b16 %v318, %v316
  %v441 = vpack.c.b16 %v319, %v317
  %v442 = vpack.c.b16 %v322, %v320
  %v443 = vpack.c.b16 %v323, %v321
  %v444 = vpack.c.b16 %v326, %v324
  %v445 = vpack.c.b16 %v327, %v325
  %v446 = vpack.c.b16 %v330, %v328
  %v447 = vpack.c.b16 %v331, %v329
  %v448 = vpack.c.b16 %v334, %v332
  %v449 = vpack.c.b16 %v335, %v333
  %v450 = vpack.c.b16 %v338, %v336
  %v451 = vpack.c.b16 %v339, %v337
  %v452 = vpack.c.b16 %v342, %v340
  %v453 = vpack.c.b16 %v343, %v341
  %v454 = vpack.c.b16 %v346, %v344
  %v455 = vpack.c.b16 %v347, %v345
  %v456 = vpack.c.b16 %v350, %v348
  %v457 = vpack.c.b16 %v351, %v349
  %v458 = vpack.c.b16 %v354, %v352
  %v459 = vpack.c.b16 %v355, %v353
  %v460 = vpack.c.b16 %v358, %v356
  %v461 = vpack.c.b16 %v359, %v357
  %v462 = vpack.c.b16 %v362, %v360
  %v463 = vpack.c.b16 %v363, %v361
  %v464 = vpack.c.b16 %v366, %v364
  %v465 = vpack.c.b16 %v367, %v365
  %v466 = vpack.c.b16 %v370, %v368
  %v467 = vpack.c.b16 %v371, %v369
  %v468 = vpack.c.b16 %v374, %v372
  %v469 = vpack.c.b16 %v375, %v373
  %v470 = vpack.c.b16 %v378, %v376
  %v471 = vpack.c.b16 %v379, %v377
  %v472 = vpack.c.b16 %v382, %v380
  %v473 = vpack.c.b16 %v383, %v381
  %v474 = vpack.c.b16 %v386, %v384
  %v475 = vpack.c.b16 %v387, %v385
  %v476 = vpack.c.b16 %v390, %v388
  %v477 = vpack.c.b16 %v391, %v389
  %v478 = vpack.c.b16 %v394, %v392
  %v479 = vpack.c.b16 %v395, %v393
  %v480 = vpack.c.b16 %v398, %v396
  %v481 = vpack.c.b16 %v399, %v397
  %v482 = vpack.c.b16 %v402, %v400
  %v483 = vpack.c.b16 %v403, %v401
  %564 = vmatpush.bf16.msra.mxu0 %v418
  %565 = vmatpush.bf16.msra.mxu0 %v416
  %566 = vmatpush.bf16.msra.mxu0 %v414
  %567 = vmatpush.bf16.msra.mxu0 %v412
  %568 = vmatpush.bf16.msra.mxu0 %v410
  %569 = vmatpush.bf16.msra.mxu0 %v408
  %570 = vmatpush.bf16.msra.mxu0 %v406
  %571 = vmatpush.bf16.msra.mxu0 %v404
  %572 = vmatmul.bf16.gmra.mxu0 %v144
  %v573 = vpop.f32.mrf.mxu0
  %v574 = vadd.f32 %v108, %v573
  %v575 = vpop.f32.mrf.mxu0
  %v576 = vadd.f32 %v108, %v575
  %577 = vmatmul.bf16.gmra.mxu0 %v149
  %v578 = vpop.f32.mrf.mxu0
  %v579 = vadd.f32 %v108, %v578
  %v580 = vpop.f32.mrf.mxu0
  %v581 = vadd.f32 %v108, %v580
  %582 = vdwg.mxu0
  %583 = vmatpush.bf16.msra.mxu0 %v434
  %584 = vmatpush.bf16.msra.mxu0 %v432
  %585 = vmatpush.bf16.msra.mxu0 %v430
  %586 = vmatpush.bf16.msra.mxu0 %v428
  %587 = vmatpush.bf16.msra.mxu0 %v426
  %588 = vmatpush.bf16.msra.mxu0 %v424
  %589 = vmatpush.bf16.msra.mxu0 %v422
  %590 = vmatpush.bf16.msra.mxu0 %v420
  %591 = vmatmul.bf16.gmra.mxu0 %v145
  %v592 = vpop.f32.mrf.mxu0
  %v593 = vadd.f32 %v574, %v592
  %v594 = vpop.f32.mrf.mxu0
  %v595 = vadd.f32 %v576, %v594
  %596 = vmatmul.bf16.gmra.mxu0 %v150
  %v597 = vpop.f32.mrf.mxu0
  %v598 = vadd.f32 %v579, %v597
  %v599 = vpop.f32.mrf.mxu0
  %v600 = vadd.f32 %v581, %v599
  %601 = vdwg.mxu0
  %602 = vmatpush.bf16.msra.mxu0 %v450
  %603 = vmatpush.bf16.msra.mxu0 %v448
  %604 = vmatpush.bf16.msra.mxu0 %v446
  %605 = vmatpush.bf16.msra.mxu0 %v444
  %606 = vmatpush.bf16.msra.mxu0 %v442
  %607 = vmatpush.bf16.msra.mxu0 %v440
  %608 = vmatpush.bf16.msra.mxu0 %v438
  %609 = vmatpush.bf16.msra.mxu0 %v436
  %610 = vmatmul.bf16.gmra.mxu0 %v146
  %v611 = vpop.f32.mrf.mxu0
  %v612 = vadd.f32 %v593, %v611
  %v613 = vpop.f32.mrf.mxu0
  %v614 = vadd.f32 %v595, %v613
  %615 = vmatmul.bf16.gmra.mxu0 %v151
  %v616 = vpop.f32.mrf.mxu0
  %v617 = vadd.f32 %v598, %v616
  %v618 = vpop.f32.mrf.mxu0
  %v619 = vadd.f32 %v600, %v618
  %620 = vdwg.mxu0
  %621 = vmatpush.bf16.msra.mxu0 %v466
  %622 = vmatpush.bf16.msra.mxu0 %v464
  %623 = vmatpush.bf16.msra.mxu0 %v462
  %624 = vmatpush.bf16.msra.mxu0 %v460
  %625 = vmatpush.bf16.msra.mxu0 %v458
  %626 = vmatpush.bf16.msra.mxu0 %v456
  %627 = vmatpush.bf16.msra.mxu0 %v454
  %628 = vmatpush.bf16.msra.mxu0 %v452
  %629 = vmatmul.bf16.gmra.mxu0 %v147
  %v630 = vpop.f32.mrf.mxu0
  %v631 = vadd.f32 %v612, %v630
  %v632 = vpop.f32.mrf.mxu0
  %v633 = vadd.f32 %v614, %v632
  %634 = vmatmul.bf16.gmra.mxu0 %v152
  %v635 = vpop.f32.mrf.mxu0
  %v636 = vadd.f32 %v617, %v635
  %v637 = vpop.f32.mrf.mxu0
  %v638 = vadd.f32 %v619, %v637
  %639 = vdwg.mxu0
  %640 = vmatpush.bf16.msra.mxu0 %v482
  %641 = vmatpush.bf16.msra.mxu0 %v480
  %642 = vmatpush.bf16.msra.mxu0 %v478
  %643 = vmatpush.bf16.msra.mxu0 %v476
  %644 = vmatpush.bf16.msra.mxu0 %v474
  %645 = vmatpush.bf16.msra.mxu0 %v472
  %646 = vmatpush.bf16.msra.mxu0 %v470
  %647 = vmatpush.bf16.msra.mxu0 %v468
  %648 = vmatmul.bf16.gmra.mxu0 %v148
  %v649 = vpop.f32.mrf.mxu0
  %v650 = vadd.f32 %v631, %v649
  %v651 = vpop.f32.mrf.mxu0
  %v652 = vadd.f32 %v633, %v651
  %653 = vmatmul.bf16.gmra.mxu0 %v153
  %v654 = vpop.f32.mrf.mxu0
  %v655 = vadd.f32 %v636, %v654
  %v656 = vpop.f32.mrf.mxu0
  %v657 = vadd.f32 %v638, %v656
  %658 = vdwg.mxu0
  %659 = vmatpush.bf16.msra.mxu0 %v419
  %660 = vmatpush.bf16.msra.mxu0 %v417
  %661 = vmatpush.bf16.msra.mxu0 %v415
  %662 = vmatpush.bf16.msra.mxu0 %v413
  %663 = vmatpush.bf16.msra.mxu0 %v411
  %664 = vmatpush.bf16.msra.mxu0 %v409
  %665 = vmatpush.bf16.msra.mxu0 %v407
  %666 = vmatpush.bf16.msra.mxu0 %v405
  %667 = vmatmul.bf16.gmra.mxu0 %v144
  %v668 = vpop.f32.mrf.mxu0
  %v669 = vadd.f32 %v109, %v668
  %v670 = vpop.f32.mrf.mxu0
  %v671 = vadd.f32 %v109, %v670
  %672 = vmatmul.bf16.gmra.mxu0 %v149
  %v673 = vpop.f32.mrf.mxu0
  %v674 = vadd.f32 %v109, %v673
  %v675 = vpop.f32.mrf.mxu0
  %v676 = vadd.f32 %v109, %v675
  %677 = vdwg.mxu0
  %678 = vmatpush.bf16.msra.mxu0 %v435
  %679 = vmatpush.bf16.msra.mxu0 %v433
  %680 = vmatpush.bf16.msra.mxu0 %v431
  %681 = vmatpush.bf16.msra.mxu0 %v429
  %682 = vmatpush.bf16.msra.mxu0 %v427
  %683 = vmatpush.bf16.msra.mxu0 %v425
  %684 = vmatpush.bf16.msra.mxu0 %v423
  %685 = vmatpush.bf16.msra.mxu0 %v421
  %686 = vmatmul.bf16.gmra.mxu0 %v145
  %v687 = vpop.f32.mrf.mxu0
  %v688 = vadd.f32 %v669, %v687
  %v689 = vpop.f32.mrf.mxu0
  %v690 = vadd.f32 %v671, %v689
  %691 = vmatmul.bf16.gmra.mxu0 %v150
  %v692 = vpop.f32.mrf.mxu0
  %v693 = vadd.f32 %v674, %v692
  %v694 = vpop.f32.mrf.mxu0
  %v695 = vadd.f32 %v676, %v694
  %696 = vdwg.mxu0
  %697 = vmatpush.bf16.msra.mxu0 %v451
  %698 = vmatpush.bf16.msra.mxu0 %v449
  %699 = vmatpush.bf16.msra.mxu0 %v447
  %700 = vmatpush.bf16.msra.mxu0 %v445
  %701 = vmatpush.bf16.msra.mxu0 %v443
  %702 = vmatpush.bf16.msra.mxu0 %v441
  %703 = vmatpush.bf16.msra.mxu0 %v439
  %704 = vmatpush.bf16.msra.mxu0 %v437
  %705 = vmatmul.bf16.gmra.mxu0 %v146
  %v706 = vpop.f32.mrf.mxu0
  %v707 = vadd.f32 %v688, %v706
  %v708 = vpop.f32.mrf.mxu0
  %v709 = vadd.f32 %v690, %v708
  %710 = vmatmul.bf16.gmra.mxu0 %v151
  %v711 = vpop.f32.mrf.mxu0
  %v712 = vadd.f32 %v693, %v711
  %v713 = vpop.f32.mrf.mxu0
  %v714 = vadd.f32 %v695, %v713
  %715 = vdwg.mxu0
  %716 = vmatpush.bf16.msra.mxu0 %v467
  %717 = vmatpush.bf16.msra.mxu0 %v465
  %718 = vmatpush.bf16.msra.mxu0 %v463
  %719 = vmatpush.bf16.msra.mxu0 %v461
  %720 = vmatpush.bf16.msra.mxu0 %v459
  %721 = vmatpush.bf16.msra.mxu0 %v457
  %722 = vmatpush.bf16.msra.mxu0 %v455
  %723 = vmatpush.bf16.msra.mxu0 %v453
  %724 = vmatmul.bf16.gmra.mxu0 %v147
  %v725 = vpop.f32.mrf.mxu0
  %v726 = vadd.f32 %v707, %v725
  %v727 = vpop.f32.mrf.mxu0
  %v728 = vadd.f32 %v709, %v727
  %729 = vmatmul.bf16.gmra.mxu0 %v152
  %v730 = vpop.f32.mrf.mxu0
  %v731 = vadd.f32 %v712, %v730
  %v732 = vpop.f32.mrf.mxu0
  %v733 = vadd.f32 %v714, %v732
  %734 = vdwg.mxu0
  %735 = vmatpush.bf16.msra.mxu0 %v483
  %736 = vmatpush.bf16.msra.mxu0 %v481
  %737 = vmatpush.bf16.msra.mxu0 %v479
  %738 = vmatpush.bf16.msra.mxu0 %v477
  %739 = vmatpush.bf16.msra.mxu0 %v475
  %740 = vmatpush.bf16.msra.mxu0 %v473
  %741 = vmatpush.bf16.msra.mxu0 %v471
  %742 = vmatpush.bf16.msra.mxu0 %v469
  %743 = vmatmul.bf16.gmra.mxu0 %v148
  %v744 = vpop.f32.mrf.mxu0
  %v745 = vadd.f32 %v726, %v744
  %v746 = vpop.f32.mrf.mxu0
  %v747 = vadd.f32 %v728, %v746
  %748 = vmatmul.bf16.gmra.mxu0 %v153
  %v749 = vpop.f32.mrf.mxu0
  %v750 = vadd.f32 %v731, %v749
  %v751 = vpop.f32.mrf.mxu0
  %v752 = vadd.f32 %v733, %v751
  %753 = vdwg.mxu0
  %v754 = vxor.u32 %v745, 2147483648
  %v755 = vxor.u32 %v747, 2147483648
  %v756 = vxor.u32 %v750, 2147483648
  %v757 = vxor.u32 %v752, 2147483648
  %v758 = vmul.f32 %v754, 1.442695
  %v759 = vpow.pop %v758
  %v760 = vmul.f32 %v755, 1.442695
  %v761 = vpow.pop %v760
  %v762 = vmul.f32 %v756, 1.442695
  %v763 = vpow.pop %v762
  %v764 = vmul.f32 %v757, 1.442695
  %v765 = vpow.pop %v764
  %v766 = vadd.f32 %v759, 1.0
  %v767 = vadd.f32 %v761, 1.0
  %v768 = vadd.f32 %v763, 1.0
  %v769 = vadd.f32 %v765, 1.0
  %v770 = vrcp.pop %v766
  %v771 = vmul.f32 %v766, %v770
  %v772 = vsub.f32 1.0, %v771
  %v773 = vmul.f32 %v770, %v772
  %v774 = vadd.f32 %v770, %v773
  %vm775 = vweird.f32 %v766
  %vm776 = vweird.f32 %v770
  %vm777 = vmor %vm775, %vm776
  %v778 = vsel %vm777, %v770, %v774
  %v779 = vand.u32 2147483647, %v766
  %vm780 = vcmp.eq.f32.partialorder %v779, 8.507059e+37
  %v781 = vand.u32 %v766, 2147483648
  %v782 = vor.u32 1.1754944e-38, %v781
  %v783 = vsel %vm780, %v782, %v778
  %v784 = vmul.f32 1.0, %v783
  %v785 = vrcp.pop %v767
  %v786 = vmul.f32 %v767, %v785
  %v787 = vsub.f32 1.0, %v786
  %v788 = vmul.f32 %v785, %v787
  %v789 = vadd.f32 %v785, %v788
  %vm790 = vweird.f32 %v767
  %vm791 = vweird.f32 %v785
  %vm792 = vmor %vm790, %vm791
  %v793 = vsel %vm792, %v785, %v789
  %v794 = vand.u32 2147483647, %v767
  %vm795 = vcmp.eq.f32.partialorder %v794, 8.507059e+37
  %v796 = vand.u32 %v767, 2147483648
  %v797 = vor.u32 1.1754944e-38, %v796
  %v798 = vsel %vm795, %v797, %v793
  %v799 = vmul.f32 1.0, %v798
  %v800 = vrcp.pop %v768
  %v801 = vmul.f32 %v768, %v800
  %v802 = vsub.f32 1.0, %v801
  %v803 = vmul.f32 %v800, %v802
  %v804 = vadd.f32 %v800, %v803
  %vm805 = vweird.f32 %v768
  %vm806 = vweird.f32 %v800
  %vm807 = vmor %vm805, %vm806
  %v808 = vsel %vm807, %v800, %v804
  %v809 = vand.u32 2147483647, %v768
  %vm810 = vcmp.eq.f32.partialorder %v809, 8.507059e+37
  %v811 = vand.u32 %v768, 2147483648
  %v812 = vor.u32 1.1754944e-38, %v811
  %v813 = vsel %vm810, %v812, %v808
  %v814 = vmul.f32 1.0, %v813
  %v815 = vrcp.pop %v769
  %v816 = vmul.f32 %v769, %v815
  %v817 = vsub.f32 1.0, %v816
  %v818 = vmul.f32 %v815, %v817
  %v819 = vadd.f32 %v815, %v818
  %vm820 = vweird.f32 %v769
  %vm821 = vweird.f32 %v815
  %vm822 = vmor %vm820, %vm821
  %v823 = vsel %vm822, %v815, %v819
  %v824 = vand.u32 2147483647, %v769
  %vm825 = vcmp.eq.f32.partialorder %v824, 8.507059e+37
  %v826 = vand.u32 %v769, 2147483648
  %v827 = vor.u32 1.1754944e-38, %v826
  %v828 = vsel %vm825, %v827, %v823
  %v829 = vmul.f32 1.0, %v828
  %vm830 = vcmp.ge.f32.partialorder %v650, 0.0
  %vm831 = vcmp.ge.f32.partialorder %v652, 0.0
  %vm832 = vcmp.ge.f32.partialorder %v655, 0.0
  %vm833 = vcmp.ge.f32.partialorder %v657, 0.0
  %v834 = vmul.f32 %v650, 0.2
  %v835 = vmul.f32 %v652, 0.2
  %v836 = vmul.f32 %v655, 0.2
  %v837 = vmul.f32 %v657, 0.2
  %v838 = vsel %vm830, %v650, %v834
  %v839 = vsel %vm831, %v652, %v835
  %v840 = vsel %vm832, %v655, %v836
  %v841 = vsel %vm833, %v657, %v837
  %v842 = vmul.f32 %v838, %v784
  %v843 = vmul.f32 %v839, %v799
  %v844 = vmul.f32 %v840, %v814
  %v845 = vmul.f32 %v841, %v829
  %846 = vst [vmem:[%s3] sm:$0xff] %v842
  %847 = vst [vmem:[%s3 + $0x8] sm:$0xff] %v843
  %848 = vst [vmem:[%s3 + $0x10] sm:$0xff] %v844
  %849 = vst [vmem:[%s3 + $0x18] sm:$0xff] %v845
  // Predicated region
  $region14: #{_lambda_.81} parent=0 // pred_check
    _
  $region15: #{_lambda_.81} parent=0 // pred_check_branch
    %851 = sbr.rel (0) target = $region17
  $region16: #{_lambda_.81} parent=0 // pred_region
    _
  $region17: #{_lambda_.81} parent=0 // pred_fallthru
    _
  // Predicated region
  $region18: #{_lambda_.81} parent=0 // pred_check
    _
  $region19: #{_lambda_.81} parent=0 // pred_check_branch
    %853 = sbr.rel (0) target = $region21
  $region20: #{_lambda_.81} parent=0 // pred_region
    _
  $region21: #{_lambda_.81} parent=0 // pred_fallthru
    _

</llo_original>
